<compile_context>
chip_gen: v6e
topology: v6e:2x2x1
jax: 0.10.0
libtpu: 0.0.40
codegen_flags: <defaults>
</compile_context>

<pallas_src>
import math

import jax
import jax.numpy as jnp
from jax import lax
from jax.experimental import pallas as pl
from jax.experimental.pallas import tpu as pltpu

_LANES = 128


def _make_fused_kernel(H, W, Cin, Cout, TH, has_skip, dup_out):
    """Fused conv3x3 + folded-BN + (upsampled residual) + ReLU kernel body.

    Ref shapes seen by the kernel:
      x_ref:    (1, H, W, Cin)       bf16, Cin zero-padded to a lane multiple
      w_ref:    (3, 3*Cin, Cout)     bf16, BN scale folded; w_ref[dy] holds the
                                     (dx, cin)-packed tap matrix
      b_ref:    (1, Cout)            f32 folded BN bias
      skip_ref: (1, H//2, W, Cout)   bf16 residual, half resolution in H only
                                     (columns already duplicated by producer)
      o_ref:    (1, H, W, Cout)  or  (1, H, W, 2*Cout) when dup_out
    """
    nt = H // TH
    THs = TH // 2

    def body(x_ref, w_ref, b_ref, skip_ref, o_ref):
        # ---- build the tap-packed LHS once (shared by all row chunks) ----
        xv = x_ref[0].astype(jnp.float32)                    # (H, W, Cin)
        zrow = jnp.zeros((1, W, Cin), jnp.float32)
        xp = jnp.concatenate([zrow, xv, zrow], axis=0)       # (H+2, W, Cin)
        # Horizontal taps via sublane rotation (XLU) + border masking (VPU):
        # no unaligned W-offset slices, SAME padding handled in-kernel.
        col = lax.broadcasted_iota(jnp.int32, (H + 2, W, Cin), 1)
        left = jnp.where(col == 0, 0.0,
                         pltpu.roll(xp, shift=1, axis=1))        # x[.., w-1]
        right = jnp.where(col == W - 1, 0.0,
                          pltpu.roll(xp, shift=W - 1, axis=1))   # x[.., w+1]
        # Pack the 3 horizontal taps along the contraction dim: K = 3*Cin.
        lhs = jnp.concatenate([left, xp, right], axis=2)     # (H+2, W, 3*Cin)
        lhs = lhs.astype(jnp.bfloat16)
        bias = b_ref[0]                                      # (Cout,) f32

        # ---- row-chunked matmuls + epilogue (f32 acc stays ~32 vregs) ----
        for t in range(nt):
            r0 = t * TH
            acc = jnp.zeros((TH, W, Cout), jnp.float32)
            for dy in range(3):                              # vertical taps
                acc = acc + lax.dot_general(
                    lhs[r0 + dy:r0 + dy + TH],               # (TH, W, 3*Cin)
                    w_ref[dy],                               # (3*Cin, Cout)
                    dimension_numbers=(((2,), (0,)), ((), ())),
                    preferred_element_type=jnp.float32)
            y = acc + bias                                   # folded BN bias
            if skip_ref is not None:
                # Fused nearest 2x upsample of the residual: rows replicated
                # here (leading-dim broadcast, no relayout); columns were
                # already duplicated by the producer kernel / wrapper.
                a = skip_ref[0, r0 // 2:r0 // 2 + THs].astype(jnp.float32)
                y = y + jnp.broadcast_to(
                    a[:, None], (THs, 2, W, Cout)).reshape(TH, W, Cout)
            y = jnp.maximum(y, 0.0).astype(o_ref.dtype)
            if dup_out:
                # Emit channels duplicated: reshaping (W, 2*Cout)->(2*W, Cout)
                # in the wrapper is a free contiguous regroup and equals the
                # nearest 2x column upsample needed by the next level.
                y = jnp.concatenate([y, y], axis=-1)         # (TH, W, 2*Cout)
            o_ref[0, r0:r0 + TH] = y                         # lane-dense store

    if has_skip:
        def kernel(x_ref, w_ref, b_ref, skip_ref, o_ref):
            body(x_ref, w_ref, b_ref, skip_ref, o_ref)
    else:
        def kernel(x_ref, w_ref, b_ref, o_ref):
            body(x_ref, w_ref, b_ref, None, o_ref)
    return kernel


def fused_conv3x3_bn_relu(x, w_packed, b, skip=None, *,
                          dup_out=False, out_dtype=jnp.bfloat16):
    """relu(conv3x3(x)*bn_scale + bn_bias [+ nearest_up2x(skip)]) in NHWC.

    x:        (N, H, W, Cin)  (zero-padded here to the packed weight's Cin)
    w_packed: (3, 3*Cin_pad, Cout) bf16, BN scale folded
    b:        (1, Cout) f32
    skip:     (N, H//2, W, Cout) — half resolution in H, columns already
              duplicated; or None.
    dup_out:  output is (N, H, W, 2*Cout), reshaped to (N, H, 2*W, Cout)
              (= nearest 2x W-upsample) for free.
    """
    N, H, W, Cin = x.shape
    Cin_pad = w_packed.shape[1] // 3
    Cout = w_packed.shape[2]
    if Cin < Cin_pad:                      # lane-align the contraction dim
        x = jnp.pad(x, ((0, 0), (0, 0), (0, 0), (0, Cin_pad - Cin)))
    TH = 8 if H % 8 == 0 else H            # row chunk height
    has_skip = skip is not None
    Cout_store = 2 * Cout if dup_out else Cout

    in_specs = [
        pl.BlockSpec((1, H, W, Cin_pad), lambda n: (n, 0, 0, 0)),
        pl.BlockSpec((3, 3 * Cin_pad, Cout), lambda n: (0, 0, 0)),  # resident
        pl.BlockSpec((1, Cout), lambda n: (0, 0)),                  # resident
    ]
    args = [x.astype(jnp.bfloat16), w_packed, b]
    if has_skip:
        in_specs.append(
            pl.BlockSpec((1, H // 2, W, Cout), lambda n: (n, 0, 0, 0)))
        args.append(skip.astype(jnp.bfloat16))

    out = pl.pallas_call(
        _make_fused_kernel(H, W, Cin_pad, Cout, TH, has_skip, dup_out),
        out_shape=jax.ShapeDtypeStruct((N, H, W, Cout_store), out_dtype),
        grid_spec=pltpu.PrefetchScalarGridSpec(
            num_scalar_prefetch=0,
            grid=(N,),
            in_specs=in_specs,
            out_specs=pl.BlockSpec((1, H, W, Cout_store),
                                   lambda n: (n, 0, 0, 0)),
        ),
        compiler_params=pltpu.CompilerParams(
            dimension_semantics=("parallel",),
            vmem_limit_bytes=32 * 1024 * 1024,
        ),
    )(*args)

    if dup_out:
        # (…, W, 2*Cout) -> (…, 2*W, Cout): contiguous regroup, free in XLA.
        out = out.reshape(N, H, 2 * W, Cout)
    return out


def init_fpn_params(key, dim_in=(64, 128, 256), out_dim=256, eps=1e-5):
    """Matches the PyTorch __init__: conv ~ N(0, sqrt(2/(3*3*out_dim))),
    BN gamma=1, beta=0, (eval) running_mean=0, running_var=1.  The BN scale is
    folded into the conv weights and the 3 horizontal taps are packed as
    (dy, dx*Cin_pad + cin, cout) for the kernel."""
    keys = jax.random.split(key, len(dim_in))
    std = math.sqrt(2.0 / (3 * 3 * out_dim))
    params = {}
    for i, cin in enumerate(dim_in, start=1):
        w = std * jax.random.normal(keys[i - 1], (3, 3, cin, out_dim),
                                    jnp.float32)           # (dy, dx, ci, co)
        gamma = jnp.ones((out_dim,), jnp.float32)
        beta = jnp.zeros((out_dim,), jnp.float32)
        mean = jnp.zeros((out_dim,), jnp.float32)
        var = jnp.ones((out_dim,), jnp.float32)
        scale = gamma / jnp.sqrt(var + eps)
        bias = beta - mean * scale
        w_folded = w * scale                                 # fold BN scale
        cin_pad = ((cin + _LANES - 1) // _LANES) * _LANES    # lane alignment
        w_pad = jnp.pad(w_folded,
                        ((0, 0), (0, 0), (0, cin_pad - cin), (0, 0)))
        params[f"w{i}"] = w_pad.reshape(3, 3 * cin_pad, out_dim).astype(
            jnp.bfloat16)
        params[f"b{i}"] = bias.reshape(1, out_dim)
        params[f"w{i}_ref"] = w_folded          # f32 HWIO copy for ref check
    return params


def fpn_forward(params, x1, x2, x3, ds_rate=2):
    """FPN.forward; x1/x2/x3 are NCHW (PyTorch convention), output is NCHW."""
    nhwc = lambda t: jnp.transpose(t, (0, 2, 3, 1)).astype(jnp.bfloat16)
    x1, x2, x3 = nhwc(x1), nhwc(x2), nhwc(x3)

    # Residuals are passed at half resolution in H with columns already
    # duplicated; the kernel replicates the rows (fused 2x nearest upsample).
    # x3 is the coarsest (tiny) level, so its column duplication is a small
    # XLA op that fuses with the NCHW->NHWC transpose.
    x3_skip = jnp.repeat(x3, 2, axis=2)                  # (N, H3, 2*W3, C)

    if ds_rate == 4:
        y2 = fused_conv3x3_bn_relu(x2, params["w2"], params["b2"],
                                   skip=x3_skip, out_dtype=jnp.float32)
        return jnp.transpose(y2, (0, 3, 1, 2))

    # x2' = relu(bn2(conv2(x2)) + up(x3)); emitted column-duplicated so the
    # next level's residual needs no wrapper upsample / extra HBM round trip.
    y2_upw = fused_conv3x3_bn_relu(x2, params["w2"], params["b2"],
                                   skip=x3_skip, dup_out=True,
                                   out_dtype=jnp.bfloat16)
    # x1' = relu(bn1(conv1(x1)) + up(x2'))
    y1 = fused_conv3x3_bn_relu(x1, params["w1"], params["b1"],
                               skip=y2_upw, out_dtype=jnp.bfloat16)
    # out = relu(bn3(conv3(x1')))   (no-residual variant -> no zero tensor)
    out = fused_conv3x3_bn_relu(y1, params["w3"], params["b3"],
                                skip=None, out_dtype=jnp.float32)
    if ds_rate == 1:
        out = jnp.repeat(jnp.repeat(out, 2, axis=1), 2, axis=2)
    return jnp.transpose(out, (0, 3, 1, 2))


def _fpn_reference(params, x1, x2, x3, ds_rate=2):
    """Pure-JAX f32 reference (same inference-mode BN folding)."""
    conv = lambda x, w: lax.conv_general_dilated(
        x, w, (1, 1), "SAME",
        dimension_numbers=("NHWC", "HWIO", "NHWC"),
        precision=lax.Precision.HIGHEST)
    up = lambda x: jnp.repeat(jnp.repeat(x, 2, axis=1), 2, axis=2)
    nhwc = lambda t: jnp.transpose(t, (0, 2, 3, 1)).astype(jnp.float32)
    x1, x2, x3 = nhwc(x1), nhwc(x2), nhwc(x3)
    b = lambda i: params[f"b{i}"].reshape(1, 1, 1, -1)
    y2 = jnp.maximum(conv(x2, params["w2_ref"]) + b(2) + up(x3), 0.0)
    if ds_rate == 4:
        return jnp.transpose(y2, (0, 3, 1, 2))
    y1 = jnp.maximum(conv(x1, params["w1_ref"]) + b(1) + up(y2), 0.0)
    out = jnp.maximum(conv(y1, params["w3_ref"]) + b(3), 0.0)
    if ds_rate == 1:
        out = up(out)
    return jnp.transpose(out, (0, 3, 1, 2))


if __name__ == "__main__":
    key = jax.random.PRNGKey(0)
    k1, k2, k3, kp = jax.random.split(key, 4)

    # Module defaults: dim_in=[64, 128, 256], out_dim=256, ds_rate=2.
    # x1 is the finest level; x2 / x3 are 2x / 4x downsampled.
    x1 = jax.random.normal(k1, (2, 64, 16, 16), jnp.float32)
    x2 = jax.random.normal(k2, (2, 128, 8, 8), jnp.float32)
    x3 = jax.random.normal(k3, (2, 256, 4, 4), jnp.float32)

    params = init_fpn_params(kp, dim_in=(64, 128, 256), out_dim=256)

    fwd = jax.jit(lambda p, a, b, c: fpn_forward(p, a, b, c, ds_rate=2))
    out = fwd(params, x1, x2, x3)
    out = jax.block_until_ready(out)
    assert out.shape == (2, 256, 16, 16), out.shape

    # bf16-tolerance correctness check against a pure-JAX f32 reference.
    ref = _fpn_reference(params, x1, x2, x3, ds_rate=2)
    err = float(jnp.max(jnp.abs(out.astype(jnp.float32) - ref)))
    assert err < 0.4, f"max abs error vs reference: {err}"
    print("KERNEL_OK")
</pallas_src>

<mosaic_0001>
module attributes {stable_mosaic.version = 11 : i64} {
  func.func @kernel(%arg0: i32, %arg1: memref<1x8x8x128xbf16, #tpu.memory_space<vmem>>, %arg2: memref<3x384x256xbf16, #tpu.memory_space<vmem>>, %arg3: memref<1x256xf32, #tpu.memory_space<vmem>>, %arg4: memref<1x4x8x256xbf16, #tpu.memory_space<vmem>>, %arg5: memref<1x8x8x512xbf16, #tpu.memory_space<vmem>>) attributes {dimension_semantics = [#tpu.dimension_semantics<parallel>], iteration_bounds = array<i64: 2>, scalar_prefetch = 0 : i64, scratch_operands = 0 : i64, tpu.core_type = #tpu.core_type<tc>, window_params = [{transform_indices = @transform_0, window_bounds = array<i64: 1, 8, 8, 128>}, {pipeline_mode = #tpu.pipeline_mode<synchronous>, transform_indices = @transform_1, window_bounds = array<i64: 3, 384, 256>}, {pipeline_mode = #tpu.pipeline_mode<synchronous>, transform_indices = @transform_2, window_bounds = array<i64: 1, 256>}, {transform_indices = @transform_3, window_bounds = array<i64: 1, 4, 8, 256>}, {transform_indices = @transform_4, window_bounds = array<i64: 1, 8, 8, 512>}]} {
    %c0 = arith.constant 0 : index
    %c0_0 = arith.constant 0 : index
    %c0_1 = arith.constant 0 : index
    %c0_2 = arith.constant 0 : index
    %0 = vector.load %arg1[%c0, %c0_0, %c0_1, %c0_2] : memref<1x8x8x128xbf16, #tpu.memory_space<vmem>>, vector<1x8x8x128xbf16>
    %1 = vector.shape_cast %0 : vector<1x8x8x128xbf16> to vector<8x8x128xbf16>
    %2 = arith.extf %1 : vector<8x8x128xbf16> to vector<8x8x128xf32>
    %cst = arith.constant 0.000000e+00 : f32
    %3 = vector.broadcast %cst : f32 to vector<1x8x128xf32>
    %4 = tpu.concatenate %3, %2, %3 in 0 : vector<1x8x128xf32>, vector<8x8x128xf32>, vector<1x8x128xf32> -> vector<10x8x128xf32>
    %5 = tpu.iota {dimensions = array<i32: 1>} : vector<10x8x128xi32>
    %c0_i32 = arith.constant 0 : i32
    %6 = vector.broadcast %c0_i32 : i32 to vector<10x8x128xi32>
    %7 = arith.cmpi eq, %5, %6 : vector<10x8x128xi32>
    %c1_i32 = arith.constant 1 : i32
    %8 = tpu.dynamic_rotate %4 by %c1_i32 dim 1 : vector<10x8x128xf32>, i32 -> vector<10x8x128xf32>
    %cst_3 = arith.constant 0.000000e+00 : f32
    %9 = vector.broadcast %cst_3 : f32 to vector<10x8x128xf32>
    %10 = arith.select %7, %9, %8 : vector<10x8x128xi1>, vector<10x8x128xf32>
    %c7_i32 = arith.constant 7 : i32
    %11 = vector.broadcast %c7_i32 : i32 to vector<10x8x128xi32>
    %12 = arith.cmpi eq, %5, %11 : vector<10x8x128xi32>
    %c7_i32_4 = arith.constant 7 : i32
    %13 = tpu.dynamic_rotate %4 by %c7_i32_4 dim 1 : vector<10x8x128xf32>, i32 -> vector<10x8x128xf32>
    %cst_5 = arith.constant 0.000000e+00 : f32
    %14 = vector.broadcast %cst_5 : f32 to vector<10x8x128xf32>
    %15 = arith.select %12, %14, %13 : vector<10x8x128xi1>, vector<10x8x128xf32>
    %16 = tpu.concatenate %10, %4, %15 in 2 : vector<10x8x128xf32>, vector<10x8x128xf32>, vector<10x8x128xf32> -> vector<10x8x384xf32>
    %17 = arith.truncf %16 : vector<10x8x384xf32> to vector<10x8x384xbf16>
    %c0_6 = arith.constant 0 : index
    %c0_7 = arith.constant 0 : index
    %18 = vector.load %arg3[%c0_6, %c0_7] : memref<1x256xf32, #tpu.memory_space<vmem>>, vector<1x256xf32>
    %19 = vector.shape_cast %18 : vector<1x256xf32> to vector<256xf32>
    %cst_8 = arith.constant 0.000000e+00 : f32
    %20 = vector.broadcast %cst_8 : f32 to vector<8x8x256xf32>
    %21 = vector.extract_strided_slice %17 {offsets = [0, 0, 0], sizes = [8, 8, 384], strides = [1, 1, 1]} : vector<10x8x384xbf16> to vector<8x8x384xbf16>
    %c0_9 = arith.constant 0 : index
    %c0_10 = arith.constant 0 : index
    %c0_11 = arith.constant 0 : index
    %22 = vector.load %arg2[%c0_9, %c0_10, %c0_11] : memref<3x384x256xbf16, #tpu.memory_space<vmem>>, vector<1x384x256xbf16>
    %23 = vector.shape_cast %22 : vector<1x384x256xbf16> to vector<384x256xbf16>
    %cst_12 = arith.constant dense<0.000000e+00> : vector<8x8x256xf32>
    %24 = tpu.matmul %21, %23, %cst_12 {dimension_numbers = #tpu.dot_dimension_numbers<[2], [0], [0, 1], [1], [0, 0, 0, 1, 1, 1], [], []>} : vector<8x8x384xbf16>, vector<384x256xbf16>, vector<8x8x256xf32> -> vector<8x8x256xf32>
    %25 = arith.addf %20, %24 : vector<8x8x256xf32>
    %26 = vector.extract_strided_slice %17 {offsets = [1, 0, 0], sizes = [8, 8, 384], strides = [1, 1, 1]} : vector<10x8x384xbf16> to vector<8x8x384xbf16>
    %c1 = arith.constant 1 : index
    %c0_13 = arith.constant 0 : index
    %c0_14 = arith.constant 0 : index
    %27 = vector.load %arg2[%c1, %c0_13, %c0_14] : memref<3x384x256xbf16, #tpu.memory_space<vmem>>, vector<1x384x256xbf16>
    %28 = vector.shape_cast %27 : vector<1x384x256xbf16> to vector<384x256xbf16>
    %cst_15 = arith.constant dense<0.000000e+00> : vector<8x8x256xf32>
    %29 = tpu.matmul %26, %28, %cst_15 {dimension_numbers = #tpu.dot_dimension_numbers<[2], [0], [0, 1], [1], [0, 0, 0, 1, 1, 1], [], []>} : vector<8x8x384xbf16>, vector<384x256xbf16>, vector<8x8x256xf32> -> vector<8x8x256xf32>
    %30 = arith.addf %25, %29 : vector<8x8x256xf32>
    %31 = vector.extract_strided_slice %17 {offsets = [2, 0, 0], sizes = [8, 8, 384], strides = [1, 1, 1]} : vector<10x8x384xbf16> to vector<8x8x384xbf16>
    %c2 = arith.constant 2 : index
    %c0_16 = arith.constant 0 : index
    %c0_17 = arith.constant 0 : index
    %32 = vector.load %arg2[%c2, %c0_16, %c0_17] : memref<3x384x256xbf16, #tpu.memory_space<vmem>>, vector<1x384x256xbf16>
    %33 = vector.shape_cast %32 : vector<1x384x256xbf16> to vector<384x256xbf16>
    %cst_18 = arith.constant dense<0.000000e+00> : vector<8x8x256xf32>
    %34 = tpu.matmul %31, %33, %cst_18 {dimension_numbers = #tpu.dot_dimension_numbers<[2], [0], [0, 1], [1], [0, 0, 0, 1, 1, 1], [], []>} : vector<8x8x384xbf16>, vector<384x256xbf16>, vector<8x8x256xf32> -> vector<8x8x256xf32>
    %35 = arith.addf %30, %34 : vector<8x8x256xf32>
    %36 = vector.shape_cast %19 : vector<256xf32> to vector<1x1x256xf32>
    %37 = vector.broadcast %36 : vector<1x1x256xf32> to vector<8x8x256xf32>
    %38 = arith.addf %35, %37 : vector<8x8x256xf32>
    %c0_19 = arith.constant 0 : index
    %c0_20 = arith.constant 0 : index
    %c0_21 = arith.constant 0 : index
    %c0_22 = arith.constant 0 : index
    %39 = vector.load %arg4[%c0_19, %c0_20, %c0_21, %c0_22] : memref<1x4x8x256xbf16, #tpu.memory_space<vmem>>, vector<1x4x8x256xbf16>
    %40 = vector.shape_cast %39 : vector<1x4x8x256xbf16> to vector<4x8x256xbf16>
    %41 = arith.extf %40 : vector<4x8x256xbf16> to vector<4x8x256xf32>
    %42 = vector.shape_cast %41 : vector<4x8x256xf32> to vector<4x1x8x256xf32>
    %43 = vector.shape_cast %42 : vector<4x1x8x256xf32> to vector<4x1x8x256xf32>
    %44 = vector.broadcast %43 : vector<4x1x8x256xf32> to vector<4x2x8x256xf32>
    %45 = vector.shape_cast %44 : vector<4x2x8x256xf32> to vector<8x8x256xf32>
    %46 = arith.addf %38, %45 : vector<8x8x256xf32>
    %cst_23 = arith.constant 0.000000e+00 : f32
    %47 = vector.broadcast %cst_23 : f32 to vector<8x8x256xf32>
    %48 = arith.maximumf %46, %47 : vector<8x8x256xf32>
    %49 = arith.truncf %48 : vector<8x8x256xf32> to vector<8x8x256xbf16>
    %50 = tpu.concatenate %49, %49 in 2 : vector<8x8x256xbf16>, vector<8x8x256xbf16> -> vector<8x8x512xbf16>
    %c0_24 = arith.constant 0 : index
    %c0_25 = arith.constant 0 : index
    %c0_26 = arith.constant 0 : index
    %c0_27 = arith.constant 0 : index
    %51 = vector.load %arg5[%c0_24, %c0_25, %c0_26, %c0_27] : memref<1x8x8x512xbf16, #tpu.memory_space<vmem>>, vector<1x8x8x512xbf16>
    %52 = vector.shape_cast %51 : vector<1x8x8x512xbf16> to vector<8x8x512xbf16>
    %53 = vector.shape_cast %50 : vector<8x8x512xbf16> to vector<1x8x8x512xbf16>
    tpu.vector_store %arg5[%c0_24, %c0_25, %c0_26, %c0_27], %53 {strides = array<i32>} : memref<1x8x8x512xbf16, #tpu.memory_space<vmem>>, vector<1x8x8x512xbf16>,
    return
  }
  func.func @transform_0(%arg0: i32) -> (i32, i32, i32, i32) {
    %c0_i32 = arith.constant 0 : i32
    %c0_i32_0 = arith.constant 0 : i32
    %c0_i32_1 = arith.constant 0 : i32
    %c0_i32_2 = arith.constant 0 : i32
    return %arg0, %c0_i32, %c0_i32_0, %c0_i32_1 : i32, i32, i32, i32
  }
  func.func @transform_1(%arg0: i32) -> (i32, i32, i32) {
    %c0_i32 = arith.constant 0 : i32
    %c0_i32_0 = arith.constant 0 : i32
    %c0_i32_1 = arith.constant 0 : i32
    %c0_i32_2 = arith.constant 0 : i32
    return %c0_i32, %c0_i32_0, %c0_i32_1 : i32, i32, i32
  }
  func.func @transform_2(%arg0: i32) -> (i32, i32) {
    %c0_i32 = arith.constant 0 : i32
    %c0_i32_0 = arith.constant 0 : i32
    %c0_i32_1 = arith.constant 0 : i32
    return %c0_i32, %c0_i32_0 : i32, i32
  }
  func.func @transform_3(%arg0: i32) -> (i32, i32, i32, i32) {
    %c0_i32 = arith.constant 0 : i32
    %c0_i32_0 = arith.constant 0 : i32
    %c0_i32_1 = arith.constant 0 : i32
    %c0_i32_2 = arith.constant 0 : i32
    return %arg0, %c0_i32, %c0_i32_0, %c0_i32_1 : i32, i32, i32, i32
  }
  func.func @transform_4(%arg0: i32) -> (i32, i32, i32, i32) {
    %c0_i32 = arith.constant 0 : i32
    %c0_i32_0 = arith.constant 0 : i32
    %c0_i32_1 = arith.constant 0 : i32
    %c0_i32_2 = arith.constant 0 : i32
    return %arg0, %c0_i32, %c0_i32_0, %c0_i32_1 : i32, i32, i32, i32
  }
}

module attributes {stable_mosaic.version = 11 : i64} {
  func.func @kernel(%arg0: i32, %arg1: memref<1x16x16x128xbf16, #tpu.memory_space<vmem>>, %arg2: memref<3x384x256xbf16, #tpu.memory_space<vmem>>, %arg3: memref<1x256xf32, #tpu.memory_space<vmem>>, %arg4: memref<1x8x16x256xbf16, #tpu.memory_space<vmem>>, %arg5: memref<1x16x16x256xbf16, #tpu.memory_space<vmem>>) attributes {dimension_semantics = [#tpu.dimension_semantics<parallel>], iteration_bounds = array<i64: 2>, scalar_prefetch = 0 : i64, scratch_operands = 0 : i64, tpu.core_type = #tpu.core_type<tc>, window_params = [{transform_indices = @transform_0, window_bounds = array<i64: 1, 16, 16, 128>}, {pipeline_mode = #tpu.pipeline_mode<synchronous>, transform_indices = @transform_1, window_bounds = array<i64: 3, 384, 256>}, {pipeline_mode = #tpu.pipeline_mode<synchronous>, transform_indices = @transform_2, window_bounds = array<i64: 1, 256>}, {transform_indices = @transform_3, window_bounds = array<i64: 1, 8, 16, 256>}, {transform_indices = @transform_4, window_bounds = array<i64: 1, 16, 16, 256>}]} {
    %c0 = arith.constant 0 : index
    %c0_0 = arith.constant 0 : index
    %c0_1 = arith.constant 0 : index
    %c0_2 = arith.constant 0 : index
    %0 = vector.load %arg1[%c0, %c0_0, %c0_1, %c0_2] : memref<1x16x16x128xbf16, #tpu.memory_space<vmem>>, vector<1x16x16x128xbf16>
    %1 = vector.shape_cast %0 : vector<1x16x16x128xbf16> to vector<16x16x128xbf16>
    %2 = arith.extf %1 : vector<16x16x128xbf16> to vector<16x16x128xf32>
    %cst = arith.constant 0.000000e+00 : f32
    %3 = vector.broadcast %cst : f32 to vector<1x16x128xf32>
    %4 = tpu.concatenate %3, %2, %3 in 0 : vector<1x16x128xf32>, vector<16x16x128xf32>, vector<1x16x128xf32> -> vector<18x16x128xf32>
    %5 = tpu.iota {dimensions = array<i32: 1>} : vector<18x16x128xi32>
    %c0_i32 = arith.constant 0 : i32
    %6 = vector.broadcast %c0_i32 : i32 to vector<18x16x128xi32>
    %7 = arith.cmpi eq, %5, %6 : vector<18x16x128xi32>
    %c1_i32 = arith.constant 1 : i32
    %8 = tpu.dynamic_rotate %4 by %c1_i32 dim 1 : vector<18x16x128xf32>, i32 -> vector<18x16x128xf32>
    %cst_3 = arith.constant 0.000000e+00 : f32
    %9 = vector.broadcast %cst_3 : f32 to vector<18x16x128xf32>
    %10 = arith.select %7, %9, %8 : vector<18x16x128xi1>, vector<18x16x128xf32>
    %c15_i32 = arith.constant 15 : i32
    %11 = vector.broadcast %c15_i32 : i32 to vector<18x16x128xi32>
    %12 = arith.cmpi eq, %5, %11 : vector<18x16x128xi32>
    %c15_i32_4 = arith.constant 15 : i32
    %13 = tpu.dynamic_rotate %4 by %c15_i32_4 dim 1 : vector<18x16x128xf32>, i32 -> vector<18x16x128xf32>
    %cst_5 = arith.constant 0.000000e+00 : f32
    %14 = vector.broadcast %cst_5 : f32 to vector<18x16x128xf32>
    %15 = arith.select %12, %14, %13 : vector<18x16x128xi1>, vector<18x16x128xf32>
    %16 = tpu.concatenate %10, %4, %15 in 2 : vector<18x16x128xf32>, vector<18x16x128xf32>, vector<18x16x128xf32> -> vector<18x16x384xf32>
    %17 = arith.truncf %16 : vector<18x16x384xf32> to vector<18x16x384xbf16>
    %c0_6 = arith.constant 0 : index
    %c0_7 = arith.constant 0 : index
    %18 = vector.load %arg3[%c0_6, %c0_7] : memref<1x256xf32, #tpu.memory_space<vmem>>, vector<1x256xf32>
    %19 = vector.shape_cast %18 : vector<1x256xf32> to vector<256xf32>
    %cst_8 = arith.constant 0.000000e+00 : f32
    %20 = vector.broadcast %cst_8 : f32 to vector<8x16x256xf32>
    %21 = vector.extract_strided_slice %17 {offsets = [0, 0, 0], sizes = [8, 16, 384], strides = [1, 1, 1]} : vector<18x16x384xbf16> to vector<8x16x384xbf16>
    %c0_9 = arith.constant 0 : index
    %c0_10 = arith.constant 0 : index
    %c0_11 = arith.constant 0 : index
    %22 = vector.load %arg2[%c0_9, %c0_10, %c0_11] : memref<3x384x256xbf16, #tpu.memory_space<vmem>>, vector<1x384x256xbf16>
    %23 = vector.shape_cast %22 : vector<1x384x256xbf16> to vector<384x256xbf16>
    %cst_12 = arith.constant dense<0.000000e+00> : vector<8x16x256xf32>
    %24 = tpu.matmul %21, %23, %cst_12 {dimension_numbers = #tpu.dot_dimension_numbers<[2], [0], [0, 1], [1], [0, 0, 0, 1, 1, 1], [], []>} : vector<8x16x384xbf16>, vector<384x256xbf16>, vector<8x16x256xf32> -> vector<8x16x256xf32>
    %25 = arith.addf %20, %24 : vector<8x16x256xf32>
    %26 = vector.extract_strided_slice %17 {offsets = [1, 0, 0], sizes = [8, 16, 384], strides = [1, 1, 1]} : vector<18x16x384xbf16> to vector<8x16x384xbf16>
    %c1 = arith.constant 1 : index
    %c0_13 = arith.constant 0 : index
    %c0_14 = arith.constant 0 : index
    %27 = vector.load %arg2[%c1, %c0_13, %c0_14] : memref<3x384x256xbf16, #tpu.memory_space<vmem>>, vector<1x384x256xbf16>
    %28 = vector.shape_cast %27 : vector<1x384x256xbf16> to vector<384x256xbf16>
    %cst_15 = arith.constant dense<0.000000e+00> : vector<8x16x256xf32>
    %29 = tpu.matmul %26, %28, %cst_15 {dimension_numbers = #tpu.dot_dimension_numbers<[2], [0], [0, 1], [1], [0, 0, 0, 1, 1, 1], [], []>} : vector<8x16x384xbf16>, vector<384x256xbf16>, vector<8x16x256xf32> -> vector<8x16x256xf32>
    %30 = arith.addf %25, %29 : vector<8x16x256xf32>
    %31 = vector.extract_strided_slice %17 {offsets = [2, 0, 0], sizes = [8, 16, 384], strides = [1, 1, 1]} : vector<18x16x384xbf16> to vector<8x16x384xbf16>
    %c2 = arith.constant 2 : index
    %c0_16 = arith.constant 0 : index
    %c0_17 = arith.constant 0 : index
    %32 = vector.load %arg2[%c2, %c0_16, %c0_17] : memref<3x384x256xbf16, #tpu.memory_space<vmem>>, vector<1x384x256xbf16>
    %33 = vector.shape_cast %32 : vector<1x384x256xbf16> to vector<384x256xbf16>
    %cst_18 = arith.constant dense<0.000000e+00> : vector<8x16x256xf32>
    %34 = tpu.matmul %31, %33, %cst_18 {dimension_numbers = #tpu.dot_dimension_numbers<[2], [0], [0, 1], [1], [0, 0, 0, 1, 1, 1], [], []>} : vector<8x16x384xbf16>, vector<384x256xbf16>, vector<8x16x256xf32> -> vector<8x16x256xf32>
    %35 = arith.addf %30, %34 : vector<8x16x256xf32>
    %36 = vector.shape_cast %19 : vector<256xf32> to vector<1x1x256xf32>
    %37 = vector.broadcast %36 : vector<1x1x256xf32> to vector<8x16x256xf32>
    %38 = arith.addf %35, %37 : vector<8x16x256xf32>
    %c0_19 = arith.constant 0 : index
    %c0_20 = arith.constant 0 : index
    %c0_21 = arith.constant 0 : index
    %c0_22 = arith.constant 0 : index
    %39 = vector.load %arg4[%c0_19, %c0_20, %c0_21, %c0_22] : memref<1x8x16x256xbf16, #tpu.memory_space<vmem>>, vector<1x4x16x256xbf16>
    %40 = vector.shape_cast %39 : vector<1x4x16x256xbf16> to vector<4x16x256xbf16>
    %41 = arith.extf %40 : vector<4x16x256xbf16> to vector<4x16x256xf32>
    %42 = vector.shape_cast %41 : vector<4x16x256xf32> to vector<4x1x16x256xf32>
    %43 = vector.shape_cast %42 : vector<4x1x16x256xf32> to vector<4x1x16x256xf32>
    %44 = vector.broadcast %43 : vector<4x1x16x256xf32> to vector<4x2x16x256xf32>
    %45 = vector.shape_cast %44 : vector<4x2x16x256xf32> to vector<8x16x256xf32>
    %46 = arith.addf %38, %45 : vector<8x16x256xf32>
    %cst_23 = arith.constant 0.000000e+00 : f32
    %47 = vector.broadcast %cst_23 : f32 to vector<8x16x256xf32>
    %48 = arith.maximumf %46, %47 : vector<8x16x256xf32>
    %49 = arith.truncf %48 : vector<8x16x256xf32> to vector<8x16x256xbf16>
    %c0_24 = arith.constant 0 : index
    %c0_25 = arith.constant 0 : index
    %c0_26 = arith.constant 0 : index
    %c0_27 = arith.constant 0 : index
    %50 = vector.load %arg5[%c0_24, %c0_25, %c0_26, %c0_27] : memref<1x16x16x256xbf16, #tpu.memory_space<vmem>>, vector<1x8x16x256xbf16>
    %51 = vector.shape_cast %50 : vector<1x8x16x256xbf16> to vector<8x16x256xbf16>
    %52 = vector.shape_cast %49 : vector<8x16x256xbf16> to vector<1x8x16x256xbf16>
    tpu.vector_store %arg5[%c0_24, %c0_25, %c0_26, %c0_27], %52 {strides = array<i32>} : memref<1x16x16x256xbf16, #tpu.memory_space<vmem>>, vector<1x8x16x256xbf16>,
    %cst_28 = arith.constant 0.000000e+00 : f32
    %53 = vector.broadcast %cst_28 : f32 to vector<8x16x256xf32>
    %54 = vector.extract_strided_slice %17 {offsets = [8, 0, 0], sizes = [8, 16, 384], strides = [1, 1, 1]} : vector<18x16x384xbf16> to vector<8x16x384xbf16>
    %c0_29 = arith.constant 0 : index
    %c0_30 = arith.constant 0 : index
    %c0_31 = arith.constant 0 : index
    %55 = vector.load %arg2[%c0_29, %c0_30, %c0_31] : memref<3x384x256xbf16, #tpu.memory_space<vmem>>, vector<1x384x256xbf16>
    %56 = vector.shape_cast %55 : vector<1x384x256xbf16> to vector<384x256xbf16>
    %cst_32 = arith.constant dense<0.000000e+00> : vector<8x16x256xf32>
    %57 = tpu.matmul %54, %56, %cst_32 {dimension_numbers = #tpu.dot_dimension_numbers<[2], [0], [0, 1], [1], [0, 0, 0, 1, 1, 1], [], []>} : vector<8x16x384xbf16>, vector<384x256xbf16>, vector<8x16x256xf32> -> vector<8x16x256xf32>
    %58 = arith.addf %53, %57 : vector<8x16x256xf32>
    %59 = vector.extract_strided_slice %17 {offsets = [9, 0, 0], sizes = [8, 16, 384], strides = [1, 1, 1]} : vector<18x16x384xbf16> to vector<8x16x384xbf16>
    %c1_33 = arith.constant 1 : index
    %c0_34 = arith.constant 0 : index
    %c0_35 = arith.constant 0 : index
    %60 = vector.load %arg2[%c1_33, %c0_34, %c0_35] : memref<3x384x256xbf16, #tpu.memory_space<vmem>>, vector<1x384x256xbf16>
    %61 = vector.shape_cast %60 : vector<1x384x256xbf16> to vector<384x256xbf16>
    %cst_36 = arith.constant dense<0.000000e+00> : vector<8x16x256xf32>
    %62 = tpu.matmul %59, %61, %cst_36 {dimension_numbers = #tpu.dot_dimension_numbers<[2], [0], [0, 1], [1], [0, 0, 0, 1, 1, 1], [], []>} : vector<8x16x384xbf16>, vector<384x256xbf16>, vector<8x16x256xf32> -> vector<8x16x256xf32>
    %63 = arith.addf %58, %62 : vector<8x16x256xf32>
    %64 = vector.extract_strided_slice %17 {offsets = [10, 0, 0], sizes = [8, 16, 384], strides = [1, 1, 1]} : vector<18x16x384xbf16> to vector<8x16x384xbf16>
    %c2_37 = arith.constant 2 : index
    %c0_38 = arith.constant 0 : index
    %c0_39 = arith.constant 0 : index
    %65 = vector.load %arg2[%c2_37, %c0_38, %c0_39] : memref<3x384x256xbf16, #tpu.memory_space<vmem>>, vector<1x384x256xbf16>
    %66 = vector.shape_cast %65 : vector<1x384x256xbf16> to vector<384x256xbf16>
    %cst_40 = arith.constant dense<0.000000e+00> : vector<8x16x256xf32>
    %67 = tpu.matmul %64, %66, %cst_40 {dimension_numbers = #tpu.dot_dimension_numbers<[2], [0], [0, 1], [1], [0, 0, 0, 1, 1, 1], [], []>} : vector<8x16x384xbf16>, vector<384x256xbf16>, vector<8x16x256xf32> -> vector<8x16x256xf32>
    %68 = arith.addf %63, %67 : vector<8x16x256xf32>
    %69 = vector.shape_cast %19 : vector<256xf32> to vector<1x1x256xf32>
    %70 = vector.broadcast %69 : vector<1x1x256xf32> to vector<8x16x256xf32>
    %71 = arith.addf %68, %70 : vector<8x16x256xf32>
    %c0_41 = arith.constant 0 : index
    %c4 = arith.constant 4 : index
    %c0_42 = arith.constant 0 : index
    %c0_43 = arith.constant 0 : index
    %72 = vector.load %arg4[%c0_41, %c4, %c0_42, %c0_43] : memref<1x8x16x256xbf16, #tpu.memory_space<vmem>>, vector<1x4x16x256xbf16>
    %73 = vector.shape_cast %72 : vector<1x4x16x256xbf16> to vector<4x16x256xbf16>
    %74 = arith.extf %73 : vector<4x16x256xbf16> to vector<4x16x256xf32>
    %75 = vector.shape_cast %74 : vector<4x16x256xf32> to vector<4x1x16x256xf32>
    %76 = vector.shape_cast %75 : vector<4x1x16x256xf32> to vector<4x1x16x256xf32>
    %77 = vector.broadcast %76 : vector<4x1x16x256xf32> to vector<4x2x16x256xf32>
    %78 = vector.shape_cast %77 : vector<4x2x16x256xf32> to vector<8x16x256xf32>
    %79 = arith.addf %71, %78 : vector<8x16x256xf32>
    %cst_44 = arith.constant 0.000000e+00 : f32
    %80 = vector.broadcast %cst_44 : f32 to vector<8x16x256xf32>
    %81 = arith.maximumf %79, %80 : vector<8x16x256xf32>
    %82 = arith.truncf %81 : vector<8x16x256xf32> to vector<8x16x256xbf16>
    %c0_45 = arith.constant 0 : index
    %c8 = arith.constant 8 : index
    %c0_46 = arith.constant 0 : index
    %c0_47 = arith.constant 0 : index
    %83 = vector.load %arg5[%c0_45, %c8, %c0_46, %c0_47] : memref<1x16x16x256xbf16, #tpu.memory_space<vmem>>, vector<1x8x16x256xbf16>
    %84 = vector.shape_cast %83 : vector<1x8x16x256xbf16> to vector<8x16x256xbf16>
    %85 = vector.shape_cast %82 : vector<8x16x256xbf16> to vector<1x8x16x256xbf16>
    tpu.vector_store %arg5[%c0_45, %c8, %c0_46, %c0_47], %85 {strides = array<i32>} : memref<1x16x16x256xbf16, #tpu.memory_space<vmem>>, vector<1x8x16x256xbf16>,
    return
  }
  func.func @transform_0(%arg0: i32) -> (i32, i32, i32, i32) {
    %c0_i32 = arith.constant 0 : i32
    %c0_i32_0 = arith.constant 0 : i32
    %c0_i32_1 = arith.constant 0 : i32
    %c0_i32_2 = arith.constant 0 : i32
    return %arg0, %c0_i32, %c0_i32_0, %c0_i32_1 : i32, i32, i32, i32
  }
  func.func @transform_1(%arg0: i32) -> (i32, i32, i32) {
    %c0_i32 = arith.constant 0 : i32
    %c0_i32_0 = arith.constant 0 : i32
    %c0_i32_1 = arith.constant 0 : i32
    %c0_i32_2 = arith.constant 0 : i32
    return %c0_i32, %c0_i32_0, %c0_i32_1 : i32, i32, i32
  }
  func.func @transform_2(%arg0: i32) -> (i32, i32) {
    %c0_i32 = arith.constant 0 : i32
    %c0_i32_0 = arith.constant 0 : i32
    %c0_i32_1 = arith.constant 0 : i32
    return %c0_i32, %c0_i32_0 : i32, i32
  }
  func.func @transform_3(%arg0: i32) -> (i32, i32, i32, i32) {
    %c0_i32 = arith.constant 0 : i32
    %c0_i32_0 = arith.constant 0 : i32
    %c0_i32_1 = arith.constant 0 : i32
    %c0_i32_2 = arith.constant 0 : i32
    return %arg0, %c0_i32, %c0_i32_0, %c0_i32_1 : i32, i32, i32, i32
  }
  func.func @transform_4(%arg0: i32) -> (i32, i32, i32, i32) {
    %c0_i32 = arith.constant 0 : i32
    %c0_i32_0 = arith.constant 0 : i32
    %c0_i32_1 = arith.constant 0 : i32
    %c0_i32_2 = arith.constant 0 : i32
    return %arg0, %c0_i32, %c0_i32_0, %c0_i32_1 : i32, i32, i32, i32
  }
}

module attributes {stable_mosaic.version = 11 : i64} {
  func.func @kernel(%arg0: i32, %arg1: memref<1x16x16x256xbf16, #tpu.memory_space<vmem>>, %arg2: memref<3x768x256xbf16, #tpu.memory_space<vmem>>, %arg3: memref<1x256xf32, #tpu.memory_space<vmem>>, %arg4: memref<1x16x16x256xf32, #tpu.memory_space<vmem>>) attributes {dimension_semantics = [#tpu.dimension_semantics<parallel>], iteration_bounds = array<i64: 2>, scalar_prefetch = 0 : i64, scratch_operands = 0 : i64, tpu.core_type = #tpu.core_type<tc>, window_params = [{transform_indices = @transform_0, window_bounds = array<i64: 1, 16, 16, 256>}, {pipeline_mode = #tpu.pipeline_mode<synchronous>, transform_indices = @transform_1, window_bounds = array<i64: 3, 768, 256>}, {pipeline_mode = #tpu.pipeline_mode<synchronous>, transform_indices = @transform_2, window_bounds = array<i64: 1, 256>}, {transform_indices = @transform_3, window_bounds = array<i64: 1, 16, 16, 256>}]} {
    %c0 = arith.constant 0 : index
    %c0_0 = arith.constant 0 : index
    %c0_1 = arith.constant 0 : index
    %c0_2 = arith.constant 0 : index
    %0 = vector.load %arg1[%c0, %c0_0, %c0_1, %c0_2] : memref<1x16x16x256xbf16, #tpu.memory_space<vmem>>, vector<1x16x16x256xbf16>
    %1 = vector.shape_cast %0 : vector<1x16x16x256xbf16> to vector<16x16x256xbf16>
    %2 = arith.extf %1 : vector<16x16x256xbf16> to vector<16x16x256xf32>
    %cst = arith.constant 0.000000e+00 : f32
    %3 = vector.broadcast %cst : f32 to vector<1x16x256xf32>
    %4 = tpu.concatenate %3, %2, %3 in 0 : vector<1x16x256xf32>, vector<16x16x256xf32>, vector<1x16x256xf32> -> vector<18x16x256xf32>
    %5 = tpu.iota {dimensions = array<i32: 1>} : vector<18x16x256xi32>
    %c0_i32 = arith.constant 0 : i32
    %6 = vector.broadcast %c0_i32 : i32 to vector<18x16x256xi32>
    %7 = arith.cmpi eq, %5, %6 : vector<18x16x256xi32>
    %c1_i32 = arith.constant 1 : i32
    %8 = tpu.dynamic_rotate %4 by %c1_i32 dim 1 : vector<18x16x256xf32>, i32 -> vector<18x16x256xf32>
    %cst_3 = arith.constant 0.000000e+00 : f32
    %9 = vector.broadcast %cst_3 : f32 to vector<18x16x256xf32>
    %10 = arith.select %7, %9, %8 : vector<18x16x256xi1>, vector<18x16x256xf32>
    %c15_i32 = arith.constant 15 : i32
    %11 = vector.broadcast %c15_i32 : i32 to vector<18x16x256xi32>
    %12 = arith.cmpi eq, %5, %11 : vector<18x16x256xi32>
    %c15_i32_4 = arith.constant 15 : i32
    %13 = tpu.dynamic_rotate %4 by %c15_i32_4 dim 1 : vector<18x16x256xf32>, i32 -> vector<18x16x256xf32>
    %cst_5 = arith.constant 0.000000e+00 : f32
    %14 = vector.broadcast %cst_5 : f32 to vector<18x16x256xf32>
    %15 = arith.select %12, %14, %13 : vector<18x16x256xi1>, vector<18x16x256xf32>
    %16 = tpu.concatenate %10, %4, %15 in 2 : vector<18x16x256xf32>, vector<18x16x256xf32>, vector<18x16x256xf32> -> vector<18x16x768xf32>
    %17 = arith.truncf %16 : vector<18x16x768xf32> to vector<18x16x768xbf16>
    %c0_6 = arith.constant 0 : index
    %c0_7 = arith.constant 0 : index
    %18 = vector.load %arg3[%c0_6, %c0_7] : memref<1x256xf32, #tpu.memory_space<vmem>>, vector<1x256xf32>
    %19 = vector.shape_cast %18 : vector<1x256xf32> to vector<256xf32>
    %cst_8 = arith.constant 0.000000e+00 : f32
    %20 = vector.broadcast %cst_8 : f32 to vector<8x16x256xf32>
    %21 = vector.extract_strided_slice %17 {offsets = [0, 0, 0], sizes = [8, 16, 768], strides = [1, 1, 1]} : vector<18x16x768xbf16> to vector<8x16x768xbf16>
    %c0_9 = arith.constant 0 : index
    %c0_10 = arith.constant 0 : index
    %c0_11 = arith.constant 0 : index
    %22 = vector.load %arg2[%c0_9, %c0_10, %c0_11] : memref<3x768x256xbf16, #tpu.memory_space<vmem>>, vector<1x768x256xbf16>
    %23 = vector.shape_cast %22 : vector<1x768x256xbf16> to vector<768x256xbf16>
    %cst_12 = arith.constant dense<0.000000e+00> : vector<8x16x256xf32>
    %24 = tpu.matmul %21, %23, %cst_12 {dimension_numbers = #tpu.dot_dimension_numbers<[2], [0], [0, 1], [1], [0, 0, 0, 1, 1, 1], [], []>} : vector<8x16x768xbf16>, vector<768x256xbf16>, vector<8x16x256xf32> -> vector<8x16x256xf32>
    %25 = arith.addf %20, %24 : vector<8x16x256xf32>
    %26 = vector.extract_strided_slice %17 {offsets = [1, 0, 0], sizes = [8, 16, 768], strides = [1, 1, 1]} : vector<18x16x768xbf16> to vector<8x16x768xbf16>
    %c1 = arith.constant 1 : index
    %c0_13 = arith.constant 0 : index
    %c0_14 = arith.constant 0 : index
    %27 = vector.load %arg2[%c1, %c0_13, %c0_14] : memref<3x768x256xbf16, #tpu.memory_space<vmem>>, vector<1x768x256xbf16>
    %28 = vector.shape_cast %27 : vector<1x768x256xbf16> to vector<768x256xbf16>
    %cst_15 = arith.constant dense<0.000000e+00> : vector<8x16x256xf32>
    %29 = tpu.matmul %26, %28, %cst_15 {dimension_numbers = #tpu.dot_dimension_numbers<[2], [0], [0, 1], [1], [0, 0, 0, 1, 1, 1], [], []>} : vector<8x16x768xbf16>, vector<768x256xbf16>, vector<8x16x256xf32> -> vector<8x16x256xf32>
    %30 = arith.addf %25, %29 : vector<8x16x256xf32>
    %31 = vector.extract_strided_slice %17 {offsets = [2, 0, 0], sizes = [8, 16, 768], strides = [1, 1, 1]} : vector<18x16x768xbf16> to vector<8x16x768xbf16>
    %c2 = arith.constant 2 : index
    %c0_16 = arith.constant 0 : index
    %c0_17 = arith.constant 0 : index
    %32 = vector.load %arg2[%c2, %c0_16, %c0_17] : memref<3x768x256xbf16, #tpu.memory_space<vmem>>, vector<1x768x256xbf16>
    %33 = vector.shape_cast %32 : vector<1x768x256xbf16> to vector<768x256xbf16>
    %cst_18 = arith.constant dense<0.000000e+00> : vector<8x16x256xf32>
    %34 = tpu.matmul %31, %33, %cst_18 {dimension_numbers = #tpu.dot_dimension_numbers<[2], [0], [0, 1], [1], [0, 0, 0, 1, 1, 1], [], []>} : vector<8x16x768xbf16>, vector<768x256xbf16>, vector<8x16x256xf32> -> vector<8x16x256xf32>
    %35 = arith.addf %30, %34 : vector<8x16x256xf32>
    %36 = vector.shape_cast %19 : vector<256xf32> to vector<1x1x256xf32>
    %37 = vector.broadcast %36 : vector<1x1x256xf32> to vector<8x16x256xf32>
    %38 = arith.addf %35, %37 : vector<8x16x256xf32>
    %cst_19 = arith.constant 0.000000e+00 : f32
    %39 = vector.broadcast %cst_19 : f32 to vector<8x16x256xf32>
    %40 = arith.maximumf %38, %39 : vector<8x16x256xf32>
    %c0_20 = arith.constant 0 : index
    %c0_21 = arith.constant 0 : index
    %c0_22 = arith.constant 0 : index
    %c0_23 = arith.constant 0 : index
    %41 = vector.load %arg4[%c0_20, %c0_21, %c0_22, %c0_23] : memref<1x16x16x256xf32, #tpu.memory_space<vmem>>, vector<1x8x16x256xf32>
    %42 = vector.shape_cast %41 : vector<1x8x16x256xf32> to vector<8x16x256xf32>
    %43 = vector.shape_cast %40 : vector<8x16x256xf32> to vector<1x8x16x256xf32>
    tpu.vector_store %arg4[%c0_20, %c0_21, %c0_22, %c0_23], %43 {strides = array<i32>} : memref<1x16x16x256xf32, #tpu.memory_space<vmem>>, vector<1x8x16x256xf32>,
    %cst_24 = arith.constant 0.000000e+00 : f32
    %44 = vector.broadcast %cst_24 : f32 to vector<8x16x256xf32>
    %45 = vector.extract_strided_slice %17 {offsets = [8, 0, 0], sizes = [8, 16, 768], strides = [1, 1, 1]} : vector<18x16x768xbf16> to vector<8x16x768xbf16>
    %c0_25 = arith.constant 0 : index
    %c0_26 = arith.constant 0 : index
    %c0_27 = arith.constant 0 : index
    %46 = vector.load %arg2[%c0_25, %c0_26, %c0_27] : memref<3x768x256xbf16, #tpu.memory_space<vmem>>, vector<1x768x256xbf16>
    %47 = vector.shape_cast %46 : vector<1x768x256xbf16> to vector<768x256xbf16>
    %cst_28 = arith.constant dense<0.000000e+00> : vector<8x16x256xf32>
    %48 = tpu.matmul %45, %47, %cst_28 {dimension_numbers = #tpu.dot_dimension_numbers<[2], [0], [0, 1], [1], [0, 0, 0, 1, 1, 1], [], []>} : vector<8x16x768xbf16>, vector<768x256xbf16>, vector<8x16x256xf32> -> vector<8x16x256xf32>
    %49 = arith.addf %44, %48 : vector<8x16x256xf32>
    %50 = vector.extract_strided_slice %17 {offsets = [9, 0, 0], sizes = [8, 16, 768], strides = [1, 1, 1]} : vector<18x16x768xbf16> to vector<8x16x768xbf16>
    %c1_29 = arith.constant 1 : index
    %c0_30 = arith.constant 0 : index
    %c0_31 = arith.constant 0 : index
    %51 = vector.load %arg2[%c1_29, %c0_30, %c0_31] : memref<3x768x256xbf16, #tpu.memory_space<vmem>>, vector<1x768x256xbf16>
    %52 = vector.shape_cast %51 : vector<1x768x256xbf16> to vector<768x256xbf16>
    %cst_32 = arith.constant dense<0.000000e+00> : vector<8x16x256xf32>
    %53 = tpu.matmul %50, %52, %cst_32 {dimension_numbers = #tpu.dot_dimension_numbers<[2], [0], [0, 1], [1], [0, 0, 0, 1, 1, 1], [], []>} : vector<8x16x768xbf16>, vector<768x256xbf16>, vector<8x16x256xf32> -> vector<8x16x256xf32>
    %54 = arith.addf %49, %53 : vector<8x16x256xf32>
    %55 = vector.extract_strided_slice %17 {offsets = [10, 0, 0], sizes = [8, 16, 768], strides = [1, 1, 1]} : vector<18x16x768xbf16> to vector<8x16x768xbf16>
    %c2_33 = arith.constant 2 : index
    %c0_34 = arith.constant 0 : index
    %c0_35 = arith.constant 0 : index
    %56 = vector.load %arg2[%c2_33, %c0_34, %c0_35] : memref<3x768x256xbf16, #tpu.memory_space<vmem>>, vector<1x768x256xbf16>
    %57 = vector.shape_cast %56 : vector<1x768x256xbf16> to vector<768x256xbf16>
    %cst_36 = arith.constant dense<0.000000e+00> : vector<8x16x256xf32>
    %58 = tpu.matmul %55, %57, %cst_36 {dimension_numbers = #tpu.dot_dimension_numbers<[2], [0], [0, 1], [1], [0, 0, 0, 1, 1, 1], [], []>} : vector<8x16x768xbf16>, vector<768x256xbf16>, vector<8x16x256xf32> -> vector<8x16x256xf32>
    %59 = arith.addf %54, %58 : vector<8x16x256xf32>
    %60 = vector.shape_cast %19 : vector<256xf32> to vector<1x1x256xf32>
    %61 = vector.broadcast %60 : vector<1x1x256xf32> to vector<8x16x256xf32>
    %62 = arith.addf %59, %61 : vector<8x16x256xf32>
    %cst_37 = arith.constant 0.000000e+00 : f32
    %63 = vector.broadcast %cst_37 : f32 to vector<8x16x256xf32>
    %64 = arith.maximumf %62, %63 : vector<8x16x256xf32>
    %c0_38 = arith.constant 0 : index
    %c8 = arith.constant 8 : index
    %c0_39 = arith.constant 0 : index
    %c0_40 = arith.constant 0 : index
    %65 = vector.load %arg4[%c0_38, %c8, %c0_39, %c0_40] : memref<1x16x16x256xf32, #tpu.memory_space<vmem>>, vector<1x8x16x256xf32>
    %66 = vector.shape_cast %65 : vector<1x8x16x256xf32> to vector<8x16x256xf32>
    %67 = vector.shape_cast %64 : vector<8x16x256xf32> to vector<1x8x16x256xf32>
    tpu.vector_store %arg4[%c0_38, %c8, %c0_39, %c0_40], %67 {strides = array<i32>} : memref<1x16x16x256xf32, #tpu.memory_space<vmem>>, vector<1x8x16x256xf32>,
    return
  }
  func.func @transform_0(%arg0: i32) -> (i32, i32, i32, i32) {
    %c0_i32 = arith.constant 0 : i32
    %c0_i32_0 = arith.constant 0 : i32
    %c0_i32_1 = arith.constant 0 : i32
    %c0_i32_2 = arith.constant 0 : i32
    return %arg0, %c0_i32, %c0_i32_0, %c0_i32_1 : i32, i32, i32, i32
  }
  func.func @transform_1(%arg0: i32) -> (i32, i32, i32) {
    %c0_i32 = arith.constant 0 : i32
    %c0_i32_0 = arith.constant 0 : i32
    %c0_i32_1 = arith.constant 0 : i32
    %c0_i32_2 = arith.constant 0 : i32
    return %c0_i32, %c0_i32_0, %c0_i32_1 : i32, i32, i32
  }
  func.func @transform_2(%arg0: i32) -> (i32, i32) {
    %c0_i32 = arith.constant 0 : i32
    %c0_i32_0 = arith.constant 0 : i32
    %c0_i32_1 = arith.constant 0 : i32
    return %c0_i32, %c0_i32_0 : i32, i32
  }
  func.func @transform_3(%arg0: i32) -> (i32, i32, i32, i32) {
    %c0_i32 = arith.constant 0 : i32
    %c0_i32_0 = arith.constant 0 : i32
    %c0_i32_1 = arith.constant 0 : i32
    %c0_i32_2 = arith.constant 0 : i32
    return %arg0, %c0_i32, %c0_i32_0, %c0_i32_1 : i32, i32, i32, i32
  }
}

</mosaic_0001>

<llo_original>
// kernel: _lambda_.3
$region0: #{_lambda_.3}
  #allocation0 [shape = 'u32[]', space=smem, size = 0x4, offset = 0x4, fixed_abs, tag = 'smem constant byte address 0x4 - core index']
  #allocation1 [shape = 'u32[144,128]{1,0:T(1,128)}', space=vmem, size = 0x12000, scoped, tag = 'internal scratch']
  %s0 = inlined_call_operand.vmem [shape: bf16[2,8,8,128], index: 0, kind: input, shape index: {}]
  %s1 = inlined_call_operand.hbm [shape: bf16[3,384,256], index: 1, kind: input, shape index: {}]
  %s2 = inlined_call_operand.hbm [shape: f32[1,256], index: 2, kind: input, shape index: {}]
  %s3 = inlined_call_operand.vmem [shape: bf16[2,4,8,256], index: 3, kind: input, shape index: {}]
  %s4 = inlined_call_operand.vmem [shape: bf16[2,8,8,512], index: 4, kind: output, shape index: {}]
  %s5 = sld [smem:[#allocation0]]
  $region57: #{_lambda_.3} parent=0
    _
  %s7 = ssub.s32 1, %s5
  %s8 = scalar_select 0, %s7, %s5
  $region1: #{_lambda_.3} parent=0
    #allocation2 [shape = 'u8[589824]{0}', space=vmem, size = 0x90000, scoped, tag = 'input window, operand 1, single buffered']
    #allocation3 [shape = 's32[2]{0}', space=sflag, size = 0x8, scoped, tag = 'scoped memory for _lambda_.3']
    #allocation4 [shape = 'u8[1024]{0}', space=vmem, size = 0x400, scoped, tag = 'input window, operand 2, single buffered']
    #allocation5 [shape = 's32[1]{0}', space=sflag, size = 0x4, scoped, tag = 'scoped memory for _lambda_.3']
    %9 = vsyncpa [#allocation3], 0
    %10 = vsyncpa [#allocation5], 0
    loop: start=0, step=1, limit=4
    $region2: #{_lambda_.3} parent=1 // loop_pre_header
      _
    $region3: #{_lambda_.3} parent=1 // loop_header
      %s12 = sphi 0, %s16
      %p13 = scmp.ge.s32.totalorder %s12, 4
      %s22 = sphi 0, %s24
      %s25 = sphi 0, %s22
      %s26 = sphi 0, %s25
      %s42 = sphi 0, %s26
      %s46 = sphi 0, %s46
      %s48 = sphi 0, %s46
      %s49 = sphi 0, %s48
      %s63 = sphi 0, %s49
      %s67 = sphi 0, %s67
      %s69 = sphi 0, %s67
      %s70 = sphi 0, %s69
      %s84 = sphi 0, %s70
      %s90 = sphi 0, %s92
      %s93 = sphi 0, %s90
      %s94 = sphi 0, %s93
      %s110 = sphi 0, %s94
      %s116 = sphi 0, %s118
      %s119 = sphi 0, %s116
      %s120 = sphi 0, %s119
      %s136 = sphi 0, %s120
    $region4: #{_lambda_.3} parent=1 // loop_header_branch
      %15 = sbr.rel (%p13) target = $region8
    $region5: #{_lambda_.3} parent=1 // loop_body
      %s17 = ssub.s32 %s12, 1
      %s18 = ssub.s32 %s12, 2
      %s19 = sadd.s32 %s12, 1
      %s20 = ssub.s32 %s12, %s19
      %p21 = scmp.eq.s32.totalorder %s20, 0
      %s23 = sadd.s32 %s22, 1
      %s24 = scalar_select %p21, %s22, %s23
      %p27 = pneg %p21
      %p28 = scmp.eq.s32.totalorder %s12, 1
      %p29 = por %p27, %p28
      %p30 = scmp.ne.s32.totalorder %s22, %s25
      %p31 = scmp.eq.s32.totalorder %s12, 0
      %p32 = por %p30, %p31
      %p33 = scmp.ne.s32.totalorder %s22, %s25
      %p34 = scmp.eq.s32.totalorder %s17, 1
      %p35 = por %p33, %p34
      %p36 = scmp.ne.s32.totalorder %s25, %s26
      %p37 = scmp.eq.s32.totalorder %s17, 0
      %p38 = por %p36, %p37
      %p39 = scmp.ne.s32.totalorder %s25, %s26
      %p40 = scmp.eq.s32.totalorder %s18, 1
      %p41 = por %p39, %p40
      %p43 = scmp.ne.s32.totalorder %s26, %s42
      %p44 = scmp.eq.s32.totalorder %s18, 0
      %p45 = por %p43, %p44
      %s47 = sadd.s32 %s46, 1
      %p50 = scmp.eq.s32.totalorder %s12, 1
      %p51 = scmp.ne.s32.totalorder %s46, %s48
      %p52 = scmp.eq.s32.totalorder %s12, 0
      %p53 = por %p51, %p52
      %p54 = scmp.ne.s32.totalorder %s46, %s48
      %p55 = scmp.eq.s32.totalorder %s17, 1
      %p56 = por %p54, %p55
      %p57 = scmp.ne.s32.totalorder %s48, %s49
      %p58 = scmp.eq.s32.totalorder %s17, 0
      %p59 = por %p57, %p58
      %p60 = scmp.ne.s32.totalorder %s48, %s49
      %p61 = scmp.eq.s32.totalorder %s18, 1
      %p62 = por %p60, %p61
      %p64 = scmp.ne.s32.totalorder %s49, %s63
      %p65 = scmp.eq.s32.totalorder %s18, 0
      %p66 = por %p64, %p65
      %s68 = sadd.s32 %s67, 1
      %p71 = scmp.eq.s32.totalorder %s12, 1
      %p72 = scmp.ne.s32.totalorder %s67, %s69
      %p73 = scmp.eq.s32.totalorder %s12, 0
      %p74 = por %p72, %p73
      %p75 = scmp.ne.s32.totalorder %s67, %s69
      %p76 = scmp.eq.s32.totalorder %s17, 1
      %p77 = por %p75, %p76
      %p78 = scmp.ne.s32.totalorder %s69, %s70
      %p79 = scmp.eq.s32.totalorder %s17, 0
      %p80 = por %p78, %p79
      %p81 = scmp.ne.s32.totalorder %s69, %s70
      %p82 = scmp.eq.s32.totalorder %s18, 1
      %p83 = por %p81, %p82
      %p85 = scmp.ne.s32.totalorder %s70, %s84
      %p86 = scmp.eq.s32.totalorder %s18, 0
      %p87 = por %p85, %p86
      %s88 = ssub.s32 %s12, %s19
      %p89 = scmp.eq.s32.totalorder %s88, 0
      %s91 = sadd.s32 %s90, 1
      %s92 = scalar_select %p89, %s90, %s91
      %p95 = pneg %p89
      %p96 = scmp.eq.s32.totalorder %s12, 1
      %p97 = por %p95, %p96
      %p98 = scmp.ne.s32.totalorder %s90, %s93
      %p99 = scmp.eq.s32.totalorder %s12, 0
      %p100 = por %p98, %p99
      %p101 = scmp.ne.s32.totalorder %s90, %s93
      %p102 = scmp.eq.s32.totalorder %s17, 1
      %p103 = por %p101, %p102
      %p104 = scmp.ne.s32.totalorder %s93, %s94
      %p105 = scmp.eq.s32.totalorder %s17, 0
      %p106 = por %p104, %p105
      %p107 = scmp.ne.s32.totalorder %s93, %s94
      %p108 = scmp.eq.s32.totalorder %s18, 1
      %p109 = por %p107, %p108
      %p111 = scmp.ne.s32.totalorder %s94, %s110
      %p112 = scmp.eq.s32.totalorder %s18, 0
      %p113 = por %p111, %p112
      %s114 = ssub.s32 %s12, %s19
      %p115 = scmp.eq.s32.totalorder %s114, 0
      %s117 = sadd.s32 %s116, 1
      %s118 = scalar_select %p115, %s116, %s117
      %p121 = pneg %p115
      %p122 = scmp.eq.s32.totalorder %s12, 1
      %p123 = por %p121, %p122
      %p124 = scmp.ne.s32.totalorder %s116, %s119
      %p125 = scmp.eq.s32.totalorder %s12, 0
      %p126 = por %p124, %p125
      %p127 = scmp.ne.s32.totalorder %s116, %s119
      %p128 = scmp.eq.s32.totalorder %s17, 1
      %p129 = por %p127, %p128
      %p130 = scmp.ne.s32.totalorder %s119, %s120
      %p131 = scmp.eq.s32.totalorder %s17, 0
      %p132 = por %p130, %p131
      %p133 = scmp.ne.s32.totalorder %s119, %s120
      %p134 = scmp.eq.s32.totalorder %s18, 1
      %p135 = por %p133, %p134
      %p137 = scmp.ne.s32.totalorder %s120, %s136
      %p138 = scmp.eq.s32.totalorder %s18, 0
      %p139 = por %p137, %p138
      %p140 = scmp.le.s32.totalorder 1, %s12
      %p141 = scmp.lt.s32.totalorder %s12, 3
      %p142 = pnand %p140, %p141
      %p143 = pneg %p142
      // Predicated region
      $region9: #{_lambda_.3} parent=5 // pred_check
        _
      $region10: #{_lambda_.3} parent=5 // pred_check_branch
        %145 = sbr.rel (%p142) target = $region12
      $region11: #{_lambda_.3} parent=5 // pred_region
        %s146 = ssub.s32 %s12, 1
        // Predicated region
        $region13: #{_lambda_.3} parent=11 // pred_check
          %p147 = pneg %p59
        $region14: #{_lambda_.3} parent=11 // pred_check_branch
          %149 = sbr.rel (%p147) target = $region16
        $region15: #{_lambda_.3} parent=11 // pred_region
          %s151 = ssub.s32 18432, 18432
          %152 = vsyncadd [#allocation3], %s151
          %s153 = sshll.u32 [#allocation2], 4
          %s154 = int_to_ptr.vmem [resolvable:$true] %s153
          %159 = dma.hbm_to_vmem [thread:$0]  %s1, 18432, %s154, [#allocation3], 128, 128, 8
        $region16: #{_lambda_.3} parent=11 // pred_fallthru
          _
        // Predicated region
        $region17: #{_lambda_.3} parent=11 // pred_check
          %p160 = pneg %p80
        $region18: #{_lambda_.3} parent=11 // pred_check_branch
          %162 = sbr.rel (%p160) target = $region20
        $region19: #{_lambda_.3} parent=11 // pred_region
          %s164 = ssub.s32 32, 32
          %165 = vsyncadd [#allocation5], %s164
          %s167 = sshll.u32 [#allocation4], 4
          %s168 = int_to_ptr.vmem [resolvable:$true] %s167
          %170 = dma.hbm_to_vmem [thread:$0]  %s2, 32, %s168, [#allocation5]
        $region20: #{_lambda_.3} parent=11 // pred_fallthru
          _
      $region12: #{_lambda_.3} parent=5 // pred_fallthru
        _
      %p171 = scmp.lt.s32.totalorder %s12, 2
      // Predicated region
      $region21: #{_lambda_.3} parent=5 // pred_check
        %p172 = pneg %p171
      $region22: #{_lambda_.3} parent=5 // pred_check_branch
        %174 = sbr.rel (%p172) target = $region24
      $region23: #{_lambda_.3} parent=5 // pred_region
        // Predicated region
        $region25: #{_lambda_.3} parent=23 // pred_check
          %p175 = pneg %p32
        $region26: #{_lambda_.3} parent=23 // pred_check_branch
          %177 = sbr.rel (%p175) target = $region28
        $region27: #{_lambda_.3} parent=23 // pred_region
          %p178 = scmp.lt.s32.totalorder %s12, 1
          %s179 = scalar_select %p178, %s12, 1
          %s180 = smul.addr %s179, 8
          %s181 = smul.addr %s180, 4
          %s182 = scalar_lea.vmem %s0, %s181
        $region28: #{_lambda_.3} parent=23 // pred_fallthru
          _
        // Predicated region
        $region29: #{_lambda_.3} parent=23 // pred_check
          %p183 = pneg %p100
        $region30: #{_lambda_.3} parent=23 // pred_check_branch
          %185 = sbr.rel (%p183) target = $region32
        $region31: #{_lambda_.3} parent=23 // pred_region
          %p186 = scmp.lt.s32.totalorder %s12, 1
          %s187 = scalar_select %p186, %s12, 1
          %s188 = smul.addr %s187, 8
          %s189 = smul.addr %s188, 4
          %s190 = scalar_lea.vmem %s3, %s189
        $region32: #{_lambda_.3} parent=23 // pred_fallthru
          _
      $region24: #{_lambda_.3} parent=5 // pred_fallthru
        _
      %p191 = scmp.le.s32.totalorder 1, %s12
      %p192 = scmp.lt.s32.totalorder %s12, 3
      %p193 = pnand %p191, %p192
      %p194 = pneg %p193
      // Predicated region
      $region33: #{_lambda_.3} parent=5 // pred_check
        _
      $region34: #{_lambda_.3} parent=5 // pred_check_branch
        %196 = sbr.rel (%p193) target = $region36
      $region35: #{_lambda_.3} parent=5 // pred_region
        %s197 = ssub.s32 %s12, 1
        // Predicated region
        $region37: #{_lambda_.3} parent=35 // pred_check
          %p198 = pneg %p59
        $region38: #{_lambda_.3} parent=35 // pred_check_branch
          %200 = sbr.rel (%p198) target = $region40
        $region39: #{_lambda_.3} parent=35 // pred_region
          %201 = dma.done [#allocation3], 18432
        $region40: #{_lambda_.3} parent=35 // pred_fallthru
          _
        // Predicated region
        $region41: #{_lambda_.3} parent=35 // pred_check
          %p202 = pneg %p80
        $region42: #{_lambda_.3} parent=35 // pred_check_branch
          %204 = sbr.rel (%p202) target = $region44
        $region43: #{_lambda_.3} parent=35 // pred_region
          %205 = dma.done [#allocation5], 32
        $region44: #{_lambda_.3} parent=35 // pred_fallthru
          _
        %p206 = scmp.lt.s32.totalorder %s17, 1
        %s207 = scalar_select %p206, %s17, 1
        %s208 = smul.addr %s207, 8
        %s209 = smul.addr %s208, 4
        %s210 = scalar_lea.vmem %s0, %s209
        %p211 = pneg %p38
        %p212 = pneg %p35
        %p213 = pneg %p59
        %p214 = pneg %p56
        %p215 = pneg %p80
        %p216 = pneg %p77
        %p217 = scmp.lt.s32.totalorder %s17, 1
        %s218 = scalar_select %p217, %s17, 1
        %s219 = smul.addr %s218, 8
        %s220 = smul.addr %s219, 4
        %s221 = scalar_lea.vmem %s3, %s220
        %p222 = pneg %p106
        %p223 = pneg %p103
        %p224 = pneg %p132
        %p225 = pneg %p129
        %p226 = scmp.lt.s32.totalorder %s17, 1
        %s227 = scalar_select %p226, %s17, 1
        %s228 = smul.addr %s227, 32
        %s229 = smul.addr %s228, 4
        %s230 = scalar_lea.vmem %s4, %s229
        %p231 = scmp.lt.s32.totalorder %s17, 1
        %s232 = scalar_select %p231, %s17, 1
        %s233 = smul.addr %s232, 8
        %s234 = smul.addr %s233, 4
        %s235 = scalar_lea.vmem %s0, %s234
        %p236 = scmp.lt.s32.totalorder %s17, 1
        %s237 = scalar_select %p236, %s17, 1
        %s238 = smul.addr %s237, 8
        %s239 = smul.addr %s238, 4
        %s240 = scalar_lea.vmem %s3, %s239
        %p241 = scmp.lt.s32.totalorder %s17, 1
        %s242 = scalar_select %p241, %s17, 1
        %s243 = smul.addr %s242, 32
        %s244 = smul.addr %s243, 4
        %s245 = scalar_lea.vmem %s4, %s244
        %v247 = vld [vmem:[%s235] sm:$0xf]
        %v248 = vld [vmem:[%s235 + $0x4] sm:$0xf]
        %v249 = vld [vmem:[%s235 + $0x8] sm:$0xf]
        %v250 = vld [vmem:[%s235 + $0xc] sm:$0xf]
        %v251 = vld [vmem:[%s235 + $0x10] sm:$0xf]
        %v252 = vld [vmem:[%s235 + $0x14] sm:$0xf]
        %v253 = vld [vmem:[%s235 + $0x18] sm:$0xf]
        %v254 = vld [vmem:[%s235 + $0x1c] sm:$0xf]
        %v255 = vunpack.c.l.bf16 %v247
        %v256 = vunpack.c.l.bf16 %v248
        %v257 = vunpack.c.l.bf16 %v249
        %v258 = vunpack.c.l.bf16 %v250
        %v259 = vunpack.c.l.bf16 %v251
        %v260 = vunpack.c.l.bf16 %v252
        %v261 = vunpack.c.l.bf16 %v253
        %v262 = vunpack.c.l.bf16 %v254
        %v263 = vlaneseq
        %v264 = vshrl.u32 %v263, 7
        %vm265 = vcmp.eq.s32.totalorder %v264, 0
        %v266 = vrot.slane %v255, 7
        %v267 = vrot.slane %v256, 7
        %v268 = vrot.slane %v257, 7
        %v269 = vrot.slane %v258, 7
        %v270 = vrot.slane %v259, 7
        %v271 = vrot.slane %v260, 7
        %v272 = vrot.slane %v261, 7
        %v273 = vrot.slane %v262, 7
        %v274 = vsel %vm265, 0.0, 0.0
        %v275 = vsel %vm265, 0.0, %v266
        %v276 = vsel %vm265, 0.0, %v267
        %v277 = vsel %vm265, 0.0, %v268
        %v278 = vsel %vm265, 0.0, %v269
        %v279 = vsel %vm265, 0.0, %v270
        %v280 = vsel %vm265, 0.0, %v271
        %v281 = vsel %vm265, 0.0, %v272
        %v282 = vsel %vm265, 0.0, %v273
        %vm283 = vcmp.eq.s32.totalorder %v264, 7
        %v284 = vrot.slane %v255, 1
        %v285 = vrot.slane %v256, 1
        %v286 = vrot.slane %v257, 1
        %v287 = vrot.slane %v258, 1
        %v288 = vrot.slane %v259, 1
        %v289 = vrot.slane %v260, 1
        %v290 = vrot.slane %v261, 1
        %v291 = vrot.slane %v262, 1
        %v292 = vsel %vm283, 0.0, 0.0
        %v293 = vsel %vm283, 0.0, %v284
        %v294 = vsel %vm283, 0.0, %v285
        %v295 = vsel %vm283, 0.0, %v286
        %v296 = vsel %vm283, 0.0, %v287
        %v297 = vsel %vm283, 0.0, %v288
        %v298 = vsel %vm283, 0.0, %v289
        %v299 = vsel %vm283, 0.0, %v290
        %v300 = vsel %vm283, 0.0, %v291
        %v301 = vpack.c.bf16 %v274, %v274
        %v302 = vpack.c.bf16 0.0, 0.0
        %v303 = vpack.c.bf16 %v292, %v292
        %v304 = vpack.c.bf16 %v275, %v275
        %v305 = vpack.c.bf16 %v255, %v255
        %v306 = vpack.c.bf16 %v293, %v293
        %v307 = vpack.c.bf16 %v276, %v276
        %v308 = vpack.c.bf16 %v256, %v256
        %v309 = vpack.c.bf16 %v294, %v294
        %v310 = vpack.c.bf16 %v277, %v277
        %v311 = vpack.c.bf16 %v257, %v257
        %v312 = vpack.c.bf16 %v295, %v295
        %v313 = vpack.c.bf16 %v278, %v278
        %v314 = vpack.c.bf16 %v258, %v258
        %v315 = vpack.c.bf16 %v296, %v296
        %v316 = vpack.c.bf16 %v279, %v279
        %v317 = vpack.c.bf16 %v259, %v259
        %v318 = vpack.c.bf16 %v297, %v297
        %v319 = vpack.c.bf16 %v280, %v280
        %v320 = vpack.c.bf16 %v260, %v260
        %v321 = vpack.c.bf16 %v298, %v298
        %v322 = vpack.c.bf16 %v281, %v281
        %v323 = vpack.c.bf16 %v261, %v261
        %v324 = vpack.c.bf16 %v299, %v299
        %v325 = vpack.c.bf16 %v282, %v282
        %v326 = vpack.c.bf16 %v262, %v262
        %v327 = vpack.c.bf16 %v300, %v300
        %v328 = vld [vmem:[#allocation4] sm:$0x3]
        %v329 = vld [vmem:[#allocation2] sm:$0xff]
        %v330 = vld [vmem:[#allocation2 + $0x8] sm:$0xff]
        %v331 = vld [vmem:[#allocation2 + $0x10] sm:$0xff]
        %v332 = vld [vmem:[#allocation2 + $0x18] sm:$0xff]
        %v333 = vld [vmem:[#allocation2 + $0x20] sm:$0xff]
        %v334 = vld [vmem:[#allocation2 + $0x28] sm:$0xff]
        %v335 = vld [vmem:[#allocation2 + $0x30] sm:$0xff]
        %v336 = vld [vmem:[#allocation2 + $0x38] sm:$0xff]
        %v337 = vld [vmem:[#allocation2 + $0x40] sm:$0xff]
        %v338 = vld [vmem:[#allocation2 + $0x48] sm:$0xff]
        %v339 = vld [vmem:[#allocation2 + $0x50] sm:$0xff]
        %v340 = vld [vmem:[#allocation2 + $0x58] sm:$0xff]
        %v341 = vld [vmem:[#allocation2 + $0x60] sm:$0xff]
        %v342 = vld [vmem:[#allocation2 + $0x68] sm:$0xff]
        %v343 = vld [vmem:[#allocation2 + $0x70] sm:$0xff]
        %v344 = vld [vmem:[#allocation2 + $0x78] sm:$0xff]
        %v345 = vld [vmem:[#allocation2 + $0x80] sm:$0xff]
        %v346 = vld [vmem:[#allocation2 + $0x88] sm:$0xff]
        %v347 = vld [vmem:[#allocation2 + $0x90] sm:$0xff]
        %v348 = vld [vmem:[#allocation2 + $0x98] sm:$0xff]
        %v349 = vld [vmem:[#allocation2 + $0xa0] sm:$0xff]
        %v350 = vld [vmem:[#allocation2 + $0xa8] sm:$0xff]
        %v351 = vld [vmem:[#allocation2 + $0xb0] sm:$0xff]
        %v352 = vld [vmem:[#allocation2 + $0xb8] sm:$0xff]
        %v353 = vld [vmem:[#allocation2 + $0xc0] sm:$0xff]
        %v354 = vld [vmem:[#allocation2 + $0xc8] sm:$0xff]
        %v355 = vld [vmem:[#allocation2 + $0xd0] sm:$0xff]
        %v356 = vld [vmem:[#allocation2 + $0xd8] sm:$0xff]
        %v357 = vld [vmem:[#allocation2 + $0xe0] sm:$0xff]
        %v358 = vld [vmem:[#allocation2 + $0xe8] sm:$0xff]
        %v359 = vld [vmem:[#allocation2 + $0xf0] sm:$0xff]
        %v360 = vld [vmem:[#allocation2 + $0xf8] sm:$0xff]
        %v361 = vld [vmem:[#allocation2 + $0x100] sm:$0xff]
        %v362 = vld [vmem:[#allocation2 + $0x108] sm:$0xff]
        %v363 = vld [vmem:[#allocation2 + $0x110] sm:$0xff]
        %v364 = vld [vmem:[#allocation2 + $0x118] sm:$0xff]
        %v365 = vld [vmem:[#allocation2 + $0x120] sm:$0xff]
        %v366 = vld [vmem:[#allocation2 + $0x128] sm:$0xff]
        %v367 = vld [vmem:[#allocation2 + $0x130] sm:$0xff]
        %v368 = vld [vmem:[#allocation2 + $0x138] sm:$0xff]
        %v369 = vld [vmem:[#allocation2 + $0x140] sm:$0xff]
        %v370 = vld [vmem:[#allocation2 + $0x148] sm:$0xff]
        %v371 = vld [vmem:[#allocation2 + $0x150] sm:$0xff]
        %v372 = vld [vmem:[#allocation2 + $0x158] sm:$0xff]
        %v373 = vld [vmem:[#allocation2 + $0x160] sm:$0xff]
        %v374 = vld [vmem:[#allocation2 + $0x168] sm:$0xff]
        %v375 = vld [vmem:[#allocation2 + $0x170] sm:$0xff]
        %v376 = vld [vmem:[#allocation2 + $0x178] sm:$0xff]
        %s377 = scalar_lea.vmem [#allocation2], 384
        %v378 = vld [vmem:[%s377] sm:$0xff]
        %v379 = vld [vmem:[%s377 + $0x8] sm:$0xff]
        %v380 = vld [vmem:[%s377 + $0x10] sm:$0xff]
        %v381 = vld [vmem:[%s377 + $0x18] sm:$0xff]
        %v382 = vld [vmem:[%s377 + $0x20] sm:$0xff]
        %v383 = vld [vmem:[%s377 + $0x28] sm:$0xff]
        %v384 = vld [vmem:[%s377 + $0x30] sm:$0xff]
        %v385 = vld [vmem:[%s377 + $0x38] sm:$0xff]
        %v386 = vld [vmem:[%s377 + $0x40] sm:$0xff]
        %v387 = vld [vmem:[%s377 + $0x48] sm:$0xff]
        %v388 = vld [vmem:[%s377 + $0x50] sm:$0xff]
        %v389 = vld [vmem:[%s377 + $0x58] sm:$0xff]
        %v390 = vld [vmem:[%s377 + $0x60] sm:$0xff]
        %v391 = vld [vmem:[%s377 + $0x68] sm:$0xff]
        %v392 = vld [vmem:[%s377 + $0x70] sm:$0xff]
        %v393 = vld [vmem:[%s377 + $0x78] sm:$0xff]
        %v394 = vld [vmem:[%s377 + $0x80] sm:$0xff]
        %v395 = vld [vmem:[%s377 + $0x88] sm:$0xff]
        %v396 = vld [vmem:[%s377 + $0x90] sm:$0xff]
        %v397 = vld [vmem:[%s377 + $0x98] sm:$0xff]
        %v398 = vld [vmem:[%s377 + $0xa0] sm:$0xff]
        %v399 = vld [vmem:[%s377 + $0xa8] sm:$0xff]
        %v400 = vld [vmem:[%s377 + $0xb0] sm:$0xff]
        %v401 = vld [vmem:[%s377 + $0xb8] sm:$0xff]
        %v402 = vld [vmem:[%s377 + $0xc0] sm:$0xff]
        %v403 = vld [vmem:[%s377 + $0xc8] sm:$0xff]
        %v404 = vld [vmem:[%s377 + $0xd0] sm:$0xff]
        %v405 = vld [vmem:[%s377 + $0xd8] sm:$0xff]
        %v406 = vld [vmem:[%s377 + $0xe0] sm:$0xff]
        %v407 = vld [vmem:[%s377 + $0xe8] sm:$0xff]
        %v408 = vld [vmem:[%s377 + $0xf0] sm:$0xff]
        %v409 = vld [vmem:[%s377 + $0xf8] sm:$0xff]
        %v410 = vld [vmem:[%s377 + $0x100] sm:$0xff]
        %v411 = vld [vmem:[%s377 + $0x108] sm:$0xff]
        %v412 = vld [vmem:[%s377 + $0x110] sm:$0xff]
        %v413 = vld [vmem:[%s377 + $0x118] sm:$0xff]
        %v414 = vld [vmem:[%s377 + $0x120] sm:$0xff]
        %v415 = vld [vmem:[%s377 + $0x128] sm:$0xff]
        %v416 = vld [vmem:[%s377 + $0x130] sm:$0xff]
        %v417 = vld [vmem:[%s377 + $0x138] sm:$0xff]
        %v418 = vld [vmem:[%s377 + $0x140] sm:$0xff]
        %v419 = vld [vmem:[%s377 + $0x148] sm:$0xff]
        %v420 = vld [vmem:[%s377 + $0x150] sm:$0xff]
        %v421 = vld [vmem:[%s377 + $0x158] sm:$0xff]
        %v422 = vld [vmem:[%s377 + $0x160] sm:$0xff]
        %v423 = vld [vmem:[%s377 + $0x168] sm:$0xff]
        %v424 = vld [vmem:[%s377 + $0x170] sm:$0xff]
        %v425 = vld [vmem:[%s377 + $0x178] sm:$0xff]
        %v450 = vunpack.c.l.b16 %v304
        %v451 = vunpack.c.l.b16 %v305
        %v452 = vunpack.c.l.b16 %v306
        %v453 = vunpack.c.l.b16 %v307
        %v454 = vunpack.c.l.b16 %v308
        %v455 = vunpack.c.l.b16 %v309
        %v456 = vunpack.c.l.b16 %v310
        %v457 = vunpack.c.l.b16 %v311
        %v458 = vunpack.c.l.b16 %v312
        %v459 = vunpack.c.l.b16 %v313
        %v460 = vunpack.c.l.b16 %v314
        %v461 = vunpack.c.l.b16 %v315
        %v462 = vunpack.c.l.b16 %v316
        %v463 = vunpack.c.l.b16 %v317
        %v464 = vunpack.c.l.b16 %v318
        %v465 = vunpack.c.l.b16 %v319
        %v466 = vunpack.c.l.b16 %v320
        %v467 = vunpack.c.l.b16 %v321
        %v468 = vunpack.c.l.b16 %v322
        %v469 = vunpack.c.l.b16 %v323
        %v470 = vunpack.c.l.b16 %v324
        %v471 = vunpack.c.l.b16 %v325
        %v472 = vunpack.c.l.b16 %v326
        %v473 = vunpack.c.l.b16 %v327
        %v474 = vpack.c.b16 %v453, %v450
        %v475 = vpack.c.b16 %v454, %v451
        %v476 = vpack.c.b16 %v455, %v452
        %v477 = vpack.c.b16 %v459, %v456
        %v478 = vpack.c.b16 %v460, %v457
        %v479 = vpack.c.b16 %v461, %v458
        %v480 = vpack.c.b16 %v465, %v462
        %v481 = vpack.c.b16 %v466, %v463
        %v482 = vpack.c.b16 %v467, %v464
        %v483 = vpack.c.b16 %v471, %v468
        %v484 = vpack.c.b16 %v472, %v469
        %v485 = vpack.c.b16 %v473, %v470
        %v546 = vunpack.c.l.b16 %v378
        %v547 = vunpack.c.h.b16 %v378
        %v548 = vunpack.c.l.b16 %v379
        %v549 = vunpack.c.h.b16 %v379
        %v550 = vunpack.c.l.b16 %v380
        %v551 = vunpack.c.h.b16 %v380
        %v552 = vunpack.c.l.b16 %v381
        %v553 = vunpack.c.h.b16 %v381
        %v554 = vunpack.c.l.b16 %v382
        %v555 = vunpack.c.h.b16 %v382
        %v556 = vunpack.c.l.b16 %v383
        %v557 = vunpack.c.h.b16 %v383
        %v558 = vunpack.c.l.b16 %v384
        %v559 = vunpack.c.h.b16 %v384
        %v560 = vunpack.c.l.b16 %v385
        %v561 = vunpack.c.h.b16 %v385
        %v562 = vunpack.c.l.b16 %v386
        %v563 = vunpack.c.h.b16 %v386
        %v564 = vunpack.c.l.b16 %v387
        %v565 = vunpack.c.h.b16 %v387
        %v566 = vunpack.c.l.b16 %v388
        %v567 = vunpack.c.h.b16 %v388
        %v568 = vunpack.c.l.b16 %v389
        %v569 = vunpack.c.h.b16 %v389
        %v570 = vunpack.c.l.b16 %v390
        %v571 = vunpack.c.h.b16 %v390
        %v572 = vunpack.c.l.b16 %v391
        %v573 = vunpack.c.h.b16 %v391
        %v574 = vunpack.c.l.b16 %v392
        %v575 = vunpack.c.h.b16 %v392
        %v576 = vunpack.c.l.b16 %v393
        %v577 = vunpack.c.h.b16 %v393
        %v578 = vunpack.c.l.b16 %v394
        %v579 = vunpack.c.h.b16 %v394
        %v580 = vunpack.c.l.b16 %v395
        %v581 = vunpack.c.h.b16 %v395
        %v582 = vunpack.c.l.b16 %v396
        %v583 = vunpack.c.h.b16 %v396
        %v584 = vunpack.c.l.b16 %v397
        %v585 = vunpack.c.h.b16 %v397
        %v586 = vunpack.c.l.b16 %v398
        %v587 = vunpack.c.h.b16 %v398
        %v588 = vunpack.c.l.b16 %v399
        %v589 = vunpack.c.h.b16 %v399
        %v590 = vunpack.c.l.b16 %v400
        %v591 = vunpack.c.h.b16 %v400
        %v592 = vunpack.c.l.b16 %v401
        %v593 = vunpack.c.h.b16 %v401
        %v594 = vunpack.c.l.b16 %v402
        %v595 = vunpack.c.h.b16 %v402
        %v596 = vunpack.c.l.b16 %v403
        %v597 = vunpack.c.h.b16 %v403
        %v598 = vunpack.c.l.b16 %v404
        %v599 = vunpack.c.h.b16 %v404
        %v600 = vunpack.c.l.b16 %v405
        %v601 = vunpack.c.h.b16 %v405
        %v602 = vunpack.c.l.b16 %v406
        %v603 = vunpack.c.h.b16 %v406
        %v604 = vunpack.c.l.b16 %v407
        %v605 = vunpack.c.h.b16 %v407
        %v606 = vunpack.c.l.b16 %v408
        %v607 = vunpack.c.h.b16 %v408
        %v608 = vunpack.c.l.b16 %v409
        %v609 = vunpack.c.h.b16 %v409
        %v610 = vunpack.c.l.b16 %v410
        %v611 = vunpack.c.h.b16 %v410
        %v612 = vunpack.c.l.b16 %v411
        %v613 = vunpack.c.h.b16 %v411
        %v614 = vunpack.c.l.b16 %v412
        %v615 = vunpack.c.h.b16 %v412
        %v616 = vunpack.c.l.b16 %v413
        %v617 = vunpack.c.h.b16 %v413
        %v618 = vunpack.c.l.b16 %v414
        %v619 = vunpack.c.h.b16 %v414
        %v620 = vunpack.c.l.b16 %v415
        %v621 = vunpack.c.h.b16 %v415
        %v622 = vunpack.c.l.b16 %v416
        %v623 = vunpack.c.h.b16 %v416
        %v624 = vunpack.c.l.b16 %v417
        %v625 = vunpack.c.h.b16 %v417
        %v626 = vunpack.c.l.b16 %v418
        %v627 = vunpack.c.h.b16 %v418
        %v628 = vunpack.c.l.b16 %v419
        %v629 = vunpack.c.h.b16 %v419
        %v630 = vunpack.c.l.b16 %v420
        %v631 = vunpack.c.h.b16 %v420
        %v632 = vunpack.c.l.b16 %v421
        %v633 = vunpack.c.h.b16 %v421
        %v634 = vunpack.c.l.b16 %v422
        %v635 = vunpack.c.h.b16 %v422
        %v636 = vunpack.c.l.b16 %v423
        %v637 = vunpack.c.h.b16 %v423
        %v638 = vunpack.c.l.b16 %v424
        %v639 = vunpack.c.h.b16 %v424
        %v640 = vunpack.c.l.b16 %v425
        %v641 = vunpack.c.h.b16 %v425
        %v642 = vpack.c.b16 %v548, %v546
        %v643 = vpack.c.b16 %v549, %v547
        %v644 = vpack.c.b16 %v552, %v550
        %v645 = vpack.c.b16 %v553, %v551
        %v646 = vpack.c.b16 %v556, %v554
        %v647 = vpack.c.b16 %v557, %v555
        %v648 = vpack.c.b16 %v560, %v558
        %v649 = vpack.c.b16 %v561, %v559
        %v650 = vpack.c.b16 %v564, %v562
        %v651 = vpack.c.b16 %v565, %v563
        %v652 = vpack.c.b16 %v568, %v566
        %v653 = vpack.c.b16 %v569, %v567
        %v654 = vpack.c.b16 %v572, %v570
        %v655 = vpack.c.b16 %v573, %v571
        %v656 = vpack.c.b16 %v576, %v574
        %v657 = vpack.c.b16 %v577, %v575
        %v658 = vpack.c.b16 %v580, %v578
        %v659 = vpack.c.b16 %v581, %v579
        %v660 = vpack.c.b16 %v584, %v582
        %v661 = vpack.c.b16 %v585, %v583
        %v662 = vpack.c.b16 %v588, %v586
        %v663 = vpack.c.b16 %v589, %v587
        %v664 = vpack.c.b16 %v592, %v590
        %v665 = vpack.c.b16 %v593, %v591
        %v666 = vpack.c.b16 %v596, %v594
        %v667 = vpack.c.b16 %v597, %v595
        %v668 = vpack.c.b16 %v600, %v598
        %v669 = vpack.c.b16 %v601, %v599
        %v670 = vpack.c.b16 %v604, %v602
        %v671 = vpack.c.b16 %v605, %v603
        %v672 = vpack.c.b16 %v608, %v606
        %v673 = vpack.c.b16 %v609, %v607
        %v674 = vpack.c.b16 %v612, %v610
        %v675 = vpack.c.b16 %v613, %v611
        %v676 = vpack.c.b16 %v616, %v614
        %v677 = vpack.c.b16 %v617, %v615
        %v678 = vpack.c.b16 %v620, %v618
        %v679 = vpack.c.b16 %v621, %v619
        %v680 = vpack.c.b16 %v624, %v622
        %v681 = vpack.c.b16 %v625, %v623
        %v682 = vpack.c.b16 %v628, %v626
        %v683 = vpack.c.b16 %v629, %v627
        %v684 = vpack.c.b16 %v632, %v630
        %v685 = vpack.c.b16 %v633, %v631
        %v686 = vpack.c.b16 %v636, %v634
        %v687 = vpack.c.b16 %v637, %v635
        %v688 = vpack.c.b16 %v640, %v638
        %v689 = vpack.c.b16 %v641, %v639
        %738 = vmatprep.subr.bf16.mxu0 %v657
        %739 = vmatpush1.bf16.msra.mxu0 %v656
        %740 = vmatprep.subr.bf16.mxu0 %v655
        %741 = vmatpush1.bf16.msra.mxu0 %v654
        %742 = vmatprep.subr.bf16.mxu0 %v653
        %743 = vmatpush1.bf16.msra.mxu0 %v652
        %744 = vmatprep.subr.bf16.mxu0 %v651
        %745 = vmatpush1.bf16.msra.mxu0 %v650
        %746 = vmatprep.subr.bf16.mxu0 %v649
        %747 = vmatpush1.bf16.msra.mxu0 %v648
        %748 = vmatprep.subr.bf16.mxu0 %v647
        %749 = vmatpush1.bf16.msra.mxu0 %v646
        %750 = vmatprep.subr.bf16.mxu0 %v645
        %751 = vmatpush1.bf16.msra.mxu0 %v644
        %752 = vmatprep.subr.bf16.mxu0 %v643
        %753 = vmatpush1.bf16.msra.mxu0 %v642
        %754 = vmatprep.subr.bf16.mxu0 %v673
        %755 = vmatpush2.bf16.msra.mxu0 %v672
        %756 = vmatprep.subr.bf16.mxu0 %v671
        %757 = vmatpush2.bf16.msra.mxu0 %v670
        %758 = vmatprep.subr.bf16.mxu0 %v669
        %759 = vmatpush2.bf16.msra.mxu0 %v668
        %760 = vmatprep.subr.bf16.mxu0 %v667
        %761 = vmatpush2.bf16.msra.mxu0 %v666
        %762 = vmatprep.subr.bf16.mxu0 %v665
        %763 = vmatpush2.bf16.msra.mxu0 %v664
        %764 = vmatprep.subr.bf16.mxu0 %v663
        %765 = vmatpush2.bf16.msra.mxu0 %v662
        %766 = vmatprep.subr.bf16.mxu0 %v661
        %767 = vmatpush2.bf16.msra.mxu0 %v660
        %768 = vmatprep.subr.bf16.mxu0 %v659
        %769 = vmatpush2.bf16.msra.mxu0 %v658
        %770 = vmatprep.mubr.bf16.mxu0 %v475
        %771 = vmatmul.mubr.bf16.gmra.mxu0 %v474
        %v772 = vpop.f32.mrf.mxu0
        %v773 = vadd.f32 0.0, %v772
        %v774 = vpop.f32.mrf.mxu0
        %v775 = vadd.f32 0.0, %v774
        %v776 = vpop.f32.mrf.mxu0
        %v777 = vadd.f32 0.0, %v776
        %v778 = vpop.f32.mrf.mxu0
        %v779 = vadd.f32 0.0, %v778
        %780 = vmatprep.mubr.bf16.mxu0 %v478
        %781 = vmatmul.mubr.bf16.gmra.mxu0 %v477
        %v782 = vpop.f32.mrf.mxu0
        %v783 = vadd.f32 0.0, %v782
        %v784 = vpop.f32.mrf.mxu0
        %v785 = vadd.f32 0.0, %v784
        %v786 = vpop.f32.mrf.mxu0
        %v787 = vadd.f32 0.0, %v786
        %v788 = vpop.f32.mrf.mxu0
        %v789 = vadd.f32 0.0, %v788
        %790 = vmatprep.mubr.bf16.mxu0 %v481
        %791 = vmatmul.mubr.bf16.gmra.mxu0 %v480
        %v792 = vpop.f32.mrf.mxu0
        %v793 = vadd.f32 0.0, %v792
        %v794 = vpop.f32.mrf.mxu0
        %v795 = vadd.f32 0.0, %v794
        %v796 = vpop.f32.mrf.mxu0
        %v797 = vadd.f32 0.0, %v796
        %v798 = vpop.f32.mrf.mxu0
        %v799 = vadd.f32 0.0, %v798
        %800 = vmatprep.mubr.bf16.mxu0 %v484
        %801 = vmatmul.mubr.bf16.gmra.mxu0 %v483
        %v802 = vpop.f32.mrf.mxu0
        %v803 = vadd.f32 0.0, %v802
        %v804 = vpop.f32.mrf.mxu0
        %v805 = vadd.f32 0.0, %v804
        %v806 = vpop.f32.mrf.mxu0
        %v807 = vadd.f32 0.0, %v806
        %v808 = vpop.f32.mrf.mxu0
        %v809 = vadd.f32 0.0, %v808
        %810 = vdwg.mxu0
        %811 = vmatprep.subr.bf16.mxu0 %v689
        %812 = vmatpush1.bf16.msra.mxu0 %v688
        %813 = vmatprep.subr.bf16.mxu0 %v687
        %814 = vmatpush1.bf16.msra.mxu0 %v686
        %815 = vmatprep.subr.bf16.mxu0 %v685
        %816 = vmatpush1.bf16.msra.mxu0 %v684
        %817 = vmatprep.subr.bf16.mxu0 %v683
        %818 = vmatpush1.bf16.msra.mxu0 %v682
        %819 = vmatprep.subr.bf16.mxu0 %v681
        %820 = vmatpush1.bf16.msra.mxu0 %v680
        %821 = vmatprep.subr.bf16.mxu0 %v679
        %822 = vmatpush1.bf16.msra.mxu0 %v678
        %823 = vmatprep.subr.bf16.mxu0 %v677
        %824 = vmatpush1.bf16.msra.mxu0 %v676
        %825 = vmatprep.subr.bf16.mxu0 %v675
        %826 = vmatpush1.bf16.msra.mxu0 %v674
        %827 = vmatprep.subr.bf16.mxu0 0
        %828 = vmatpush2.bf16.msra.mxu0 0
        %829 = vmatprep.subr.bf16.mxu0 0
        %830 = vmatpush2.bf16.msra.mxu0 0
        %831 = vmatprep.subr.bf16.mxu0 0
        %832 = vmatpush2.bf16.msra.mxu0 0
        %833 = vmatprep.subr.bf16.mxu0 0
        %834 = vmatpush2.bf16.msra.mxu0 0
        %835 = vmatprep.subr.bf16.mxu0 0
        %836 = vmatpush2.bf16.msra.mxu0 0
        %837 = vmatprep.subr.bf16.mxu0 0
        %838 = vmatpush2.bf16.msra.mxu0 0
        %839 = vmatprep.subr.bf16.mxu0 0
        %840 = vmatpush2.bf16.msra.mxu0 0
        %841 = vmatprep.subr.bf16.mxu0 0
        %842 = vmatpush2.bf16.msra.mxu0 0
        %843 = vmatprep.mubr.bf16.mxu0 0
        %844 = vmatmul.mubr.bf16.gmra.mxu0 %v476
        %v845 = vpop.f32.mrf.mxu0
        %v846 = vadd.f32 %v773, %v845
        %v847 = vpop.f32.mrf.mxu0
        %v848 = vadd.f32 %v775, %v847
        %v849 = vpop.f32.mrf.mxu0
        %v850 = vadd.f32 %v777, %v849
        %v851 = vpop.f32.mrf.mxu0
        %v852 = vadd.f32 %v779, %v851
        %853 = vmatprep.mubr.bf16.mxu0 0
        %854 = vmatmul.mubr.bf16.gmra.mxu0 %v479
        %v855 = vpop.f32.mrf.mxu0
        %v856 = vadd.f32 %v783, %v855
        %v857 = vpop.f32.mrf.mxu0
        %v858 = vadd.f32 %v785, %v857
        %v859 = vpop.f32.mrf.mxu0
        %v860 = vadd.f32 %v787, %v859
        %v861 = vpop.f32.mrf.mxu0
        %v862 = vadd.f32 %v789, %v861
        %863 = vmatprep.mubr.bf16.mxu0 0
        %864 = vmatmul.mubr.bf16.gmra.mxu0 %v482
        %v865 = vpop.f32.mrf.mxu0
        %v866 = vadd.f32 %v793, %v865
        %v867 = vpop.f32.mrf.mxu0
        %v868 = vadd.f32 %v795, %v867
        %v869 = vpop.f32.mrf.mxu0
        %v870 = vadd.f32 %v797, %v869
        %v871 = vpop.f32.mrf.mxu0
        %v872 = vadd.f32 %v799, %v871
        %873 = vmatprep.mubr.bf16.mxu0 0
        %874 = vmatmul.mubr.bf16.gmra.mxu0 %v485
        %v875 = vpop.f32.mrf.mxu0
        %v876 = vadd.f32 %v803, %v875
        %v877 = vpop.f32.mrf.mxu0
        %v878 = vadd.f32 %v805, %v877
        %v879 = vpop.f32.mrf.mxu0
        %v880 = vadd.f32 %v807, %v879
        %v881 = vpop.f32.mrf.mxu0
        %v882 = vadd.f32 %v809, %v881
        %883 = vdwg.mxu0
        %v887 = vunpack.c.l.b16 %v301
        %v888 = vunpack.c.l.b16 %v302
        %v889 = vunpack.c.l.b16 %v303
        %v890 = vpack.c.b16 %v450, %v887
        %v891 = vpack.c.b16 %v451, %v888
        %v892 = vpack.c.b16 %v452, %v889
        %v893 = vpack.c.b16 %v456, %v453
        %v894 = vpack.c.b16 %v457, %v454
        %v895 = vpack.c.b16 %v458, %v455
        %v896 = vpack.c.b16 %v462, %v459
        %v897 = vpack.c.b16 %v463, %v460
        %v898 = vpack.c.b16 %v464, %v461
        %v899 = vpack.c.b16 %v468, %v465
        %v900 = vpack.c.b16 %v469, %v466
        %v901 = vpack.c.b16 %v470, %v467
        %v962 = vunpack.c.l.b16 %v329
        %v963 = vunpack.c.h.b16 %v329
        %v964 = vunpack.c.l.b16 %v330
        %v965 = vunpack.c.h.b16 %v330
        %v966 = vunpack.c.l.b16 %v331
        %v967 = vunpack.c.h.b16 %v331
        %v968 = vunpack.c.l.b16 %v332
        %v969 = vunpack.c.h.b16 %v332
        %v970 = vunpack.c.l.b16 %v333
        %v971 = vunpack.c.h.b16 %v333
        %v972 = vunpack.c.l.b16 %v334
        %v973 = vunpack.c.h.b16 %v334
        %v974 = vunpack.c.l.b16 %v335
        %v975 = vunpack.c.h.b16 %v335
        %v976 = vunpack.c.l.b16 %v336
        %v977 = vunpack.c.h.b16 %v336
        %v978 = vunpack.c.l.b16 %v337
        %v979 = vunpack.c.h.b16 %v337
        %v980 = vunpack.c.l.b16 %v338
        %v981 = vunpack.c.h.b16 %v338
        %v982 = vunpack.c.l.b16 %v339
        %v983 = vunpack.c.h.b16 %v339
        %v984 = vunpack.c.l.b16 %v340
        %v985 = vunpack.c.h.b16 %v340
        %v986 = vunpack.c.l.b16 %v341
        %v987 = vunpack.c.h.b16 %v341
        %v988 = vunpack.c.l.b16 %v342
        %v989 = vunpack.c.h.b16 %v342
        %v990 = vunpack.c.l.b16 %v343
        %v991 = vunpack.c.h.b16 %v343
        %v992 = vunpack.c.l.b16 %v344
        %v993 = vunpack.c.h.b16 %v344
        %v994 = vunpack.c.l.b16 %v345
        %v995 = vunpack.c.h.b16 %v345
        %v996 = vunpack.c.l.b16 %v346
        %v997 = vunpack.c.h.b16 %v346
        %v998 = vunpack.c.l.b16 %v347
        %v999 = vunpack.c.h.b16 %v347
        %v1000 = vunpack.c.l.b16 %v348
        %v1001 = vunpack.c.h.b16 %v348
        %v1002 = vunpack.c.l.b16 %v349
        %v1003 = vunpack.c.h.b16 %v349
        %v1004 = vunpack.c.l.b16 %v350
        %v1005 = vunpack.c.h.b16 %v350
        %v1006 = vunpack.c.l.b16 %v351
        %v1007 = vunpack.c.h.b16 %v351
        %v1008 = vunpack.c.l.b16 %v352
        %v1009 = vunpack.c.h.b16 %v352
        %v1010 = vunpack.c.l.b16 %v353
        %v1011 = vunpack.c.h.b16 %v353
        %v1012 = vunpack.c.l.b16 %v354
        %v1013 = vunpack.c.h.b16 %v354
        %v1014 = vunpack.c.l.b16 %v355
        %v1015 = vunpack.c.h.b16 %v355
        %v1016 = vunpack.c.l.b16 %v356
        %v1017 = vunpack.c.h.b16 %v356
        %v1018 = vunpack.c.l.b16 %v357
        %v1019 = vunpack.c.h.b16 %v357
        %v1020 = vunpack.c.l.b16 %v358
        %v1021 = vunpack.c.h.b16 %v358
        %v1022 = vunpack.c.l.b16 %v359
        %v1023 = vunpack.c.h.b16 %v359
        %v1024 = vunpack.c.l.b16 %v360
        %v1025 = vunpack.c.h.b16 %v360
        %v1026 = vunpack.c.l.b16 %v361
        %v1027 = vunpack.c.h.b16 %v361
        %v1028 = vunpack.c.l.b16 %v362
        %v1029 = vunpack.c.h.b16 %v362
        %v1030 = vunpack.c.l.b16 %v363
        %v1031 = vunpack.c.h.b16 %v363
        %v1032 = vunpack.c.l.b16 %v364
        %v1033 = vunpack.c.h.b16 %v364
        %v1034 = vunpack.c.l.b16 %v365
        %v1035 = vunpack.c.h.b16 %v365
        %v1036 = vunpack.c.l.b16 %v366
        %v1037 = vunpack.c.h.b16 %v366
        %v1038 = vunpack.c.l.b16 %v367
        %v1039 = vunpack.c.h.b16 %v367
        %v1040 = vunpack.c.l.b16 %v368
        %v1041 = vunpack.c.h.b16 %v368
        %v1042 = vunpack.c.l.b16 %v369
        %v1043 = vunpack.c.h.b16 %v369
        %v1044 = vunpack.c.l.b16 %v370
        %v1045 = vunpack.c.h.b16 %v370
        %v1046 = vunpack.c.l.b16 %v371
        %v1047 = vunpack.c.h.b16 %v371
        %v1048 = vunpack.c.l.b16 %v372
        %v1049 = vunpack.c.h.b16 %v372
        %v1050 = vunpack.c.l.b16 %v373
        %v1051 = vunpack.c.h.b16 %v373
        %v1052 = vunpack.c.l.b16 %v374
        %v1053 = vunpack.c.h.b16 %v374
        %v1054 = vunpack.c.l.b16 %v375
        %v1055 = vunpack.c.h.b16 %v375
        %v1056 = vunpack.c.l.b16 %v376
        %v1057 = vunpack.c.h.b16 %v376
        %v1058 = vpack.c.b16 %v964, %v962
        %v1059 = vpack.c.b16 %v965, %v963
        %v1060 = vpack.c.b16 %v968, %v966
        %v1061 = vpack.c.b16 %v969, %v967
        %v1062 = vpack.c.b16 %v972, %v970
        %v1063 = vpack.c.b16 %v973, %v971
        %v1064 = vpack.c.b16 %v976, %v974
        %v1065 = vpack.c.b16 %v977, %v975
        %v1066 = vpack.c.b16 %v980, %v978
        %v1067 = vpack.c.b16 %v981, %v979
        %v1068 = vpack.c.b16 %v984, %v982
        %v1069 = vpack.c.b16 %v985, %v983
        %v1070 = vpack.c.b16 %v988, %v986
        %v1071 = vpack.c.b16 %v989, %v987
        %v1072 = vpack.c.b16 %v992, %v990
        %v1073 = vpack.c.b16 %v993, %v991
        %v1074 = vpack.c.b16 %v996, %v994
        %v1075 = vpack.c.b16 %v997, %v995
        %v1076 = vpack.c.b16 %v1000, %v998
        %v1077 = vpack.c.b16 %v1001, %v999
        %v1078 = vpack.c.b16 %v1004, %v1002
        %v1079 = vpack.c.b16 %v1005, %v1003
        %v1080 = vpack.c.b16 %v1008, %v1006
        %v1081 = vpack.c.b16 %v1009, %v1007
        %v1082 = vpack.c.b16 %v1012, %v1010
        %v1083 = vpack.c.b16 %v1013, %v1011
        %v1084 = vpack.c.b16 %v1016, %v1014
        %v1085 = vpack.c.b16 %v1017, %v1015
        %v1086 = vpack.c.b16 %v1020, %v1018
        %v1087 = vpack.c.b16 %v1021, %v1019
        %v1088 = vpack.c.b16 %v1024, %v1022
        %v1089 = vpack.c.b16 %v1025, %v1023
        %v1090 = vpack.c.b16 %v1028, %v1026
        %v1091 = vpack.c.b16 %v1029, %v1027
        %v1092 = vpack.c.b16 %v1032, %v1030
        %v1093 = vpack.c.b16 %v1033, %v1031
        %v1094 = vpack.c.b16 %v1036, %v1034
        %v1095 = vpack.c.b16 %v1037, %v1035
        %v1096 = vpack.c.b16 %v1040, %v1038
        %v1097 = vpack.c.b16 %v1041, %v1039
        %v1098 = vpack.c.b16 %v1044, %v1042
        %v1099 = vpack.c.b16 %v1045, %v1043
        %v1100 = vpack.c.b16 %v1048, %v1046
        %v1101 = vpack.c.b16 %v1049, %v1047
        %v1102 = vpack.c.b16 %v1052, %v1050
        %v1103 = vpack.c.b16 %v1053, %v1051
        %v1104 = vpack.c.b16 %v1056, %v1054
        %v1105 = vpack.c.b16 %v1057, %v1055
        %1154 = vmatprep.subr.bf16.mxu0 %v1073
        %1155 = vmatpush1.bf16.msra.mxu0 %v1072
        %1156 = vmatprep.subr.bf16.mxu0 %v1071
        %1157 = vmatpush1.bf16.msra.mxu0 %v1070
        %1158 = vmatprep.subr.bf16.mxu0 %v1069
        %1159 = vmatpush1.bf16.msra.mxu0 %v1068
        %1160 = vmatprep.subr.bf16.mxu0 %v1067
        %1161 = vmatpush1.bf16.msra.mxu0 %v1066
        %1162 = vmatprep.subr.bf16.mxu0 %v1065
        %1163 = vmatpush1.bf16.msra.mxu0 %v1064
        %1164 = vmatprep.subr.bf16.mxu0 %v1063
        %1165 = vmatpush1.bf16.msra.mxu0 %v1062
        %1166 = vmatprep.subr.bf16.mxu0 %v1061
        %1167 = vmatpush1.bf16.msra.mxu0 %v1060
        %1168 = vmatprep.subr.bf16.mxu0 %v1059
        %1169 = vmatpush1.bf16.msra.mxu0 %v1058
        %1170 = vmatprep.subr.bf16.mxu0 %v1089
        %1171 = vmatpush2.bf16.msra.mxu0 %v1088
        %1172 = vmatprep.subr.bf16.mxu0 %v1087
        %1173 = vmatpush2.bf16.msra.mxu0 %v1086
        %1174 = vmatprep.subr.bf16.mxu0 %v1085
        %1175 = vmatpush2.bf16.msra.mxu0 %v1084
        %1176 = vmatprep.subr.bf16.mxu0 %v1083
        %1177 = vmatpush2.bf16.msra.mxu0 %v1082
        %1178 = vmatprep.subr.bf16.mxu0 %v1081
        %1179 = vmatpush2.bf16.msra.mxu0 %v1080
        %1180 = vmatprep.subr.bf16.mxu0 %v1079
        %1181 = vmatpush2.bf16.msra.mxu0 %v1078
        %1182 = vmatprep.subr.bf16.mxu0 %v1077
        %1183 = vmatpush2.bf16.msra.mxu0 %v1076
        %1184 = vmatprep.subr.bf16.mxu0 %v1075
        %1185 = vmatpush2.bf16.msra.mxu0 %v1074
        %1186 = vmatprep.mubr.bf16.mxu0 %v891
        %1187 = vmatmul.mubr.bf16.gmra.mxu0 %v890
        %v1188 = vpop.f32.mrf.mxu0
        %v1189 = vadd.f32 %v846, %v1188
        %v1190 = vpop.f32.mrf.mxu0
        %v1191 = vadd.f32 %v848, %v1190
        %v1192 = vpop.f32.mrf.mxu0
        %v1193 = vadd.f32 %v850, %v1192
        %v1194 = vpop.f32.mrf.mxu0
        %v1195 = vadd.f32 %v852, %v1194
        %1196 = vmatprep.mubr.bf16.mxu0 %v894
        %1197 = vmatmul.mubr.bf16.gmra.mxu0 %v893
        %v1198 = vpop.f32.mrf.mxu0
        %v1199 = vadd.f32 %v856, %v1198
        %v1200 = vpop.f32.mrf.mxu0
        %v1201 = vadd.f32 %v858, %v1200
        %v1202 = vpop.f32.mrf.mxu0
        %v1203 = vadd.f32 %v860, %v1202
        %v1204 = vpop.f32.mrf.mxu0
        %v1205 = vadd.f32 %v862, %v1204
        %1206 = vmatprep.mubr.bf16.mxu0 %v897
        %1207 = vmatmul.mubr.bf16.gmra.mxu0 %v896
        %v1208 = vpop.f32.mrf.mxu0
        %v1209 = vadd.f32 %v866, %v1208
        %v1210 = vpop.f32.mrf.mxu0
        %v1211 = vadd.f32 %v868, %v1210
        %v1212 = vpop.f32.mrf.mxu0
        %v1213 = vadd.f32 %v870, %v1212
        %v1214 = vpop.f32.mrf.mxu0
        %v1215 = vadd.f32 %v872, %v1214
        %1216 = vmatprep.mubr.bf16.mxu0 %v900
        %1217 = vmatmul.mubr.bf16.gmra.mxu0 %v899
        %v1218 = vpop.f32.mrf.mxu0
        %v1219 = vadd.f32 %v876, %v1218
        %v1220 = vpop.f32.mrf.mxu0
        %v1221 = vadd.f32 %v878, %v1220
        %v1222 = vpop.f32.mrf.mxu0
        %v1223 = vadd.f32 %v880, %v1222
        %v1224 = vpop.f32.mrf.mxu0
        %v1225 = vadd.f32 %v882, %v1224
        %1226 = vdwg.mxu0
        %1227 = vmatprep.subr.bf16.mxu0 %v1105
        %1228 = vmatpush1.bf16.msra.mxu0 %v1104
        %1229 = vmatprep.subr.bf16.mxu0 %v1103
        %1230 = vmatpush1.bf16.msra.mxu0 %v1102
        %1231 = vmatprep.subr.bf16.mxu0 %v1101
        %1232 = vmatpush1.bf16.msra.mxu0 %v1100
        %1233 = vmatprep.subr.bf16.mxu0 %v1099
        %1234 = vmatpush1.bf16.msra.mxu0 %v1098
        %1235 = vmatprep.subr.bf16.mxu0 %v1097
        %1236 = vmatpush1.bf16.msra.mxu0 %v1096
        %1237 = vmatprep.subr.bf16.mxu0 %v1095
        %1238 = vmatpush1.bf16.msra.mxu0 %v1094
        %1239 = vmatprep.subr.bf16.mxu0 %v1093
        %1240 = vmatpush1.bf16.msra.mxu0 %v1092
        %1241 = vmatprep.subr.bf16.mxu0 %v1091
        %1242 = vmatpush1.bf16.msra.mxu0 %v1090
        %1243 = vmatprep.subr.bf16.mxu0 0
        %1244 = vmatpush2.bf16.msra.mxu0 0
        %1245 = vmatprep.subr.bf16.mxu0 0
        %1246 = vmatpush2.bf16.msra.mxu0 0
        %1247 = vmatprep.subr.bf16.mxu0 0
        %1248 = vmatpush2.bf16.msra.mxu0 0
        %1249 = vmatprep.subr.bf16.mxu0 0
        %1250 = vmatpush2.bf16.msra.mxu0 0
        %1251 = vmatprep.subr.bf16.mxu0 0
        %1252 = vmatpush2.bf16.msra.mxu0 0
        %1253 = vmatprep.subr.bf16.mxu0 0
        %1254 = vmatpush2.bf16.msra.mxu0 0
        %1255 = vmatprep.subr.bf16.mxu0 0
        %1256 = vmatpush2.bf16.msra.mxu0 0
        %1257 = vmatprep.subr.bf16.mxu0 0
        %1258 = vmatpush2.bf16.msra.mxu0 0
        %1259 = vmatprep.mubr.bf16.mxu0 0
        %1260 = vmatmul.mubr.bf16.gmra.mxu0 %v892
        %v1261 = vpop.f32.mrf.mxu0
        %v1262 = vadd.f32 %v1189, %v1261
        %v1263 = vpop.f32.mrf.mxu0
        %v1264 = vadd.f32 %v1191, %v1263
        %v1265 = vpop.f32.mrf.mxu0
        %v1266 = vadd.f32 %v1193, %v1265
        %v1267 = vpop.f32.mrf.mxu0
        %v1268 = vadd.f32 %v1195, %v1267
        %1269 = vmatprep.mubr.bf16.mxu0 0
        %1270 = vmatmul.mubr.bf16.gmra.mxu0 %v895
        %v1271 = vpop.f32.mrf.mxu0
        %v1272 = vadd.f32 %v1199, %v1271
        %v1273 = vpop.f32.mrf.mxu0
        %v1274 = vadd.f32 %v1201, %v1273
        %v1275 = vpop.f32.mrf.mxu0
        %v1276 = vadd.f32 %v1203, %v1275
        %v1277 = vpop.f32.mrf.mxu0
        %v1278 = vadd.f32 %v1205, %v1277
        %1279 = vmatprep.mubr.bf16.mxu0 0
        %1280 = vmatmul.mubr.bf16.gmra.mxu0 %v898
        %v1281 = vpop.f32.mrf.mxu0
        %v1282 = vadd.f32 %v1209, %v1281
        %v1283 = vpop.f32.mrf.mxu0
        %v1284 = vadd.f32 %v1211, %v1283
        %v1285 = vpop.f32.mrf.mxu0
        %v1286 = vadd.f32 %v1213, %v1285
        %v1287 = vpop.f32.mrf.mxu0
        %v1288 = vadd.f32 %v1215, %v1287
        %1289 = vmatprep.mubr.bf16.mxu0 0
        %1290 = vmatmul.mubr.bf16.gmra.mxu0 %v901
        %v1291 = vpop.f32.mrf.mxu0
        %v1292 = vadd.f32 %v1219, %v1291
        %v1293 = vpop.f32.mrf.mxu0
        %v1294 = vadd.f32 %v1221, %v1293
        %v1295 = vpop.f32.mrf.mxu0
        %v1296 = vadd.f32 %v1223, %v1295
        %v1297 = vpop.f32.mrf.mxu0
        %v1298 = vadd.f32 %v1225, %v1297
        %1299 = vdwg.mxu0
        %s1300 = scalar_lea.vmem [#allocation2], 768
        %v1301 = vld [vmem:[%s1300] sm:$0xff]
        %v1302 = vld [vmem:[%s1300 + $0x8] sm:$0xff]
        %v1303 = vld [vmem:[%s1300 + $0x10] sm:$0xff]
        %v1304 = vld [vmem:[%s1300 + $0x18] sm:$0xff]
        %v1305 = vld [vmem:[%s1300 + $0x20] sm:$0xff]
        %v1306 = vld [vmem:[%s1300 + $0x28] sm:$0xff]
        %v1307 = vld [vmem:[%s1300 + $0x30] sm:$0xff]
        %v1308 = vld [vmem:[%s1300 + $0x38] sm:$0xff]
        %v1309 = vld [vmem:[%s1300 + $0x40] sm:$0xff]
        %v1310 = vld [vmem:[%s1300 + $0x48] sm:$0xff]
        %v1311 = vld [vmem:[%s1300 + $0x50] sm:$0xff]
        %v1312 = vld [vmem:[%s1300 + $0x58] sm:$0xff]
        %v1313 = vld [vmem:[%s1300 + $0x60] sm:$0xff]
        %v1314 = vld [vmem:[%s1300 + $0x68] sm:$0xff]
        %v1315 = vld [vmem:[%s1300 + $0x70] sm:$0xff]
        %v1316 = vld [vmem:[%s1300 + $0x78] sm:$0xff]
        %v1317 = vld [vmem:[%s1300 + $0x80] sm:$0xff]
        %v1318 = vld [vmem:[%s1300 + $0x88] sm:$0xff]
        %v1319 = vld [vmem:[%s1300 + $0x90] sm:$0xff]
        %v1320 = vld [vmem:[%s1300 + $0x98] sm:$0xff]
        %v1321 = vld [vmem:[%s1300 + $0xa0] sm:$0xff]
        %v1322 = vld [vmem:[%s1300 + $0xa8] sm:$0xff]
        %v1323 = vld [vmem:[%s1300 + $0xb0] sm:$0xff]
        %v1324 = vld [vmem:[%s1300 + $0xb8] sm:$0xff]
        %v1325 = vld [vmem:[%s1300 + $0xc0] sm:$0xff]
        %v1326 = vld [vmem:[%s1300 + $0xc8] sm:$0xff]
        %v1327 = vld [vmem:[%s1300 + $0xd0] sm:$0xff]
        %v1328 = vld [vmem:[%s1300 + $0xd8] sm:$0xff]
        %v1329 = vld [vmem:[%s1300 + $0xe0] sm:$0xff]
        %v1330 = vld [vmem:[%s1300 + $0xe8] sm:$0xff]
        %v1331 = vld [vmem:[%s1300 + $0xf0] sm:$0xff]
        %v1332 = vld [vmem:[%s1300 + $0xf8] sm:$0xff]
        %v1333 = vld [vmem:[%s1300 + $0x100] sm:$0xff]
        %v1334 = vld [vmem:[%s1300 + $0x108] sm:$0xff]
        %v1335 = vld [vmem:[%s1300 + $0x110] sm:$0xff]
        %v1336 = vld [vmem:[%s1300 + $0x118] sm:$0xff]
        %v1337 = vld [vmem:[%s1300 + $0x120] sm:$0xff]
        %v1338 = vld [vmem:[%s1300 + $0x128] sm:$0xff]
        %v1339 = vld [vmem:[%s1300 + $0x130] sm:$0xff]
        %v1340 = vld [vmem:[%s1300 + $0x138] sm:$0xff]
        %v1341 = vld [vmem:[%s1300 + $0x140] sm:$0xff]
        %v1342 = vld [vmem:[%s1300 + $0x148] sm:$0xff]
        %v1343 = vld [vmem:[%s1300 + $0x150] sm:$0xff]
        %v1344 = vld [vmem:[%s1300 + $0x158] sm:$0xff]
        %v1345 = vld [vmem:[%s1300 + $0x160] sm:$0xff]
        %v1346 = vld [vmem:[%s1300 + $0x168] sm:$0xff]
        %v1347 = vld [vmem:[%s1300 + $0x170] sm:$0xff]
        %v1348 = vld [vmem:[%s1300 + $0x178] sm:$0xff]
        %v1349 = vpack.c.b16 %v887, %v471
        %v1350 = vpack.c.b16 %v888, %v472
        %v1351 = vpack.c.b16 %v889, %v473
        %v1403 = vunpack.c.l.b16 %v1301
        %v1404 = vunpack.c.h.b16 %v1301
        %v1405 = vunpack.c.l.b16 %v1302
        %v1406 = vunpack.c.h.b16 %v1302
        %v1407 = vunpack.c.l.b16 %v1303
        %v1408 = vunpack.c.h.b16 %v1303
        %v1409 = vunpack.c.l.b16 %v1304
        %v1410 = vunpack.c.h.b16 %v1304
        %v1411 = vunpack.c.l.b16 %v1305
        %v1412 = vunpack.c.h.b16 %v1305
        %v1413 = vunpack.c.l.b16 %v1306
        %v1414 = vunpack.c.h.b16 %v1306
        %v1415 = vunpack.c.l.b16 %v1307
        %v1416 = vunpack.c.h.b16 %v1307
        %v1417 = vunpack.c.l.b16 %v1308
        %v1418 = vunpack.c.h.b16 %v1308
        %v1419 = vunpack.c.l.b16 %v1309
        %v1420 = vunpack.c.h.b16 %v1309
        %v1421 = vunpack.c.l.b16 %v1310
        %v1422 = vunpack.c.h.b16 %v1310
        %v1423 = vunpack.c.l.b16 %v1311
        %v1424 = vunpack.c.h.b16 %v1311
        %v1425 = vunpack.c.l.b16 %v1312
        %v1426 = vunpack.c.h.b16 %v1312
        %v1427 = vunpack.c.l.b16 %v1313
        %v1428 = vunpack.c.h.b16 %v1313
        %v1429 = vunpack.c.l.b16 %v1314
        %v1430 = vunpack.c.h.b16 %v1314
        %v1431 = vunpack.c.l.b16 %v1315
        %v1432 = vunpack.c.h.b16 %v1315
        %v1433 = vunpack.c.l.b16 %v1316
        %v1434 = vunpack.c.h.b16 %v1316
        %v1435 = vunpack.c.l.b16 %v1317
        %v1436 = vunpack.c.h.b16 %v1317
        %v1437 = vunpack.c.l.b16 %v1318
        %v1438 = vunpack.c.h.b16 %v1318
        %v1439 = vunpack.c.l.b16 %v1319
        %v1440 = vunpack.c.h.b16 %v1319
        %v1441 = vunpack.c.l.b16 %v1320
        %v1442 = vunpack.c.h.b16 %v1320
        %v1443 = vunpack.c.l.b16 %v1321
        %v1444 = vunpack.c.h.b16 %v1321
        %v1445 = vunpack.c.l.b16 %v1322
        %v1446 = vunpack.c.h.b16 %v1322
        %v1447 = vunpack.c.l.b16 %v1323
        %v1448 = vunpack.c.h.b16 %v1323
        %v1449 = vunpack.c.l.b16 %v1324
        %v1450 = vunpack.c.h.b16 %v1324
        %v1451 = vunpack.c.l.b16 %v1325
        %v1452 = vunpack.c.h.b16 %v1325
        %v1453 = vunpack.c.l.b16 %v1326
        %v1454 = vunpack.c.h.b16 %v1326
        %v1455 = vunpack.c.l.b16 %v1327
        %v1456 = vunpack.c.h.b16 %v1327
        %v1457 = vunpack.c.l.b16 %v1328
        %v1458 = vunpack.c.h.b16 %v1328
        %v1459 = vunpack.c.l.b16 %v1329
        %v1460 = vunpack.c.h.b16 %v1329
        %v1461 = vunpack.c.l.b16 %v1330
        %v1462 = vunpack.c.h.b16 %v1330
        %v1463 = vunpack.c.l.b16 %v1331
        %v1464 = vunpack.c.h.b16 %v1331
        %v1465 = vunpack.c.l.b16 %v1332
        %v1466 = vunpack.c.h.b16 %v1332
        %v1467 = vunpack.c.l.b16 %v1333
        %v1468 = vunpack.c.h.b16 %v1333
        %v1469 = vunpack.c.l.b16 %v1334
        %v1470 = vunpack.c.h.b16 %v1334
        %v1471 = vunpack.c.l.b16 %v1335
        %v1472 = vunpack.c.h.b16 %v1335
        %v1473 = vunpack.c.l.b16 %v1336
        %v1474 = vunpack.c.h.b16 %v1336
        %v1475 = vunpack.c.l.b16 %v1337
        %v1476 = vunpack.c.h.b16 %v1337
        %v1477 = vunpack.c.l.b16 %v1338
        %v1478 = vunpack.c.h.b16 %v1338
        %v1479 = vunpack.c.l.b16 %v1339
        %v1480 = vunpack.c.h.b16 %v1339
        %v1481 = vunpack.c.l.b16 %v1340
        %v1482 = vunpack.c.h.b16 %v1340
        %v1483 = vunpack.c.l.b16 %v1341
        %v1484 = vunpack.c.h.b16 %v1341
        %v1485 = vunpack.c.l.b16 %v1342
        %v1486 = vunpack.c.h.b16 %v1342
        %v1487 = vunpack.c.l.b16 %v1343
        %v1488 = vunpack.c.h.b16 %v1343
        %v1489 = vunpack.c.l.b16 %v1344
        %v1490 = vunpack.c.h.b16 %v1344
        %v1491 = vunpack.c.l.b16 %v1345
        %v1492 = vunpack.c.h.b16 %v1345
        %v1493 = vunpack.c.l.b16 %v1346
        %v1494 = vunpack.c.h.b16 %v1346
        %v1495 = vunpack.c.l.b16 %v1347
        %v1496 = vunpack.c.h.b16 %v1347
        %v1497 = vunpack.c.l.b16 %v1348
        %v1498 = vunpack.c.h.b16 %v1348
        %v1499 = vpack.c.b16 %v1405, %v1403
        %v1500 = vpack.c.b16 %v1406, %v1404
        %v1501 = vpack.c.b16 %v1409, %v1407
        %v1502 = vpack.c.b16 %v1410, %v1408
        %v1503 = vpack.c.b16 %v1413, %v1411
        %v1504 = vpack.c.b16 %v1414, %v1412
        %v1505 = vpack.c.b16 %v1417, %v1415
        %v1506 = vpack.c.b16 %v1418, %v1416
        %v1507 = vpack.c.b16 %v1421, %v1419
        %v1508 = vpack.c.b16 %v1422, %v1420
        %v1509 = vpack.c.b16 %v1425, %v1423
        %v1510 = vpack.c.b16 %v1426, %v1424
        %v1511 = vpack.c.b16 %v1429, %v1427
        %v1512 = vpack.c.b16 %v1430, %v1428
        %v1513 = vpack.c.b16 %v1433, %v1431
        %v1514 = vpack.c.b16 %v1434, %v1432
        %v1515 = vpack.c.b16 %v1437, %v1435
        %v1516 = vpack.c.b16 %v1438, %v1436
        %v1517 = vpack.c.b16 %v1441, %v1439
        %v1518 = vpack.c.b16 %v1442, %v1440
        %v1519 = vpack.c.b16 %v1445, %v1443
        %v1520 = vpack.c.b16 %v1446, %v1444
        %v1521 = vpack.c.b16 %v1449, %v1447
        %v1522 = vpack.c.b16 %v1450, %v1448
        %v1523 = vpack.c.b16 %v1453, %v1451
        %v1524 = vpack.c.b16 %v1454, %v1452
        %v1525 = vpack.c.b16 %v1457, %v1455
        %v1526 = vpack.c.b16 %v1458, %v1456
        %v1527 = vpack.c.b16 %v1461, %v1459
        %v1528 = vpack.c.b16 %v1462, %v1460
        %v1529 = vpack.c.b16 %v1465, %v1463
        %v1530 = vpack.c.b16 %v1466, %v1464
        %v1531 = vpack.c.b16 %v1469, %v1467
        %v1532 = vpack.c.b16 %v1470, %v1468
        %v1533 = vpack.c.b16 %v1473, %v1471
        %v1534 = vpack.c.b16 %v1474, %v1472
        %v1535 = vpack.c.b16 %v1477, %v1475
        %v1536 = vpack.c.b16 %v1478, %v1476
        %v1537 = vpack.c.b16 %v1481, %v1479
        %v1538 = vpack.c.b16 %v1482, %v1480
        %v1539 = vpack.c.b16 %v1485, %v1483
        %v1540 = vpack.c.b16 %v1486, %v1484
        %v1541 = vpack.c.b16 %v1489, %v1487
        %v1542 = vpack.c.b16 %v1490, %v1488
        %v1543 = vpack.c.b16 %v1493, %v1491
        %v1544 = vpack.c.b16 %v1494, %v1492
        %v1545 = vpack.c.b16 %v1497, %v1495
        %v1546 = vpack.c.b16 %v1498, %v1496
        %1595 = vmatprep.subr.bf16.mxu0 %v1514
        %1596 = vmatpush1.bf16.msra.mxu0 %v1513
        %1597 = vmatprep.subr.bf16.mxu0 %v1512
        %1598 = vmatpush1.bf16.msra.mxu0 %v1511
        %1599 = vmatprep.subr.bf16.mxu0 %v1510
        %1600 = vmatpush1.bf16.msra.mxu0 %v1509
        %1601 = vmatprep.subr.bf16.mxu0 %v1508
        %1602 = vmatpush1.bf16.msra.mxu0 %v1507
        %1603 = vmatprep.subr.bf16.mxu0 %v1506
        %1604 = vmatpush1.bf16.msra.mxu0 %v1505
        %1605 = vmatprep.subr.bf16.mxu0 %v1504
        %1606 = vmatpush1.bf16.msra.mxu0 %v1503
        %1607 = vmatprep.subr.bf16.mxu0 %v1502
        %1608 = vmatpush1.bf16.msra.mxu0 %v1501
        %1609 = vmatprep.subr.bf16.mxu0 %v1500
        %1610 = vmatpush1.bf16.msra.mxu0 %v1499
        %1611 = vmatprep.subr.bf16.mxu0 %v1530
        %1612 = vmatpush2.bf16.msra.mxu0 %v1529
        %1613 = vmatprep.subr.bf16.mxu0 %v1528
        %1614 = vmatpush2.bf16.msra.mxu0 %v1527
        %1615 = vmatprep.subr.bf16.mxu0 %v1526
        %1616 = vmatpush2.bf16.msra.mxu0 %v1525
        %1617 = vmatprep.subr.bf16.mxu0 %v1524
        %1618 = vmatpush2.bf16.msra.mxu0 %v1523
        %1619 = vmatprep.subr.bf16.mxu0 %v1522
        %1620 = vmatpush2.bf16.msra.mxu0 %v1521
        %1621 = vmatprep.subr.bf16.mxu0 %v1520
        %1622 = vmatpush2.bf16.msra.mxu0 %v1519
        %1623 = vmatprep.subr.bf16.mxu0 %v1518
        %1624 = vmatpush2.bf16.msra.mxu0 %v1517
        %1625 = vmatprep.subr.bf16.mxu0 %v1516
        %1626 = vmatpush2.bf16.msra.mxu0 %v1515
        %1627 = vmatprep.mubr.bf16.mxu0 %v894
        %1628 = vmatmul.mubr.bf16.gmra.mxu0 %v893
        %v1629 = vpop.f32.mrf.mxu0
        %v1630 = vadd.f32 0.0, %v1629
        %v1631 = vpop.f32.mrf.mxu0
        %v1632 = vadd.f32 0.0, %v1631
        %v1633 = vpop.f32.mrf.mxu0
        %v1634 = vadd.f32 0.0, %v1633
        %v1635 = vpop.f32.mrf.mxu0
        %v1636 = vadd.f32 0.0, %v1635
        %1637 = vmatprep.mubr.bf16.mxu0 %v897
        %1638 = vmatmul.mubr.bf16.gmra.mxu0 %v896
        %v1639 = vpop.f32.mrf.mxu0
        %v1640 = vadd.f32 0.0, %v1639
        %v1641 = vpop.f32.mrf.mxu0
        %v1642 = vadd.f32 0.0, %v1641
        %v1643 = vpop.f32.mrf.mxu0
        %v1644 = vadd.f32 0.0, %v1643
        %v1645 = vpop.f32.mrf.mxu0
        %v1646 = vadd.f32 0.0, %v1645
        %1647 = vmatprep.mubr.bf16.mxu0 %v900
        %1648 = vmatmul.mubr.bf16.gmra.mxu0 %v899
        %v1649 = vpop.f32.mrf.mxu0
        %v1650 = vadd.f32 0.0, %v1649
        %v1651 = vpop.f32.mrf.mxu0
        %v1652 = vadd.f32 0.0, %v1651
        %v1653 = vpop.f32.mrf.mxu0
        %v1654 = vadd.f32 0.0, %v1653
        %v1655 = vpop.f32.mrf.mxu0
        %v1656 = vadd.f32 0.0, %v1655
        %1657 = vmatprep.mubr.bf16.mxu0 %v1350
        %1658 = vmatmul.mubr.bf16.gmra.mxu0 %v1349
        %v1659 = vpop.f32.mrf.mxu0
        %v1660 = vadd.f32 0.0, %v1659
        %v1661 = vpop.f32.mrf.mxu0
        %v1662 = vadd.f32 0.0, %v1661
        %v1663 = vpop.f32.mrf.mxu0
        %v1664 = vadd.f32 0.0, %v1663
        %v1665 = vpop.f32.mrf.mxu0
        %v1666 = vadd.f32 0.0, %v1665
        %1667 = vdwg.mxu0
        %1668 = vmatprep.subr.bf16.mxu0 %v1546
        %1669 = vmatpush1.bf16.msra.mxu0 %v1545
        %1670 = vmatprep.subr.bf16.mxu0 %v1544
        %1671 = vmatpush1.bf16.msra.mxu0 %v1543
        %1672 = vmatprep.subr.bf16.mxu0 %v1542
        %1673 = vmatpush1.bf16.msra.mxu0 %v1541
        %1674 = vmatprep.subr.bf16.mxu0 %v1540
        %1675 = vmatpush1.bf16.msra.mxu0 %v1539
        %1676 = vmatprep.subr.bf16.mxu0 %v1538
        %1677 = vmatpush1.bf16.msra.mxu0 %v1537
        %1678 = vmatprep.subr.bf16.mxu0 %v1536
        %1679 = vmatpush1.bf16.msra.mxu0 %v1535
        %1680 = vmatprep.subr.bf16.mxu0 %v1534
        %1681 = vmatpush1.bf16.msra.mxu0 %v1533
        %1682 = vmatprep.subr.bf16.mxu0 %v1532
        %1683 = vmatpush1.bf16.msra.mxu0 %v1531
        %1684 = vmatprep.subr.bf16.mxu0 0
        %1685 = vmatpush2.bf16.msra.mxu0 0
        %1686 = vmatprep.subr.bf16.mxu0 0
        %1687 = vmatpush2.bf16.msra.mxu0 0
        %1688 = vmatprep.subr.bf16.mxu0 0
        %1689 = vmatpush2.bf16.msra.mxu0 0
        %1690 = vmatprep.subr.bf16.mxu0 0
        %1691 = vmatpush2.bf16.msra.mxu0 0
        %1692 = vmatprep.subr.bf16.mxu0 0
        %1693 = vmatpush2.bf16.msra.mxu0 0
        %1694 = vmatprep.subr.bf16.mxu0 0
        %1695 = vmatpush2.bf16.msra.mxu0 0
        %1696 = vmatprep.subr.bf16.mxu0 0
        %1697 = vmatpush2.bf16.msra.mxu0 0
        %1698 = vmatprep.subr.bf16.mxu0 0
        %1699 = vmatpush2.bf16.msra.mxu0 0
        %1700 = vmatprep.mubr.bf16.mxu0 0
        %1701 = vmatmul.mubr.bf16.gmra.mxu0 %v895
        %v1702 = vpop.f32.mrf.mxu0
        %v1703 = vadd.f32 %v1630, %v1702
        %v1704 = vpop.f32.mrf.mxu0
        %v1705 = vadd.f32 %v1632, %v1704
        %v1706 = vpop.f32.mrf.mxu0
        %v1707 = vadd.f32 %v1634, %v1706
        %v1708 = vpop.f32.mrf.mxu0
        %v1709 = vadd.f32 %v1636, %v1708
        %1710 = vmatprep.mubr.bf16.mxu0 0
        %1711 = vmatmul.mubr.bf16.gmra.mxu0 %v898
        %v1712 = vpop.f32.mrf.mxu0
        %v1713 = vadd.f32 %v1640, %v1712
        %v1714 = vpop.f32.mrf.mxu0
        %v1715 = vadd.f32 %v1642, %v1714
        %v1716 = vpop.f32.mrf.mxu0
        %v1717 = vadd.f32 %v1644, %v1716
        %v1718 = vpop.f32.mrf.mxu0
        %v1719 = vadd.f32 %v1646, %v1718
        %1720 = vmatprep.mubr.bf16.mxu0 0
        %1721 = vmatmul.mubr.bf16.gmra.mxu0 %v901
        %v1722 = vpop.f32.mrf.mxu0
        %v1723 = vadd.f32 %v1650, %v1722
        %v1724 = vpop.f32.mrf.mxu0
        %v1725 = vadd.f32 %v1652, %v1724
        %v1726 = vpop.f32.mrf.mxu0
        %v1727 = vadd.f32 %v1654, %v1726
        %v1728 = vpop.f32.mrf.mxu0
        %v1729 = vadd.f32 %v1656, %v1728
        %1730 = vmatprep.mubr.bf16.mxu0 0
        %1731 = vmatmul.mubr.bf16.gmra.mxu0 %v1351
        %v1732 = vpop.f32.mrf.mxu0
        %v1733 = vadd.f32 %v1660, %v1732
        %v1734 = vpop.f32.mrf.mxu0
        %v1735 = vadd.f32 %v1662, %v1734
        %v1736 = vpop.f32.mrf.mxu0
        %v1737 = vadd.f32 %v1664, %v1736
        %v1738 = vpop.f32.mrf.mxu0
        %v1739 = vadd.f32 %v1666, %v1738
        %1740 = vdwg.mxu0
        %v1741 = vadd.f32 %v1262, %v1703
        %v1742 = vadd.f32 %v1264, %v1705
        %v1743 = vadd.f32 %v1266, %v1707
        %v1744 = vadd.f32 %v1268, %v1709
        %v1745 = vadd.f32 %v1272, %v1713
        %v1746 = vadd.f32 %v1274, %v1715
        %v1747 = vadd.f32 %v1276, %v1717
        %v1748 = vadd.f32 %v1278, %v1719
        %v1749 = vadd.f32 %v1282, %v1723
        %v1750 = vadd.f32 %v1284, %v1725
        %v1751 = vadd.f32 %v1286, %v1727
        %v1752 = vadd.f32 %v1288, %v1729
        %v1753 = vadd.f32 %v1292, %v1733
        %v1754 = vadd.f32 %v1294, %v1735
        %v1755 = vadd.f32 %v1296, %v1737
        %v1756 = vadd.f32 %v1298, %v1739
        %v1758 = vlaneseq
        %v1759 = vshrl.u32 %v1758, 7
        %v1760 = vsub.s32 0, %v1759
        %v1761 = vrot.slane %v328, %v1760
        %v1762 = vlaneseq
        %v1763 = vshrl.u32 %v1762, 7
        %v1764 = vsub.s32 1, %v1763
        %v1765 = vrot.slane %v328, %v1764
        %v1768 = vadd.f32 %v1741, %v1761
        %v1769 = vadd.f32 %v1742, %v1765
        %v1770 = vadd.f32 %v1743, %v1761
        %v1771 = vadd.f32 %v1744, %v1765
        %v1772 = vadd.f32 %v1745, %v1761
        %v1773 = vadd.f32 %v1746, %v1765
        %v1774 = vadd.f32 %v1747, %v1761
        %v1775 = vadd.f32 %v1748, %v1765
        %v1776 = vadd.f32 %v1749, %v1761
        %v1777 = vadd.f32 %v1750, %v1765
        %v1778 = vadd.f32 %v1751, %v1761
        %v1779 = vadd.f32 %v1752, %v1765
        %v1780 = vadd.f32 %v1753, %v1761
        %v1781 = vadd.f32 %v1754, %v1765
        %v1782 = vadd.f32 %v1755, %v1761
        %v1783 = vadd.f32 %v1756, %v1765
        %v1784 = vld [vmem:[%s240] sm:$0xff]
        %v1785 = vld [vmem:[%s240 + $0x8] sm:$0xff]
        %v1786 = vld [vmem:[%s240 + $0x10] sm:$0xff]
        %v1787 = vld [vmem:[%s240 + $0x18] sm:$0xff]
        %v1788 = vunpack.c.l.bf16 %v1784
        %v1789 = vunpack.c.h.bf16 %v1784
        %v1790 = vunpack.c.l.bf16 %v1785
        %v1791 = vunpack.c.h.bf16 %v1785
        %v1792 = vunpack.c.l.bf16 %v1786
        %v1793 = vunpack.c.h.bf16 %v1786
        %v1794 = vunpack.c.l.bf16 %v1787
        %v1795 = vunpack.c.h.bf16 %v1787
        %v1796 = vadd.f32 %v1768, %v1788
        %v1797 = vadd.f32 %v1769, %v1789
        %v1798 = vadd.f32 %v1770, %v1788
        %v1799 = vadd.f32 %v1771, %v1789
        %v1800 = vadd.f32 %v1772, %v1790
        %v1801 = vadd.f32 %v1773, %v1791
        %v1802 = vadd.f32 %v1774, %v1790
        %v1803 = vadd.f32 %v1775, %v1791
        %v1804 = vadd.f32 %v1776, %v1792
        %v1805 = vadd.f32 %v1777, %v1793
        %v1806 = vadd.f32 %v1778, %v1792
        %v1807 = vadd.f32 %v1779, %v1793
        %v1808 = vadd.f32 %v1780, %v1794
        %v1809 = vadd.f32 %v1781, %v1795
        %v1810 = vadd.f32 %v1782, %v1794
        %v1811 = vadd.f32 %v1783, %v1795
        %v1812 = vmax.f32 %v1796, 0.0
        %v1813 = vmax.f32 %v1797, 0.0
        %v1814 = vmax.f32 %v1798, 0.0
        %v1815 = vmax.f32 %v1799, 0.0
        %v1816 = vmax.f32 %v1800, 0.0
        %v1817 = vmax.f32 %v1801, 0.0
        %v1818 = vmax.f32 %v1802, 0.0
        %v1819 = vmax.f32 %v1803, 0.0
        %v1820 = vmax.f32 %v1804, 0.0
        %v1821 = vmax.f32 %v1805, 0.0
        %v1822 = vmax.f32 %v1806, 0.0
        %v1823 = vmax.f32 %v1807, 0.0
        %v1824 = vmax.f32 %v1808, 0.0
        %v1825 = vmax.f32 %v1809, 0.0
        %v1826 = vmax.f32 %v1810, 0.0
        %v1827 = vmax.f32 %v1811, 0.0
        %v1828 = vpack.c.bf16 %v1812, %v1812
        %v1829 = vpack.c.bf16 %v1813, %v1813
        %v1830 = vpack.c.bf16 %v1814, %v1814
        %v1831 = vpack.c.bf16 %v1815, %v1815
        %v1832 = vpack.c.bf16 %v1816, %v1816
        %v1833 = vpack.c.bf16 %v1817, %v1817
        %v1834 = vpack.c.bf16 %v1818, %v1818
        %v1835 = vpack.c.bf16 %v1819, %v1819
        %v1836 = vpack.c.bf16 %v1820, %v1820
        %v1837 = vpack.c.bf16 %v1821, %v1821
        %v1838 = vpack.c.bf16 %v1822, %v1822
        %v1839 = vpack.c.bf16 %v1823, %v1823
        %v1840 = vpack.c.bf16 %v1824, %v1824
        %v1841 = vpack.c.bf16 %v1825, %v1825
        %v1842 = vpack.c.bf16 %v1826, %v1826
        %v1843 = vpack.c.bf16 %v1827, %v1827
        %v1860 = vunpack.c.l.b16 %v1828
        %v1861 = vunpack.c.l.b16 %v1829
        %v1862 = vunpack.c.l.b16 %v1830
        %v1863 = vunpack.c.l.b16 %v1831
        %v1864 = vunpack.c.l.b16 %v1832
        %v1865 = vunpack.c.l.b16 %v1833
        %v1866 = vunpack.c.l.b16 %v1834
        %v1867 = vunpack.c.l.b16 %v1835
        %v1868 = vunpack.c.l.b16 %v1836
        %v1869 = vunpack.c.l.b16 %v1837
        %v1870 = vunpack.c.l.b16 %v1838
        %v1871 = vunpack.c.l.b16 %v1839
        %v1872 = vunpack.c.l.b16 %v1840
        %v1873 = vunpack.c.l.b16 %v1841
        %v1874 = vunpack.c.l.b16 %v1842
        %v1875 = vunpack.c.l.b16 %v1843
        %v1876 = vpack.c.b16 %v1861, %v1860
        %v1877 = vpack.c.b16 %v1863, %v1862
        %v1878 = vpack.c.b16 %v1865, %v1864
        %v1879 = vpack.c.b16 %v1867, %v1866
        %v1880 = vpack.c.b16 %v1869, %v1868
        %v1881 = vpack.c.b16 %v1871, %v1870
        %v1882 = vpack.c.b16 %v1873, %v1872
        %v1883 = vpack.c.b16 %v1875, %v1874
        %1892 = vst [vmem:[%s245] sm:$0xff] %v1876
        %1893 = vst [vmem:[%s245 + $0x8] sm:$0xff] %v1876
        %1894 = vst [vmem:[%s245 + $0x10] sm:$0xff] %v1877
        %1895 = vst [vmem:[%s245 + $0x18] sm:$0xff] %v1877
        %1896 = vst [vmem:[%s245 + $0x20] sm:$0xff] %v1878
        %1897 = vst [vmem:[%s245 + $0x28] sm:$0xff] %v1878
        %1898 = vst [vmem:[%s245 + $0x30] sm:$0xff] %v1879
        %1899 = vst [vmem:[%s245 + $0x38] sm:$0xff] %v1879
        %1900 = vst [vmem:[%s245 + $0x40] sm:$0xff] %v1880
        %1901 = vst [vmem:[%s245 + $0x48] sm:$0xff] %v1880
        %1902 = vst [vmem:[%s245 + $0x50] sm:$0xff] %v1881
        %1903 = vst [vmem:[%s245 + $0x58] sm:$0xff] %v1881
        %1904 = vst [vmem:[%s245 + $0x60] sm:$0xff] %v1882
        %1905 = vst [vmem:[%s245 + $0x68] sm:$0xff] %v1882
        %1906 = vst [vmem:[%s245 + $0x70] sm:$0xff] %v1883
        %1907 = vst [vmem:[%s245 + $0x78] sm:$0xff] %v1883
        %p1908 = scmp.lt.s32.totalorder %s17, 1
        %s1909 = scalar_select %p1908, %s17, 1
        %s1910 = smul.addr %s1909, 32
        %s1911 = smul.addr %s1910, 4
        %s1912 = scalar_lea.vmem %s4, %s1911
        // Predicated region
        $region45: #{_lambda_.3} parent=35 // pred_check
          %p1913 = pneg %p129
        $region46: #{_lambda_.3} parent=35 // pred_check_branch
          %1915 = sbr.rel (%p1913) target = $region48
        $region47: #{_lambda_.3} parent=35 // pred_region
          _
        $region48: #{_lambda_.3} parent=35 // pred_fallthru
          _
      $region36: #{_lambda_.3} parent=5 // pred_fallthru
        _
      %p1916 = scmp.le.s32.totalorder 2, %s12
      // Predicated region
      $region49: #{_lambda_.3} parent=5 // pred_check
        %p1917 = pneg %p1916
      $region50: #{_lambda_.3} parent=5 // pred_check_branch
        %1919 = sbr.rel (%p1917) target = $region52
      $region51: #{_lambda_.3} parent=5 // pred_region
        %s1920 = ssub.s32 %s12, 2
        // Predicated region
        $region53: #{_lambda_.3} parent=51 // pred_check
          %p1921 = pneg %p135
        $region54: #{_lambda_.3} parent=51 // pred_check_branch
          %1923 = sbr.rel (%p1921) target = $region56
        $region55: #{_lambda_.3} parent=51 // pred_region
          %p1924 = scmp.lt.s32.totalorder %s18, 1
          %s1925 = scalar_select %p1924, %s18, 1
          %s1926 = smul.addr %s1925, 32
          %s1927 = smul.addr %s1926, 4
          %s1928 = scalar_lea.vmem %s4, %s1927
        $region56: #{_lambda_.3} parent=51 // pred_fallthru
          _
      $region52: #{_lambda_.3} parent=5 // pred_fallthru
        _
    $region6: #{_lambda_.3} parent=1 // loop_footer
      %s16 = sadd.s32 1, %s12
    $region7: #{_lambda_.3} parent=1 // loop_footer_branch
      %11 = sbr.rel target = $region3
    $region8: #{_lambda_.3} parent=1 // loop_exit
      _
    %1929 = vsyncpa [#allocation3], 1
    %s1930 = scalar_lea.sflag [#allocation3], 1
    %1931 = vsyncpa %s1930, 1
    %1932 = vsyncpa [#allocation5], 1

// kernel: _lambda_.4
$region0: #{_lambda_.4}
  #allocation0 [shape = 'u32[]', space=smem, size = 0x4, offset = 0x4, fixed_abs, tag = 'smem constant byte address 0x4 - core index']
  #allocation1 [shape = 'u32[144,128]{1,0:T(1,128)}', space=vmem, size = 0x12000, scoped, tag = 'internal scratch']
  %s0 = inlined_call_operand.vmem [shape: bf16[2,16,16,128], index: 0, kind: input, shape index: {}]
  %s1 = inlined_call_operand.vmem [shape: bf16[3,384,256], index: 1, kind: input, shape index: {}]
  %s2 = inlined_call_operand.vmem [shape: f32[1,256], index: 2, kind: input, shape index: {}]
  %s3 = inlined_call_operand.vmem [shape: bf16[2,8,16,256], index: 3, kind: input, shape index: {}]
  %s4 = inlined_call_operand.vmem [shape: bf16[2,16,16,256], index: 4, kind: output, shape index: {}]
  %s5 = sld [smem:[#allocation0]]
  $region49: #{_lambda_.4} parent=0
    _
  %s7 = ssub.s32 1, %s5
  %s8 = scalar_select 0, %s7, %s5
  loop: start=0, step=1, limit=4
  $region2: #{_lambda_.4} parent=0 // loop_pre_header
    _
  $region3: #{_lambda_.4} parent=0 // loop_header
    %s10 = sphi 0, %s14
    %p11 = scmp.ge.s32.totalorder %s10, 4
    %s20 = sphi 0, %s22
    %s23 = sphi 0, %s20
    %s24 = sphi 0, %s23
    %s40 = sphi 0, %s24
    %s44 = sphi 0, %s44
    %s46 = sphi 0, %s44
    %s47 = sphi 0, %s46
    %s61 = sphi 0, %s47
    %s65 = sphi 0, %s65
    %s67 = sphi 0, %s65
    %s68 = sphi 0, %s67
    %s82 = sphi 0, %s68
    %s88 = sphi 0, %s90
    %s91 = sphi 0, %s88
    %s92 = sphi 0, %s91
    %s108 = sphi 0, %s92
    %s114 = sphi 0, %s116
    %s117 = sphi 0, %s114
    %s118 = sphi 0, %s117
    %s134 = sphi 0, %s118
  $region4: #{_lambda_.4} parent=0 // loop_header_branch
    %13 = sbr.rel (%p11) target = $region8
  $region5: #{_lambda_.4} parent=0 // loop_body
    %s15 = ssub.s32 %s10, 1
    %s16 = ssub.s32 %s10, 2
    %s17 = sadd.s32 %s10, 1
    %s18 = ssub.s32 %s10, %s17
    %p19 = scmp.eq.s32.totalorder %s18, 0
    %s21 = sadd.s32 %s20, 1
    %s22 = scalar_select %p19, %s20, %s21
    %p25 = pneg %p19
    %p26 = scmp.eq.s32.totalorder %s10, 1
    %p27 = por %p25, %p26
    %p28 = scmp.ne.s32.totalorder %s20, %s23
    %p29 = scmp.eq.s32.totalorder %s10, 0
    %p30 = por %p28, %p29
    %p31 = scmp.ne.s32.totalorder %s20, %s23
    %p32 = scmp.eq.s32.totalorder %s15, 1
    %p33 = por %p31, %p32
    %p34 = scmp.ne.s32.totalorder %s23, %s24
    %p35 = scmp.eq.s32.totalorder %s15, 0
    %p36 = por %p34, %p35
    %p37 = scmp.ne.s32.totalorder %s23, %s24
    %p38 = scmp.eq.s32.totalorder %s16, 1
    %p39 = por %p37, %p38
    %p41 = scmp.ne.s32.totalorder %s24, %s40
    %p42 = scmp.eq.s32.totalorder %s16, 0
    %p43 = por %p41, %p42
    %s45 = sadd.s32 %s44, 1
    %p48 = scmp.eq.s32.totalorder %s10, 1
    %p49 = scmp.ne.s32.totalorder %s44, %s46
    %p50 = scmp.eq.s32.totalorder %s10, 0
    %p51 = por %p49, %p50
    %p52 = scmp.ne.s32.totalorder %s44, %s46
    %p53 = scmp.eq.s32.totalorder %s15, 1
    %p54 = por %p52, %p53
    %p55 = scmp.ne.s32.totalorder %s46, %s47
    %p56 = scmp.eq.s32.totalorder %s15, 0
    %p57 = por %p55, %p56
    %p58 = scmp.ne.s32.totalorder %s46, %s47
    %p59 = scmp.eq.s32.totalorder %s16, 1
    %p60 = por %p58, %p59
    %p62 = scmp.ne.s32.totalorder %s47, %s61
    %p63 = scmp.eq.s32.totalorder %s16, 0
    %p64 = por %p62, %p63
    %s66 = sadd.s32 %s65, 1
    %p69 = scmp.eq.s32.totalorder %s10, 1
    %p70 = scmp.ne.s32.totalorder %s65, %s67
    %p71 = scmp.eq.s32.totalorder %s10, 0
    %p72 = por %p70, %p71
    %p73 = scmp.ne.s32.totalorder %s65, %s67
    %p74 = scmp.eq.s32.totalorder %s15, 1
    %p75 = por %p73, %p74
    %p76 = scmp.ne.s32.totalorder %s67, %s68
    %p77 = scmp.eq.s32.totalorder %s15, 0
    %p78 = por %p76, %p77
    %p79 = scmp.ne.s32.totalorder %s67, %s68
    %p80 = scmp.eq.s32.totalorder %s16, 1
    %p81 = por %p79, %p80
    %p83 = scmp.ne.s32.totalorder %s68, %s82
    %p84 = scmp.eq.s32.totalorder %s16, 0
    %p85 = por %p83, %p84
    %s86 = ssub.s32 %s10, %s17
    %p87 = scmp.eq.s32.totalorder %s86, 0
    %s89 = sadd.s32 %s88, 1
    %s90 = scalar_select %p87, %s88, %s89
    %p93 = pneg %p87
    %p94 = scmp.eq.s32.totalorder %s10, 1
    %p95 = por %p93, %p94
    %p96 = scmp.ne.s32.totalorder %s88, %s91
    %p97 = scmp.eq.s32.totalorder %s10, 0
    %p98 = por %p96, %p97
    %p99 = scmp.ne.s32.totalorder %s88, %s91
    %p100 = scmp.eq.s32.totalorder %s15, 1
    %p101 = por %p99, %p100
    %p102 = scmp.ne.s32.totalorder %s91, %s92
    %p103 = scmp.eq.s32.totalorder %s15, 0
    %p104 = por %p102, %p103
    %p105 = scmp.ne.s32.totalorder %s91, %s92
    %p106 = scmp.eq.s32.totalorder %s16, 1
    %p107 = por %p105, %p106
    %p109 = scmp.ne.s32.totalorder %s92, %s108
    %p110 = scmp.eq.s32.totalorder %s16, 0
    %p111 = por %p109, %p110
    %s112 = ssub.s32 %s10, %s17
    %p113 = scmp.eq.s32.totalorder %s112, 0
    %s115 = sadd.s32 %s114, 1
    %s116 = scalar_select %p113, %s114, %s115
    %p119 = pneg %p113
    %p120 = scmp.eq.s32.totalorder %s10, 1
    %p121 = por %p119, %p120
    %p122 = scmp.ne.s32.totalorder %s114, %s117
    %p123 = scmp.eq.s32.totalorder %s10, 0
    %p124 = por %p122, %p123
    %p125 = scmp.ne.s32.totalorder %s114, %s117
    %p126 = scmp.eq.s32.totalorder %s15, 1
    %p127 = por %p125, %p126
    %p128 = scmp.ne.s32.totalorder %s117, %s118
    %p129 = scmp.eq.s32.totalorder %s15, 0
    %p130 = por %p128, %p129
    %p131 = scmp.ne.s32.totalorder %s117, %s118
    %p132 = scmp.eq.s32.totalorder %s16, 1
    %p133 = por %p131, %p132
    %p135 = scmp.ne.s32.totalorder %s118, %s134
    %p136 = scmp.eq.s32.totalorder %s16, 0
    %p137 = por %p135, %p136
    %p138 = scmp.le.s32.totalorder 1, %s10
    %p139 = scmp.lt.s32.totalorder %s10, 3
    %p140 = pnand %p138, %p139
    %p141 = pneg %p140
    // Predicated region
    $region9: #{_lambda_.4} parent=5 // pred_check
      _
    $region10: #{_lambda_.4} parent=5 // pred_check_branch
      %143 = sbr.rel (%p140) target = $region12
    $region11: #{_lambda_.4} parent=5 // pred_region
      %s144 = ssub.s32 %s10, 1
      // Predicated region
      $region13: #{_lambda_.4} parent=11 // pred_check
        %p145 = pneg %p57
      $region14: #{_lambda_.4} parent=11 // pred_check_branch
        %147 = sbr.rel (%p145) target = $region16
      $region15: #{_lambda_.4} parent=11 // pred_region
        _
      $region16: #{_lambda_.4} parent=11 // pred_fallthru
        _
      // Predicated region
      $region17: #{_lambda_.4} parent=11 // pred_check
        %p148 = pneg %p78
      $region18: #{_lambda_.4} parent=11 // pred_check_branch
        %150 = sbr.rel (%p148) target = $region20
      $region19: #{_lambda_.4} parent=11 // pred_region
        _
      $region20: #{_lambda_.4} parent=11 // pred_fallthru
        _
    $region12: #{_lambda_.4} parent=5 // pred_fallthru
      _
    %p151 = scmp.lt.s32.totalorder %s10, 2
    // Predicated region
    $region21: #{_lambda_.4} parent=5 // pred_check
      %p152 = pneg %p151
    $region22: #{_lambda_.4} parent=5 // pred_check_branch
      %154 = sbr.rel (%p152) target = $region24
    $region23: #{_lambda_.4} parent=5 // pred_region
      // Predicated region
      $region25: #{_lambda_.4} parent=23 // pred_check
        %p155 = pneg %p30
      $region26: #{_lambda_.4} parent=23 // pred_check_branch
        %157 = sbr.rel (%p155) target = $region28
      $region27: #{_lambda_.4} parent=23 // pred_region
        %p158 = scmp.lt.s32.totalorder %s10, 1
        %s159 = scalar_select %p158, %s10, 1
        %s160 = smul.addr %s159, 32
        %s161 = smul.addr %s160, 4
        %s162 = scalar_lea.vmem %s0, %s161
      $region28: #{_lambda_.4} parent=23 // pred_fallthru
        _
      // Predicated region
      $region29: #{_lambda_.4} parent=23 // pred_check
        %p163 = pneg %p98
      $region30: #{_lambda_.4} parent=23 // pred_check_branch
        %165 = sbr.rel (%p163) target = $region32
      $region31: #{_lambda_.4} parent=23 // pred_region
        %p166 = scmp.lt.s32.totalorder %s10, 1
        %s167 = scalar_select %p166, %s10, 1
        %s168 = smul.addr %s167, 32
        %s169 = smul.addr %s168, 4
        %s170 = scalar_lea.vmem %s3, %s169
      $region32: #{_lambda_.4} parent=23 // pred_fallthru
        _
    $region24: #{_lambda_.4} parent=5 // pred_fallthru
      _
    %p171 = scmp.le.s32.totalorder 1, %s10
    %p172 = scmp.lt.s32.totalorder %s10, 3
    %p173 = pnand %p171, %p172
    %p174 = pneg %p173
    // Predicated region
    $region33: #{_lambda_.4} parent=5 // pred_check
      _
    $region34: #{_lambda_.4} parent=5 // pred_check_branch
      %176 = sbr.rel (%p173) target = $region36
    $region35: #{_lambda_.4} parent=5 // pred_region
      %s177 = ssub.s32 %s10, 1
      %p178 = scmp.lt.s32.totalorder %s15, 1
      %s179 = scalar_select %p178, %s15, 1
      %s180 = smul.addr %s179, 32
      %s181 = smul.addr %s180, 4
      %s182 = scalar_lea.vmem %s0, %s181
      %p183 = pneg %p36
      %p184 = pneg %p33
      %p185 = pneg %p57
      %p186 = pneg %p54
      %p187 = pneg %p78
      %p188 = pneg %p75
      %p189 = scmp.lt.s32.totalorder %s15, 1
      %s190 = scalar_select %p189, %s15, 1
      %s191 = smul.addr %s190, 32
      %s192 = smul.addr %s191, 4
      %s193 = scalar_lea.vmem %s3, %s192
      %p194 = pneg %p104
      %p195 = pneg %p101
      %p196 = pneg %p130
      %p197 = pneg %p127
      %p198 = scmp.lt.s32.totalorder %s15, 1
      %s199 = scalar_select %p198, %s15, 1
      %s200 = smul.addr %s199, 64
      %s201 = smul.addr %s200, 4
      %s202 = scalar_lea.vmem %s4, %s201
      %p203 = scmp.lt.s32.totalorder %s15, 1
      %s204 = scalar_select %p203, %s15, 1
      %s205 = smul.addr %s204, 32
      %s206 = smul.addr %s205, 4
      %s207 = scalar_lea.vmem %s0, %s206
      %p208 = scmp.lt.s32.totalorder %s15, 1
      %s209 = scalar_select %p208, %s15, 1
      %s210 = smul.addr %s209, 32
      %s211 = smul.addr %s210, 4
      %s212 = scalar_lea.vmem %s3, %s211
      %p213 = scmp.lt.s32.totalorder %s15, 1
      %s214 = scalar_select %p213, %s15, 1
      %s215 = smul.addr %s214, 64
      %s216 = smul.addr %s215, 4
      %s217 = scalar_lea.vmem %s4, %s216
      %v219 = vld [vmem:[%s207] sm:$0xf]
      %v220 = vld [vmem:[%s207 + $0x4] sm:$0xf]
      %v221 = vld [vmem:[%s207 + $0x8] sm:$0xf]
      %v222 = vld [vmem:[%s207 + $0xc] sm:$0xf]
      %v223 = vld [vmem:[%s207 + $0x10] sm:$0xf]
      %v224 = vld [vmem:[%s207 + $0x14] sm:$0xf]
      %v225 = vld [vmem:[%s207 + $0x18] sm:$0xf]
      %v226 = vld [vmem:[%s207 + $0x1c] sm:$0xf]
      %v227 = vld [vmem:[%s207 + $0x20] sm:$0xf]
      %v228 = vld [vmem:[%s207 + $0x24] sm:$0xf]
      %v229 = vld [vmem:[%s207 + $0x28] sm:$0xf]
      %v230 = vld [vmem:[%s207 + $0x2c] sm:$0xf]
      %v231 = vld [vmem:[%s207 + $0x30] sm:$0xf]
      %v232 = vld [vmem:[%s207 + $0x34] sm:$0xf]
      %v233 = vld [vmem:[%s207 + $0x38] sm:$0xf]
      %v234 = vld [vmem:[%s207 + $0x3c] sm:$0xf]
      %v235 = vld [vmem:[%s207 + $0x40] sm:$0xf]
      %v236 = vld [vmem:[%s207 + $0x44] sm:$0xf]
      %v237 = vld [vmem:[%s207 + $0x48] sm:$0xf]
      %v238 = vld [vmem:[%s207 + $0x4c] sm:$0xf]
      %v239 = vld [vmem:[%s207 + $0x50] sm:$0xf]
      %v240 = vld [vmem:[%s207 + $0x54] sm:$0xf]
      %v241 = vld [vmem:[%s207 + $0x58] sm:$0xf]
      %v242 = vld [vmem:[%s207 + $0x5c] sm:$0xf]
      %v243 = vld [vmem:[%s207 + $0x60] sm:$0xf]
      %v244 = vld [vmem:[%s207 + $0x64] sm:$0xf]
      %v245 = vld [vmem:[%s207 + $0x68] sm:$0xf]
      %v246 = vld [vmem:[%s207 + $0x6c] sm:$0xf]
      %v247 = vld [vmem:[%s207 + $0x70] sm:$0xf]
      %v248 = vld [vmem:[%s207 + $0x74] sm:$0xf]
      %v249 = vld [vmem:[%s207 + $0x78] sm:$0xf]
      %v250 = vld [vmem:[%s207 + $0x7c] sm:$0xf]
      %v251 = vunpack.c.l.bf16 %v219
      %v252 = vunpack.c.l.bf16 %v220
      %v253 = vunpack.c.l.bf16 %v221
      %v254 = vunpack.c.l.bf16 %v222
      %v255 = vunpack.c.l.bf16 %v223
      %v256 = vunpack.c.l.bf16 %v224
      %v257 = vunpack.c.l.bf16 %v225
      %v258 = vunpack.c.l.bf16 %v226
      %v259 = vunpack.c.l.bf16 %v227
      %v260 = vunpack.c.l.bf16 %v228
      %v261 = vunpack.c.l.bf16 %v229
      %v262 = vunpack.c.l.bf16 %v230
      %v263 = vunpack.c.l.bf16 %v231
      %v264 = vunpack.c.l.bf16 %v232
      %v265 = vunpack.c.l.bf16 %v233
      %v266 = vunpack.c.l.bf16 %v234
      %v267 = vunpack.c.l.bf16 %v235
      %v268 = vunpack.c.l.bf16 %v236
      %v269 = vunpack.c.l.bf16 %v237
      %v270 = vunpack.c.l.bf16 %v238
      %v271 = vunpack.c.l.bf16 %v239
      %v272 = vunpack.c.l.bf16 %v240
      %v273 = vunpack.c.l.bf16 %v241
      %v274 = vunpack.c.l.bf16 %v242
      %v275 = vunpack.c.l.bf16 %v243
      %v276 = vunpack.c.l.bf16 %v244
      %v277 = vunpack.c.l.bf16 %v245
      %v278 = vunpack.c.l.bf16 %v246
      %v279 = vunpack.c.l.bf16 %v247
      %v280 = vunpack.c.l.bf16 %v248
      %v281 = vunpack.c.l.bf16 %v249
      %v282 = vunpack.c.l.bf16 %v250
      %v283 = vlaneseq
      %v284 = vshrl.u32 %v283, 7
      %v285 = vadd.s32 %v284, 8
      %vm286 = vcmp.eq.s32.totalorder %v284, 0
      %vm287 = vcmp.eq.s32.totalorder %v285, 0
      %v288 = vrot.slane %v251, 7
      %v289 = vrot.slane %v253, 7
      %v290 = vrot.slane %v255, 7
      %v291 = vrot.slane %v257, 7
      %v292 = vrot.slane %v259, 7
      %v293 = vrot.slane %v261, 7
      %v294 = vrot.slane %v263, 7
      %v295 = vrot.slane %v265, 7
      %v296 = vrot.slane %v267, 7
      %v297 = vrot.slane %v269, 7
      %v298 = vrot.slane %v271, 7
      %v299 = vrot.slane %v273, 7
      %v300 = vrot.slane %v275, 7
      %v301 = vrot.slane %v277, 7
      %v302 = vrot.slane %v279, 7
      %v303 = vrot.slane %v281, 7
      %v304 = vrot.slane %v252, 7
      %v305 = vrot.slane %v254, 7
      %v306 = vrot.slane %v256, 7
      %v307 = vrot.slane %v258, 7
      %v308 = vrot.slane %v260, 7
      %v309 = vrot.slane %v262, 7
      %v310 = vrot.slane %v264, 7
      %v311 = vrot.slane %v266, 7
      %v312 = vrot.slane %v268, 7
      %v313 = vrot.slane %v270, 7
      %v314 = vrot.slane %v272, 7
      %v315 = vrot.slane %v274, 7
      %v316 = vrot.slane %v276, 7
      %v317 = vrot.slane %v278, 7
      %v318 = vrot.slane %v280, 7
      %v319 = vrot.slane %v282, 7
      %vm320 = vcmp.lt.s32.totalorder %v284, 1
      %v321 = vsel %vm320, %v288, %v304
      %v322 = vsel %vm320, %v289, %v305
      %v323 = vsel %vm320, %v290, %v306
      %v324 = vsel %vm320, %v291, %v307
      %v325 = vsel %vm320, %v292, %v308
      %v326 = vsel %vm320, %v293, %v309
      %v327 = vsel %vm320, %v294, %v310
      %v328 = vsel %vm320, %v295, %v311
      %v329 = vsel %vm320, %v296, %v312
      %v330 = vsel %vm320, %v297, %v313
      %v331 = vsel %vm320, %v298, %v314
      %v332 = vsel %vm320, %v299, %v315
      %v333 = vsel %vm320, %v300, %v316
      %v334 = vsel %vm320, %v301, %v317
      %v335 = vsel %vm320, %v302, %v318
      %v336 = vsel %vm320, %v303, %v319
      %v337 = vsel %vm320, %v304, %v288
      %v338 = vsel %vm320, %v305, %v289
      %v339 = vsel %vm320, %v306, %v290
      %v340 = vsel %vm320, %v307, %v291
      %v341 = vsel %vm320, %v308, %v292
      %v342 = vsel %vm320, %v309, %v293
      %v343 = vsel %vm320, %v310, %v294
      %v344 = vsel %vm320, %v311, %v295
      %v345 = vsel %vm320, %v312, %v296
      %v346 = vsel %vm320, %v313, %v297
      %v347 = vsel %vm320, %v314, %v298
      %v348 = vsel %vm320, %v315, %v299
      %v349 = vsel %vm320, %v316, %v300
      %v350 = vsel %vm320, %v317, %v301
      %v351 = vsel %vm320, %v318, %v302
      %v352 = vsel %vm320, %v319, %v303
      %v353 = vsel %vm286, 0.0, 0.0
      %v354 = vsel %vm287, 0.0, 0.0
      %v355 = vsel %vm286, 0.0, %v337
      %v356 = vsel %vm287, 0.0, %v321
      %v357 = vsel %vm286, 0.0, %v338
      %v358 = vsel %vm287, 0.0, %v322
      %v359 = vsel %vm286, 0.0, %v339
      %v360 = vsel %vm287, 0.0, %v323
      %v361 = vsel %vm286, 0.0, %v340
      %v362 = vsel %vm287, 0.0, %v324
      %v363 = vsel %vm286, 0.0, %v341
      %v364 = vsel %vm287, 0.0, %v325
      %v365 = vsel %vm286, 0.0, %v342
      %v366 = vsel %vm287, 0.0, %v326
      %v367 = vsel %vm286, 0.0, %v343
      %v368 = vsel %vm287, 0.0, %v327
      %v369 = vsel %vm286, 0.0, %v344
      %v370 = vsel %vm287, 0.0, %v328
      %v371 = vsel %vm286, 0.0, %v345
      %v372 = vsel %vm287, 0.0, %v329
      %v373 = vsel %vm286, 0.0, %v346
      %v374 = vsel %vm287, 0.0, %v330
      %v375 = vsel %vm286, 0.0, %v347
      %v376 = vsel %vm287, 0.0, %v331
      %v377 = vsel %vm286, 0.0, %v348
      %v378 = vsel %vm287, 0.0, %v332
      %v379 = vsel %vm286, 0.0, %v349
      %v380 = vsel %vm287, 0.0, %v333
      %v381 = vsel %vm286, 0.0, %v350
      %v382 = vsel %vm287, 0.0, %v334
      %v383 = vsel %vm286, 0.0, %v351
      %v384 = vsel %vm287, 0.0, %v335
      %v385 = vsel %vm286, 0.0, %v352
      %v386 = vsel %vm287, 0.0, %v336
      %vm387 = vcmp.eq.s32.totalorder %v284, 15
      %vm388 = vcmp.eq.s32.totalorder %v285, 15
      %v389 = vrot.slane %v251, 1
      %v390 = vrot.slane %v253, 1
      %v391 = vrot.slane %v255, 1
      %v392 = vrot.slane %v257, 1
      %v393 = vrot.slane %v259, 1
      %v394 = vrot.slane %v261, 1
      %v395 = vrot.slane %v263, 1
      %v396 = vrot.slane %v265, 1
      %v397 = vrot.slane %v267, 1
      %v398 = vrot.slane %v269, 1
      %v399 = vrot.slane %v271, 1
      %v400 = vrot.slane %v273, 1
      %v401 = vrot.slane %v275, 1
      %v402 = vrot.slane %v277, 1
      %v403 = vrot.slane %v279, 1
      %v404 = vrot.slane %v281, 1
      %v405 = vrot.slane %v252, 1
      %v406 = vrot.slane %v254, 1
      %v407 = vrot.slane %v256, 1
      %v408 = vrot.slane %v258, 1
      %v409 = vrot.slane %v260, 1
      %v410 = vrot.slane %v262, 1
      %v411 = vrot.slane %v264, 1
      %v412 = vrot.slane %v266, 1
      %v413 = vrot.slane %v268, 1
      %v414 = vrot.slane %v270, 1
      %v415 = vrot.slane %v272, 1
      %v416 = vrot.slane %v274, 1
      %v417 = vrot.slane %v276, 1
      %v418 = vrot.slane %v278, 1
      %v419 = vrot.slane %v280, 1
      %v420 = vrot.slane %v282, 1
      %vm421 = vcmp.lt.s32.totalorder %v284, 7
      %v422 = vsel %vm421, %v389, %v405
      %v423 = vsel %vm421, %v390, %v406
      %v424 = vsel %vm421, %v391, %v407
      %v425 = vsel %vm421, %v392, %v408
      %v426 = vsel %vm421, %v393, %v409
      %v427 = vsel %vm421, %v394, %v410
      %v428 = vsel %vm421, %v395, %v411
      %v429 = vsel %vm421, %v396, %v412
      %v430 = vsel %vm421, %v397, %v413
      %v431 = vsel %vm421, %v398, %v414
      %v432 = vsel %vm421, %v399, %v415
      %v433 = vsel %vm421, %v400, %v416
      %v434 = vsel %vm421, %v401, %v417
      %v435 = vsel %vm421, %v402, %v418
      %v436 = vsel %vm421, %v403, %v419
      %v437 = vsel %vm421, %v404, %v420
      %v438 = vsel %vm421, %v405, %v389
      %v439 = vsel %vm421, %v406, %v390
      %v440 = vsel %vm421, %v407, %v391
      %v441 = vsel %vm421, %v408, %v392
      %v442 = vsel %vm421, %v409, %v393
      %v443 = vsel %vm421, %v410, %v394
      %v444 = vsel %vm421, %v411, %v395
      %v445 = vsel %vm421, %v412, %v396
      %v446 = vsel %vm421, %v413, %v397
      %v447 = vsel %vm421, %v414, %v398
      %v448 = vsel %vm421, %v415, %v399
      %v449 = vsel %vm421, %v416, %v400
      %v450 = vsel %vm421, %v417, %v401
      %v451 = vsel %vm421, %v418, %v402
      %v452 = vsel %vm421, %v419, %v403
      %v453 = vsel %vm421, %v420, %v404
      %v454 = vsel %vm387, 0.0, 0.0
      %v455 = vsel %vm388, 0.0, 0.0
      %v456 = vsel %vm387, 0.0, %v422
      %v457 = vsel %vm388, 0.0, %v438
      %v458 = vsel %vm387, 0.0, %v423
      %v459 = vsel %vm388, 0.0, %v439
      %v460 = vsel %vm387, 0.0, %v424
      %v461 = vsel %vm388, 0.0, %v440
      %v462 = vsel %vm387, 0.0, %v425
      %v463 = vsel %vm388, 0.0, %v441
      %v464 = vsel %vm387, 0.0, %v426
      %v465 = vsel %vm388, 0.0, %v442
      %v466 = vsel %vm387, 0.0, %v427
      %v467 = vsel %vm388, 0.0, %v443
      %v468 = vsel %vm387, 0.0, %v428
      %v469 = vsel %vm388, 0.0, %v444
      %v470 = vsel %vm387, 0.0, %v429
      %v471 = vsel %vm388, 0.0, %v445
      %v472 = vsel %vm387, 0.0, %v430
      %v473 = vsel %vm388, 0.0, %v446
      %v474 = vsel %vm387, 0.0, %v431
      %v475 = vsel %vm388, 0.0, %v447
      %v476 = vsel %vm387, 0.0, %v432
      %v477 = vsel %vm388, 0.0, %v448
      %v478 = vsel %vm387, 0.0, %v433
      %v479 = vsel %vm388, 0.0, %v449
      %v480 = vsel %vm387, 0.0, %v434
      %v481 = vsel %vm388, 0.0, %v450
      %v482 = vsel %vm387, 0.0, %v435
      %v483 = vsel %vm388, 0.0, %v451
      %v484 = vsel %vm387, 0.0, %v436
      %v485 = vsel %vm388, 0.0, %v452
      %v486 = vsel %vm387, 0.0, %v437
      %v487 = vsel %vm388, 0.0, %v453
      %v488 = vpack.c.bf16 %v354, %v353
      %v489 = vpack.c.bf16 0.0, 0.0
      %v490 = vpack.c.bf16 %v455, %v454
      %v491 = vpack.c.bf16 %v356, %v355
      %v492 = vpack.c.bf16 %v252, %v251
      %v493 = vpack.c.bf16 %v457, %v456
      %v494 = vpack.c.bf16 %v358, %v357
      %v495 = vpack.c.bf16 %v254, %v253
      %v496 = vpack.c.bf16 %v459, %v458
      %v497 = vpack.c.bf16 %v360, %v359
      %v498 = vpack.c.bf16 %v256, %v255
      %v499 = vpack.c.bf16 %v461, %v460
      %v500 = vpack.c.bf16 %v362, %v361
      %v501 = vpack.c.bf16 %v258, %v257
      %v502 = vpack.c.bf16 %v463, %v462
      %v503 = vpack.c.bf16 %v364, %v363
      %v504 = vpack.c.bf16 %v260, %v259
      %v505 = vpack.c.bf16 %v465, %v464
      %v506 = vpack.c.bf16 %v366, %v365
      %v507 = vpack.c.bf16 %v262, %v261
      %v508 = vpack.c.bf16 %v467, %v466
      %v509 = vpack.c.bf16 %v368, %v367
      %v510 = vpack.c.bf16 %v264, %v263
      %v511 = vpack.c.bf16 %v469, %v468
      %v512 = vpack.c.bf16 %v370, %v369
      %v513 = vpack.c.bf16 %v266, %v265
      %v514 = vpack.c.bf16 %v471, %v470
      %v515 = vpack.c.bf16 %v372, %v371
      %v516 = vpack.c.bf16 %v268, %v267
      %v517 = vpack.c.bf16 %v473, %v472
      %v518 = vpack.c.bf16 %v374, %v373
      %v519 = vpack.c.bf16 %v270, %v269
      %v520 = vpack.c.bf16 %v475, %v474
      %v521 = vpack.c.bf16 %v376, %v375
      %v522 = vpack.c.bf16 %v272, %v271
      %v523 = vpack.c.bf16 %v477, %v476
      %v524 = vpack.c.bf16 %v378, %v377
      %v525 = vpack.c.bf16 %v274, %v273
      %v526 = vpack.c.bf16 %v479, %v478
      %v527 = vpack.c.bf16 %v380, %v379
      %v528 = vpack.c.bf16 %v276, %v275
      %v529 = vpack.c.bf16 %v481, %v480
      %v530 = vpack.c.bf16 %v382, %v381
      %v531 = vpack.c.bf16 %v278, %v277
      %v532 = vpack.c.bf16 %v483, %v482
      %v533 = vpack.c.bf16 %v384, %v383
      %v534 = vpack.c.bf16 %v280, %v279
      %v535 = vpack.c.bf16 %v485, %v484
      %v536 = vpack.c.bf16 %v386, %v385
      %v537 = vpack.c.bf16 %v282, %v281
      %v538 = vpack.c.bf16 %v487, %v486
      %v539 = vld [vmem:[%s2] sm:$0x3]
      %v540 = vld [vmem:[%s1] sm:$0xff]
      %v541 = vld [vmem:[%s1 + $0x8] sm:$0xff]
      %v542 = vld [vmem:[%s1 + $0x10] sm:$0xff]
      %v543 = vld [vmem:[%s1 + $0x18] sm:$0xff]
      %v544 = vld [vmem:[%s1 + $0x20] sm:$0xff]
      %v545 = vld [vmem:[%s1 + $0x28] sm:$0xff]
      %v546 = vld [vmem:[%s1 + $0x30] sm:$0xff]
      %v547 = vld [vmem:[%s1 + $0x38] sm:$0xff]
      %v548 = vld [vmem:[%s1 + $0x40] sm:$0xff]
      %v549 = vld [vmem:[%s1 + $0x48] sm:$0xff]
      %v550 = vld [vmem:[%s1 + $0x50] sm:$0xff]
      %v551 = vld [vmem:[%s1 + $0x58] sm:$0xff]
      %v552 = vld [vmem:[%s1 + $0x60] sm:$0xff]
      %v553 = vld [vmem:[%s1 + $0x68] sm:$0xff]
      %v554 = vld [vmem:[%s1 + $0x70] sm:$0xff]
      %v555 = vld [vmem:[%s1 + $0x78] sm:$0xff]
      %v556 = vld [vmem:[%s1 + $0x80] sm:$0xff]
      %v557 = vld [vmem:[%s1 + $0x88] sm:$0xff]
      %v558 = vld [vmem:[%s1 + $0x90] sm:$0xff]
      %v559 = vld [vmem:[%s1 + $0x98] sm:$0xff]
      %v560 = vld [vmem:[%s1 + $0xa0] sm:$0xff]
      %v561 = vld [vmem:[%s1 + $0xa8] sm:$0xff]
      %v562 = vld [vmem:[%s1 + $0xb0] sm:$0xff]
      %v563 = vld [vmem:[%s1 + $0xb8] sm:$0xff]
      %v564 = vld [vmem:[%s1 + $0xc0] sm:$0xff]
      %v565 = vld [vmem:[%s1 + $0xc8] sm:$0xff]
      %v566 = vld [vmem:[%s1 + $0xd0] sm:$0xff]
      %v567 = vld [vmem:[%s1 + $0xd8] sm:$0xff]
      %v568 = vld [vmem:[%s1 + $0xe0] sm:$0xff]
      %v569 = vld [vmem:[%s1 + $0xe8] sm:$0xff]
      %v570 = vld [vmem:[%s1 + $0xf0] sm:$0xff]
      %v571 = vld [vmem:[%s1 + $0xf8] sm:$0xff]
      %v572 = vld [vmem:[%s1 + $0x100] sm:$0xff]
      %v573 = vld [vmem:[%s1 + $0x108] sm:$0xff]
      %v574 = vld [vmem:[%s1 + $0x110] sm:$0xff]
      %v575 = vld [vmem:[%s1 + $0x118] sm:$0xff]
      %v576 = vld [vmem:[%s1 + $0x120] sm:$0xff]
      %v577 = vld [vmem:[%s1 + $0x128] sm:$0xff]
      %v578 = vld [vmem:[%s1 + $0x130] sm:$0xff]
      %v579 = vld [vmem:[%s1 + $0x138] sm:$0xff]
      %v580 = vld [vmem:[%s1 + $0x140] sm:$0xff]
      %v581 = vld [vmem:[%s1 + $0x148] sm:$0xff]
      %v582 = vld [vmem:[%s1 + $0x150] sm:$0xff]
      %v583 = vld [vmem:[%s1 + $0x158] sm:$0xff]
      %v584 = vld [vmem:[%s1 + $0x160] sm:$0xff]
      %v585 = vld [vmem:[%s1 + $0x168] sm:$0xff]
      %v586 = vld [vmem:[%s1 + $0x170] sm:$0xff]
      %v587 = vld [vmem:[%s1 + $0x178] sm:$0xff]
      %s588 = scalar_lea.vmem %s1, 384
      %v589 = vld [vmem:[%s588] sm:$0xff]
      %v590 = vld [vmem:[%s588 + $0x8] sm:$0xff]
      %v591 = vld [vmem:[%s588 + $0x10] sm:$0xff]
      %v592 = vld [vmem:[%s588 + $0x18] sm:$0xff]
      %v593 = vld [vmem:[%s588 + $0x20] sm:$0xff]
      %v594 = vld [vmem:[%s588 + $0x28] sm:$0xff]
      %v595 = vld [vmem:[%s588 + $0x30] sm:$0xff]
      %v596 = vld [vmem:[%s588 + $0x38] sm:$0xff]
      %v597 = vld [vmem:[%s588 + $0x40] sm:$0xff]
      %v598 = vld [vmem:[%s588 + $0x48] sm:$0xff]
      %v599 = vld [vmem:[%s588 + $0x50] sm:$0xff]
      %v600 = vld [vmem:[%s588 + $0x58] sm:$0xff]
      %v601 = vld [vmem:[%s588 + $0x60] sm:$0xff]
      %v602 = vld [vmem:[%s588 + $0x68] sm:$0xff]
      %v603 = vld [vmem:[%s588 + $0x70] sm:$0xff]
      %v604 = vld [vmem:[%s588 + $0x78] sm:$0xff]
      %v605 = vld [vmem:[%s588 + $0x80] sm:$0xff]
      %v606 = vld [vmem:[%s588 + $0x88] sm:$0xff]
      %v607 = vld [vmem:[%s588 + $0x90] sm:$0xff]
      %v608 = vld [vmem:[%s588 + $0x98] sm:$0xff]
      %v609 = vld [vmem:[%s588 + $0xa0] sm:$0xff]
      %v610 = vld [vmem:[%s588 + $0xa8] sm:$0xff]
      %v611 = vld [vmem:[%s588 + $0xb0] sm:$0xff]
      %v612 = vld [vmem:[%s588 + $0xb8] sm:$0xff]
      %v613 = vld [vmem:[%s588 + $0xc0] sm:$0xff]
      %v614 = vld [vmem:[%s588 + $0xc8] sm:$0xff]
      %v615 = vld [vmem:[%s588 + $0xd0] sm:$0xff]
      %v616 = vld [vmem:[%s588 + $0xd8] sm:$0xff]
      %v617 = vld [vmem:[%s588 + $0xe0] sm:$0xff]
      %v618 = vld [vmem:[%s588 + $0xe8] sm:$0xff]
      %v619 = vld [vmem:[%s588 + $0xf0] sm:$0xff]
      %v620 = vld [vmem:[%s588 + $0xf8] sm:$0xff]
      %v621 = vld [vmem:[%s588 + $0x100] sm:$0xff]
      %v622 = vld [vmem:[%s588 + $0x108] sm:$0xff]
      %v623 = vld [vmem:[%s588 + $0x110] sm:$0xff]
      %v624 = vld [vmem:[%s588 + $0x118] sm:$0xff]
      %v625 = vld [vmem:[%s588 + $0x120] sm:$0xff]
      %v626 = vld [vmem:[%s588 + $0x128] sm:$0xff]
      %v627 = vld [vmem:[%s588 + $0x130] sm:$0xff]
      %v628 = vld [vmem:[%s588 + $0x138] sm:$0xff]
      %v629 = vld [vmem:[%s588 + $0x140] sm:$0xff]
      %v630 = vld [vmem:[%s588 + $0x148] sm:$0xff]
      %v631 = vld [vmem:[%s588 + $0x150] sm:$0xff]
      %v632 = vld [vmem:[%s588 + $0x158] sm:$0xff]
      %v633 = vld [vmem:[%s588 + $0x160] sm:$0xff]
      %v634 = vld [vmem:[%s588 + $0x168] sm:$0xff]
      %v635 = vld [vmem:[%s588 + $0x170] sm:$0xff]
      %v636 = vld [vmem:[%s588 + $0x178] sm:$0xff]
      %v685 = vunpack.c.l.b16 %v589
      %v686 = vunpack.c.h.b16 %v589
      %v687 = vunpack.c.l.b16 %v590
      %v688 = vunpack.c.h.b16 %v590
      %v689 = vunpack.c.l.b16 %v591
      %v690 = vunpack.c.h.b16 %v591
      %v691 = vunpack.c.l.b16 %v592
      %v692 = vunpack.c.h.b16 %v592
      %v693 = vunpack.c.l.b16 %v593
      %v694 = vunpack.c.h.b16 %v593
      %v695 = vunpack.c.l.b16 %v594
      %v696 = vunpack.c.h.b16 %v594
      %v697 = vunpack.c.l.b16 %v595
      %v698 = vunpack.c.h.b16 %v595
      %v699 = vunpack.c.l.b16 %v596
      %v700 = vunpack.c.h.b16 %v596
      %v701 = vunpack.c.l.b16 %v597
      %v702 = vunpack.c.h.b16 %v597
      %v703 = vunpack.c.l.b16 %v598
      %v704 = vunpack.c.h.b16 %v598
      %v705 = vunpack.c.l.b16 %v599
      %v706 = vunpack.c.h.b16 %v599
      %v707 = vunpack.c.l.b16 %v600
      %v708 = vunpack.c.h.b16 %v600
      %v709 = vunpack.c.l.b16 %v601
      %v710 = vunpack.c.h.b16 %v601
      %v711 = vunpack.c.l.b16 %v602
      %v712 = vunpack.c.h.b16 %v602
      %v713 = vunpack.c.l.b16 %v603
      %v714 = vunpack.c.h.b16 %v603
      %v715 = vunpack.c.l.b16 %v604
      %v716 = vunpack.c.h.b16 %v604
      %v717 = vunpack.c.l.b16 %v605
      %v718 = vunpack.c.h.b16 %v605
      %v719 = vunpack.c.l.b16 %v606
      %v720 = vunpack.c.h.b16 %v606
      %v721 = vunpack.c.l.b16 %v607
      %v722 = vunpack.c.h.b16 %v607
      %v723 = vunpack.c.l.b16 %v608
      %v724 = vunpack.c.h.b16 %v608
      %v725 = vunpack.c.l.b16 %v609
      %v726 = vunpack.c.h.b16 %v609
      %v727 = vunpack.c.l.b16 %v610
      %v728 = vunpack.c.h.b16 %v610
      %v729 = vunpack.c.l.b16 %v611
      %v730 = vunpack.c.h.b16 %v611
      %v731 = vunpack.c.l.b16 %v612
      %v732 = vunpack.c.h.b16 %v612
      %v733 = vunpack.c.l.b16 %v613
      %v734 = vunpack.c.h.b16 %v613
      %v735 = vunpack.c.l.b16 %v614
      %v736 = vunpack.c.h.b16 %v614
      %v737 = vunpack.c.l.b16 %v615
      %v738 = vunpack.c.h.b16 %v615
      %v739 = vunpack.c.l.b16 %v616
      %v740 = vunpack.c.h.b16 %v616
      %v741 = vunpack.c.l.b16 %v617
      %v742 = vunpack.c.h.b16 %v617
      %v743 = vunpack.c.l.b16 %v618
      %v744 = vunpack.c.h.b16 %v618
      %v745 = vunpack.c.l.b16 %v619
      %v746 = vunpack.c.h.b16 %v619
      %v747 = vunpack.c.l.b16 %v620
      %v748 = vunpack.c.h.b16 %v620
      %v749 = vunpack.c.l.b16 %v621
      %v750 = vunpack.c.h.b16 %v621
      %v751 = vunpack.c.l.b16 %v622
      %v752 = vunpack.c.h.b16 %v622
      %v753 = vunpack.c.l.b16 %v623
      %v754 = vunpack.c.h.b16 %v623
      %v755 = vunpack.c.l.b16 %v624
      %v756 = vunpack.c.h.b16 %v624
      %v757 = vunpack.c.l.b16 %v625
      %v758 = vunpack.c.h.b16 %v625
      %v759 = vunpack.c.l.b16 %v626
      %v760 = vunpack.c.h.b16 %v626
      %v761 = vunpack.c.l.b16 %v627
      %v762 = vunpack.c.h.b16 %v627
      %v763 = vunpack.c.l.b16 %v628
      %v764 = vunpack.c.h.b16 %v628
      %v765 = vunpack.c.l.b16 %v629
      %v766 = vunpack.c.h.b16 %v629
      %v767 = vunpack.c.l.b16 %v630
      %v768 = vunpack.c.h.b16 %v630
      %v769 = vunpack.c.l.b16 %v631
      %v770 = vunpack.c.h.b16 %v631
      %v771 = vunpack.c.l.b16 %v632
      %v772 = vunpack.c.h.b16 %v632
      %v773 = vunpack.c.l.b16 %v633
      %v774 = vunpack.c.h.b16 %v633
      %v775 = vunpack.c.l.b16 %v634
      %v776 = vunpack.c.h.b16 %v634
      %v777 = vunpack.c.l.b16 %v635
      %v778 = vunpack.c.h.b16 %v635
      %v779 = vunpack.c.l.b16 %v636
      %v780 = vunpack.c.h.b16 %v636
      %v781 = vpack.c.b16 %v687, %v685
      %v782 = vpack.c.b16 %v688, %v686
      %v783 = vpack.c.b16 %v691, %v689
      %v784 = vpack.c.b16 %v692, %v690
      %v785 = vpack.c.b16 %v695, %v693
      %v786 = vpack.c.b16 %v696, %v694
      %v787 = vpack.c.b16 %v699, %v697
      %v788 = vpack.c.b16 %v700, %v698
      %v789 = vpack.c.b16 %v703, %v701
      %v790 = vpack.c.b16 %v704, %v702
      %v791 = vpack.c.b16 %v707, %v705
      %v792 = vpack.c.b16 %v708, %v706
      %v793 = vpack.c.b16 %v711, %v709
      %v794 = vpack.c.b16 %v712, %v710
      %v795 = vpack.c.b16 %v715, %v713
      %v796 = vpack.c.b16 %v716, %v714
      %v797 = vpack.c.b16 %v719, %v717
      %v798 = vpack.c.b16 %v720, %v718
      %v799 = vpack.c.b16 %v723, %v721
      %v800 = vpack.c.b16 %v724, %v722
      %v801 = vpack.c.b16 %v727, %v725
      %v802 = vpack.c.b16 %v728, %v726
      %v803 = vpack.c.b16 %v731, %v729
      %v804 = vpack.c.b16 %v732, %v730
      %v805 = vpack.c.b16 %v735, %v733
      %v806 = vpack.c.b16 %v736, %v734
      %v807 = vpack.c.b16 %v739, %v737
      %v808 = vpack.c.b16 %v740, %v738
      %v809 = vpack.c.b16 %v743, %v741
      %v810 = vpack.c.b16 %v744, %v742
      %v811 = vpack.c.b16 %v747, %v745
      %v812 = vpack.c.b16 %v748, %v746
      %v813 = vpack.c.b16 %v751, %v749
      %v814 = vpack.c.b16 %v752, %v750
      %v815 = vpack.c.b16 %v755, %v753
      %v816 = vpack.c.b16 %v756, %v754
      %v817 = vpack.c.b16 %v759, %v757
      %v818 = vpack.c.b16 %v760, %v758
      %v819 = vpack.c.b16 %v763, %v761
      %v820 = vpack.c.b16 %v764, %v762
      %v821 = vpack.c.b16 %v767, %v765
      %v822 = vpack.c.b16 %v768, %v766
      %v823 = vpack.c.b16 %v771, %v769
      %v824 = vpack.c.b16 %v772, %v770
      %v825 = vpack.c.b16 %v775, %v773
      %v826 = vpack.c.b16 %v776, %v774
      %v827 = vpack.c.b16 %v779, %v777
      %v828 = vpack.c.b16 %v780, %v778
      %877 = vmatprep.subr.bf16.mxu0 %v796
      %878 = vmatpush1.bf16.msra.mxu0 %v795
      %879 = vmatprep.subr.bf16.mxu0 %v794
      %880 = vmatpush1.bf16.msra.mxu0 %v793
      %881 = vmatprep.subr.bf16.mxu0 %v792
      %882 = vmatpush1.bf16.msra.mxu0 %v791
      %883 = vmatprep.subr.bf16.mxu0 %v790
      %884 = vmatpush1.bf16.msra.mxu0 %v789
      %885 = vmatprep.subr.bf16.mxu0 %v788
      %886 = vmatpush1.bf16.msra.mxu0 %v787
      %887 = vmatprep.subr.bf16.mxu0 %v786
      %888 = vmatpush1.bf16.msra.mxu0 %v785
      %889 = vmatprep.subr.bf16.mxu0 %v784
      %890 = vmatpush1.bf16.msra.mxu0 %v783
      %891 = vmatprep.subr.bf16.mxu0 %v782
      %892 = vmatpush1.bf16.msra.mxu0 %v781
      %893 = vmatprep.subr.bf16.mxu0 %v812
      %894 = vmatpush2.bf16.msra.mxu0 %v811
      %895 = vmatprep.subr.bf16.mxu0 %v810
      %896 = vmatpush2.bf16.msra.mxu0 %v809
      %897 = vmatprep.subr.bf16.mxu0 %v808
      %898 = vmatpush2.bf16.msra.mxu0 %v807
      %899 = vmatprep.subr.bf16.mxu0 %v806
      %900 = vmatpush2.bf16.msra.mxu0 %v805
      %901 = vmatprep.subr.bf16.mxu0 %v804
      %902 = vmatpush2.bf16.msra.mxu0 %v803
      %903 = vmatprep.subr.bf16.mxu0 %v802
      %904 = vmatpush2.bf16.msra.mxu0 %v801
      %905 = vmatprep.subr.bf16.mxu0 %v800
      %906 = vmatpush2.bf16.msra.mxu0 %v799
      %907 = vmatprep.subr.bf16.mxu0 %v798
      %908 = vmatpush2.bf16.msra.mxu0 %v797
      %909 = vmatprep.mubr.bf16.mxu0 %v492
      %910 = vmatmul.mubr.bf16.gmra.mxu0 %v491
      %v911 = vpop.f32.mrf.mxu0
      %v912 = vadd.f32 0.0, %v911
      %v913 = vpop.f32.mrf.mxu0
      %v914 = vadd.f32 0.0, %v913
      %v915 = vpop.f32.mrf.mxu0
      %v916 = vadd.f32 0.0, %v915
      %v917 = vpop.f32.mrf.mxu0
      %v918 = vadd.f32 0.0, %v917
      %919 = vmatprep.mubr.bf16.mxu0 %v495
      %920 = vmatmul.mubr.bf16.gmra.mxu0 %v494
      %v921 = vpop.f32.mrf.mxu0
      %v922 = vadd.f32 0.0, %v921
      %v923 = vpop.f32.mrf.mxu0
      %v924 = vadd.f32 0.0, %v923
      %v925 = vpop.f32.mrf.mxu0
      %v926 = vadd.f32 0.0, %v925
      %v927 = vpop.f32.mrf.mxu0
      %v928 = vadd.f32 0.0, %v927
      %929 = vmatprep.mubr.bf16.mxu0 %v498
      %930 = vmatmul.mubr.bf16.gmra.mxu0 %v497
      %v931 = vpop.f32.mrf.mxu0
      %v932 = vadd.f32 0.0, %v931
      %v933 = vpop.f32.mrf.mxu0
      %v934 = vadd.f32 0.0, %v933
      %v935 = vpop.f32.mrf.mxu0
      %v936 = vadd.f32 0.0, %v935
      %v937 = vpop.f32.mrf.mxu0
      %v938 = vadd.f32 0.0, %v937
      %939 = vmatprep.mubr.bf16.mxu0 %v501
      %940 = vmatmul.mubr.bf16.gmra.mxu0 %v500
      %v941 = vpop.f32.mrf.mxu0
      %v942 = vadd.f32 0.0, %v941
      %v943 = vpop.f32.mrf.mxu0
      %v944 = vadd.f32 0.0, %v943
      %v945 = vpop.f32.mrf.mxu0
      %v946 = vadd.f32 0.0, %v945
      %v947 = vpop.f32.mrf.mxu0
      %v948 = vadd.f32 0.0, %v947
      %949 = vmatprep.mubr.bf16.mxu0 %v504
      %950 = vmatmul.mubr.bf16.gmra.mxu0 %v503
      %v951 = vpop.f32.mrf.mxu0
      %v952 = vadd.f32 0.0, %v951
      %v953 = vpop.f32.mrf.mxu0
      %v954 = vadd.f32 0.0, %v953
      %v955 = vpop.f32.mrf.mxu0
      %v956 = vadd.f32 0.0, %v955
      %v957 = vpop.f32.mrf.mxu0
      %v958 = vadd.f32 0.0, %v957
      %959 = vmatprep.mubr.bf16.mxu0 %v507
      %960 = vmatmul.mubr.bf16.gmra.mxu0 %v506
      %v961 = vpop.f32.mrf.mxu0
      %v962 = vadd.f32 0.0, %v961
      %v963 = vpop.f32.mrf.mxu0
      %v964 = vadd.f32 0.0, %v963
      %v965 = vpop.f32.mrf.mxu0
      %v966 = vadd.f32 0.0, %v965
      %v967 = vpop.f32.mrf.mxu0
      %v968 = vadd.f32 0.0, %v967
      %969 = vmatprep.mubr.bf16.mxu0 %v510
      %970 = vmatmul.mubr.bf16.gmra.mxu0 %v509
      %v971 = vpop.f32.mrf.mxu0
      %v972 = vadd.f32 0.0, %v971
      %v973 = vpop.f32.mrf.mxu0
      %v974 = vadd.f32 0.0, %v973
      %v975 = vpop.f32.mrf.mxu0
      %v976 = vadd.f32 0.0, %v975
      %v977 = vpop.f32.mrf.mxu0
      %v978 = vadd.f32 0.0, %v977
      %979 = vmatprep.mubr.bf16.mxu0 %v513
      %980 = vmatmul.mubr.bf16.gmra.mxu0 %v512
      %v981 = vpop.f32.mrf.mxu0
      %v982 = vadd.f32 0.0, %v981
      %v983 = vpop.f32.mrf.mxu0
      %v984 = vadd.f32 0.0, %v983
      %v985 = vpop.f32.mrf.mxu0
      %v986 = vadd.f32 0.0, %v985
      %v987 = vpop.f32.mrf.mxu0
      %v988 = vadd.f32 0.0, %v987
      %989 = vdwg.mxu0
      %990 = vmatprep.subr.bf16.mxu0 %v828
      %991 = vmatpush1.bf16.msra.mxu0 %v827
      %992 = vmatprep.subr.bf16.mxu0 %v826
      %993 = vmatpush1.bf16.msra.mxu0 %v825
      %994 = vmatprep.subr.bf16.mxu0 %v824
      %995 = vmatpush1.bf16.msra.mxu0 %v823
      %996 = vmatprep.subr.bf16.mxu0 %v822
      %997 = vmatpush1.bf16.msra.mxu0 %v821
      %998 = vmatprep.subr.bf16.mxu0 %v820
      %999 = vmatpush1.bf16.msra.mxu0 %v819
      %1000 = vmatprep.subr.bf16.mxu0 %v818
      %1001 = vmatpush1.bf16.msra.mxu0 %v817
      %1002 = vmatprep.subr.bf16.mxu0 %v816
      %1003 = vmatpush1.bf16.msra.mxu0 %v815
      %1004 = vmatprep.subr.bf16.mxu0 %v814
      %1005 = vmatpush1.bf16.msra.mxu0 %v813
      %1006 = vmatprep.subr.bf16.mxu0 0
      %1007 = vmatpush2.bf16.msra.mxu0 0
      %1008 = vmatprep.subr.bf16.mxu0 0
      %1009 = vmatpush2.bf16.msra.mxu0 0
      %1010 = vmatprep.subr.bf16.mxu0 0
      %1011 = vmatpush2.bf16.msra.mxu0 0
      %1012 = vmatprep.subr.bf16.mxu0 0
      %1013 = vmatpush2.bf16.msra.mxu0 0
      %1014 = vmatprep.subr.bf16.mxu0 0
      %1015 = vmatpush2.bf16.msra.mxu0 0
      %1016 = vmatprep.subr.bf16.mxu0 0
      %1017 = vmatpush2.bf16.msra.mxu0 0
      %1018 = vmatprep.subr.bf16.mxu0 0
      %1019 = vmatpush2.bf16.msra.mxu0 0
      %1020 = vmatprep.subr.bf16.mxu0 0
      %1021 = vmatpush2.bf16.msra.mxu0 0
      %1022 = vmatprep.mubr.bf16.mxu0 0
      %1023 = vmatmul.mubr.bf16.gmra.mxu0 %v493
      %v1024 = vpop.f32.mrf.mxu0
      %v1025 = vadd.f32 %v912, %v1024
      %v1026 = vpop.f32.mrf.mxu0
      %v1027 = vadd.f32 %v914, %v1026
      %v1028 = vpop.f32.mrf.mxu0
      %v1029 = vadd.f32 %v916, %v1028
      %v1030 = vpop.f32.mrf.mxu0
      %v1031 = vadd.f32 %v918, %v1030
      %1032 = vmatprep.mubr.bf16.mxu0 0
      %1033 = vmatmul.mubr.bf16.gmra.mxu0 %v496
      %v1034 = vpop.f32.mrf.mxu0
      %v1035 = vadd.f32 %v922, %v1034
      %v1036 = vpop.f32.mrf.mxu0
      %v1037 = vadd.f32 %v924, %v1036
      %v1038 = vpop.f32.mrf.mxu0
      %v1039 = vadd.f32 %v926, %v1038
      %v1040 = vpop.f32.mrf.mxu0
      %v1041 = vadd.f32 %v928, %v1040
      %1042 = vmatprep.mubr.bf16.mxu0 0
      %1043 = vmatmul.mubr.bf16.gmra.mxu0 %v499
      %v1044 = vpop.f32.mrf.mxu0
      %v1045 = vadd.f32 %v932, %v1044
      %v1046 = vpop.f32.mrf.mxu0
      %v1047 = vadd.f32 %v934, %v1046
      %v1048 = vpop.f32.mrf.mxu0
      %v1049 = vadd.f32 %v936, %v1048
      %v1050 = vpop.f32.mrf.mxu0
      %v1051 = vadd.f32 %v938, %v1050
      %1052 = vmatprep.mubr.bf16.mxu0 0
      %1053 = vmatmul.mubr.bf16.gmra.mxu0 %v502
      %v1054 = vpop.f32.mrf.mxu0
      %v1055 = vadd.f32 %v942, %v1054
      %v1056 = vpop.f32.mrf.mxu0
      %v1057 = vadd.f32 %v944, %v1056
      %v1058 = vpop.f32.mrf.mxu0
      %v1059 = vadd.f32 %v946, %v1058
      %v1060 = vpop.f32.mrf.mxu0
      %v1061 = vadd.f32 %v948, %v1060
      %1062 = vmatprep.mubr.bf16.mxu0 0
      %1063 = vmatmul.mubr.bf16.gmra.mxu0 %v505
      %v1064 = vpop.f32.mrf.mxu0
      %v1065 = vadd.f32 %v952, %v1064
      %v1066 = vpop.f32.mrf.mxu0
      %v1067 = vadd.f32 %v954, %v1066
      %v1068 = vpop.f32.mrf.mxu0
      %v1069 = vadd.f32 %v956, %v1068
      %v1070 = vpop.f32.mrf.mxu0
      %v1071 = vadd.f32 %v958, %v1070
      %1072 = vmatprep.mubr.bf16.mxu0 0
      %1073 = vmatmul.mubr.bf16.gmra.mxu0 %v508
      %v1074 = vpop.f32.mrf.mxu0
      %v1075 = vadd.f32 %v962, %v1074
      %v1076 = vpop.f32.mrf.mxu0
      %v1077 = vadd.f32 %v964, %v1076
      %v1078 = vpop.f32.mrf.mxu0
      %v1079 = vadd.f32 %v966, %v1078
      %v1080 = vpop.f32.mrf.mxu0
      %v1081 = vadd.f32 %v968, %v1080
      %1082 = vmatprep.mubr.bf16.mxu0 0
      %1083 = vmatmul.mubr.bf16.gmra.mxu0 %v511
      %v1084 = vpop.f32.mrf.mxu0
      %v1085 = vadd.f32 %v972, %v1084
      %v1086 = vpop.f32.mrf.mxu0
      %v1087 = vadd.f32 %v974, %v1086
      %v1088 = vpop.f32.mrf.mxu0
      %v1089 = vadd.f32 %v976, %v1088
      %v1090 = vpop.f32.mrf.mxu0
      %v1091 = vadd.f32 %v978, %v1090
      %1092 = vmatprep.mubr.bf16.mxu0 0
      %1093 = vmatmul.mubr.bf16.gmra.mxu0 %v514
      %v1094 = vpop.f32.mrf.mxu0
      %v1095 = vadd.f32 %v982, %v1094
      %v1096 = vpop.f32.mrf.mxu0
      %v1097 = vadd.f32 %v984, %v1096
      %v1098 = vpop.f32.mrf.mxu0
      %v1099 = vadd.f32 %v986, %v1098
      %v1100 = vpop.f32.mrf.mxu0
      %v1101 = vadd.f32 %v988, %v1100
      %1102 = vdwg.mxu0
      %v1151 = vunpack.c.l.b16 %v540
      %v1152 = vunpack.c.h.b16 %v540
      %v1153 = vunpack.c.l.b16 %v541
      %v1154 = vunpack.c.h.b16 %v541
      %v1155 = vunpack.c.l.b16 %v542
      %v1156 = vunpack.c.h.b16 %v542
      %v1157 = vunpack.c.l.b16 %v543
      %v1158 = vunpack.c.h.b16 %v543
      %v1159 = vunpack.c.l.b16 %v544
      %v1160 = vunpack.c.h.b16 %v544
      %v1161 = vunpack.c.l.b16 %v545
      %v1162 = vunpack.c.h.b16 %v545
      %v1163 = vunpack.c.l.b16 %v546
      %v1164 = vunpack.c.h.b16 %v546
      %v1165 = vunpack.c.l.b16 %v547
      %v1166 = vunpack.c.h.b16 %v547
      %v1167 = vunpack.c.l.b16 %v548
      %v1168 = vunpack.c.h.b16 %v548
      %v1169 = vunpack.c.l.b16 %v549
      %v1170 = vunpack.c.h.b16 %v549
      %v1171 = vunpack.c.l.b16 %v550
      %v1172 = vunpack.c.h.b16 %v550
      %v1173 = vunpack.c.l.b16 %v551
      %v1174 = vunpack.c.h.b16 %v551
      %v1175 = vunpack.c.l.b16 %v552
      %v1176 = vunpack.c.h.b16 %v552
      %v1177 = vunpack.c.l.b16 %v553
      %v1178 = vunpack.c.h.b16 %v553
      %v1179 = vunpack.c.l.b16 %v554
      %v1180 = vunpack.c.h.b16 %v554
      %v1181 = vunpack.c.l.b16 %v555
      %v1182 = vunpack.c.h.b16 %v555
      %v1183 = vunpack.c.l.b16 %v556
      %v1184 = vunpack.c.h.b16 %v556
      %v1185 = vunpack.c.l.b16 %v557
      %v1186 = vunpack.c.h.b16 %v557
      %v1187 = vunpack.c.l.b16 %v558
      %v1188 = vunpack.c.h.b16 %v558
      %v1189 = vunpack.c.l.b16 %v559
      %v1190 = vunpack.c.h.b16 %v559
      %v1191 = vunpack.c.l.b16 %v560
      %v1192 = vunpack.c.h.b16 %v560
      %v1193 = vunpack.c.l.b16 %v561
      %v1194 = vunpack.c.h.b16 %v561
      %v1195 = vunpack.c.l.b16 %v562
      %v1196 = vunpack.c.h.b16 %v562
      %v1197 = vunpack.c.l.b16 %v563
      %v1198 = vunpack.c.h.b16 %v563
      %v1199 = vunpack.c.l.b16 %v564
      %v1200 = vunpack.c.h.b16 %v564
      %v1201 = vunpack.c.l.b16 %v565
      %v1202 = vunpack.c.h.b16 %v565
      %v1203 = vunpack.c.l.b16 %v566
      %v1204 = vunpack.c.h.b16 %v566
      %v1205 = vunpack.c.l.b16 %v567
      %v1206 = vunpack.c.h.b16 %v567
      %v1207 = vunpack.c.l.b16 %v568
      %v1208 = vunpack.c.h.b16 %v568
      %v1209 = vunpack.c.l.b16 %v569
      %v1210 = vunpack.c.h.b16 %v569
      %v1211 = vunpack.c.l.b16 %v570
      %v1212 = vunpack.c.h.b16 %v570
      %v1213 = vunpack.c.l.b16 %v571
      %v1214 = vunpack.c.h.b16 %v571
      %v1215 = vunpack.c.l.b16 %v572
      %v1216 = vunpack.c.h.b16 %v572
      %v1217 = vunpack.c.l.b16 %v573
      %v1218 = vunpack.c.h.b16 %v573
      %v1219 = vunpack.c.l.b16 %v574
      %v1220 = vunpack.c.h.b16 %v574
      %v1221 = vunpack.c.l.b16 %v575
      %v1222 = vunpack.c.h.b16 %v575
      %v1223 = vunpack.c.l.b16 %v576
      %v1224 = vunpack.c.h.b16 %v576
      %v1225 = vunpack.c.l.b16 %v577
      %v1226 = vunpack.c.h.b16 %v577
      %v1227 = vunpack.c.l.b16 %v578
      %v1228 = vunpack.c.h.b16 %v578
      %v1229 = vunpack.c.l.b16 %v579
      %v1230 = vunpack.c.h.b16 %v579
      %v1231 = vunpack.c.l.b16 %v580
      %v1232 = vunpack.c.h.b16 %v580
      %v1233 = vunpack.c.l.b16 %v581
      %v1234 = vunpack.c.h.b16 %v581
      %v1235 = vunpack.c.l.b16 %v582
      %v1236 = vunpack.c.h.b16 %v582
      %v1237 = vunpack.c.l.b16 %v583
      %v1238 = vunpack.c.h.b16 %v583
      %v1239 = vunpack.c.l.b16 %v584
      %v1240 = vunpack.c.h.b16 %v584
      %v1241 = vunpack.c.l.b16 %v585
      %v1242 = vunpack.c.h.b16 %v585
      %v1243 = vunpack.c.l.b16 %v586
      %v1244 = vunpack.c.h.b16 %v586
      %v1245 = vunpack.c.l.b16 %v587
      %v1246 = vunpack.c.h.b16 %v587
      %v1247 = vpack.c.b16 %v1153, %v1151
      %v1248 = vpack.c.b16 %v1154, %v1152
      %v1249 = vpack.c.b16 %v1157, %v1155
      %v1250 = vpack.c.b16 %v1158, %v1156
      %v1251 = vpack.c.b16 %v1161, %v1159
      %v1252 = vpack.c.b16 %v1162, %v1160
      %v1253 = vpack.c.b16 %v1165, %v1163
      %v1254 = vpack.c.b16 %v1166, %v1164
      %v1255 = vpack.c.b16 %v1169, %v1167
      %v1256 = vpack.c.b16 %v1170, %v1168
      %v1257 = vpack.c.b16 %v1173, %v1171
      %v1258 = vpack.c.b16 %v1174, %v1172
      %v1259 = vpack.c.b16 %v1177, %v1175
      %v1260 = vpack.c.b16 %v1178, %v1176
      %v1261 = vpack.c.b16 %v1181, %v1179
      %v1262 = vpack.c.b16 %v1182, %v1180
      %v1263 = vpack.c.b16 %v1185, %v1183
      %v1264 = vpack.c.b16 %v1186, %v1184
      %v1265 = vpack.c.b16 %v1189, %v1187
      %v1266 = vpack.c.b16 %v1190, %v1188
      %v1267 = vpack.c.b16 %v1193, %v1191
      %v1268 = vpack.c.b16 %v1194, %v1192
      %v1269 = vpack.c.b16 %v1197, %v1195
      %v1270 = vpack.c.b16 %v1198, %v1196
      %v1271 = vpack.c.b16 %v1201, %v1199
      %v1272 = vpack.c.b16 %v1202, %v1200
      %v1273 = vpack.c.b16 %v1205, %v1203
      %v1274 = vpack.c.b16 %v1206, %v1204
      %v1275 = vpack.c.b16 %v1209, %v1207
      %v1276 = vpack.c.b16 %v1210, %v1208
      %v1277 = vpack.c.b16 %v1213, %v1211
      %v1278 = vpack.c.b16 %v1214, %v1212
      %v1279 = vpack.c.b16 %v1217, %v1215
      %v1280 = vpack.c.b16 %v1218, %v1216
      %v1281 = vpack.c.b16 %v1221, %v1219
      %v1282 = vpack.c.b16 %v1222, %v1220
      %v1283 = vpack.c.b16 %v1225, %v1223
      %v1284 = vpack.c.b16 %v1226, %v1224
      %v1285 = vpack.c.b16 %v1229, %v1227
      %v1286 = vpack.c.b16 %v1230, %v1228
      %v1287 = vpack.c.b16 %v1233, %v1231
      %v1288 = vpack.c.b16 %v1234, %v1232
      %v1289 = vpack.c.b16 %v1237, %v1235
      %v1290 = vpack.c.b16 %v1238, %v1236
      %v1291 = vpack.c.b16 %v1241, %v1239
      %v1292 = vpack.c.b16 %v1242, %v1240
      %v1293 = vpack.c.b16 %v1245, %v1243
      %v1294 = vpack.c.b16 %v1246, %v1244
      %1343 = vmatprep.subr.bf16.mxu0 %v1262
      %1344 = vmatpush1.bf16.msra.mxu0 %v1261
      %1345 = vmatprep.subr.bf16.mxu0 %v1260
      %1346 = vmatpush1.bf16.msra.mxu0 %v1259
      %1347 = vmatprep.subr.bf16.mxu0 %v1258
      %1348 = vmatpush1.bf16.msra.mxu0 %v1257
      %1349 = vmatprep.subr.bf16.mxu0 %v1256
      %1350 = vmatpush1.bf16.msra.mxu0 %v1255
      %1351 = vmatprep.subr.bf16.mxu0 %v1254
      %1352 = vmatpush1.bf16.msra.mxu0 %v1253
      %1353 = vmatprep.subr.bf16.mxu0 %v1252
      %1354 = vmatpush1.bf16.msra.mxu0 %v1251
      %1355 = vmatprep.subr.bf16.mxu0 %v1250
      %1356 = vmatpush1.bf16.msra.mxu0 %v1249
      %1357 = vmatprep.subr.bf16.mxu0 %v1248
      %1358 = vmatpush1.bf16.msra.mxu0 %v1247
      %1359 = vmatprep.subr.bf16.mxu0 %v1278
      %1360 = vmatpush2.bf16.msra.mxu0 %v1277
      %1361 = vmatprep.subr.bf16.mxu0 %v1276
      %1362 = vmatpush2.bf16.msra.mxu0 %v1275
      %1363 = vmatprep.subr.bf16.mxu0 %v1274
      %1364 = vmatpush2.bf16.msra.mxu0 %v1273
      %1365 = vmatprep.subr.bf16.mxu0 %v1272
      %1366 = vmatpush2.bf16.msra.mxu0 %v1271
      %1367 = vmatprep.subr.bf16.mxu0 %v1270
      %1368 = vmatpush2.bf16.msra.mxu0 %v1269
      %1369 = vmatprep.subr.bf16.mxu0 %v1268
      %1370 = vmatpush2.bf16.msra.mxu0 %v1267
      %1371 = vmatprep.subr.bf16.mxu0 %v1266
      %1372 = vmatpush2.bf16.msra.mxu0 %v1265
      %1373 = vmatprep.subr.bf16.mxu0 %v1264
      %1374 = vmatpush2.bf16.msra.mxu0 %v1263
      %1375 = vmatprep.mubr.bf16.mxu0 %v489
      %1376 = vmatmul.mubr.bf16.gmra.mxu0 %v488
      %v1377 = vpop.f32.mrf.mxu0
      %v1378 = vadd.f32 %v1025, %v1377
      %v1379 = vpop.f32.mrf.mxu0
      %v1380 = vadd.f32 %v1027, %v1379
      %v1381 = vpop.f32.mrf.mxu0
      %v1382 = vadd.f32 %v1029, %v1381
      %v1383 = vpop.f32.mrf.mxu0
      %v1384 = vadd.f32 %v1031, %v1383
      %1385 = vmatprep.mubr.bf16.mxu0 %v492
      %1386 = vmatmul.mubr.bf16.gmra.mxu0 %v491
      %v1387 = vpop.f32.mrf.mxu0
      %v1388 = vadd.f32 %v1035, %v1387
      %v1389 = vpop.f32.mrf.mxu0
      %v1390 = vadd.f32 %v1037, %v1389
      %v1391 = vpop.f32.mrf.mxu0
      %v1392 = vadd.f32 %v1039, %v1391
      %v1393 = vpop.f32.mrf.mxu0
      %v1394 = vadd.f32 %v1041, %v1393
      %1395 = vmatprep.mubr.bf16.mxu0 %v495
      %1396 = vmatmul.mubr.bf16.gmra.mxu0 %v494
      %v1397 = vpop.f32.mrf.mxu0
      %v1398 = vadd.f32 %v1045, %v1397
      %v1399 = vpop.f32.mrf.mxu0
      %v1400 = vadd.f32 %v1047, %v1399
      %v1401 = vpop.f32.mrf.mxu0
      %v1402 = vadd.f32 %v1049, %v1401
      %v1403 = vpop.f32.mrf.mxu0
      %v1404 = vadd.f32 %v1051, %v1403
      %1405 = vmatprep.mubr.bf16.mxu0 %v498
      %1406 = vmatmul.mubr.bf16.gmra.mxu0 %v497
      %v1407 = vpop.f32.mrf.mxu0
      %v1408 = vadd.f32 %v1055, %v1407
      %v1409 = vpop.f32.mrf.mxu0
      %v1410 = vadd.f32 %v1057, %v1409
      %v1411 = vpop.f32.mrf.mxu0
      %v1412 = vadd.f32 %v1059, %v1411
      %v1413 = vpop.f32.mrf.mxu0
      %v1414 = vadd.f32 %v1061, %v1413
      %1415 = vmatprep.mubr.bf16.mxu0 %v501
      %1416 = vmatmul.mubr.bf16.gmra.mxu0 %v500
      %v1417 = vpop.f32.mrf.mxu0
      %v1418 = vadd.f32 %v1065, %v1417
      %v1419 = vpop.f32.mrf.mxu0
      %v1420 = vadd.f32 %v1067, %v1419
      %v1421 = vpop.f32.mrf.mxu0
      %v1422 = vadd.f32 %v1069, %v1421
      %v1423 = vpop.f32.mrf.mxu0
      %v1424 = vadd.f32 %v1071, %v1423
      %1425 = vmatprep.mubr.bf16.mxu0 %v504
      %1426 = vmatmul.mubr.bf16.gmra.mxu0 %v503
      %v1427 = vpop.f32.mrf.mxu0
      %v1428 = vadd.f32 %v1075, %v1427
      %v1429 = vpop.f32.mrf.mxu0
      %v1430 = vadd.f32 %v1077, %v1429
      %v1431 = vpop.f32.mrf.mxu0
      %v1432 = vadd.f32 %v1079, %v1431
      %v1433 = vpop.f32.mrf.mxu0
      %v1434 = vadd.f32 %v1081, %v1433
      %1435 = vmatprep.mubr.bf16.mxu0 %v507
      %1436 = vmatmul.mubr.bf16.gmra.mxu0 %v506
      %v1437 = vpop.f32.mrf.mxu0
      %v1438 = vadd.f32 %v1085, %v1437
      %v1439 = vpop.f32.mrf.mxu0
      %v1440 = vadd.f32 %v1087, %v1439
      %v1441 = vpop.f32.mrf.mxu0
      %v1442 = vadd.f32 %v1089, %v1441
      %v1443 = vpop.f32.mrf.mxu0
      %v1444 = vadd.f32 %v1091, %v1443
      %1445 = vmatprep.mubr.bf16.mxu0 %v510
      %1446 = vmatmul.mubr.bf16.gmra.mxu0 %v509
      %v1447 = vpop.f32.mrf.mxu0
      %v1448 = vadd.f32 %v1095, %v1447
      %v1449 = vpop.f32.mrf.mxu0
      %v1450 = vadd.f32 %v1097, %v1449
      %v1451 = vpop.f32.mrf.mxu0
      %v1452 = vadd.f32 %v1099, %v1451
      %v1453 = vpop.f32.mrf.mxu0
      %v1454 = vadd.f32 %v1101, %v1453
      %1455 = vdwg.mxu0
      %1456 = vmatprep.subr.bf16.mxu0 %v1294
      %1457 = vmatpush1.bf16.msra.mxu0 %v1293
      %1458 = vmatprep.subr.bf16.mxu0 %v1292
      %1459 = vmatpush1.bf16.msra.mxu0 %v1291
      %1460 = vmatprep.subr.bf16.mxu0 %v1290
      %1461 = vmatpush1.bf16.msra.mxu0 %v1289
      %1462 = vmatprep.subr.bf16.mxu0 %v1288
      %1463 = vmatpush1.bf16.msra.mxu0 %v1287
      %1464 = vmatprep.subr.bf16.mxu0 %v1286
      %1465 = vmatpush1.bf16.msra.mxu0 %v1285
      %1466 = vmatprep.subr.bf16.mxu0 %v1284
      %1467 = vmatpush1.bf16.msra.mxu0 %v1283
      %1468 = vmatprep.subr.bf16.mxu0 %v1282
      %1469 = vmatpush1.bf16.msra.mxu0 %v1281
      %1470 = vmatprep.subr.bf16.mxu0 %v1280
      %1471 = vmatpush1.bf16.msra.mxu0 %v1279
      %1472 = vmatprep.subr.bf16.mxu0 0
      %1473 = vmatpush2.bf16.msra.mxu0 0
      %1474 = vmatprep.subr.bf16.mxu0 0
      %1475 = vmatpush2.bf16.msra.mxu0 0
      %1476 = vmatprep.subr.bf16.mxu0 0
      %1477 = vmatpush2.bf16.msra.mxu0 0
      %1478 = vmatprep.subr.bf16.mxu0 0
      %1479 = vmatpush2.bf16.msra.mxu0 0
      %1480 = vmatprep.subr.bf16.mxu0 0
      %1481 = vmatpush2.bf16.msra.mxu0 0
      %1482 = vmatprep.subr.bf16.mxu0 0
      %1483 = vmatpush2.bf16.msra.mxu0 0
      %1484 = vmatprep.subr.bf16.mxu0 0
      %1485 = vmatpush2.bf16.msra.mxu0 0
      %1486 = vmatprep.subr.bf16.mxu0 0
      %1487 = vmatpush2.bf16.msra.mxu0 0
      %1488 = vmatprep.mubr.bf16.mxu0 0
      %1489 = vmatmul.mubr.bf16.gmra.mxu0 %v490
      %v1490 = vpop.f32.mrf.mxu0
      %v1491 = vadd.f32 %v1378, %v1490
      %v1492 = vpop.f32.mrf.mxu0
      %v1493 = vadd.f32 %v1380, %v1492
      %v1494 = vpop.f32.mrf.mxu0
      %v1495 = vadd.f32 %v1382, %v1494
      %v1496 = vpop.f32.mrf.mxu0
      %v1497 = vadd.f32 %v1384, %v1496
      %1498 = vmatprep.mubr.bf16.mxu0 0
      %1499 = vmatmul.mubr.bf16.gmra.mxu0 %v493
      %v1500 = vpop.f32.mrf.mxu0
      %v1501 = vadd.f32 %v1388, %v1500
      %v1502 = vpop.f32.mrf.mxu0
      %v1503 = vadd.f32 %v1390, %v1502
      %v1504 = vpop.f32.mrf.mxu0
      %v1505 = vadd.f32 %v1392, %v1504
      %v1506 = vpop.f32.mrf.mxu0
      %v1507 = vadd.f32 %v1394, %v1506
      %1508 = vmatprep.mubr.bf16.mxu0 0
      %1509 = vmatmul.mubr.bf16.gmra.mxu0 %v496
      %v1510 = vpop.f32.mrf.mxu0
      %v1511 = vadd.f32 %v1398, %v1510
      %v1512 = vpop.f32.mrf.mxu0
      %v1513 = vadd.f32 %v1400, %v1512
      %v1514 = vpop.f32.mrf.mxu0
      %v1515 = vadd.f32 %v1402, %v1514
      %v1516 = vpop.f32.mrf.mxu0
      %v1517 = vadd.f32 %v1404, %v1516
      %1518 = vmatprep.mubr.bf16.mxu0 0
      %1519 = vmatmul.mubr.bf16.gmra.mxu0 %v499
      %v1520 = vpop.f32.mrf.mxu0
      %v1521 = vadd.f32 %v1408, %v1520
      %v1522 = vpop.f32.mrf.mxu0
      %v1523 = vadd.f32 %v1410, %v1522
      %v1524 = vpop.f32.mrf.mxu0
      %v1525 = vadd.f32 %v1412, %v1524
      %v1526 = vpop.f32.mrf.mxu0
      %v1527 = vadd.f32 %v1414, %v1526
      %1528 = vmatprep.mubr.bf16.mxu0 0
      %1529 = vmatmul.mubr.bf16.gmra.mxu0 %v502
      %v1530 = vpop.f32.mrf.mxu0
      %v1531 = vadd.f32 %v1418, %v1530
      %v1532 = vpop.f32.mrf.mxu0
      %v1533 = vadd.f32 %v1420, %v1532
      %v1534 = vpop.f32.mrf.mxu0
      %v1535 = vadd.f32 %v1422, %v1534
      %v1536 = vpop.f32.mrf.mxu0
      %v1537 = vadd.f32 %v1424, %v1536
      %1538 = vmatprep.mubr.bf16.mxu0 0
      %1539 = vmatmul.mubr.bf16.gmra.mxu0 %v505
      %v1540 = vpop.f32.mrf.mxu0
      %v1541 = vadd.f32 %v1428, %v1540
      %v1542 = vpop.f32.mrf.mxu0
      %v1543 = vadd.f32 %v1430, %v1542
      %v1544 = vpop.f32.mrf.mxu0
      %v1545 = vadd.f32 %v1432, %v1544
      %v1546 = vpop.f32.mrf.mxu0
      %v1547 = vadd.f32 %v1434, %v1546
      %1548 = vmatprep.mubr.bf16.mxu0 0
      %1549 = vmatmul.mubr.bf16.gmra.mxu0 %v508
      %v1550 = vpop.f32.mrf.mxu0
      %v1551 = vadd.f32 %v1438, %v1550
      %v1552 = vpop.f32.mrf.mxu0
      %v1553 = vadd.f32 %v1440, %v1552
      %v1554 = vpop.f32.mrf.mxu0
      %v1555 = vadd.f32 %v1442, %v1554
      %v1556 = vpop.f32.mrf.mxu0
      %v1557 = vadd.f32 %v1444, %v1556
      %1558 = vmatprep.mubr.bf16.mxu0 0
      %1559 = vmatmul.mubr.bf16.gmra.mxu0 %v511
      %v1560 = vpop.f32.mrf.mxu0
      %v1561 = vadd.f32 %v1448, %v1560
      %v1562 = vpop.f32.mrf.mxu0
      %v1563 = vadd.f32 %v1450, %v1562
      %v1564 = vpop.f32.mrf.mxu0
      %v1565 = vadd.f32 %v1452, %v1564
      %v1566 = vpop.f32.mrf.mxu0
      %v1567 = vadd.f32 %v1454, %v1566
      %1568 = vdwg.mxu0
      %s1569 = scalar_lea.vmem %s1, 768
      %v1570 = vld [vmem:[%s1569] sm:$0xff]
      %v1571 = vld [vmem:[%s1569 + $0x8] sm:$0xff]
      %v1572 = vld [vmem:[%s1569 + $0x10] sm:$0xff]
      %v1573 = vld [vmem:[%s1569 + $0x18] sm:$0xff]
      %v1574 = vld [vmem:[%s1569 + $0x20] sm:$0xff]
      %v1575 = vld [vmem:[%s1569 + $0x28] sm:$0xff]
      %v1576 = vld [vmem:[%s1569 + $0x30] sm:$0xff]
      %v1577 = vld [vmem:[%s1569 + $0x38] sm:$0xff]
      %v1578 = vld [vmem:[%s1569 + $0x40] sm:$0xff]
      %v1579 = vld [vmem:[%s1569 + $0x48] sm:$0xff]
      %v1580 = vld [vmem:[%s1569 + $0x50] sm:$0xff]
      %v1581 = vld [vmem:[%s1569 + $0x58] sm:$0xff]
      %v1582 = vld [vmem:[%s1569 + $0x60] sm:$0xff]
      %v1583 = vld [vmem:[%s1569 + $0x68] sm:$0xff]
      %v1584 = vld [vmem:[%s1569 + $0x70] sm:$0xff]
      %v1585 = vld [vmem:[%s1569 + $0x78] sm:$0xff]
      %v1586 = vld [vmem:[%s1569 + $0x80] sm:$0xff]
      %v1587 = vld [vmem:[%s1569 + $0x88] sm:$0xff]
      %v1588 = vld [vmem:[%s1569 + $0x90] sm:$0xff]
      %v1589 = vld [vmem:[%s1569 + $0x98] sm:$0xff]
      %v1590 = vld [vmem:[%s1569 + $0xa0] sm:$0xff]
      %v1591 = vld [vmem:[%s1569 + $0xa8] sm:$0xff]
      %v1592 = vld [vmem:[%s1569 + $0xb0] sm:$0xff]
      %v1593 = vld [vmem:[%s1569 + $0xb8] sm:$0xff]
      %v1594 = vld [vmem:[%s1569 + $0xc0] sm:$0xff]
      %v1595 = vld [vmem:[%s1569 + $0xc8] sm:$0xff]
      %v1596 = vld [vmem:[%s1569 + $0xd0] sm:$0xff]
      %v1597 = vld [vmem:[%s1569 + $0xd8] sm:$0xff]
      %v1598 = vld [vmem:[%s1569 + $0xe0] sm:$0xff]
      %v1599 = vld [vmem:[%s1569 + $0xe8] sm:$0xff]
      %v1600 = vld [vmem:[%s1569 + $0xf0] sm:$0xff]
      %v1601 = vld [vmem:[%s1569 + $0xf8] sm:$0xff]
      %v1602 = vld [vmem:[%s1569 + $0x100] sm:$0xff]
      %v1603 = vld [vmem:[%s1569 + $0x108] sm:$0xff]
      %v1604 = vld [vmem:[%s1569 + $0x110] sm:$0xff]
      %v1605 = vld [vmem:[%s1569 + $0x118] sm:$0xff]
      %v1606 = vld [vmem:[%s1569 + $0x120] sm:$0xff]
      %v1607 = vld [vmem:[%s1569 + $0x128] sm:$0xff]
      %v1608 = vld [vmem:[%s1569 + $0x130] sm:$0xff]
      %v1609 = vld [vmem:[%s1569 + $0x138] sm:$0xff]
      %v1610 = vld [vmem:[%s1569 + $0x140] sm:$0xff]
      %v1611 = vld [vmem:[%s1569 + $0x148] sm:$0xff]
      %v1612 = vld [vmem:[%s1569 + $0x150] sm:$0xff]
      %v1613 = vld [vmem:[%s1569 + $0x158] sm:$0xff]
      %v1614 = vld [vmem:[%s1569 + $0x160] sm:$0xff]
      %v1615 = vld [vmem:[%s1569 + $0x168] sm:$0xff]
      %v1616 = vld [vmem:[%s1569 + $0x170] sm:$0xff]
      %v1617 = vld [vmem:[%s1569 + $0x178] sm:$0xff]
      %v1666 = vunpack.c.l.b16 %v1570
      %v1667 = vunpack.c.h.b16 %v1570
      %v1668 = vunpack.c.l.b16 %v1571
      %v1669 = vunpack.c.h.b16 %v1571
      %v1670 = vunpack.c.l.b16 %v1572
      %v1671 = vunpack.c.h.b16 %v1572
      %v1672 = vunpack.c.l.b16 %v1573
      %v1673 = vunpack.c.h.b16 %v1573
      %v1674 = vunpack.c.l.b16 %v1574
      %v1675 = vunpack.c.h.b16 %v1574
      %v1676 = vunpack.c.l.b16 %v1575
      %v1677 = vunpack.c.h.b16 %v1575
      %v1678 = vunpack.c.l.b16 %v1576
      %v1679 = vunpack.c.h.b16 %v1576
      %v1680 = vunpack.c.l.b16 %v1577
      %v1681 = vunpack.c.h.b16 %v1577
      %v1682 = vunpack.c.l.b16 %v1578
      %v1683 = vunpack.c.h.b16 %v1578
      %v1684 = vunpack.c.l.b16 %v1579
      %v1685 = vunpack.c.h.b16 %v1579
      %v1686 = vunpack.c.l.b16 %v1580
      %v1687 = vunpack.c.h.b16 %v1580
      %v1688 = vunpack.c.l.b16 %v1581
      %v1689 = vunpack.c.h.b16 %v1581
      %v1690 = vunpack.c.l.b16 %v1582
      %v1691 = vunpack.c.h.b16 %v1582
      %v1692 = vunpack.c.l.b16 %v1583
      %v1693 = vunpack.c.h.b16 %v1583
      %v1694 = vunpack.c.l.b16 %v1584
      %v1695 = vunpack.c.h.b16 %v1584
      %v1696 = vunpack.c.l.b16 %v1585
      %v1697 = vunpack.c.h.b16 %v1585
      %v1698 = vunpack.c.l.b16 %v1586
      %v1699 = vunpack.c.h.b16 %v1586
      %v1700 = vunpack.c.l.b16 %v1587
      %v1701 = vunpack.c.h.b16 %v1587
      %v1702 = vunpack.c.l.b16 %v1588
      %v1703 = vunpack.c.h.b16 %v1588
      %v1704 = vunpack.c.l.b16 %v1589
      %v1705 = vunpack.c.h.b16 %v1589
      %v1706 = vunpack.c.l.b16 %v1590
      %v1707 = vunpack.c.h.b16 %v1590
      %v1708 = vunpack.c.l.b16 %v1591
      %v1709 = vunpack.c.h.b16 %v1591
      %v1710 = vunpack.c.l.b16 %v1592
      %v1711 = vunpack.c.h.b16 %v1592
      %v1712 = vunpack.c.l.b16 %v1593
      %v1713 = vunpack.c.h.b16 %v1593
      %v1714 = vunpack.c.l.b16 %v1594
      %v1715 = vunpack.c.h.b16 %v1594
      %v1716 = vunpack.c.l.b16 %v1595
      %v1717 = vunpack.c.h.b16 %v1595
      %v1718 = vunpack.c.l.b16 %v1596
      %v1719 = vunpack.c.h.b16 %v1596
      %v1720 = vunpack.c.l.b16 %v1597
      %v1721 = vunpack.c.h.b16 %v1597
      %v1722 = vunpack.c.l.b16 %v1598
      %v1723 = vunpack.c.h.b16 %v1598
      %v1724 = vunpack.c.l.b16 %v1599
      %v1725 = vunpack.c.h.b16 %v1599
      %v1726 = vunpack.c.l.b16 %v1600
      %v1727 = vunpack.c.h.b16 %v1600
      %v1728 = vunpack.c.l.b16 %v1601
      %v1729 = vunpack.c.h.b16 %v1601
      %v1730 = vunpack.c.l.b16 %v1602
      %v1731 = vunpack.c.h.b16 %v1602
      %v1732 = vunpack.c.l.b16 %v1603
      %v1733 = vunpack.c.h.b16 %v1603
      %v1734 = vunpack.c.l.b16 %v1604
      %v1735 = vunpack.c.h.b16 %v1604
      %v1736 = vunpack.c.l.b16 %v1605
      %v1737 = vunpack.c.h.b16 %v1605
      %v1738 = vunpack.c.l.b16 %v1606
      %v1739 = vunpack.c.h.b16 %v1606
      %v1740 = vunpack.c.l.b16 %v1607
      %v1741 = vunpack.c.h.b16 %v1607
      %v1742 = vunpack.c.l.b16 %v1608
      %v1743 = vunpack.c.h.b16 %v1608
      %v1744 = vunpack.c.l.b16 %v1609
      %v1745 = vunpack.c.h.b16 %v1609
      %v1746 = vunpack.c.l.b16 %v1610
      %v1747 = vunpack.c.h.b16 %v1610
      %v1748 = vunpack.c.l.b16 %v1611
      %v1749 = vunpack.c.h.b16 %v1611
      %v1750 = vunpack.c.l.b16 %v1612
      %v1751 = vunpack.c.h.b16 %v1612
      %v1752 = vunpack.c.l.b16 %v1613
      %v1753 = vunpack.c.h.b16 %v1613
      %v1754 = vunpack.c.l.b16 %v1614
      %v1755 = vunpack.c.h.b16 %v1614
      %v1756 = vunpack.c.l.b16 %v1615
      %v1757 = vunpack.c.h.b16 %v1615
      %v1758 = vunpack.c.l.b16 %v1616
      %v1759 = vunpack.c.h.b16 %v1616
      %v1760 = vunpack.c.l.b16 %v1617
      %v1761 = vunpack.c.h.b16 %v1617
      %v1762 = vpack.c.b16 %v1668, %v1666
      %v1763 = vpack.c.b16 %v1669, %v1667
      %v1764 = vpack.c.b16 %v1672, %v1670
      %v1765 = vpack.c.b16 %v1673, %v1671
      %v1766 = vpack.c.b16 %v1676, %v1674
      %v1767 = vpack.c.b16 %v1677, %v1675
      %v1768 = vpack.c.b16 %v1680, %v1678
      %v1769 = vpack.c.b16 %v1681, %v1679
      %v1770 = vpack.c.b16 %v1684, %v1682
      %v1771 = vpack.c.b16 %v1685, %v1683
      %v1772 = vpack.c.b16 %v1688, %v1686
      %v1773 = vpack.c.b16 %v1689, %v1687
      %v1774 = vpack.c.b16 %v1692, %v1690
      %v1775 = vpack.c.b16 %v1693, %v1691
      %v1776 = vpack.c.b16 %v1696, %v1694
      %v1777 = vpack.c.b16 %v1697, %v1695
      %v1778 = vpack.c.b16 %v1700, %v1698
      %v1779 = vpack.c.b16 %v1701, %v1699
      %v1780 = vpack.c.b16 %v1704, %v1702
      %v1781 = vpack.c.b16 %v1705, %v1703
      %v1782 = vpack.c.b16 %v1708, %v1706
      %v1783 = vpack.c.b16 %v1709, %v1707
      %v1784 = vpack.c.b16 %v1712, %v1710
      %v1785 = vpack.c.b16 %v1713, %v1711
      %v1786 = vpack.c.b16 %v1716, %v1714
      %v1787 = vpack.c.b16 %v1717, %v1715
      %v1788 = vpack.c.b16 %v1720, %v1718
      %v1789 = vpack.c.b16 %v1721, %v1719
      %v1790 = vpack.c.b16 %v1724, %v1722
      %v1791 = vpack.c.b16 %v1725, %v1723
      %v1792 = vpack.c.b16 %v1728, %v1726
      %v1793 = vpack.c.b16 %v1729, %v1727
      %v1794 = vpack.c.b16 %v1732, %v1730
      %v1795 = vpack.c.b16 %v1733, %v1731
      %v1796 = vpack.c.b16 %v1736, %v1734
      %v1797 = vpack.c.b16 %v1737, %v1735
      %v1798 = vpack.c.b16 %v1740, %v1738
      %v1799 = vpack.c.b16 %v1741, %v1739
      %v1800 = vpack.c.b16 %v1744, %v1742
      %v1801 = vpack.c.b16 %v1745, %v1743
      %v1802 = vpack.c.b16 %v1748, %v1746
      %v1803 = vpack.c.b16 %v1749, %v1747
      %v1804 = vpack.c.b16 %v1752, %v1750
      %v1805 = vpack.c.b16 %v1753, %v1751
      %v1806 = vpack.c.b16 %v1756, %v1754
      %v1807 = vpack.c.b16 %v1757, %v1755
      %v1808 = vpack.c.b16 %v1760, %v1758
      %v1809 = vpack.c.b16 %v1761, %v1759
      %1858 = vmatprep.subr.bf16.mxu0 %v1777
      %1859 = vmatpush1.bf16.msra.mxu0 %v1776
      %1860 = vmatprep.subr.bf16.mxu0 %v1775
      %1861 = vmatpush1.bf16.msra.mxu0 %v1774
      %1862 = vmatprep.subr.bf16.mxu0 %v1773
      %1863 = vmatpush1.bf16.msra.mxu0 %v1772
      %1864 = vmatprep.subr.bf16.mxu0 %v1771
      %1865 = vmatpush1.bf16.msra.mxu0 %v1770
      %1866 = vmatprep.subr.bf16.mxu0 %v1769
      %1867 = vmatpush1.bf16.msra.mxu0 %v1768
      %1868 = vmatprep.subr.bf16.mxu0 %v1767
      %1869 = vmatpush1.bf16.msra.mxu0 %v1766
      %1870 = vmatprep.subr.bf16.mxu0 %v1765
      %1871 = vmatpush1.bf16.msra.mxu0 %v1764
      %1872 = vmatprep.subr.bf16.mxu0 %v1763
      %1873 = vmatpush1.bf16.msra.mxu0 %v1762
      %1874 = vmatprep.subr.bf16.mxu0 %v1793
      %1875 = vmatpush2.bf16.msra.mxu0 %v1792
      %1876 = vmatprep.subr.bf16.mxu0 %v1791
      %1877 = vmatpush2.bf16.msra.mxu0 %v1790
      %1878 = vmatprep.subr.bf16.mxu0 %v1789
      %1879 = vmatpush2.bf16.msra.mxu0 %v1788
      %1880 = vmatprep.subr.bf16.mxu0 %v1787
      %1881 = vmatpush2.bf16.msra.mxu0 %v1786
      %1882 = vmatprep.subr.bf16.mxu0 %v1785
      %1883 = vmatpush2.bf16.msra.mxu0 %v1784
      %1884 = vmatprep.subr.bf16.mxu0 %v1783
      %1885 = vmatpush2.bf16.msra.mxu0 %v1782
      %1886 = vmatprep.subr.bf16.mxu0 %v1781
      %1887 = vmatpush2.bf16.msra.mxu0 %v1780
      %1888 = vmatprep.subr.bf16.mxu0 %v1779
      %1889 = vmatpush2.bf16.msra.mxu0 %v1778
      %1890 = vmatprep.mubr.bf16.mxu0 %v495
      %1891 = vmatmul.mubr.bf16.gmra.mxu0 %v494
      %v1892 = vpop.f32.mrf.mxu0
      %v1893 = vadd.f32 0.0, %v1892
      %v1894 = vpop.f32.mrf.mxu0
      %v1895 = vadd.f32 0.0, %v1894
      %v1896 = vpop.f32.mrf.mxu0
      %v1897 = vadd.f32 0.0, %v1896
      %v1898 = vpop.f32.mrf.mxu0
      %v1899 = vadd.f32 0.0, %v1898
      %1900 = vmatprep.mubr.bf16.mxu0 %v498
      %1901 = vmatmul.mubr.bf16.gmra.mxu0 %v497
      %v1902 = vpop.f32.mrf.mxu0
      %v1903 = vadd.f32 0.0, %v1902
      %v1904 = vpop.f32.mrf.mxu0
      %v1905 = vadd.f32 0.0, %v1904
      %v1906 = vpop.f32.mrf.mxu0
      %v1907 = vadd.f32 0.0, %v1906
      %v1908 = vpop.f32.mrf.mxu0
      %v1909 = vadd.f32 0.0, %v1908
      %1910 = vmatprep.mubr.bf16.mxu0 %v501
      %1911 = vmatmul.mubr.bf16.gmra.mxu0 %v500
      %v1912 = vpop.f32.mrf.mxu0
      %v1913 = vadd.f32 0.0, %v1912
      %v1914 = vpop.f32.mrf.mxu0
      %v1915 = vadd.f32 0.0, %v1914
      %v1916 = vpop.f32.mrf.mxu0
      %v1917 = vadd.f32 0.0, %v1916
      %v1918 = vpop.f32.mrf.mxu0
      %v1919 = vadd.f32 0.0, %v1918
      %1920 = vmatprep.mubr.bf16.mxu0 %v504
      %1921 = vmatmul.mubr.bf16.gmra.mxu0 %v503
      %v1922 = vpop.f32.mrf.mxu0
      %v1923 = vadd.f32 0.0, %v1922
      %v1924 = vpop.f32.mrf.mxu0
      %v1925 = vadd.f32 0.0, %v1924
      %v1926 = vpop.f32.mrf.mxu0
      %v1927 = vadd.f32 0.0, %v1926
      %v1928 = vpop.f32.mrf.mxu0
      %v1929 = vadd.f32 0.0, %v1928
      %1930 = vmatprep.mubr.bf16.mxu0 %v507
      %1931 = vmatmul.mubr.bf16.gmra.mxu0 %v506
      %v1932 = vpop.f32.mrf.mxu0
      %v1933 = vadd.f32 0.0, %v1932
      %v1934 = vpop.f32.mrf.mxu0
      %v1935 = vadd.f32 0.0, %v1934
      %v1936 = vpop.f32.mrf.mxu0
      %v1937 = vadd.f32 0.0, %v1936
      %v1938 = vpop.f32.mrf.mxu0
      %v1939 = vadd.f32 0.0, %v1938
      %1940 = vmatprep.mubr.bf16.mxu0 %v510
      %1941 = vmatmul.mubr.bf16.gmra.mxu0 %v509
      %v1942 = vpop.f32.mrf.mxu0
      %v1943 = vadd.f32 0.0, %v1942
      %v1944 = vpop.f32.mrf.mxu0
      %v1945 = vadd.f32 0.0, %v1944
      %v1946 = vpop.f32.mrf.mxu0
      %v1947 = vadd.f32 0.0, %v1946
      %v1948 = vpop.f32.mrf.mxu0
      %v1949 = vadd.f32 0.0, %v1948
      %1950 = vmatprep.mubr.bf16.mxu0 %v513
      %1951 = vmatmul.mubr.bf16.gmra.mxu0 %v512
      %v1952 = vpop.f32.mrf.mxu0
      %v1953 = vadd.f32 0.0, %v1952
      %v1954 = vpop.f32.mrf.mxu0
      %v1955 = vadd.f32 0.0, %v1954
      %v1956 = vpop.f32.mrf.mxu0
      %v1957 = vadd.f32 0.0, %v1956
      %v1958 = vpop.f32.mrf.mxu0
      %v1959 = vadd.f32 0.0, %v1958
      %1960 = vmatprep.mubr.bf16.mxu0 %v516
      %1961 = vmatmul.mubr.bf16.gmra.mxu0 %v515
      %v1962 = vpop.f32.mrf.mxu0
      %v1963 = vadd.f32 0.0, %v1962
      %v1964 = vpop.f32.mrf.mxu0
      %v1965 = vadd.f32 0.0, %v1964
      %v1966 = vpop.f32.mrf.mxu0
      %v1967 = vadd.f32 0.0, %v1966
      %v1968 = vpop.f32.mrf.mxu0
      %v1969 = vadd.f32 0.0, %v1968
      %1970 = vdwg.mxu0
      %1971 = vmatprep.subr.bf16.mxu0 %v1809
      %1972 = vmatpush1.bf16.msra.mxu0 %v1808
      %1973 = vmatprep.subr.bf16.mxu0 %v1807
      %1974 = vmatpush1.bf16.msra.mxu0 %v1806
      %1975 = vmatprep.subr.bf16.mxu0 %v1805
      %1976 = vmatpush1.bf16.msra.mxu0 %v1804
      %1977 = vmatprep.subr.bf16.mxu0 %v1803
      %1978 = vmatpush1.bf16.msra.mxu0 %v1802
      %1979 = vmatprep.subr.bf16.mxu0 %v1801
      %1980 = vmatpush1.bf16.msra.mxu0 %v1800
      %1981 = vmatprep.subr.bf16.mxu0 %v1799
      %1982 = vmatpush1.bf16.msra.mxu0 %v1798
      %1983 = vmatprep.subr.bf16.mxu0 %v1797
      %1984 = vmatpush1.bf16.msra.mxu0 %v1796
      %1985 = vmatprep.subr.bf16.mxu0 %v1795
      %1986 = vmatpush1.bf16.msra.mxu0 %v1794
      %1987 = vmatprep.subr.bf16.mxu0 0
      %1988 = vmatpush2.bf16.msra.mxu0 0
      %1989 = vmatprep.subr.bf16.mxu0 0
      %1990 = vmatpush2.bf16.msra.mxu0 0
      %1991 = vmatprep.subr.bf16.mxu0 0
      %1992 = vmatpush2.bf16.msra.mxu0 0
      %1993 = vmatprep.subr.bf16.mxu0 0
      %1994 = vmatpush2.bf16.msra.mxu0 0
      %1995 = vmatprep.subr.bf16.mxu0 0
      %1996 = vmatpush2.bf16.msra.mxu0 0
      %1997 = vmatprep.subr.bf16.mxu0 0
      %1998 = vmatpush2.bf16.msra.mxu0 0
      %1999 = vmatprep.subr.bf16.mxu0 0
      %2000 = vmatpush2.bf16.msra.mxu0 0
      %2001 = vmatprep.subr.bf16.mxu0 0
      %2002 = vmatpush2.bf16.msra.mxu0 0
      %2003 = vmatprep.mubr.bf16.mxu0 0
      %2004 = vmatmul.mubr.bf16.gmra.mxu0 %v496
      %v2005 = vpop.f32.mrf.mxu0
      %v2006 = vadd.f32 %v1893, %v2005
      %v2007 = vpop.f32.mrf.mxu0
      %v2008 = vadd.f32 %v1895, %v2007
      %v2009 = vpop.f32.mrf.mxu0
      %v2010 = vadd.f32 %v1897, %v2009
      %v2011 = vpop.f32.mrf.mxu0
      %v2012 = vadd.f32 %v1899, %v2011
      %2013 = vmatprep.mubr.bf16.mxu0 0
      %2014 = vmatmul.mubr.bf16.gmra.mxu0 %v499
      %v2015 = vpop.f32.mrf.mxu0
      %v2016 = vadd.f32 %v1903, %v2015
      %v2017 = vpop.f32.mrf.mxu0
      %v2018 = vadd.f32 %v1905, %v2017
      %v2019 = vpop.f32.mrf.mxu0
      %v2020 = vadd.f32 %v1907, %v2019
      %v2021 = vpop.f32.mrf.mxu0
      %v2022 = vadd.f32 %v1909, %v2021
      %2023 = vmatprep.mubr.bf16.mxu0 0
      %2024 = vmatmul.mubr.bf16.gmra.mxu0 %v502
      %v2025 = vpop.f32.mrf.mxu0
      %v2026 = vadd.f32 %v1913, %v2025
      %v2027 = vpop.f32.mrf.mxu0
      %v2028 = vadd.f32 %v1915, %v2027
      %v2029 = vpop.f32.mrf.mxu0
      %v2030 = vadd.f32 %v1917, %v2029
      %v2031 = vpop.f32.mrf.mxu0
      %v2032 = vadd.f32 %v1919, %v2031
      %2033 = vmatprep.mubr.bf16.mxu0 0
      %2034 = vmatmul.mubr.bf16.gmra.mxu0 %v505
      %v2035 = vpop.f32.mrf.mxu0
      %v2036 = vadd.f32 %v1923, %v2035
      %v2037 = vpop.f32.mrf.mxu0
      %v2038 = vadd.f32 %v1925, %v2037
      %v2039 = vpop.f32.mrf.mxu0
      %v2040 = vadd.f32 %v1927, %v2039
      %v2041 = vpop.f32.mrf.mxu0
      %v2042 = vadd.f32 %v1929, %v2041
      %2043 = vmatprep.mubr.bf16.mxu0 0
      %2044 = vmatmul.mubr.bf16.gmra.mxu0 %v508
      %v2045 = vpop.f32.mrf.mxu0
      %v2046 = vadd.f32 %v1933, %v2045
      %v2047 = vpop.f32.mrf.mxu0
      %v2048 = vadd.f32 %v1935, %v2047
      %v2049 = vpop.f32.mrf.mxu0
      %v2050 = vadd.f32 %v1937, %v2049
      %v2051 = vpop.f32.mrf.mxu0
      %v2052 = vadd.f32 %v1939, %v2051
      %2053 = vmatprep.mubr.bf16.mxu0 0
      %2054 = vmatmul.mubr.bf16.gmra.mxu0 %v511
      %v2055 = vpop.f32.mrf.mxu0
      %v2056 = vadd.f32 %v1943, %v2055
      %v2057 = vpop.f32.mrf.mxu0
      %v2058 = vadd.f32 %v1945, %v2057
      %v2059 = vpop.f32.mrf.mxu0
      %v2060 = vadd.f32 %v1947, %v2059
      %v2061 = vpop.f32.mrf.mxu0
      %v2062 = vadd.f32 %v1949, %v2061
      %2063 = vmatprep.mubr.bf16.mxu0 0
      %2064 = vmatmul.mubr.bf16.gmra.mxu0 %v514
      %v2065 = vpop.f32.mrf.mxu0
      %v2066 = vadd.f32 %v1953, %v2065
      %v2067 = vpop.f32.mrf.mxu0
      %v2068 = vadd.f32 %v1955, %v2067
      %v2069 = vpop.f32.mrf.mxu0
      %v2070 = vadd.f32 %v1957, %v2069
      %v2071 = vpop.f32.mrf.mxu0
      %v2072 = vadd.f32 %v1959, %v2071
      %2073 = vmatprep.mubr.bf16.mxu0 0
      %2074 = vmatmul.mubr.bf16.gmra.mxu0 %v517
      %v2075 = vpop.f32.mrf.mxu0
      %v2076 = vadd.f32 %v1963, %v2075
      %v2077 = vpop.f32.mrf.mxu0
      %v2078 = vadd.f32 %v1965, %v2077
      %v2079 = vpop.f32.mrf.mxu0
      %v2080 = vadd.f32 %v1967, %v2079
      %v2081 = vpop.f32.mrf.mxu0
      %v2082 = vadd.f32 %v1969, %v2081
      %2083 = vdwg.mxu0
      %v2084 = vadd.f32 %v1491, %v2006
      %v2085 = vadd.f32 %v1493, %v2008
      %v2086 = vadd.f32 %v1495, %v2010
      %v2087 = vadd.f32 %v1497, %v2012
      %v2088 = vadd.f32 %v1501, %v2016
      %v2089 = vadd.f32 %v1503, %v2018
      %v2090 = vadd.f32 %v1505, %v2020
      %v2091 = vadd.f32 %v1507, %v2022
      %v2092 = vadd.f32 %v1511, %v2026
      %v2093 = vadd.f32 %v1513, %v2028
      %v2094 = vadd.f32 %v1515, %v2030
      %v2095 = vadd.f32 %v1517, %v2032
      %v2096 = vadd.f32 %v1521, %v2036
      %v2097 = vadd.f32 %v1523, %v2038
      %v2098 = vadd.f32 %v1525, %v2040
      %v2099 = vadd.f32 %v1527, %v2042
      %v2100 = vadd.f32 %v1531, %v2046
      %v2101 = vadd.f32 %v1533, %v2048
      %v2102 = vadd.f32 %v1535, %v2050
      %v2103 = vadd.f32 %v1537, %v2052
      %v2104 = vadd.f32 %v1541, %v2056
      %v2105 = vadd.f32 %v1543, %v2058
      %v2106 = vadd.f32 %v1545, %v2060
      %v2107 = vadd.f32 %v1547, %v2062
      %v2108 = vadd.f32 %v1551, %v2066
      %v2109 = vadd.f32 %v1553, %v2068
      %v2110 = vadd.f32 %v1555, %v2070
      %v2111 = vadd.f32 %v1557, %v2072
      %v2112 = vadd.f32 %v1561, %v2076
      %v2113 = vadd.f32 %v1563, %v2078
      %v2114 = vadd.f32 %v1565, %v2080
      %v2115 = vadd.f32 %v1567, %v2082
      %v2117 = vlaneseq
      %v2118 = vshrl.u32 %v2117, 7
      %v2119 = vsub.s32 0, %v2118
      %v2120 = vrot.slane %v539, %v2119
      %v2121 = vlaneseq
      %v2122 = vshrl.u32 %v2121, 7
      %v2123 = vsub.s32 1, %v2122
      %v2124 = vrot.slane %v539, %v2123
      %v2127 = vadd.f32 %v2084, %v2120
      %v2128 = vadd.f32 %v2085, %v2124
      %v2129 = vadd.f32 %v2086, %v2120
      %v2130 = vadd.f32 %v2087, %v2124
      %v2131 = vadd.f32 %v2088, %v2120
      %v2132 = vadd.f32 %v2089, %v2124
      %v2133 = vadd.f32 %v2090, %v2120
      %v2134 = vadd.f32 %v2091, %v2124
      %v2135 = vadd.f32 %v2092, %v2120
      %v2136 = vadd.f32 %v2093, %v2124
      %v2137 = vadd.f32 %v2094, %v2120
      %v2138 = vadd.f32 %v2095, %v2124
      %v2139 = vadd.f32 %v2096, %v2120
      %v2140 = vadd.f32 %v2097, %v2124
      %v2141 = vadd.f32 %v2098, %v2120
      %v2142 = vadd.f32 %v2099, %v2124
      %v2143 = vadd.f32 %v2100, %v2120
      %v2144 = vadd.f32 %v2101, %v2124
      %v2145 = vadd.f32 %v2102, %v2120
      %v2146 = vadd.f32 %v2103, %v2124
      %v2147 = vadd.f32 %v2104, %v2120
      %v2148 = vadd.f32 %v2105, %v2124
      %v2149 = vadd.f32 %v2106, %v2120
      %v2150 = vadd.f32 %v2107, %v2124
      %v2151 = vadd.f32 %v2108, %v2120
      %v2152 = vadd.f32 %v2109, %v2124
      %v2153 = vadd.f32 %v2110, %v2120
      %v2154 = vadd.f32 %v2111, %v2124
      %v2155 = vadd.f32 %v2112, %v2120
      %v2156 = vadd.f32 %v2113, %v2124
      %v2157 = vadd.f32 %v2114, %v2120
      %v2158 = vadd.f32 %v2115, %v2124
      %v2159 = vld [vmem:[%s212] sm:$0xff]
      %v2160 = vld [vmem:[%s212 + $0x8] sm:$0xff]
      %v2161 = vld [vmem:[%s212 + $0x10] sm:$0xff]
      %v2162 = vld [vmem:[%s212 + $0x18] sm:$0xff]
      %v2163 = vld [vmem:[%s212 + $0x20] sm:$0xff]
      %v2164 = vld [vmem:[%s212 + $0x28] sm:$0xff]
      %v2165 = vld [vmem:[%s212 + $0x30] sm:$0xff]
      %v2166 = vld [vmem:[%s212 + $0x38] sm:$0xff]
      %v2167 = vunpack.c.l.bf16 %v2159
      %v2168 = vunpack.c.h.bf16 %v2159
      %v2169 = vunpack.c.l.bf16 %v2160
      %v2170 = vunpack.c.h.bf16 %v2160
      %v2171 = vunpack.c.l.bf16 %v2161
      %v2172 = vunpack.c.h.bf16 %v2161
      %v2173 = vunpack.c.l.bf16 %v2162
      %v2174 = vunpack.c.h.bf16 %v2162
      %v2175 = vunpack.c.l.bf16 %v2163
      %v2176 = vunpack.c.h.bf16 %v2163
      %v2177 = vunpack.c.l.bf16 %v2164
      %v2178 = vunpack.c.h.bf16 %v2164
      %v2179 = vunpack.c.l.bf16 %v2165
      %v2180 = vunpack.c.h.bf16 %v2165
      %v2181 = vunpack.c.l.bf16 %v2166
      %v2182 = vunpack.c.h.bf16 %v2166
      %v2183 = vadd.f32 %v2127, %v2167
      %v2184 = vadd.f32 %v2128, %v2168
      %v2185 = vadd.f32 %v2129, %v2169
      %v2186 = vadd.f32 %v2130, %v2170
      %v2187 = vadd.f32 %v2131, %v2167
      %v2188 = vadd.f32 %v2132, %v2168
      %v2189 = vadd.f32 %v2133, %v2169
      %v2190 = vadd.f32 %v2134, %v2170
      %v2191 = vadd.f32 %v2135, %v2171
      %v2192 = vadd.f32 %v2136, %v2172
      %v2193 = vadd.f32 %v2137, %v2173
      %v2194 = vadd.f32 %v2138, %v2174
      %v2195 = vadd.f32 %v2139, %v2171
      %v2196 = vadd.f32 %v2140, %v2172
      %v2197 = vadd.f32 %v2141, %v2173
      %v2198 = vadd.f32 %v2142, %v2174
      %v2199 = vadd.f32 %v2143, %v2175
      %v2200 = vadd.f32 %v2144, %v2176
      %v2201 = vadd.f32 %v2145, %v2177
      %v2202 = vadd.f32 %v2146, %v2178
      %v2203 = vadd.f32 %v2147, %v2175
      %v2204 = vadd.f32 %v2148, %v2176
      %v2205 = vadd.f32 %v2149, %v2177
      %v2206 = vadd.f32 %v2150, %v2178
      %v2207 = vadd.f32 %v2151, %v2179
      %v2208 = vadd.f32 %v2152, %v2180
      %v2209 = vadd.f32 %v2153, %v2181
      %v2210 = vadd.f32 %v2154, %v2182
      %v2211 = vadd.f32 %v2155, %v2179
      %v2212 = vadd.f32 %v2156, %v2180
      %v2213 = vadd.f32 %v2157, %v2181
      %v2214 = vadd.f32 %v2158, %v2182
      %v2215 = vmax.f32 %v2183, 0.0
      %v2216 = vmax.f32 %v2184, 0.0
      %v2217 = vmax.f32 %v2185, 0.0
      %v2218 = vmax.f32 %v2186, 0.0
      %v2219 = vmax.f32 %v2187, 0.0
      %v2220 = vmax.f32 %v2188, 0.0
      %v2221 = vmax.f32 %v2189, 0.0
      %v2222 = vmax.f32 %v2190, 0.0
      %v2223 = vmax.f32 %v2191, 0.0
      %v2224 = vmax.f32 %v2192, 0.0
      %v2225 = vmax.f32 %v2193, 0.0
      %v2226 = vmax.f32 %v2194, 0.0
      %v2227 = vmax.f32 %v2195, 0.0
      %v2228 = vmax.f32 %v2196, 0.0
      %v2229 = vmax.f32 %v2197, 0.0
      %v2230 = vmax.f32 %v2198, 0.0
      %v2231 = vmax.f32 %v2199, 0.0
      %v2232 = vmax.f32 %v2200, 0.0
      %v2233 = vmax.f32 %v2201, 0.0
      %v2234 = vmax.f32 %v2202, 0.0
      %v2235 = vmax.f32 %v2203, 0.0
      %v2236 = vmax.f32 %v2204, 0.0
      %v2237 = vmax.f32 %v2205, 0.0
      %v2238 = vmax.f32 %v2206, 0.0
      %v2239 = vmax.f32 %v2207, 0.0
      %v2240 = vmax.f32 %v2208, 0.0
      %v2241 = vmax.f32 %v2209, 0.0
      %v2242 = vmax.f32 %v2210, 0.0
      %v2243 = vmax.f32 %v2211, 0.0
      %v2244 = vmax.f32 %v2212, 0.0
      %v2245 = vmax.f32 %v2213, 0.0
      %v2246 = vmax.f32 %v2214, 0.0
      %v2247 = vpack.c.bf16 %v2217, %v2215
      %v2248 = vpack.c.bf16 %v2218, %v2216
      %v2249 = vpack.c.bf16 %v2221, %v2219
      %v2250 = vpack.c.bf16 %v2222, %v2220
      %v2251 = vpack.c.bf16 %v2225, %v2223
      %v2252 = vpack.c.bf16 %v2226, %v2224
      %v2253 = vpack.c.bf16 %v2229, %v2227
      %v2254 = vpack.c.bf16 %v2230, %v2228
      %v2255 = vpack.c.bf16 %v2233, %v2231
      %v2256 = vpack.c.bf16 %v2234, %v2232
      %v2257 = vpack.c.bf16 %v2237, %v2235
      %v2258 = vpack.c.bf16 %v2238, %v2236
      %v2259 = vpack.c.bf16 %v2241, %v2239
      %v2260 = vpack.c.bf16 %v2242, %v2240
      %v2261 = vpack.c.bf16 %v2245, %v2243
      %v2262 = vpack.c.bf16 %v2246, %v2244
      %v2279 = vunpack.c.l.b16 %v2247
      %v2280 = vunpack.c.l.b16 %v2248
      %v2281 = vunpack.c.h.b16 %v2247
      %v2282 = vunpack.c.h.b16 %v2248
      %v2283 = vunpack.c.l.b16 %v2249
      %v2284 = vunpack.c.l.b16 %v2250
      %v2285 = vunpack.c.h.b16 %v2249
      %v2286 = vunpack.c.h.b16 %v2250
      %v2287 = vunpack.c.l.b16 %v2251
      %v2288 = vunpack.c.l.b16 %v2252
      %v2289 = vunpack.c.h.b16 %v2251
      %v2290 = vunpack.c.h.b16 %v2252
      %v2291 = vunpack.c.l.b16 %v2253
      %v2292 = vunpack.c.l.b16 %v2254
      %v2293 = vunpack.c.h.b16 %v2253
      %v2294 = vunpack.c.h.b16 %v2254
      %v2295 = vunpack.c.l.b16 %v2255
      %v2296 = vunpack.c.l.b16 %v2256
      %v2297 = vunpack.c.h.b16 %v2255
      %v2298 = vunpack.c.h.b16 %v2256
      %v2299 = vunpack.c.l.b16 %v2257
      %v2300 = vunpack.c.l.b16 %v2258
      %v2301 = vunpack.c.h.b16 %v2257
      %v2302 = vunpack.c.h.b16 %v2258
      %v2303 = vunpack.c.l.b16 %v2259
      %v2304 = vunpack.c.l.b16 %v2260
      %v2305 = vunpack.c.h.b16 %v2259
      %v2306 = vunpack.c.h.b16 %v2260
      %v2307 = vunpack.c.l.b16 %v2261
      %v2308 = vunpack.c.l.b16 %v2262
      %v2309 = vunpack.c.h.b16 %v2261
      %v2310 = vunpack.c.h.b16 %v2262
      %v2311 = vpack.c.b16 %v2280, %v2279
      %v2312 = vpack.c.b16 %v2282, %v2281
      %v2313 = vpack.c.b16 %v2284, %v2283
      %v2314 = vpack.c.b16 %v2286, %v2285
      %v2315 = vpack.c.b16 %v2288, %v2287
      %v2316 = vpack.c.b16 %v2290, %v2289
      %v2317 = vpack.c.b16 %v2292, %v2291
      %v2318 = vpack.c.b16 %v2294, %v2293
      %v2319 = vpack.c.b16 %v2296, %v2295
      %v2320 = vpack.c.b16 %v2298, %v2297
      %v2321 = vpack.c.b16 %v2300, %v2299
      %v2322 = vpack.c.b16 %v2302, %v2301
      %v2323 = vpack.c.b16 %v2304, %v2303
      %v2324 = vpack.c.b16 %v2306, %v2305
      %v2325 = vpack.c.b16 %v2308, %v2307
      %v2326 = vpack.c.b16 %v2310, %v2309
      %2343 = vst [vmem:[%s217] sm:$0xff] %v2311
      %2344 = vst [vmem:[%s217 + $0x8] sm:$0xff] %v2312
      %2345 = vst [vmem:[%s217 + $0x10] sm:$0xff] %v2313
      %2346 = vst [vmem:[%s217 + $0x18] sm:$0xff] %v2314
      %2347 = vst [vmem:[%s217 + $0x20] sm:$0xff] %v2315
      %2348 = vst [vmem:[%s217 + $0x28] sm:$0xff] %v2316
      %2349 = vst [vmem:[%s217 + $0x30] sm:$0xff] %v2317
      %2350 = vst [vmem:[%s217 + $0x38] sm:$0xff] %v2318
      %2351 = vst [vmem:[%s217 + $0x40] sm:$0xff] %v2319
      %2352 = vst [vmem:[%s217 + $0x48] sm:$0xff] %v2320
      %2353 = vst [vmem:[%s217 + $0x50] sm:$0xff] %v2321
      %2354 = vst [vmem:[%s217 + $0x58] sm:$0xff] %v2322
      %2355 = vst [vmem:[%s217 + $0x60] sm:$0xff] %v2323
      %2356 = vst [vmem:[%s217 + $0x68] sm:$0xff] %v2324
      %2357 = vst [vmem:[%s217 + $0x70] sm:$0xff] %v2325
      %2358 = vst [vmem:[%s217 + $0x78] sm:$0xff] %v2326
      %v2359 = vld [vmem:[%s1] sm:$0xff]
      %v2360 = vld [vmem:[%s1 + $0x8] sm:$0xff]
      %v2361 = vld [vmem:[%s1 + $0x10] sm:$0xff]
      %v2362 = vld [vmem:[%s1 + $0x18] sm:$0xff]
      %v2363 = vld [vmem:[%s1 + $0x20] sm:$0xff]
      %v2364 = vld [vmem:[%s1 + $0x28] sm:$0xff]
      %v2365 = vld [vmem:[%s1 + $0x30] sm:$0xff]
      %v2366 = vld [vmem:[%s1 + $0x38] sm:$0xff]
      %v2367 = vld [vmem:[%s1 + $0x40] sm:$0xff]
      %v2368 = vld [vmem:[%s1 + $0x48] sm:$0xff]
      %v2369 = vld [vmem:[%s1 + $0x50] sm:$0xff]
      %v2370 = vld [vmem:[%s1 + $0x58] sm:$0xff]
      %v2371 = vld [vmem:[%s1 + $0x60] sm:$0xff]
      %v2372 = vld [vmem:[%s1 + $0x68] sm:$0xff]
      %v2373 = vld [vmem:[%s1 + $0x70] sm:$0xff]
      %v2374 = vld [vmem:[%s1 + $0x78] sm:$0xff]
      %v2375 = vld [vmem:[%s1 + $0x80] sm:$0xff]
      %v2376 = vld [vmem:[%s1 + $0x88] sm:$0xff]
      %v2377 = vld [vmem:[%s1 + $0x90] sm:$0xff]
      %v2378 = vld [vmem:[%s1 + $0x98] sm:$0xff]
      %v2379 = vld [vmem:[%s1 + $0xa0] sm:$0xff]
      %v2380 = vld [vmem:[%s1 + $0xa8] sm:$0xff]
      %v2381 = vld [vmem:[%s1 + $0xb0] sm:$0xff]
      %v2382 = vld [vmem:[%s1 + $0xb8] sm:$0xff]
      %v2383 = vld [vmem:[%s1 + $0xc0] sm:$0xff]
      %v2384 = vld [vmem:[%s1 + $0xc8] sm:$0xff]
      %v2385 = vld [vmem:[%s1 + $0xd0] sm:$0xff]
      %v2386 = vld [vmem:[%s1 + $0xd8] sm:$0xff]
      %v2387 = vld [vmem:[%s1 + $0xe0] sm:$0xff]
      %v2388 = vld [vmem:[%s1 + $0xe8] sm:$0xff]
      %v2389 = vld [vmem:[%s1 + $0xf0] sm:$0xff]
      %v2390 = vld [vmem:[%s1 + $0xf8] sm:$0xff]
      %v2391 = vld [vmem:[%s1 + $0x100] sm:$0xff]
      %v2392 = vld [vmem:[%s1 + $0x108] sm:$0xff]
      %v2393 = vld [vmem:[%s1 + $0x110] sm:$0xff]
      %v2394 = vld [vmem:[%s1 + $0x118] sm:$0xff]
      %v2395 = vld [vmem:[%s1 + $0x120] sm:$0xff]
      %v2396 = vld [vmem:[%s1 + $0x128] sm:$0xff]
      %v2397 = vld [vmem:[%s1 + $0x130] sm:$0xff]
      %v2398 = vld [vmem:[%s1 + $0x138] sm:$0xff]
      %v2399 = vld [vmem:[%s1 + $0x140] sm:$0xff]
      %v2400 = vld [vmem:[%s1 + $0x148] sm:$0xff]
      %v2401 = vld [vmem:[%s1 + $0x150] sm:$0xff]
      %v2402 = vld [vmem:[%s1 + $0x158] sm:$0xff]
      %v2403 = vld [vmem:[%s1 + $0x160] sm:$0xff]
      %v2404 = vld [vmem:[%s1 + $0x168] sm:$0xff]
      %v2405 = vld [vmem:[%s1 + $0x170] sm:$0xff]
      %v2406 = vld [vmem:[%s1 + $0x178] sm:$0xff]
      %v2407 = vld [vmem:[%s588] sm:$0xff]
      %v2408 = vld [vmem:[%s588 + $0x8] sm:$0xff]
      %v2409 = vld [vmem:[%s588 + $0x10] sm:$0xff]
      %v2410 = vld [vmem:[%s588 + $0x18] sm:$0xff]
      %v2411 = vld [vmem:[%s588 + $0x20] sm:$0xff]
      %v2412 = vld [vmem:[%s588 + $0x28] sm:$0xff]
      %v2413 = vld [vmem:[%s588 + $0x30] sm:$0xff]
      %v2414 = vld [vmem:[%s588 + $0x38] sm:$0xff]
      %v2415 = vld [vmem:[%s588 + $0x40] sm:$0xff]
      %v2416 = vld [vmem:[%s588 + $0x48] sm:$0xff]
      %v2417 = vld [vmem:[%s588 + $0x50] sm:$0xff]
      %v2418 = vld [vmem:[%s588 + $0x58] sm:$0xff]
      %v2419 = vld [vmem:[%s588 + $0x60] sm:$0xff]
      %v2420 = vld [vmem:[%s588 + $0x68] sm:$0xff]
      %v2421 = vld [vmem:[%s588 + $0x70] sm:$0xff]
      %v2422 = vld [vmem:[%s588 + $0x78] sm:$0xff]
      %v2423 = vld [vmem:[%s588 + $0x80] sm:$0xff]
      %v2424 = vld [vmem:[%s588 + $0x88] sm:$0xff]
      %v2425 = vld [vmem:[%s588 + $0x90] sm:$0xff]
      %v2426 = vld [vmem:[%s588 + $0x98] sm:$0xff]
      %v2427 = vld [vmem:[%s588 + $0xa0] sm:$0xff]
      %v2428 = vld [vmem:[%s588 + $0xa8] sm:$0xff]
      %v2429 = vld [vmem:[%s588 + $0xb0] sm:$0xff]
      %v2430 = vld [vmem:[%s588 + $0xb8] sm:$0xff]
      %v2431 = vld [vmem:[%s588 + $0xc0] sm:$0xff]
      %v2432 = vld [vmem:[%s588 + $0xc8] sm:$0xff]
      %v2433 = vld [vmem:[%s588 + $0xd0] sm:$0xff]
      %v2434 = vld [vmem:[%s588 + $0xd8] sm:$0xff]
      %v2435 = vld [vmem:[%s588 + $0xe0] sm:$0xff]
      %v2436 = vld [vmem:[%s588 + $0xe8] sm:$0xff]
      %v2437 = vld [vmem:[%s588 + $0xf0] sm:$0xff]
      %v2438 = vld [vmem:[%s588 + $0xf8] sm:$0xff]
      %v2439 = vld [vmem:[%s588 + $0x100] sm:$0xff]
      %v2440 = vld [vmem:[%s588 + $0x108] sm:$0xff]
      %v2441 = vld [vmem:[%s588 + $0x110] sm:$0xff]
      %v2442 = vld [vmem:[%s588 + $0x118] sm:$0xff]
      %v2443 = vld [vmem:[%s588 + $0x120] sm:$0xff]
      %v2444 = vld [vmem:[%s588 + $0x128] sm:$0xff]
      %v2445 = vld [vmem:[%s588 + $0x130] sm:$0xff]
      %v2446 = vld [vmem:[%s588 + $0x138] sm:$0xff]
      %v2447 = vld [vmem:[%s588 + $0x140] sm:$0xff]
      %v2448 = vld [vmem:[%s588 + $0x148] sm:$0xff]
      %v2449 = vld [vmem:[%s588 + $0x150] sm:$0xff]
      %v2450 = vld [vmem:[%s588 + $0x158] sm:$0xff]
      %v2451 = vld [vmem:[%s588 + $0x160] sm:$0xff]
      %v2452 = vld [vmem:[%s588 + $0x168] sm:$0xff]
      %v2453 = vld [vmem:[%s588 + $0x170] sm:$0xff]
      %v2454 = vld [vmem:[%s588 + $0x178] sm:$0xff]
      %v2503 = vunpack.c.l.b16 %v2407
      %v2504 = vunpack.c.h.b16 %v2407
      %v2505 = vunpack.c.l.b16 %v2408
      %v2506 = vunpack.c.h.b16 %v2408
      %v2507 = vunpack.c.l.b16 %v2409
      %v2508 = vunpack.c.h.b16 %v2409
      %v2509 = vunpack.c.l.b16 %v2410
      %v2510 = vunpack.c.h.b16 %v2410
      %v2511 = vunpack.c.l.b16 %v2411
      %v2512 = vunpack.c.h.b16 %v2411
      %v2513 = vunpack.c.l.b16 %v2412
      %v2514 = vunpack.c.h.b16 %v2412
      %v2515 = vunpack.c.l.b16 %v2413
      %v2516 = vunpack.c.h.b16 %v2413
      %v2517 = vunpack.c.l.b16 %v2414
      %v2518 = vunpack.c.h.b16 %v2414
      %v2519 = vunpack.c.l.b16 %v2415
      %v2520 = vunpack.c.h.b16 %v2415
      %v2521 = vunpack.c.l.b16 %v2416
      %v2522 = vunpack.c.h.b16 %v2416
      %v2523 = vunpack.c.l.b16 %v2417
      %v2524 = vunpack.c.h.b16 %v2417
      %v2525 = vunpack.c.l.b16 %v2418
      %v2526 = vunpack.c.h.b16 %v2418
      %v2527 = vunpack.c.l.b16 %v2419
      %v2528 = vunpack.c.h.b16 %v2419
      %v2529 = vunpack.c.l.b16 %v2420
      %v2530 = vunpack.c.h.b16 %v2420
      %v2531 = vunpack.c.l.b16 %v2421
      %v2532 = vunpack.c.h.b16 %v2421
      %v2533 = vunpack.c.l.b16 %v2422
      %v2534 = vunpack.c.h.b16 %v2422
      %v2535 = vunpack.c.l.b16 %v2423
      %v2536 = vunpack.c.h.b16 %v2423
      %v2537 = vunpack.c.l.b16 %v2424
      %v2538 = vunpack.c.h.b16 %v2424
      %v2539 = vunpack.c.l.b16 %v2425
      %v2540 = vunpack.c.h.b16 %v2425
      %v2541 = vunpack.c.l.b16 %v2426
      %v2542 = vunpack.c.h.b16 %v2426
      %v2543 = vunpack.c.l.b16 %v2427
      %v2544 = vunpack.c.h.b16 %v2427
      %v2545 = vunpack.c.l.b16 %v2428
      %v2546 = vunpack.c.h.b16 %v2428
      %v2547 = vunpack.c.l.b16 %v2429
      %v2548 = vunpack.c.h.b16 %v2429
      %v2549 = vunpack.c.l.b16 %v2430
      %v2550 = vunpack.c.h.b16 %v2430
      %v2551 = vunpack.c.l.b16 %v2431
      %v2552 = vunpack.c.h.b16 %v2431
      %v2553 = vunpack.c.l.b16 %v2432
      %v2554 = vunpack.c.h.b16 %v2432
      %v2555 = vunpack.c.l.b16 %v2433
      %v2556 = vunpack.c.h.b16 %v2433
      %v2557 = vunpack.c.l.b16 %v2434
      %v2558 = vunpack.c.h.b16 %v2434
      %v2559 = vunpack.c.l.b16 %v2435
      %v2560 = vunpack.c.h.b16 %v2435
      %v2561 = vunpack.c.l.b16 %v2436
      %v2562 = vunpack.c.h.b16 %v2436
      %v2563 = vunpack.c.l.b16 %v2437
      %v2564 = vunpack.c.h.b16 %v2437
      %v2565 = vunpack.c.l.b16 %v2438
      %v2566 = vunpack.c.h.b16 %v2438
      %v2567 = vunpack.c.l.b16 %v2439
      %v2568 = vunpack.c.h.b16 %v2439
      %v2569 = vunpack.c.l.b16 %v2440
      %v2570 = vunpack.c.h.b16 %v2440
      %v2571 = vunpack.c.l.b16 %v2441
      %v2572 = vunpack.c.h.b16 %v2441
      %v2573 = vunpack.c.l.b16 %v2442
      %v2574 = vunpack.c.h.b16 %v2442
      %v2575 = vunpack.c.l.b16 %v2443
      %v2576 = vunpack.c.h.b16 %v2443
      %v2577 = vunpack.c.l.b16 %v2444
      %v2578 = vunpack.c.h.b16 %v2444
      %v2579 = vunpack.c.l.b16 %v2445
      %v2580 = vunpack.c.h.b16 %v2445
      %v2581 = vunpack.c.l.b16 %v2446
      %v2582 = vunpack.c.h.b16 %v2446
      %v2583 = vunpack.c.l.b16 %v2447
      %v2584 = vunpack.c.h.b16 %v2447
      %v2585 = vunpack.c.l.b16 %v2448
      %v2586 = vunpack.c.h.b16 %v2448
      %v2587 = vunpack.c.l.b16 %v2449
      %v2588 = vunpack.c.h.b16 %v2449
      %v2589 = vunpack.c.l.b16 %v2450
      %v2590 = vunpack.c.h.b16 %v2450
      %v2591 = vunpack.c.l.b16 %v2451
      %v2592 = vunpack.c.h.b16 %v2451
      %v2593 = vunpack.c.l.b16 %v2452
      %v2594 = vunpack.c.h.b16 %v2452
      %v2595 = vunpack.c.l.b16 %v2453
      %v2596 = vunpack.c.h.b16 %v2453
      %v2597 = vunpack.c.l.b16 %v2454
      %v2598 = vunpack.c.h.b16 %v2454
      %v2599 = vpack.c.b16 %v2505, %v2503
      %v2600 = vpack.c.b16 %v2506, %v2504
      %v2601 = vpack.c.b16 %v2509, %v2507
      %v2602 = vpack.c.b16 %v2510, %v2508
      %v2603 = vpack.c.b16 %v2513, %v2511
      %v2604 = vpack.c.b16 %v2514, %v2512
      %v2605 = vpack.c.b16 %v2517, %v2515
      %v2606 = vpack.c.b16 %v2518, %v2516
      %v2607 = vpack.c.b16 %v2521, %v2519
      %v2608 = vpack.c.b16 %v2522, %v2520
      %v2609 = vpack.c.b16 %v2525, %v2523
      %v2610 = vpack.c.b16 %v2526, %v2524
      %v2611 = vpack.c.b16 %v2529, %v2527
      %v2612 = vpack.c.b16 %v2530, %v2528
      %v2613 = vpack.c.b16 %v2533, %v2531
      %v2614 = vpack.c.b16 %v2534, %v2532
      %v2615 = vpack.c.b16 %v2537, %v2535
      %v2616 = vpack.c.b16 %v2538, %v2536
      %v2617 = vpack.c.b16 %v2541, %v2539
      %v2618 = vpack.c.b16 %v2542, %v2540
      %v2619 = vpack.c.b16 %v2545, %v2543
      %v2620 = vpack.c.b16 %v2546, %v2544
      %v2621 = vpack.c.b16 %v2549, %v2547
      %v2622 = vpack.c.b16 %v2550, %v2548
      %v2623 = vpack.c.b16 %v2553, %v2551
      %v2624 = vpack.c.b16 %v2554, %v2552
      %v2625 = vpack.c.b16 %v2557, %v2555
      %v2626 = vpack.c.b16 %v2558, %v2556
      %v2627 = vpack.c.b16 %v2561, %v2559
      %v2628 = vpack.c.b16 %v2562, %v2560
      %v2629 = vpack.c.b16 %v2565, %v2563
      %v2630 = vpack.c.b16 %v2566, %v2564
      %v2631 = vpack.c.b16 %v2569, %v2567
      %v2632 = vpack.c.b16 %v2570, %v2568
      %v2633 = vpack.c.b16 %v2573, %v2571
      %v2634 = vpack.c.b16 %v2574, %v2572
      %v2635 = vpack.c.b16 %v2577, %v2575
      %v2636 = vpack.c.b16 %v2578, %v2576
      %v2637 = vpack.c.b16 %v2581, %v2579
      %v2638 = vpack.c.b16 %v2582, %v2580
      %v2639 = vpack.c.b16 %v2585, %v2583
      %v2640 = vpack.c.b16 %v2586, %v2584
      %v2641 = vpack.c.b16 %v2589, %v2587
      %v2642 = vpack.c.b16 %v2590, %v2588
      %v2643 = vpack.c.b16 %v2593, %v2591
      %v2644 = vpack.c.b16 %v2594, %v2592
      %v2645 = vpack.c.b16 %v2597, %v2595
      %v2646 = vpack.c.b16 %v2598, %v2596
      %2695 = vmatprep.subr.bf16.mxu0 %v2614
      %2696 = vmatpush1.bf16.msra.mxu0 %v2613
      %2697 = vmatprep.subr.bf16.mxu0 %v2612
      %2698 = vmatpush1.bf16.msra.mxu0 %v2611
      %2699 = vmatprep.subr.bf16.mxu0 %v2610
      %2700 = vmatpush1.bf16.msra.mxu0 %v2609
      %2701 = vmatprep.subr.bf16.mxu0 %v2608
      %2702 = vmatpush1.bf16.msra.mxu0 %v2607
      %2703 = vmatprep.subr.bf16.mxu0 %v2606
      %2704 = vmatpush1.bf16.msra.mxu0 %v2605
      %2705 = vmatprep.subr.bf16.mxu0 %v2604
      %2706 = vmatpush1.bf16.msra.mxu0 %v2603
      %2707 = vmatprep.subr.bf16.mxu0 %v2602
      %2708 = vmatpush1.bf16.msra.mxu0 %v2601
      %2709 = vmatprep.subr.bf16.mxu0 %v2600
      %2710 = vmatpush1.bf16.msra.mxu0 %v2599
      %2711 = vmatprep.subr.bf16.mxu0 %v2630
      %2712 = vmatpush2.bf16.msra.mxu0 %v2629
      %2713 = vmatprep.subr.bf16.mxu0 %v2628
      %2714 = vmatpush2.bf16.msra.mxu0 %v2627
      %2715 = vmatprep.subr.bf16.mxu0 %v2626
      %2716 = vmatpush2.bf16.msra.mxu0 %v2625
      %2717 = vmatprep.subr.bf16.mxu0 %v2624
      %2718 = vmatpush2.bf16.msra.mxu0 %v2623
      %2719 = vmatprep.subr.bf16.mxu0 %v2622
      %2720 = vmatpush2.bf16.msra.mxu0 %v2621
      %2721 = vmatprep.subr.bf16.mxu0 %v2620
      %2722 = vmatpush2.bf16.msra.mxu0 %v2619
      %2723 = vmatprep.subr.bf16.mxu0 %v2618
      %2724 = vmatpush2.bf16.msra.mxu0 %v2617
      %2725 = vmatprep.subr.bf16.mxu0 %v2616
      %2726 = vmatpush2.bf16.msra.mxu0 %v2615
      %2727 = vmatprep.mubr.bf16.mxu0 %v516
      %2728 = vmatmul.mubr.bf16.gmra.mxu0 %v515
      %v2729 = vpop.f32.mrf.mxu0
      %v2730 = vadd.f32 0.0, %v2729
      %v2731 = vpop.f32.mrf.mxu0
      %v2732 = vadd.f32 0.0, %v2731
      %v2733 = vpop.f32.mrf.mxu0
      %v2734 = vadd.f32 0.0, %v2733
      %v2735 = vpop.f32.mrf.mxu0
      %v2736 = vadd.f32 0.0, %v2735
      %2737 = vmatprep.mubr.bf16.mxu0 %v519
      %2738 = vmatmul.mubr.bf16.gmra.mxu0 %v518
      %v2739 = vpop.f32.mrf.mxu0
      %v2740 = vadd.f32 0.0, %v2739
      %v2741 = vpop.f32.mrf.mxu0
      %v2742 = vadd.f32 0.0, %v2741
      %v2743 = vpop.f32.mrf.mxu0
      %v2744 = vadd.f32 0.0, %v2743
      %v2745 = vpop.f32.mrf.mxu0
      %v2746 = vadd.f32 0.0, %v2745
      %2747 = vmatprep.mubr.bf16.mxu0 %v522
      %2748 = vmatmul.mubr.bf16.gmra.mxu0 %v521
      %v2749 = vpop.f32.mrf.mxu0
      %v2750 = vadd.f32 0.0, %v2749
      %v2751 = vpop.f32.mrf.mxu0
      %v2752 = vadd.f32 0.0, %v2751
      %v2753 = vpop.f32.mrf.mxu0
      %v2754 = vadd.f32 0.0, %v2753
      %v2755 = vpop.f32.mrf.mxu0
      %v2756 = vadd.f32 0.0, %v2755
      %2757 = vmatprep.mubr.bf16.mxu0 %v525
      %2758 = vmatmul.mubr.bf16.gmra.mxu0 %v524
      %v2759 = vpop.f32.mrf.mxu0
      %v2760 = vadd.f32 0.0, %v2759
      %v2761 = vpop.f32.mrf.mxu0
      %v2762 = vadd.f32 0.0, %v2761
      %v2763 = vpop.f32.mrf.mxu0
      %v2764 = vadd.f32 0.0, %v2763
      %v2765 = vpop.f32.mrf.mxu0
      %v2766 = vadd.f32 0.0, %v2765
      %2767 = vmatprep.mubr.bf16.mxu0 %v528
      %2768 = vmatmul.mubr.bf16.gmra.mxu0 %v527
      %v2769 = vpop.f32.mrf.mxu0
      %v2770 = vadd.f32 0.0, %v2769
      %v2771 = vpop.f32.mrf.mxu0
      %v2772 = vadd.f32 0.0, %v2771
      %v2773 = vpop.f32.mrf.mxu0
      %v2774 = vadd.f32 0.0, %v2773
      %v2775 = vpop.f32.mrf.mxu0
      %v2776 = vadd.f32 0.0, %v2775
      %2777 = vmatprep.mubr.bf16.mxu0 %v531
      %2778 = vmatmul.mubr.bf16.gmra.mxu0 %v530
      %v2779 = vpop.f32.mrf.mxu0
      %v2780 = vadd.f32 0.0, %v2779
      %v2781 = vpop.f32.mrf.mxu0
      %v2782 = vadd.f32 0.0, %v2781
      %v2783 = vpop.f32.mrf.mxu0
      %v2784 = vadd.f32 0.0, %v2783
      %v2785 = vpop.f32.mrf.mxu0
      %v2786 = vadd.f32 0.0, %v2785
      %2787 = vmatprep.mubr.bf16.mxu0 %v534
      %2788 = vmatmul.mubr.bf16.gmra.mxu0 %v533
      %v2789 = vpop.f32.mrf.mxu0
      %v2790 = vadd.f32 0.0, %v2789
      %v2791 = vpop.f32.mrf.mxu0
      %v2792 = vadd.f32 0.0, %v2791
      %v2793 = vpop.f32.mrf.mxu0
      %v2794 = vadd.f32 0.0, %v2793
      %v2795 = vpop.f32.mrf.mxu0
      %v2796 = vadd.f32 0.0, %v2795
      %2797 = vmatprep.mubr.bf16.mxu0 %v537
      %2798 = vmatmul.mubr.bf16.gmra.mxu0 %v536
      %v2799 = vpop.f32.mrf.mxu0
      %v2800 = vadd.f32 0.0, %v2799
      %v2801 = vpop.f32.mrf.mxu0
      %v2802 = vadd.f32 0.0, %v2801
      %v2803 = vpop.f32.mrf.mxu0
      %v2804 = vadd.f32 0.0, %v2803
      %v2805 = vpop.f32.mrf.mxu0
      %v2806 = vadd.f32 0.0, %v2805
      %2807 = vdwg.mxu0
      %2808 = vmatprep.subr.bf16.mxu0 %v2646
      %2809 = vmatpush1.bf16.msra.mxu0 %v2645
      %2810 = vmatprep.subr.bf16.mxu0 %v2644
      %2811 = vmatpush1.bf16.msra.mxu0 %v2643
      %2812 = vmatprep.subr.bf16.mxu0 %v2642
      %2813 = vmatpush1.bf16.msra.mxu0 %v2641
      %2814 = vmatprep.subr.bf16.mxu0 %v2640
      %2815 = vmatpush1.bf16.msra.mxu0 %v2639
      %2816 = vmatprep.subr.bf16.mxu0 %v2638
      %2817 = vmatpush1.bf16.msra.mxu0 %v2637
      %2818 = vmatprep.subr.bf16.mxu0 %v2636
      %2819 = vmatpush1.bf16.msra.mxu0 %v2635
      %2820 = vmatprep.subr.bf16.mxu0 %v2634
      %2821 = vmatpush1.bf16.msra.mxu0 %v2633
      %2822 = vmatprep.subr.bf16.mxu0 %v2632
      %2823 = vmatpush1.bf16.msra.mxu0 %v2631
      %2824 = vmatprep.subr.bf16.mxu0 0
      %2825 = vmatpush2.bf16.msra.mxu0 0
      %2826 = vmatprep.subr.bf16.mxu0 0
      %2827 = vmatpush2.bf16.msra.mxu0 0
      %2828 = vmatprep.subr.bf16.mxu0 0
      %2829 = vmatpush2.bf16.msra.mxu0 0
      %2830 = vmatprep.subr.bf16.mxu0 0
      %2831 = vmatpush2.bf16.msra.mxu0 0
      %2832 = vmatprep.subr.bf16.mxu0 0
      %2833 = vmatpush2.bf16.msra.mxu0 0
      %2834 = vmatprep.subr.bf16.mxu0 0
      %2835 = vmatpush2.bf16.msra.mxu0 0
      %2836 = vmatprep.subr.bf16.mxu0 0
      %2837 = vmatpush2.bf16.msra.mxu0 0
      %2838 = vmatprep.subr.bf16.mxu0 0
      %2839 = vmatpush2.bf16.msra.mxu0 0
      %2840 = vmatprep.mubr.bf16.mxu0 0
      %2841 = vmatmul.mubr.bf16.gmra.mxu0 %v517
      %v2842 = vpop.f32.mrf.mxu0
      %v2843 = vadd.f32 %v2730, %v2842
      %v2844 = vpop.f32.mrf.mxu0
      %v2845 = vadd.f32 %v2732, %v2844
      %v2846 = vpop.f32.mrf.mxu0
      %v2847 = vadd.f32 %v2734, %v2846
      %v2848 = vpop.f32.mrf.mxu0
      %v2849 = vadd.f32 %v2736, %v2848
      %2850 = vmatprep.mubr.bf16.mxu0 0
      %2851 = vmatmul.mubr.bf16.gmra.mxu0 %v520
      %v2852 = vpop.f32.mrf.mxu0
      %v2853 = vadd.f32 %v2740, %v2852
      %v2854 = vpop.f32.mrf.mxu0
      %v2855 = vadd.f32 %v2742, %v2854
      %v2856 = vpop.f32.mrf.mxu0
      %v2857 = vadd.f32 %v2744, %v2856
      %v2858 = vpop.f32.mrf.mxu0
      %v2859 = vadd.f32 %v2746, %v2858
      %2860 = vmatprep.mubr.bf16.mxu0 0
      %2861 = vmatmul.mubr.bf16.gmra.mxu0 %v523
      %v2862 = vpop.f32.mrf.mxu0
      %v2863 = vadd.f32 %v2750, %v2862
      %v2864 = vpop.f32.mrf.mxu0
      %v2865 = vadd.f32 %v2752, %v2864
      %v2866 = vpop.f32.mrf.mxu0
      %v2867 = vadd.f32 %v2754, %v2866
      %v2868 = vpop.f32.mrf.mxu0
      %v2869 = vadd.f32 %v2756, %v2868
      %2870 = vmatprep.mubr.bf16.mxu0 0
      %2871 = vmatmul.mubr.bf16.gmra.mxu0 %v526
      %v2872 = vpop.f32.mrf.mxu0
      %v2873 = vadd.f32 %v2760, %v2872
      %v2874 = vpop.f32.mrf.mxu0
      %v2875 = vadd.f32 %v2762, %v2874
      %v2876 = vpop.f32.mrf.mxu0
      %v2877 = vadd.f32 %v2764, %v2876
      %v2878 = vpop.f32.mrf.mxu0
      %v2879 = vadd.f32 %v2766, %v2878
      %2880 = vmatprep.mubr.bf16.mxu0 0
      %2881 = vmatmul.mubr.bf16.gmra.mxu0 %v529
      %v2882 = vpop.f32.mrf.mxu0
      %v2883 = vadd.f32 %v2770, %v2882
      %v2884 = vpop.f32.mrf.mxu0
      %v2885 = vadd.f32 %v2772, %v2884
      %v2886 = vpop.f32.mrf.mxu0
      %v2887 = vadd.f32 %v2774, %v2886
      %v2888 = vpop.f32.mrf.mxu0
      %v2889 = vadd.f32 %v2776, %v2888
      %2890 = vmatprep.mubr.bf16.mxu0 0
      %2891 = vmatmul.mubr.bf16.gmra.mxu0 %v532
      %v2892 = vpop.f32.mrf.mxu0
      %v2893 = vadd.f32 %v2780, %v2892
      %v2894 = vpop.f32.mrf.mxu0
      %v2895 = vadd.f32 %v2782, %v2894
      %v2896 = vpop.f32.mrf.mxu0
      %v2897 = vadd.f32 %v2784, %v2896
      %v2898 = vpop.f32.mrf.mxu0
      %v2899 = vadd.f32 %v2786, %v2898
      %2900 = vmatprep.mubr.bf16.mxu0 0
      %2901 = vmatmul.mubr.bf16.gmra.mxu0 %v535
      %v2902 = vpop.f32.mrf.mxu0
      %v2903 = vadd.f32 %v2790, %v2902
      %v2904 = vpop.f32.mrf.mxu0
      %v2905 = vadd.f32 %v2792, %v2904
      %v2906 = vpop.f32.mrf.mxu0
      %v2907 = vadd.f32 %v2794, %v2906
      %v2908 = vpop.f32.mrf.mxu0
      %v2909 = vadd.f32 %v2796, %v2908
      %2910 = vmatprep.mubr.bf16.mxu0 0
      %2911 = vmatmul.mubr.bf16.gmra.mxu0 %v538
      %v2912 = vpop.f32.mrf.mxu0
      %v2913 = vadd.f32 %v2800, %v2912
      %v2914 = vpop.f32.mrf.mxu0
      %v2915 = vadd.f32 %v2802, %v2914
      %v2916 = vpop.f32.mrf.mxu0
      %v2917 = vadd.f32 %v2804, %v2916
      %v2918 = vpop.f32.mrf.mxu0
      %v2919 = vadd.f32 %v2806, %v2918
      %2920 = vdwg.mxu0
      %v2969 = vunpack.c.l.b16 %v2359
      %v2970 = vunpack.c.h.b16 %v2359
      %v2971 = vunpack.c.l.b16 %v2360
      %v2972 = vunpack.c.h.b16 %v2360
      %v2973 = vunpack.c.l.b16 %v2361
      %v2974 = vunpack.c.h.b16 %v2361
      %v2975 = vunpack.c.l.b16 %v2362
      %v2976 = vunpack.c.h.b16 %v2362
      %v2977 = vunpack.c.l.b16 %v2363
      %v2978 = vunpack.c.h.b16 %v2363
      %v2979 = vunpack.c.l.b16 %v2364
      %v2980 = vunpack.c.h.b16 %v2364
      %v2981 = vunpack.c.l.b16 %v2365
      %v2982 = vunpack.c.h.b16 %v2365
      %v2983 = vunpack.c.l.b16 %v2366
      %v2984 = vunpack.c.h.b16 %v2366
      %v2985 = vunpack.c.l.b16 %v2367
      %v2986 = vunpack.c.h.b16 %v2367
      %v2987 = vunpack.c.l.b16 %v2368
      %v2988 = vunpack.c.h.b16 %v2368
      %v2989 = vunpack.c.l.b16 %v2369
      %v2990 = vunpack.c.h.b16 %v2369
      %v2991 = vunpack.c.l.b16 %v2370
      %v2992 = vunpack.c.h.b16 %v2370
      %v2993 = vunpack.c.l.b16 %v2371
      %v2994 = vunpack.c.h.b16 %v2371
      %v2995 = vunpack.c.l.b16 %v2372
      %v2996 = vunpack.c.h.b16 %v2372
      %v2997 = vunpack.c.l.b16 %v2373
      %v2998 = vunpack.c.h.b16 %v2373
      %v2999 = vunpack.c.l.b16 %v2374
      %v3000 = vunpack.c.h.b16 %v2374
      %v3001 = vunpack.c.l.b16 %v2375
      %v3002 = vunpack.c.h.b16 %v2375
      %v3003 = vunpack.c.l.b16 %v2376
      %v3004 = vunpack.c.h.b16 %v2376
      %v3005 = vunpack.c.l.b16 %v2377
      %v3006 = vunpack.c.h.b16 %v2377
      %v3007 = vunpack.c.l.b16 %v2378
      %v3008 = vunpack.c.h.b16 %v2378
      %v3009 = vunpack.c.l.b16 %v2379
      %v3010 = vunpack.c.h.b16 %v2379
      %v3011 = vunpack.c.l.b16 %v2380
      %v3012 = vunpack.c.h.b16 %v2380
      %v3013 = vunpack.c.l.b16 %v2381
      %v3014 = vunpack.c.h.b16 %v2381
      %v3015 = vunpack.c.l.b16 %v2382
      %v3016 = vunpack.c.h.b16 %v2382
      %v3017 = vunpack.c.l.b16 %v2383
      %v3018 = vunpack.c.h.b16 %v2383
      %v3019 = vunpack.c.l.b16 %v2384
      %v3020 = vunpack.c.h.b16 %v2384
      %v3021 = vunpack.c.l.b16 %v2385
      %v3022 = vunpack.c.h.b16 %v2385
      %v3023 = vunpack.c.l.b16 %v2386
      %v3024 = vunpack.c.h.b16 %v2386
      %v3025 = vunpack.c.l.b16 %v2387
      %v3026 = vunpack.c.h.b16 %v2387
      %v3027 = vunpack.c.l.b16 %v2388
      %v3028 = vunpack.c.h.b16 %v2388
      %v3029 = vunpack.c.l.b16 %v2389
      %v3030 = vunpack.c.h.b16 %v2389
      %v3031 = vunpack.c.l.b16 %v2390
      %v3032 = vunpack.c.h.b16 %v2390
      %v3033 = vunpack.c.l.b16 %v2391
      %v3034 = vunpack.c.h.b16 %v2391
      %v3035 = vunpack.c.l.b16 %v2392
      %v3036 = vunpack.c.h.b16 %v2392
      %v3037 = vunpack.c.l.b16 %v2393
      %v3038 = vunpack.c.h.b16 %v2393
      %v3039 = vunpack.c.l.b16 %v2394
      %v3040 = vunpack.c.h.b16 %v2394
      %v3041 = vunpack.c.l.b16 %v2395
      %v3042 = vunpack.c.h.b16 %v2395
      %v3043 = vunpack.c.l.b16 %v2396
      %v3044 = vunpack.c.h.b16 %v2396
      %v3045 = vunpack.c.l.b16 %v2397
      %v3046 = vunpack.c.h.b16 %v2397
      %v3047 = vunpack.c.l.b16 %v2398
      %v3048 = vunpack.c.h.b16 %v2398
      %v3049 = vunpack.c.l.b16 %v2399
      %v3050 = vunpack.c.h.b16 %v2399
      %v3051 = vunpack.c.l.b16 %v2400
      %v3052 = vunpack.c.h.b16 %v2400
      %v3053 = vunpack.c.l.b16 %v2401
      %v3054 = vunpack.c.h.b16 %v2401
      %v3055 = vunpack.c.l.b16 %v2402
      %v3056 = vunpack.c.h.b16 %v2402
      %v3057 = vunpack.c.l.b16 %v2403
      %v3058 = vunpack.c.h.b16 %v2403
      %v3059 = vunpack.c.l.b16 %v2404
      %v3060 = vunpack.c.h.b16 %v2404
      %v3061 = vunpack.c.l.b16 %v2405
      %v3062 = vunpack.c.h.b16 %v2405
      %v3063 = vunpack.c.l.b16 %v2406
      %v3064 = vunpack.c.h.b16 %v2406
      %v3065 = vpack.c.b16 %v2971, %v2969
      %v3066 = vpack.c.b16 %v2972, %v2970
      %v3067 = vpack.c.b16 %v2975, %v2973
      %v3068 = vpack.c.b16 %v2976, %v2974
      %v3069 = vpack.c.b16 %v2979, %v2977
      %v3070 = vpack.c.b16 %v2980, %v2978
      %v3071 = vpack.c.b16 %v2983, %v2981
      %v3072 = vpack.c.b16 %v2984, %v2982
      %v3073 = vpack.c.b16 %v2987, %v2985
      %v3074 = vpack.c.b16 %v2988, %v2986
      %v3075 = vpack.c.b16 %v2991, %v2989
      %v3076 = vpack.c.b16 %v2992, %v2990
      %v3077 = vpack.c.b16 %v2995, %v2993
      %v3078 = vpack.c.b16 %v2996, %v2994
      %v3079 = vpack.c.b16 %v2999, %v2997
      %v3080 = vpack.c.b16 %v3000, %v2998
      %v3081 = vpack.c.b16 %v3003, %v3001
      %v3082 = vpack.c.b16 %v3004, %v3002
      %v3083 = vpack.c.b16 %v3007, %v3005
      %v3084 = vpack.c.b16 %v3008, %v3006
      %v3085 = vpack.c.b16 %v3011, %v3009
      %v3086 = vpack.c.b16 %v3012, %v3010
      %v3087 = vpack.c.b16 %v3015, %v3013
      %v3088 = vpack.c.b16 %v3016, %v3014
      %v3089 = vpack.c.b16 %v3019, %v3017
      %v3090 = vpack.c.b16 %v3020, %v3018
      %v3091 = vpack.c.b16 %v3023, %v3021
      %v3092 = vpack.c.b16 %v3024, %v3022
      %v3093 = vpack.c.b16 %v3027, %v3025
      %v3094 = vpack.c.b16 %v3028, %v3026
      %v3095 = vpack.c.b16 %v3031, %v3029
      %v3096 = vpack.c.b16 %v3032, %v3030
      %v3097 = vpack.c.b16 %v3035, %v3033
      %v3098 = vpack.c.b16 %v3036, %v3034
      %v3099 = vpack.c.b16 %v3039, %v3037
      %v3100 = vpack.c.b16 %v3040, %v3038
      %v3101 = vpack.c.b16 %v3043, %v3041
      %v3102 = vpack.c.b16 %v3044, %v3042
      %v3103 = vpack.c.b16 %v3047, %v3045
      %v3104 = vpack.c.b16 %v3048, %v3046
      %v3105 = vpack.c.b16 %v3051, %v3049
      %v3106 = vpack.c.b16 %v3052, %v3050
      %v3107 = vpack.c.b16 %v3055, %v3053
      %v3108 = vpack.c.b16 %v3056, %v3054
      %v3109 = vpack.c.b16 %v3059, %v3057
      %v3110 = vpack.c.b16 %v3060, %v3058
      %v3111 = vpack.c.b16 %v3063, %v3061
      %v3112 = vpack.c.b16 %v3064, %v3062
      %3161 = vmatprep.subr.bf16.mxu0 %v3080
      %3162 = vmatpush1.bf16.msra.mxu0 %v3079
      %3163 = vmatprep.subr.bf16.mxu0 %v3078
      %3164 = vmatpush1.bf16.msra.mxu0 %v3077
      %3165 = vmatprep.subr.bf16.mxu0 %v3076
      %3166 = vmatpush1.bf16.msra.mxu0 %v3075
      %3167 = vmatprep.subr.bf16.mxu0 %v3074
      %3168 = vmatpush1.bf16.msra.mxu0 %v3073
      %3169 = vmatprep.subr.bf16.mxu0 %v3072
      %3170 = vmatpush1.bf16.msra.mxu0 %v3071
      %3171 = vmatprep.subr.bf16.mxu0 %v3070
      %3172 = vmatpush1.bf16.msra.mxu0 %v3069
      %3173 = vmatprep.subr.bf16.mxu0 %v3068
      %3174 = vmatpush1.bf16.msra.mxu0 %v3067
      %3175 = vmatprep.subr.bf16.mxu0 %v3066
      %3176 = vmatpush1.bf16.msra.mxu0 %v3065
      %3177 = vmatprep.subr.bf16.mxu0 %v3096
      %3178 = vmatpush2.bf16.msra.mxu0 %v3095
      %3179 = vmatprep.subr.bf16.mxu0 %v3094
      %3180 = vmatpush2.bf16.msra.mxu0 %v3093
      %3181 = vmatprep.subr.bf16.mxu0 %v3092
      %3182 = vmatpush2.bf16.msra.mxu0 %v3091
      %3183 = vmatprep.subr.bf16.mxu0 %v3090
      %3184 = vmatpush2.bf16.msra.mxu0 %v3089
      %3185 = vmatprep.subr.bf16.mxu0 %v3088
      %3186 = vmatpush2.bf16.msra.mxu0 %v3087
      %3187 = vmatprep.subr.bf16.mxu0 %v3086
      %3188 = vmatpush2.bf16.msra.mxu0 %v3085
      %3189 = vmatprep.subr.bf16.mxu0 %v3084
      %3190 = vmatpush2.bf16.msra.mxu0 %v3083
      %3191 = vmatprep.subr.bf16.mxu0 %v3082
      %3192 = vmatpush2.bf16.msra.mxu0 %v3081
      %3193 = vmatprep.mubr.bf16.mxu0 %v513
      %3194 = vmatmul.mubr.bf16.gmra.mxu0 %v512
      %v3195 = vpop.f32.mrf.mxu0
      %v3196 = vadd.f32 %v2843, %v3195
      %v3197 = vpop.f32.mrf.mxu0
      %v3198 = vadd.f32 %v2845, %v3197
      %v3199 = vpop.f32.mrf.mxu0
      %v3200 = vadd.f32 %v2847, %v3199
      %v3201 = vpop.f32.mrf.mxu0
      %v3202 = vadd.f32 %v2849, %v3201
      %3203 = vmatprep.mubr.bf16.mxu0 %v516
      %3204 = vmatmul.mubr.bf16.gmra.mxu0 %v515
      %v3205 = vpop.f32.mrf.mxu0
      %v3206 = vadd.f32 %v2853, %v3205
      %v3207 = vpop.f32.mrf.mxu0
      %v3208 = vadd.f32 %v2855, %v3207
      %v3209 = vpop.f32.mrf.mxu0
      %v3210 = vadd.f32 %v2857, %v3209
      %v3211 = vpop.f32.mrf.mxu0
      %v3212 = vadd.f32 %v2859, %v3211
      %3213 = vmatprep.mubr.bf16.mxu0 %v519
      %3214 = vmatmul.mubr.bf16.gmra.mxu0 %v518
      %v3215 = vpop.f32.mrf.mxu0
      %v3216 = vadd.f32 %v2863, %v3215
      %v3217 = vpop.f32.mrf.mxu0
      %v3218 = vadd.f32 %v2865, %v3217
      %v3219 = vpop.f32.mrf.mxu0
      %v3220 = vadd.f32 %v2867, %v3219
      %v3221 = vpop.f32.mrf.mxu0
      %v3222 = vadd.f32 %v2869, %v3221
      %3223 = vmatprep.mubr.bf16.mxu0 %v522
      %3224 = vmatmul.mubr.bf16.gmra.mxu0 %v521
      %v3225 = vpop.f32.mrf.mxu0
      %v3226 = vadd.f32 %v2873, %v3225
      %v3227 = vpop.f32.mrf.mxu0
      %v3228 = vadd.f32 %v2875, %v3227
      %v3229 = vpop.f32.mrf.mxu0
      %v3230 = vadd.f32 %v2877, %v3229
      %v3231 = vpop.f32.mrf.mxu0
      %v3232 = vadd.f32 %v2879, %v3231
      %3233 = vmatprep.mubr.bf16.mxu0 %v525
      %3234 = vmatmul.mubr.bf16.gmra.mxu0 %v524
      %v3235 = vpop.f32.mrf.mxu0
      %v3236 = vadd.f32 %v2883, %v3235
      %v3237 = vpop.f32.mrf.mxu0
      %v3238 = vadd.f32 %v2885, %v3237
      %v3239 = vpop.f32.mrf.mxu0
      %v3240 = vadd.f32 %v2887, %v3239
      %v3241 = vpop.f32.mrf.mxu0
      %v3242 = vadd.f32 %v2889, %v3241
      %3243 = vmatprep.mubr.bf16.mxu0 %v528
      %3244 = vmatmul.mubr.bf16.gmra.mxu0 %v527
      %v3245 = vpop.f32.mrf.mxu0
      %v3246 = vadd.f32 %v2893, %v3245
      %v3247 = vpop.f32.mrf.mxu0
      %v3248 = vadd.f32 %v2895, %v3247
      %v3249 = vpop.f32.mrf.mxu0
      %v3250 = vadd.f32 %v2897, %v3249
      %v3251 = vpop.f32.mrf.mxu0
      %v3252 = vadd.f32 %v2899, %v3251
      %3253 = vmatprep.mubr.bf16.mxu0 %v531
      %3254 = vmatmul.mubr.bf16.gmra.mxu0 %v530
      %v3255 = vpop.f32.mrf.mxu0
      %v3256 = vadd.f32 %v2903, %v3255
      %v3257 = vpop.f32.mrf.mxu0
      %v3258 = vadd.f32 %v2905, %v3257
      %v3259 = vpop.f32.mrf.mxu0
      %v3260 = vadd.f32 %v2907, %v3259
      %v3261 = vpop.f32.mrf.mxu0
      %v3262 = vadd.f32 %v2909, %v3261
      %3263 = vmatprep.mubr.bf16.mxu0 %v534
      %3264 = vmatmul.mubr.bf16.gmra.mxu0 %v533
      %v3265 = vpop.f32.mrf.mxu0
      %v3266 = vadd.f32 %v2913, %v3265
      %v3267 = vpop.f32.mrf.mxu0
      %v3268 = vadd.f32 %v2915, %v3267
      %v3269 = vpop.f32.mrf.mxu0
      %v3270 = vadd.f32 %v2917, %v3269
      %v3271 = vpop.f32.mrf.mxu0
      %v3272 = vadd.f32 %v2919, %v3271
      %3273 = vdwg.mxu0
      %3274 = vmatprep.subr.bf16.mxu0 %v3112
      %3275 = vmatpush1.bf16.msra.mxu0 %v3111
      %3276 = vmatprep.subr.bf16.mxu0 %v3110
      %3277 = vmatpush1.bf16.msra.mxu0 %v3109
      %3278 = vmatprep.subr.bf16.mxu0 %v3108
      %3279 = vmatpush1.bf16.msra.mxu0 %v3107
      %3280 = vmatprep.subr.bf16.mxu0 %v3106
      %3281 = vmatpush1.bf16.msra.mxu0 %v3105
      %3282 = vmatprep.subr.bf16.mxu0 %v3104
      %3283 = vmatpush1.bf16.msra.mxu0 %v3103
      %3284 = vmatprep.subr.bf16.mxu0 %v3102
      %3285 = vmatpush1.bf16.msra.mxu0 %v3101
      %3286 = vmatprep.subr.bf16.mxu0 %v3100
      %3287 = vmatpush1.bf16.msra.mxu0 %v3099
      %3288 = vmatprep.subr.bf16.mxu0 %v3098
      %3289 = vmatpush1.bf16.msra.mxu0 %v3097
      %3290 = vmatprep.subr.bf16.mxu0 0
      %3291 = vmatpush2.bf16.msra.mxu0 0
      %3292 = vmatprep.subr.bf16.mxu0 0
      %3293 = vmatpush2.bf16.msra.mxu0 0
      %3294 = vmatprep.subr.bf16.mxu0 0
      %3295 = vmatpush2.bf16.msra.mxu0 0
      %3296 = vmatprep.subr.bf16.mxu0 0
      %3297 = vmatpush2.bf16.msra.mxu0 0
      %3298 = vmatprep.subr.bf16.mxu0 0
      %3299 = vmatpush2.bf16.msra.mxu0 0
      %3300 = vmatprep.subr.bf16.mxu0 0
      %3301 = vmatpush2.bf16.msra.mxu0 0
      %3302 = vmatprep.subr.bf16.mxu0 0
      %3303 = vmatpush2.bf16.msra.mxu0 0
      %3304 = vmatprep.subr.bf16.mxu0 0
      %3305 = vmatpush2.bf16.msra.mxu0 0
      %3306 = vmatprep.mubr.bf16.mxu0 0
      %3307 = vmatmul.mubr.bf16.gmra.mxu0 %v514
      %v3308 = vpop.f32.mrf.mxu0
      %v3309 = vadd.f32 %v3196, %v3308
      %v3310 = vpop.f32.mrf.mxu0
      %v3311 = vadd.f32 %v3198, %v3310
      %v3312 = vpop.f32.mrf.mxu0
      %v3313 = vadd.f32 %v3200, %v3312
      %v3314 = vpop.f32.mrf.mxu0
      %v3315 = vadd.f32 %v3202, %v3314
      %3316 = vmatprep.mubr.bf16.mxu0 0
      %3317 = vmatmul.mubr.bf16.gmra.mxu0 %v517
      %v3318 = vpop.f32.mrf.mxu0
      %v3319 = vadd.f32 %v3206, %v3318
      %v3320 = vpop.f32.mrf.mxu0
      %v3321 = vadd.f32 %v3208, %v3320
      %v3322 = vpop.f32.mrf.mxu0
      %v3323 = vadd.f32 %v3210, %v3322
      %v3324 = vpop.f32.mrf.mxu0
      %v3325 = vadd.f32 %v3212, %v3324
      %3326 = vmatprep.mubr.bf16.mxu0 0
      %3327 = vmatmul.mubr.bf16.gmra.mxu0 %v520
      %v3328 = vpop.f32.mrf.mxu0
      %v3329 = vadd.f32 %v3216, %v3328
      %v3330 = vpop.f32.mrf.mxu0
      %v3331 = vadd.f32 %v3218, %v3330
      %v3332 = vpop.f32.mrf.mxu0
      %v3333 = vadd.f32 %v3220, %v3332
      %v3334 = vpop.f32.mrf.mxu0
      %v3335 = vadd.f32 %v3222, %v3334
      %3336 = vmatprep.mubr.bf16.mxu0 0
      %3337 = vmatmul.mubr.bf16.gmra.mxu0 %v523
      %v3338 = vpop.f32.mrf.mxu0
      %v3339 = vadd.f32 %v3226, %v3338
      %v3340 = vpop.f32.mrf.mxu0
      %v3341 = vadd.f32 %v3228, %v3340
      %v3342 = vpop.f32.mrf.mxu0
      %v3343 = vadd.f32 %v3230, %v3342
      %v3344 = vpop.f32.mrf.mxu0
      %v3345 = vadd.f32 %v3232, %v3344
      %3346 = vmatprep.mubr.bf16.mxu0 0
      %3347 = vmatmul.mubr.bf16.gmra.mxu0 %v526
      %v3348 = vpop.f32.mrf.mxu0
      %v3349 = vadd.f32 %v3236, %v3348
      %v3350 = vpop.f32.mrf.mxu0
      %v3351 = vadd.f32 %v3238, %v3350
      %v3352 = vpop.f32.mrf.mxu0
      %v3353 = vadd.f32 %v3240, %v3352
      %v3354 = vpop.f32.mrf.mxu0
      %v3355 = vadd.f32 %v3242, %v3354
      %3356 = vmatprep.mubr.bf16.mxu0 0
      %3357 = vmatmul.mubr.bf16.gmra.mxu0 %v529
      %v3358 = vpop.f32.mrf.mxu0
      %v3359 = vadd.f32 %v3246, %v3358
      %v3360 = vpop.f32.mrf.mxu0
      %v3361 = vadd.f32 %v3248, %v3360
      %v3362 = vpop.f32.mrf.mxu0
      %v3363 = vadd.f32 %v3250, %v3362
      %v3364 = vpop.f32.mrf.mxu0
      %v3365 = vadd.f32 %v3252, %v3364
      %3366 = vmatprep.mubr.bf16.mxu0 0
      %3367 = vmatmul.mubr.bf16.gmra.mxu0 %v532
      %v3368 = vpop.f32.mrf.mxu0
      %v3369 = vadd.f32 %v3256, %v3368
      %v3370 = vpop.f32.mrf.mxu0
      %v3371 = vadd.f32 %v3258, %v3370
      %v3372 = vpop.f32.mrf.mxu0
      %v3373 = vadd.f32 %v3260, %v3372
      %v3374 = vpop.f32.mrf.mxu0
      %v3375 = vadd.f32 %v3262, %v3374
      %3376 = vmatprep.mubr.bf16.mxu0 0
      %3377 = vmatmul.mubr.bf16.gmra.mxu0 %v535
      %v3378 = vpop.f32.mrf.mxu0
      %v3379 = vadd.f32 %v3266, %v3378
      %v3380 = vpop.f32.mrf.mxu0
      %v3381 = vadd.f32 %v3268, %v3380
      %v3382 = vpop.f32.mrf.mxu0
      %v3383 = vadd.f32 %v3270, %v3382
      %v3384 = vpop.f32.mrf.mxu0
      %v3385 = vadd.f32 %v3272, %v3384
      %3386 = vdwg.mxu0
      %v3387 = vld [vmem:[%s1569] sm:$0xff]
      %v3388 = vld [vmem:[%s1569 + $0x8] sm:$0xff]
      %v3389 = vld [vmem:[%s1569 + $0x10] sm:$0xff]
      %v3390 = vld [vmem:[%s1569 + $0x18] sm:$0xff]
      %v3391 = vld [vmem:[%s1569 + $0x20] sm:$0xff]
      %v3392 = vld [vmem:[%s1569 + $0x28] sm:$0xff]
      %v3393 = vld [vmem:[%s1569 + $0x30] sm:$0xff]
      %v3394 = vld [vmem:[%s1569 + $0x38] sm:$0xff]
      %v3395 = vld [vmem:[%s1569 + $0x40] sm:$0xff]
      %v3396 = vld [vmem:[%s1569 + $0x48] sm:$0xff]
      %v3397 = vld [vmem:[%s1569 + $0x50] sm:$0xff]
      %v3398 = vld [vmem:[%s1569 + $0x58] sm:$0xff]
      %v3399 = vld [vmem:[%s1569 + $0x60] sm:$0xff]
      %v3400 = vld [vmem:[%s1569 + $0x68] sm:$0xff]
      %v3401 = vld [vmem:[%s1569 + $0x70] sm:$0xff]
      %v3402 = vld [vmem:[%s1569 + $0x78] sm:$0xff]
      %v3403 = vld [vmem:[%s1569 + $0x80] sm:$0xff]
      %v3404 = vld [vmem:[%s1569 + $0x88] sm:$0xff]
      %v3405 = vld [vmem:[%s1569 + $0x90] sm:$0xff]
      %v3406 = vld [vmem:[%s1569 + $0x98] sm:$0xff]
      %v3407 = vld [vmem:[%s1569 + $0xa0] sm:$0xff]
      %v3408 = vld [vmem:[%s1569 + $0xa8] sm:$0xff]
      %v3409 = vld [vmem:[%s1569 + $0xb0] sm:$0xff]
      %v3410 = vld [vmem:[%s1569 + $0xb8] sm:$0xff]
      %v3411 = vld [vmem:[%s1569 + $0xc0] sm:$0xff]
      %v3412 = vld [vmem:[%s1569 + $0xc8] sm:$0xff]
      %v3413 = vld [vmem:[%s1569 + $0xd0] sm:$0xff]
      %v3414 = vld [vmem:[%s1569 + $0xd8] sm:$0xff]
      %v3415 = vld [vmem:[%s1569 + $0xe0] sm:$0xff]
      %v3416 = vld [vmem:[%s1569 + $0xe8] sm:$0xff]
      %v3417 = vld [vmem:[%s1569 + $0xf0] sm:$0xff]
      %v3418 = vld [vmem:[%s1569 + $0xf8] sm:$0xff]
      %v3419 = vld [vmem:[%s1569 + $0x100] sm:$0xff]
      %v3420 = vld [vmem:[%s1569 + $0x108] sm:$0xff]
      %v3421 = vld [vmem:[%s1569 + $0x110] sm:$0xff]
      %v3422 = vld [vmem:[%s1569 + $0x118] sm:$0xff]
      %v3423 = vld [vmem:[%s1569 + $0x120] sm:$0xff]
      %v3424 = vld [vmem:[%s1569 + $0x128] sm:$0xff]
      %v3425 = vld [vmem:[%s1569 + $0x130] sm:$0xff]
      %v3426 = vld [vmem:[%s1569 + $0x138] sm:$0xff]
      %v3427 = vld [vmem:[%s1569 + $0x140] sm:$0xff]
      %v3428 = vld [vmem:[%s1569 + $0x148] sm:$0xff]
      %v3429 = vld [vmem:[%s1569 + $0x150] sm:$0xff]
      %v3430 = vld [vmem:[%s1569 + $0x158] sm:$0xff]
      %v3431 = vld [vmem:[%s1569 + $0x160] sm:$0xff]
      %v3432 = vld [vmem:[%s1569 + $0x168] sm:$0xff]
      %v3433 = vld [vmem:[%s1569 + $0x170] sm:$0xff]
      %v3434 = vld [vmem:[%s1569 + $0x178] sm:$0xff]
      %v3483 = vunpack.c.l.b16 %v3387
      %v3484 = vunpack.c.h.b16 %v3387
      %v3485 = vunpack.c.l.b16 %v3388
      %v3486 = vunpack.c.h.b16 %v3388
      %v3487 = vunpack.c.l.b16 %v3389
      %v3488 = vunpack.c.h.b16 %v3389
      %v3489 = vunpack.c.l.b16 %v3390
      %v3490 = vunpack.c.h.b16 %v3390
      %v3491 = vunpack.c.l.b16 %v3391
      %v3492 = vunpack.c.h.b16 %v3391
      %v3493 = vunpack.c.l.b16 %v3392
      %v3494 = vunpack.c.h.b16 %v3392
      %v3495 = vunpack.c.l.b16 %v3393
      %v3496 = vunpack.c.h.b16 %v3393
      %v3497 = vunpack.c.l.b16 %v3394
      %v3498 = vunpack.c.h.b16 %v3394
      %v3499 = vunpack.c.l.b16 %v3395
      %v3500 = vunpack.c.h.b16 %v3395
      %v3501 = vunpack.c.l.b16 %v3396
      %v3502 = vunpack.c.h.b16 %v3396
      %v3503 = vunpack.c.l.b16 %v3397
      %v3504 = vunpack.c.h.b16 %v3397
      %v3505 = vunpack.c.l.b16 %v3398
      %v3506 = vunpack.c.h.b16 %v3398
      %v3507 = vunpack.c.l.b16 %v3399
      %v3508 = vunpack.c.h.b16 %v3399
      %v3509 = vunpack.c.l.b16 %v3400
      %v3510 = vunpack.c.h.b16 %v3400
      %v3511 = vunpack.c.l.b16 %v3401
      %v3512 = vunpack.c.h.b16 %v3401
      %v3513 = vunpack.c.l.b16 %v3402
      %v3514 = vunpack.c.h.b16 %v3402
      %v3515 = vunpack.c.l.b16 %v3403
      %v3516 = vunpack.c.h.b16 %v3403
      %v3517 = vunpack.c.l.b16 %v3404
      %v3518 = vunpack.c.h.b16 %v3404
      %v3519 = vunpack.c.l.b16 %v3405
      %v3520 = vunpack.c.h.b16 %v3405
      %v3521 = vunpack.c.l.b16 %v3406
      %v3522 = vunpack.c.h.b16 %v3406
      %v3523 = vunpack.c.l.b16 %v3407
      %v3524 = vunpack.c.h.b16 %v3407
      %v3525 = vunpack.c.l.b16 %v3408
      %v3526 = vunpack.c.h.b16 %v3408
      %v3527 = vunpack.c.l.b16 %v3409
      %v3528 = vunpack.c.h.b16 %v3409
      %v3529 = vunpack.c.l.b16 %v3410
      %v3530 = vunpack.c.h.b16 %v3410
      %v3531 = vunpack.c.l.b16 %v3411
      %v3532 = vunpack.c.h.b16 %v3411
      %v3533 = vunpack.c.l.b16 %v3412
      %v3534 = vunpack.c.h.b16 %v3412
      %v3535 = vunpack.c.l.b16 %v3413
      %v3536 = vunpack.c.h.b16 %v3413
      %v3537 = vunpack.c.l.b16 %v3414
      %v3538 = vunpack.c.h.b16 %v3414
      %v3539 = vunpack.c.l.b16 %v3415
      %v3540 = vunpack.c.h.b16 %v3415
      %v3541 = vunpack.c.l.b16 %v3416
      %v3542 = vunpack.c.h.b16 %v3416
      %v3543 = vunpack.c.l.b16 %v3417
      %v3544 = vunpack.c.h.b16 %v3417
      %v3545 = vunpack.c.l.b16 %v3418
      %v3546 = vunpack.c.h.b16 %v3418
      %v3547 = vunpack.c.l.b16 %v3419
      %v3548 = vunpack.c.h.b16 %v3419
      %v3549 = vunpack.c.l.b16 %v3420
      %v3550 = vunpack.c.h.b16 %v3420
      %v3551 = vunpack.c.l.b16 %v3421
      %v3552 = vunpack.c.h.b16 %v3421
      %v3553 = vunpack.c.l.b16 %v3422
      %v3554 = vunpack.c.h.b16 %v3422
      %v3555 = vunpack.c.l.b16 %v3423
      %v3556 = vunpack.c.h.b16 %v3423
      %v3557 = vunpack.c.l.b16 %v3424
      %v3558 = vunpack.c.h.b16 %v3424
      %v3559 = vunpack.c.l.b16 %v3425
      %v3560 = vunpack.c.h.b16 %v3425
      %v3561 = vunpack.c.l.b16 %v3426
      %v3562 = vunpack.c.h.b16 %v3426
      %v3563 = vunpack.c.l.b16 %v3427
      %v3564 = vunpack.c.h.b16 %v3427
      %v3565 = vunpack.c.l.b16 %v3428
      %v3566 = vunpack.c.h.b16 %v3428
      %v3567 = vunpack.c.l.b16 %v3429
      %v3568 = vunpack.c.h.b16 %v3429
      %v3569 = vunpack.c.l.b16 %v3430
      %v3570 = vunpack.c.h.b16 %v3430
      %v3571 = vunpack.c.l.b16 %v3431
      %v3572 = vunpack.c.h.b16 %v3431
      %v3573 = vunpack.c.l.b16 %v3432
      %v3574 = vunpack.c.h.b16 %v3432
      %v3575 = vunpack.c.l.b16 %v3433
      %v3576 = vunpack.c.h.b16 %v3433
      %v3577 = vunpack.c.l.b16 %v3434
      %v3578 = vunpack.c.h.b16 %v3434
      %v3579 = vpack.c.b16 %v3485, %v3483
      %v3580 = vpack.c.b16 %v3486, %v3484
      %v3581 = vpack.c.b16 %v3489, %v3487
      %v3582 = vpack.c.b16 %v3490, %v3488
      %v3583 = vpack.c.b16 %v3493, %v3491
      %v3584 = vpack.c.b16 %v3494, %v3492
      %v3585 = vpack.c.b16 %v3497, %v3495
      %v3586 = vpack.c.b16 %v3498, %v3496
      %v3587 = vpack.c.b16 %v3501, %v3499
      %v3588 = vpack.c.b16 %v3502, %v3500
      %v3589 = vpack.c.b16 %v3505, %v3503
      %v3590 = vpack.c.b16 %v3506, %v3504
      %v3591 = vpack.c.b16 %v3509, %v3507
      %v3592 = vpack.c.b16 %v3510, %v3508
      %v3593 = vpack.c.b16 %v3513, %v3511
      %v3594 = vpack.c.b16 %v3514, %v3512
      %v3595 = vpack.c.b16 %v3517, %v3515
      %v3596 = vpack.c.b16 %v3518, %v3516
      %v3597 = vpack.c.b16 %v3521, %v3519
      %v3598 = vpack.c.b16 %v3522, %v3520
      %v3599 = vpack.c.b16 %v3525, %v3523
      %v3600 = vpack.c.b16 %v3526, %v3524
      %v3601 = vpack.c.b16 %v3529, %v3527
      %v3602 = vpack.c.b16 %v3530, %v3528
      %v3603 = vpack.c.b16 %v3533, %v3531
      %v3604 = vpack.c.b16 %v3534, %v3532
      %v3605 = vpack.c.b16 %v3537, %v3535
      %v3606 = vpack.c.b16 %v3538, %v3536
      %v3607 = vpack.c.b16 %v3541, %v3539
      %v3608 = vpack.c.b16 %v3542, %v3540
      %v3609 = vpack.c.b16 %v3545, %v3543
      %v3610 = vpack.c.b16 %v3546, %v3544
      %v3611 = vpack.c.b16 %v3549, %v3547
      %v3612 = vpack.c.b16 %v3550, %v3548
      %v3613 = vpack.c.b16 %v3553, %v3551
      %v3614 = vpack.c.b16 %v3554, %v3552
      %v3615 = vpack.c.b16 %v3557, %v3555
      %v3616 = vpack.c.b16 %v3558, %v3556
      %v3617 = vpack.c.b16 %v3561, %v3559
      %v3618 = vpack.c.b16 %v3562, %v3560
      %v3619 = vpack.c.b16 %v3565, %v3563
      %v3620 = vpack.c.b16 %v3566, %v3564
      %v3621 = vpack.c.b16 %v3569, %v3567
      %v3622 = vpack.c.b16 %v3570, %v3568
      %v3623 = vpack.c.b16 %v3573, %v3571
      %v3624 = vpack.c.b16 %v3574, %v3572
      %v3625 = vpack.c.b16 %v3577, %v3575
      %v3626 = vpack.c.b16 %v3578, %v3576
      %3675 = vmatprep.subr.bf16.mxu0 %v3594
      %3676 = vmatpush1.bf16.msra.mxu0 %v3593
      %3677 = vmatprep.subr.bf16.mxu0 %v3592
      %3678 = vmatpush1.bf16.msra.mxu0 %v3591
      %3679 = vmatprep.subr.bf16.mxu0 %v3590
      %3680 = vmatpush1.bf16.msra.mxu0 %v3589
      %3681 = vmatprep.subr.bf16.mxu0 %v3588
      %3682 = vmatpush1.bf16.msra.mxu0 %v3587
      %3683 = vmatprep.subr.bf16.mxu0 %v3586
      %3684 = vmatpush1.bf16.msra.mxu0 %v3585
      %3685 = vmatprep.subr.bf16.mxu0 %v3584
      %3686 = vmatpush1.bf16.msra.mxu0 %v3583
      %3687 = vmatprep.subr.bf16.mxu0 %v3582
      %3688 = vmatpush1.bf16.msra.mxu0 %v3581
      %3689 = vmatprep.subr.bf16.mxu0 %v3580
      %3690 = vmatpush1.bf16.msra.mxu0 %v3579
      %3691 = vmatprep.subr.bf16.mxu0 %v3610
      %3692 = vmatpush2.bf16.msra.mxu0 %v3609
      %3693 = vmatprep.subr.bf16.mxu0 %v3608
      %3694 = vmatpush2.bf16.msra.mxu0 %v3607
      %3695 = vmatprep.subr.bf16.mxu0 %v3606
      %3696 = vmatpush2.bf16.msra.mxu0 %v3605
      %3697 = vmatprep.subr.bf16.mxu0 %v3604
      %3698 = vmatpush2.bf16.msra.mxu0 %v3603
      %3699 = vmatprep.subr.bf16.mxu0 %v3602
      %3700 = vmatpush2.bf16.msra.mxu0 %v3601
      %3701 = vmatprep.subr.bf16.mxu0 %v3600
      %3702 = vmatpush2.bf16.msra.mxu0 %v3599
      %3703 = vmatprep.subr.bf16.mxu0 %v3598
      %3704 = vmatpush2.bf16.msra.mxu0 %v3597
      %3705 = vmatprep.subr.bf16.mxu0 %v3596
      %3706 = vmatpush2.bf16.msra.mxu0 %v3595
      %3707 = vmatprep.mubr.bf16.mxu0 %v519
      %3708 = vmatmul.mubr.bf16.gmra.mxu0 %v518
      %v3709 = vpop.f32.mrf.mxu0
      %v3710 = vadd.f32 0.0, %v3709
      %v3711 = vpop.f32.mrf.mxu0
      %v3712 = vadd.f32 0.0, %v3711
      %v3713 = vpop.f32.mrf.mxu0
      %v3714 = vadd.f32 0.0, %v3713
      %v3715 = vpop.f32.mrf.mxu0
      %v3716 = vadd.f32 0.0, %v3715
      %3717 = vmatprep.mubr.bf16.mxu0 %v522
      %3718 = vmatmul.mubr.bf16.gmra.mxu0 %v521
      %v3719 = vpop.f32.mrf.mxu0
      %v3720 = vadd.f32 0.0, %v3719
      %v3721 = vpop.f32.mrf.mxu0
      %v3722 = vadd.f32 0.0, %v3721
      %v3723 = vpop.f32.mrf.mxu0
      %v3724 = vadd.f32 0.0, %v3723
      %v3725 = vpop.f32.mrf.mxu0
      %v3726 = vadd.f32 0.0, %v3725
      %3727 = vmatprep.mubr.bf16.mxu0 %v525
      %3728 = vmatmul.mubr.bf16.gmra.mxu0 %v524
      %v3729 = vpop.f32.mrf.mxu0
      %v3730 = vadd.f32 0.0, %v3729
      %v3731 = vpop.f32.mrf.mxu0
      %v3732 = vadd.f32 0.0, %v3731
      %v3733 = vpop.f32.mrf.mxu0
      %v3734 = vadd.f32 0.0, %v3733
      %v3735 = vpop.f32.mrf.mxu0
      %v3736 = vadd.f32 0.0, %v3735
      %3737 = vmatprep.mubr.bf16.mxu0 %v528
      %3738 = vmatmul.mubr.bf16.gmra.mxu0 %v527
      %v3739 = vpop.f32.mrf.mxu0
      %v3740 = vadd.f32 0.0, %v3739
      %v3741 = vpop.f32.mrf.mxu0
      %v3742 = vadd.f32 0.0, %v3741
      %v3743 = vpop.f32.mrf.mxu0
      %v3744 = vadd.f32 0.0, %v3743
      %v3745 = vpop.f32.mrf.mxu0
      %v3746 = vadd.f32 0.0, %v3745
      %3747 = vmatprep.mubr.bf16.mxu0 %v531
      %3748 = vmatmul.mubr.bf16.gmra.mxu0 %v530
      %v3749 = vpop.f32.mrf.mxu0
      %v3750 = vadd.f32 0.0, %v3749
      %v3751 = vpop.f32.mrf.mxu0
      %v3752 = vadd.f32 0.0, %v3751
      %v3753 = vpop.f32.mrf.mxu0
      %v3754 = vadd.f32 0.0, %v3753
      %v3755 = vpop.f32.mrf.mxu0
      %v3756 = vadd.f32 0.0, %v3755
      %3757 = vmatprep.mubr.bf16.mxu0 %v534
      %3758 = vmatmul.mubr.bf16.gmra.mxu0 %v533
      %v3759 = vpop.f32.mrf.mxu0
      %v3760 = vadd.f32 0.0, %v3759
      %v3761 = vpop.f32.mrf.mxu0
      %v3762 = vadd.f32 0.0, %v3761
      %v3763 = vpop.f32.mrf.mxu0
      %v3764 = vadd.f32 0.0, %v3763
      %v3765 = vpop.f32.mrf.mxu0
      %v3766 = vadd.f32 0.0, %v3765
      %3767 = vmatprep.mubr.bf16.mxu0 %v537
      %3768 = vmatmul.mubr.bf16.gmra.mxu0 %v536
      %v3769 = vpop.f32.mrf.mxu0
      %v3770 = vadd.f32 0.0, %v3769
      %v3771 = vpop.f32.mrf.mxu0
      %v3772 = vadd.f32 0.0, %v3771
      %v3773 = vpop.f32.mrf.mxu0
      %v3774 = vadd.f32 0.0, %v3773
      %v3775 = vpop.f32.mrf.mxu0
      %v3776 = vadd.f32 0.0, %v3775
      %3777 = vmatprep.mubr.bf16.mxu0 %v489
      %3778 = vmatmul.mubr.bf16.gmra.mxu0 %v488
      %v3779 = vpop.f32.mrf.mxu0
      %v3780 = vadd.f32 0.0, %v3779
      %v3781 = vpop.f32.mrf.mxu0
      %v3782 = vadd.f32 0.0, %v3781
      %v3783 = vpop.f32.mrf.mxu0
      %v3784 = vadd.f32 0.0, %v3783
      %v3785 = vpop.f32.mrf.mxu0
      %v3786 = vadd.f32 0.0, %v3785
      %3787 = vdwg.mxu0
      %3788 = vmatprep.subr.bf16.mxu0 %v3626
      %3789 = vmatpush1.bf16.msra.mxu0 %v3625
      %3790 = vmatprep.subr.bf16.mxu0 %v3624
      %3791 = vmatpush1.bf16.msra.mxu0 %v3623
      %3792 = vmatprep.subr.bf16.mxu0 %v3622
      %3793 = vmatpush1.bf16.msra.mxu0 %v3621
      %3794 = vmatprep.subr.bf16.mxu0 %v3620
      %3795 = vmatpush1.bf16.msra.mxu0 %v3619
      %3796 = vmatprep.subr.bf16.mxu0 %v3618
      %3797 = vmatpush1.bf16.msra.mxu0 %v3617
      %3798 = vmatprep.subr.bf16.mxu0 %v3616
      %3799 = vmatpush1.bf16.msra.mxu0 %v3615
      %3800 = vmatprep.subr.bf16.mxu0 %v3614
      %3801 = vmatpush1.bf16.msra.mxu0 %v3613
      %3802 = vmatprep.subr.bf16.mxu0 %v3612
      %3803 = vmatpush1.bf16.msra.mxu0 %v3611
      %3804 = vmatprep.subr.bf16.mxu0 0
      %3805 = vmatpush2.bf16.msra.mxu0 0
      %3806 = vmatprep.subr.bf16.mxu0 0
      %3807 = vmatpush2.bf16.msra.mxu0 0
      %3808 = vmatprep.subr.bf16.mxu0 0
      %3809 = vmatpush2.bf16.msra.mxu0 0
      %3810 = vmatprep.subr.bf16.mxu0 0
      %3811 = vmatpush2.bf16.msra.mxu0 0
      %3812 = vmatprep.subr.bf16.mxu0 0
      %3813 = vmatpush2.bf16.msra.mxu0 0
      %3814 = vmatprep.subr.bf16.mxu0 0
      %3815 = vmatpush2.bf16.msra.mxu0 0
      %3816 = vmatprep.subr.bf16.mxu0 0
      %3817 = vmatpush2.bf16.msra.mxu0 0
      %3818 = vmatprep.subr.bf16.mxu0 0
      %3819 = vmatpush2.bf16.msra.mxu0 0
      %3820 = vmatprep.mubr.bf16.mxu0 0
      %3821 = vmatmul.mubr.bf16.gmra.mxu0 %v520
      %v3822 = vpop.f32.mrf.mxu0
      %v3823 = vadd.f32 %v3710, %v3822
      %v3824 = vpop.f32.mrf.mxu0
      %v3825 = vadd.f32 %v3712, %v3824
      %v3826 = vpop.f32.mrf.mxu0
      %v3827 = vadd.f32 %v3714, %v3826
      %v3828 = vpop.f32.mrf.mxu0
      %v3829 = vadd.f32 %v3716, %v3828
      %3830 = vmatprep.mubr.bf16.mxu0 0
      %3831 = vmatmul.mubr.bf16.gmra.mxu0 %v523
      %v3832 = vpop.f32.mrf.mxu0
      %v3833 = vadd.f32 %v3720, %v3832
      %v3834 = vpop.f32.mrf.mxu0
      %v3835 = vadd.f32 %v3722, %v3834
      %v3836 = vpop.f32.mrf.mxu0
      %v3837 = vadd.f32 %v3724, %v3836
      %v3838 = vpop.f32.mrf.mxu0
      %v3839 = vadd.f32 %v3726, %v3838
      %3840 = vmatprep.mubr.bf16.mxu0 0
      %3841 = vmatmul.mubr.bf16.gmra.mxu0 %v526
      %v3842 = vpop.f32.mrf.mxu0
      %v3843 = vadd.f32 %v3730, %v3842
      %v3844 = vpop.f32.mrf.mxu0
      %v3845 = vadd.f32 %v3732, %v3844
      %v3846 = vpop.f32.mrf.mxu0
      %v3847 = vadd.f32 %v3734, %v3846
      %v3848 = vpop.f32.mrf.mxu0
      %v3849 = vadd.f32 %v3736, %v3848
      %3850 = vmatprep.mubr.bf16.mxu0 0
      %3851 = vmatmul.mubr.bf16.gmra.mxu0 %v529
      %v3852 = vpop.f32.mrf.mxu0
      %v3853 = vadd.f32 %v3740, %v3852
      %v3854 = vpop.f32.mrf.mxu0
      %v3855 = vadd.f32 %v3742, %v3854
      %v3856 = vpop.f32.mrf.mxu0
      %v3857 = vadd.f32 %v3744, %v3856
      %v3858 = vpop.f32.mrf.mxu0
      %v3859 = vadd.f32 %v3746, %v3858
      %3860 = vmatprep.mubr.bf16.mxu0 0
      %3861 = vmatmul.mubr.bf16.gmra.mxu0 %v532
      %v3862 = vpop.f32.mrf.mxu0
      %v3863 = vadd.f32 %v3750, %v3862
      %v3864 = vpop.f32.mrf.mxu0
      %v3865 = vadd.f32 %v3752, %v3864
      %v3866 = vpop.f32.mrf.mxu0
      %v3867 = vadd.f32 %v3754, %v3866
      %v3868 = vpop.f32.mrf.mxu0
      %v3869 = vadd.f32 %v3756, %v3868
      %3870 = vmatprep.mubr.bf16.mxu0 0
      %3871 = vmatmul.mubr.bf16.gmra.mxu0 %v535
      %v3872 = vpop.f32.mrf.mxu0
      %v3873 = vadd.f32 %v3760, %v3872
      %v3874 = vpop.f32.mrf.mxu0
      %v3875 = vadd.f32 %v3762, %v3874
      %v3876 = vpop.f32.mrf.mxu0
      %v3877 = vadd.f32 %v3764, %v3876
      %v3878 = vpop.f32.mrf.mxu0
      %v3879 = vadd.f32 %v3766, %v3878
      %3880 = vmatprep.mubr.bf16.mxu0 0
      %3881 = vmatmul.mubr.bf16.gmra.mxu0 %v538
      %v3882 = vpop.f32.mrf.mxu0
      %v3883 = vadd.f32 %v3770, %v3882
      %v3884 = vpop.f32.mrf.mxu0
      %v3885 = vadd.f32 %v3772, %v3884
      %v3886 = vpop.f32.mrf.mxu0
      %v3887 = vadd.f32 %v3774, %v3886
      %v3888 = vpop.f32.mrf.mxu0
      %v3889 = vadd.f32 %v3776, %v3888
      %3890 = vmatprep.mubr.bf16.mxu0 0
      %3891 = vmatmul.mubr.bf16.gmra.mxu0 %v490
      %v3892 = vpop.f32.mrf.mxu0
      %v3893 = vadd.f32 %v3780, %v3892
      %v3894 = vpop.f32.mrf.mxu0
      %v3895 = vadd.f32 %v3782, %v3894
      %v3896 = vpop.f32.mrf.mxu0
      %v3897 = vadd.f32 %v3784, %v3896
      %v3898 = vpop.f32.mrf.mxu0
      %v3899 = vadd.f32 %v3786, %v3898
      %3900 = vdwg.mxu0
      %v3901 = vadd.f32 %v3309, %v3823
      %v3902 = vadd.f32 %v3311, %v3825
      %v3903 = vadd.f32 %v3313, %v3827
      %v3904 = vadd.f32 %v3315, %v3829
      %v3905 = vadd.f32 %v3319, %v3833
      %v3906 = vadd.f32 %v3321, %v3835
      %v3907 = vadd.f32 %v3323, %v3837
      %v3908 = vadd.f32 %v3325, %v3839
      %v3909 = vadd.f32 %v3329, %v3843
      %v3910 = vadd.f32 %v3331, %v3845
      %v3911 = vadd.f32 %v3333, %v3847
      %v3912 = vadd.f32 %v3335, %v3849
      %v3913 = vadd.f32 %v3339, %v3853
      %v3914 = vadd.f32 %v3341, %v3855
      %v3915 = vadd.f32 %v3343, %v3857
      %v3916 = vadd.f32 %v3345, %v3859
      %v3917 = vadd.f32 %v3349, %v3863
      %v3918 = vadd.f32 %v3351, %v3865
      %v3919 = vadd.f32 %v3353, %v3867
      %v3920 = vadd.f32 %v3355, %v3869
      %v3921 = vadd.f32 %v3359, %v3873
      %v3922 = vadd.f32 %v3361, %v3875
      %v3923 = vadd.f32 %v3363, %v3877
      %v3924 = vadd.f32 %v3365, %v3879
      %v3925 = vadd.f32 %v3369, %v3883
      %v3926 = vadd.f32 %v3371, %v3885
      %v3927 = vadd.f32 %v3373, %v3887
      %v3928 = vadd.f32 %v3375, %v3889
      %v3929 = vadd.f32 %v3379, %v3893
      %v3930 = vadd.f32 %v3381, %v3895
      %v3931 = vadd.f32 %v3383, %v3897
      %v3932 = vadd.f32 %v3385, %v3899
      %v3933 = vadd.f32 %v3901, %v2120
      %v3934 = vadd.f32 %v3902, %v2124
      %v3935 = vadd.f32 %v3903, %v2120
      %v3936 = vadd.f32 %v3904, %v2124
      %v3937 = vadd.f32 %v3905, %v2120
      %v3938 = vadd.f32 %v3906, %v2124
      %v3939 = vadd.f32 %v3907, %v2120
      %v3940 = vadd.f32 %v3908, %v2124
      %v3941 = vadd.f32 %v3909, %v2120
      %v3942 = vadd.f32 %v3910, %v2124
      %v3943 = vadd.f32 %v3911, %v2120
      %v3944 = vadd.f32 %v3912, %v2124
      %v3945 = vadd.f32 %v3913, %v2120
      %v3946 = vadd.f32 %v3914, %v2124
      %v3947 = vadd.f32 %v3915, %v2120
      %v3948 = vadd.f32 %v3916, %v2124
      %v3949 = vadd.f32 %v3917, %v2120
      %v3950 = vadd.f32 %v3918, %v2124
      %v3951 = vadd.f32 %v3919, %v2120
      %v3952 = vadd.f32 %v3920, %v2124
      %v3953 = vadd.f32 %v3921, %v2120
      %v3954 = vadd.f32 %v3922, %v2124
      %v3955 = vadd.f32 %v3923, %v2120
      %v3956 = vadd.f32 %v3924, %v2124
      %v3957 = vadd.f32 %v3925, %v2120
      %v3958 = vadd.f32 %v3926, %v2124
      %v3959 = vadd.f32 %v3927, %v2120
      %v3960 = vadd.f32 %v3928, %v2124
      %v3961 = vadd.f32 %v3929, %v2120
      %v3962 = vadd.f32 %v3930, %v2124
      %v3963 = vadd.f32 %v3931, %v2120
      %v3964 = vadd.f32 %v3932, %v2124
      %s3965 = scalar_lea.vmem %s212, 64
      %v3966 = vld [vmem:[%s3965] sm:$0xff]
      %v3967 = vld [vmem:[%s3965 + $0x8] sm:$0xff]
      %v3968 = vld [vmem:[%s3965 + $0x10] sm:$0xff]
      %v3969 = vld [vmem:[%s3965 + $0x18] sm:$0xff]
      %v3970 = vld [vmem:[%s3965 + $0x20] sm:$0xff]
      %v3971 = vld [vmem:[%s3965 + $0x28] sm:$0xff]
      %v3972 = vld [vmem:[%s3965 + $0x30] sm:$0xff]
      %v3973 = vld [vmem:[%s3965 + $0x38] sm:$0xff]
      %v3974 = vunpack.c.l.bf16 %v3966
      %v3975 = vunpack.c.h.bf16 %v3966
      %v3976 = vunpack.c.l.bf16 %v3967
      %v3977 = vunpack.c.h.bf16 %v3967
      %v3978 = vunpack.c.l.bf16 %v3968
      %v3979 = vunpack.c.h.bf16 %v3968
      %v3980 = vunpack.c.l.bf16 %v3969
      %v3981 = vunpack.c.h.bf16 %v3969
      %v3982 = vunpack.c.l.bf16 %v3970
      %v3983 = vunpack.c.h.bf16 %v3970
      %v3984 = vunpack.c.l.bf16 %v3971
      %v3985 = vunpack.c.h.bf16 %v3971
      %v3986 = vunpack.c.l.bf16 %v3972
      %v3987 = vunpack.c.h.bf16 %v3972
      %v3988 = vunpack.c.l.bf16 %v3973
      %v3989 = vunpack.c.h.bf16 %v3973
      %v3990 = vadd.f32 %v3933, %v3974
      %v3991 = vadd.f32 %v3934, %v3975
      %v3992 = vadd.f32 %v3935, %v3976
      %v3993 = vadd.f32 %v3936, %v3977
      %v3994 = vadd.f32 %v3937, %v3974
      %v3995 = vadd.f32 %v3938, %v3975
      %v3996 = vadd.f32 %v3939, %v3976
      %v3997 = vadd.f32 %v3940, %v3977
      %v3998 = vadd.f32 %v3941, %v3978
      %v3999 = vadd.f32 %v3942, %v3979
      %v4000 = vadd.f32 %v3943, %v3980
      %v4001 = vadd.f32 %v3944, %v3981
      %v4002 = vadd.f32 %v3945, %v3978
      %v4003 = vadd.f32 %v3946, %v3979
      %v4004 = vadd.f32 %v3947, %v3980
      %v4005 = vadd.f32 %v3948, %v3981
      %v4006 = vadd.f32 %v3949, %v3982
      %v4007 = vadd.f32 %v3950, %v3983
      %v4008 = vadd.f32 %v3951, %v3984
      %v4009 = vadd.f32 %v3952, %v3985
      %v4010 = vadd.f32 %v3953, %v3982
      %v4011 = vadd.f32 %v3954, %v3983
      %v4012 = vadd.f32 %v3955, %v3984
      %v4013 = vadd.f32 %v3956, %v3985
      %v4014 = vadd.f32 %v3957, %v3986
      %v4015 = vadd.f32 %v3958, %v3987
      %v4016 = vadd.f32 %v3959, %v3988
      %v4017 = vadd.f32 %v3960, %v3989
      %v4018 = vadd.f32 %v3961, %v3986
      %v4019 = vadd.f32 %v3962, %v3987
      %v4020 = vadd.f32 %v3963, %v3988
      %v4021 = vadd.f32 %v3964, %v3989
      %v4022 = vmax.f32 %v3990, 0.0
      %v4023 = vmax.f32 %v3991, 0.0
      %v4024 = vmax.f32 %v3992, 0.0
      %v4025 = vmax.f32 %v3993, 0.0
      %v4026 = vmax.f32 %v3994, 0.0
      %v4027 = vmax.f32 %v3995, 0.0
      %v4028 = vmax.f32 %v3996, 0.0
      %v4029 = vmax.f32 %v3997, 0.0
      %v4030 = vmax.f32 %v3998, 0.0
      %v4031 = vmax.f32 %v3999, 0.0
      %v4032 = vmax.f32 %v4000, 0.0
      %v4033 = vmax.f32 %v4001, 0.0
      %v4034 = vmax.f32 %v4002, 0.0
      %v4035 = vmax.f32 %v4003, 0.0
      %v4036 = vmax.f32 %v4004, 0.0
      %v4037 = vmax.f32 %v4005, 0.0
      %v4038 = vmax.f32 %v4006, 0.0
      %v4039 = vmax.f32 %v4007, 0.0
      %v4040 = vmax.f32 %v4008, 0.0
      %v4041 = vmax.f32 %v4009, 0.0
      %v4042 = vmax.f32 %v4010, 0.0
      %v4043 = vmax.f32 %v4011, 0.0
      %v4044 = vmax.f32 %v4012, 0.0
      %v4045 = vmax.f32 %v4013, 0.0
      %v4046 = vmax.f32 %v4014, 0.0
      %v4047 = vmax.f32 %v4015, 0.0
      %v4048 = vmax.f32 %v4016, 0.0
      %v4049 = vmax.f32 %v4017, 0.0
      %v4050 = vmax.f32 %v4018, 0.0
      %v4051 = vmax.f32 %v4019, 0.0
      %v4052 = vmax.f32 %v4020, 0.0
      %v4053 = vmax.f32 %v4021, 0.0
      %v4054 = vpack.c.bf16 %v4024, %v4022
      %v4055 = vpack.c.bf16 %v4025, %v4023
      %v4056 = vpack.c.bf16 %v4028, %v4026
      %v4057 = vpack.c.bf16 %v4029, %v4027
      %v4058 = vpack.c.bf16 %v4032, %v4030
      %v4059 = vpack.c.bf16 %v4033, %v4031
      %v4060 = vpack.c.bf16 %v4036, %v4034
      %v4061 = vpack.c.bf16 %v4037, %v4035
      %v4062 = vpack.c.bf16 %v4040, %v4038
      %v4063 = vpack.c.bf16 %v4041, %v4039
      %v4064 = vpack.c.bf16 %v4044, %v4042
      %v4065 = vpack.c.bf16 %v4045, %v4043
      %v4066 = vpack.c.bf16 %v4048, %v4046
      %v4067 = vpack.c.bf16 %v4049, %v4047
      %v4068 = vpack.c.bf16 %v4052, %v4050
      %v4069 = vpack.c.bf16 %v4053, %v4051
      %v4086 = vunpack.c.l.b16 %v4054
      %v4087 = vunpack.c.l.b16 %v4055
      %v4088 = vunpack.c.h.b16 %v4054
      %v4089 = vunpack.c.h.b16 %v4055
      %v4090 = vunpack.c.l.b16 %v4056
      %v4091 = vunpack.c.l.b16 %v4057
      %v4092 = vunpack.c.h.b16 %v4056
      %v4093 = vunpack.c.h.b16 %v4057
      %v4094 = vunpack.c.l.b16 %v4058
      %v4095 = vunpack.c.l.b16 %v4059
      %v4096 = vunpack.c.h.b16 %v4058
      %v4097 = vunpack.c.h.b16 %v4059
      %v4098 = vunpack.c.l.b16 %v4060
      %v4099 = vunpack.c.l.b16 %v4061
      %v4100 = vunpack.c.h.b16 %v4060
      %v4101 = vunpack.c.h.b16 %v4061
      %v4102 = vunpack.c.l.b16 %v4062
      %v4103 = vunpack.c.l.b16 %v4063
      %v4104 = vunpack.c.h.b16 %v4062
      %v4105 = vunpack.c.h.b16 %v4063
      %v4106 = vunpack.c.l.b16 %v4064
      %v4107 = vunpack.c.l.b16 %v4065
      %v4108 = vunpack.c.h.b16 %v4064
      %v4109 = vunpack.c.h.b16 %v4065
      %v4110 = vunpack.c.l.b16 %v4066
      %v4111 = vunpack.c.l.b16 %v4067
      %v4112 = vunpack.c.h.b16 %v4066
      %v4113 = vunpack.c.h.b16 %v4067
      %v4114 = vunpack.c.l.b16 %v4068
      %v4115 = vunpack.c.l.b16 %v4069
      %v4116 = vunpack.c.h.b16 %v4068
      %v4117 = vunpack.c.h.b16 %v4069
      %v4118 = vpack.c.b16 %v4087, %v4086
      %v4119 = vpack.c.b16 %v4089, %v4088
      %v4120 = vpack.c.b16 %v4091, %v4090
      %v4121 = vpack.c.b16 %v4093, %v4092
      %v4122 = vpack.c.b16 %v4095, %v4094
      %v4123 = vpack.c.b16 %v4097, %v4096
      %v4124 = vpack.c.b16 %v4099, %v4098
      %v4125 = vpack.c.b16 %v4101, %v4100
      %v4126 = vpack.c.b16 %v4103, %v4102
      %v4127 = vpack.c.b16 %v4105, %v4104
      %v4128 = vpack.c.b16 %v4107, %v4106
      %v4129 = vpack.c.b16 %v4109, %v4108
      %v4130 = vpack.c.b16 %v4111, %v4110
      %v4131 = vpack.c.b16 %v4113, %v4112
      %v4132 = vpack.c.b16 %v4115, %v4114
      %v4133 = vpack.c.b16 %v4117, %v4116
      %s4150 = scalar_lea.vmem %s217, 128
      %4151 = vst [vmem:[%s4150] sm:$0xff] %v4118
      %4152 = vst [vmem:[%s4150 + $0x8] sm:$0xff] %v4119
      %4153 = vst [vmem:[%s4150 + $0x10] sm:$0xff] %v4120
      %4154 = vst [vmem:[%s4150 + $0x18] sm:$0xff] %v4121
      %4155 = vst [vmem:[%s4150 + $0x20] sm:$0xff] %v4122
      %4156 = vst [vmem:[%s4150 + $0x28] sm:$0xff] %v4123
      %4157 = vst [vmem:[%s4150 + $0x30] sm:$0xff] %v4124
      %4158 = vst [vmem:[%s4150 + $0x38] sm:$0xff] %v4125
      %4159 = vst [vmem:[%s4150 + $0x40] sm:$0xff] %v4126
      %4160 = vst [vmem:[%s4150 + $0x48] sm:$0xff] %v4127
      %4161 = vst [vmem:[%s4150 + $0x50] sm:$0xff] %v4128
      %4162 = vst [vmem:[%s4150 + $0x58] sm:$0xff] %v4129
      %4163 = vst [vmem:[%s4150 + $0x60] sm:$0xff] %v4130
      %4164 = vst [vmem:[%s4150 + $0x68] sm:$0xff] %v4131
      %4165 = vst [vmem:[%s4150 + $0x70] sm:$0xff] %v4132
      %4166 = vst [vmem:[%s4150 + $0x78] sm:$0xff] %v4133
      %p4167 = scmp.lt.s32.totalorder %s15, 1
      %s4168 = scalar_select %p4167, %s15, 1
      %s4169 = smul.addr %s4168, 64
      %s4170 = smul.addr %s4169, 4
      %s4171 = scalar_lea.vmem %s4, %s4170
      // Predicated region
      $region37: #{_lambda_.4} parent=35 // pred_check
        %p4172 = pneg %p127
      $region38: #{_lambda_.4} parent=35 // pred_check_branch
        %4174 = sbr.rel (%p4172) target = $region40
      $region39: #{_lambda_.4} parent=35 // pred_region
        _
      $region40: #{_lambda_.4} parent=35 // pred_fallthru
        _
    $region36: #{_lambda_.4} parent=5 // pred_fallthru
      _
    %p4175 = scmp.le.s32.totalorder 2, %s10
    // Predicated region
    $region41: #{_lambda_.4} parent=5 // pred_check
      %p4176 = pneg %p4175
    $region42: #{_lambda_.4} parent=5 // pred_check_branch
      %4178 = sbr.rel (%p4176) target = $region44
    $region43: #{_lambda_.4} parent=5 // pred_region
      %s4179 = ssub.s32 %s10, 2
      // Predicated region
      $region45: #{_lambda_.4} parent=43 // pred_check
        %p4180 = pneg %p133
      $region46: #{_lambda_.4} parent=43 // pred_check_branch
        %4182 = sbr.rel (%p4180) target = $region48
      $region47: #{_lambda_.4} parent=43 // pred_region
        %p4183 = scmp.lt.s32.totalorder %s16, 1
        %s4184 = scalar_select %p4183, %s16, 1
        %s4185 = smul.addr %s4184, 64
        %s4186 = smul.addr %s4185, 4
        %s4187 = scalar_lea.vmem %s4, %s4186
      $region48: #{_lambda_.4} parent=43 // pred_fallthru
        _
    $region44: #{_lambda_.4} parent=5 // pred_fallthru
      _
  $region6: #{_lambda_.4} parent=0 // loop_footer
    %s14 = sadd.s32 1, %s10
  $region7: #{_lambda_.4} parent=0 // loop_footer_branch
    %9 = sbr.rel target = $region3
  $region8: #{_lambda_.4} parent=0 // loop_exit
    _

// kernel: _lambda_.5
$region0: #{_lambda_.5}
  #allocation0 [shape = 'u32[]', space=smem, size = 0x4, offset = 0x4, fixed_abs, tag = 'smem constant byte address 0x4 - core index']
  #allocation1 [shape = 'u32[144,128]{1,0:T(1,128)}', space=vmem, size = 0x12000, scoped, tag = 'internal scratch']
  %s0 = inlined_call_operand.vmem [shape: bf16[2,16,16,256], index: 0, kind: input, shape index: {}]
  %s1 = inlined_call_operand.vmem [shape: bf16[3,768,256], index: 1, kind: input, shape index: {}]
  %s2 = inlined_call_operand.vmem [shape: f32[1,256], index: 2, kind: input, shape index: {}]
  %s3 = inlined_call_operand.hbm [shape: f32[2,16,16,256], index: 3, kind: output, shape index: {}]
  %s4 = sld [smem:[#allocation0]]
  $region45: #{_lambda_.5} parent=0
    _
  %s6 = ssub.s32 1, %s4
  %s7 = scalar_select 0, %s6, %s4
  $region1: #{_lambda_.5} parent=0
    #allocation2 [shape = 'u8[524288]{0}', space=vmem, size = 0x80000, scoped, tag = 'output window, operand 0']
    #allocation3 [shape = 's32[2]{0}', space=sflag, size = 0x8, scoped, tag = 'scoped memory for _lambda_.5']
    %8 = vsyncpa [#allocation3], 0
    %s9 = scalar_lea.sflag [#allocation3], 1
    %10 = vsyncpa %s9, 0
    loop: start=0, step=1, limit=4
    $region2: #{_lambda_.5} parent=1 // loop_pre_header
      _
    $region3: #{_lambda_.5} parent=1 // loop_header
      %s12 = sphi 0, %s16
      %p13 = scmp.ge.s32.totalorder %s12, 4
      %s22 = sphi 0, %s24
      %s25 = sphi 0, %s22
      %s26 = sphi 0, %s25
      %s42 = sphi 0, %s26
      %s46 = sphi 0, %s46
      %s48 = sphi 0, %s46
      %s49 = sphi 0, %s48
      %s63 = sphi 0, %s49
      %s67 = sphi 0, %s67
      %s69 = sphi 0, %s67
      %s70 = sphi 0, %s69
      %s84 = sphi 0, %s70
      %s90 = sphi 0, %s92
      %s93 = sphi 0, %s90
      %s94 = sphi 0, %s93
      %s110 = sphi 0, %s94
    $region4: #{_lambda_.5} parent=1 // loop_header_branch
      %15 = sbr.rel (%p13) target = $region8
    $region5: #{_lambda_.5} parent=1 // loop_body
      %s17 = ssub.s32 %s12, 1
      %s18 = ssub.s32 %s12, 2
      %s19 = sadd.s32 %s12, 1
      %s20 = ssub.s32 %s12, %s19
      %p21 = scmp.eq.s32.totalorder %s20, 0
      %s23 = sadd.s32 %s22, 1
      %s24 = scalar_select %p21, %s22, %s23
      %p27 = pneg %p21
      %p28 = scmp.eq.s32.totalorder %s12, 1
      %p29 = por %p27, %p28
      %p30 = scmp.ne.s32.totalorder %s22, %s25
      %p31 = scmp.eq.s32.totalorder %s12, 0
      %p32 = por %p30, %p31
      %p33 = scmp.ne.s32.totalorder %s22, %s25
      %p34 = scmp.eq.s32.totalorder %s17, 1
      %p35 = por %p33, %p34
      %p36 = scmp.ne.s32.totalorder %s25, %s26
      %p37 = scmp.eq.s32.totalorder %s17, 0
      %p38 = por %p36, %p37
      %p39 = scmp.ne.s32.totalorder %s25, %s26
      %p40 = scmp.eq.s32.totalorder %s18, 1
      %p41 = por %p39, %p40
      %p43 = scmp.ne.s32.totalorder %s26, %s42
      %p44 = scmp.eq.s32.totalorder %s18, 0
      %p45 = por %p43, %p44
      %s47 = sadd.s32 %s46, 1
      %p50 = scmp.eq.s32.totalorder %s12, 1
      %p51 = scmp.ne.s32.totalorder %s46, %s48
      %p52 = scmp.eq.s32.totalorder %s12, 0
      %p53 = por %p51, %p52
      %p54 = scmp.ne.s32.totalorder %s46, %s48
      %p55 = scmp.eq.s32.totalorder %s17, 1
      %p56 = por %p54, %p55
      %p57 = scmp.ne.s32.totalorder %s48, %s49
      %p58 = scmp.eq.s32.totalorder %s17, 0
      %p59 = por %p57, %p58
      %p60 = scmp.ne.s32.totalorder %s48, %s49
      %p61 = scmp.eq.s32.totalorder %s18, 1
      %p62 = por %p60, %p61
      %p64 = scmp.ne.s32.totalorder %s49, %s63
      %p65 = scmp.eq.s32.totalorder %s18, 0
      %p66 = por %p64, %p65
      %s68 = sadd.s32 %s67, 1
      %p71 = scmp.eq.s32.totalorder %s12, 1
      %p72 = scmp.ne.s32.totalorder %s67, %s69
      %p73 = scmp.eq.s32.totalorder %s12, 0
      %p74 = por %p72, %p73
      %p75 = scmp.ne.s32.totalorder %s67, %s69
      %p76 = scmp.eq.s32.totalorder %s17, 1
      %p77 = por %p75, %p76
      %p78 = scmp.ne.s32.totalorder %s69, %s70
      %p79 = scmp.eq.s32.totalorder %s17, 0
      %p80 = por %p78, %p79
      %p81 = scmp.ne.s32.totalorder %s69, %s70
      %p82 = scmp.eq.s32.totalorder %s18, 1
      %p83 = por %p81, %p82
      %p85 = scmp.ne.s32.totalorder %s70, %s84
      %p86 = scmp.eq.s32.totalorder %s18, 0
      %p87 = por %p85, %p86
      %s88 = ssub.s32 %s12, %s19
      %p89 = scmp.eq.s32.totalorder %s88, 0
      %s91 = sadd.s32 %s90, 1
      %s92 = scalar_select %p89, %s90, %s91
      %p95 = pneg %p89
      %p96 = scmp.eq.s32.totalorder %s12, 1
      %p97 = por %p95, %p96
      %p98 = scmp.ne.s32.totalorder %s90, %s93
      %p99 = scmp.eq.s32.totalorder %s12, 0
      %p100 = por %p98, %p99
      %p101 = scmp.ne.s32.totalorder %s90, %s93
      %p102 = scmp.eq.s32.totalorder %s17, 1
      %p103 = por %p101, %p102
      %p104 = scmp.ne.s32.totalorder %s93, %s94
      %p105 = scmp.eq.s32.totalorder %s17, 0
      %p106 = por %p104, %p105
      %p107 = scmp.ne.s32.totalorder %s93, %s94
      %p108 = scmp.eq.s32.totalorder %s18, 1
      %p109 = por %p107, %p108
      %p111 = scmp.ne.s32.totalorder %s94, %s110
      %p112 = scmp.eq.s32.totalorder %s18, 0
      %p113 = por %p111, %p112
      %p114 = scmp.le.s32.totalorder 1, %s12
      %p115 = scmp.lt.s32.totalorder %s12, 3
      %p116 = pnand %p114, %p115
      %p117 = pneg %p116
      // Predicated region
      $region9: #{_lambda_.5} parent=5 // pred_check
        _
      $region10: #{_lambda_.5} parent=5 // pred_check_branch
        %119 = sbr.rel (%p116) target = $region12
      $region11: #{_lambda_.5} parent=5 // pred_region
        %s120 = ssub.s32 %s12, 1
        // Predicated region
        $region13: #{_lambda_.5} parent=11 // pred_check
          %p121 = pneg %p59
        $region14: #{_lambda_.5} parent=11 // pred_check_branch
          %123 = sbr.rel (%p121) target = $region16
        $region15: #{_lambda_.5} parent=11 // pred_region
          _
        $region16: #{_lambda_.5} parent=11 // pred_fallthru
          _
        // Predicated region
        $region17: #{_lambda_.5} parent=11 // pred_check
          %p124 = pneg %p80
        $region18: #{_lambda_.5} parent=11 // pred_check_branch
          %126 = sbr.rel (%p124) target = $region20
        $region19: #{_lambda_.5} parent=11 // pred_region
          _
        $region20: #{_lambda_.5} parent=11 // pred_fallthru
          _
      $region12: #{_lambda_.5} parent=5 // pred_fallthru
        _
      %p127 = scmp.lt.s32.totalorder %s12, 2
      // Predicated region
      $region21: #{_lambda_.5} parent=5 // pred_check
        %p128 = pneg %p127
      $region22: #{_lambda_.5} parent=5 // pred_check_branch
        %130 = sbr.rel (%p128) target = $region24
      $region23: #{_lambda_.5} parent=5 // pred_region
        // Predicated region
        $region25: #{_lambda_.5} parent=23 // pred_check
          %p131 = pneg %p32
        $region26: #{_lambda_.5} parent=23 // pred_check_branch
          %133 = sbr.rel (%p131) target = $region28
        $region27: #{_lambda_.5} parent=23 // pred_region
          %p134 = scmp.lt.s32.totalorder %s12, 1
          %s135 = scalar_select %p134, %s12, 1
          %s136 = smul.addr %s135, 64
          %s137 = smul.addr %s136, 4
          %s138 = scalar_lea.vmem %s0, %s137
        $region28: #{_lambda_.5} parent=23 // pred_fallthru
          _
      $region24: #{_lambda_.5} parent=5 // pred_fallthru
        _
      %p139 = scmp.le.s32.totalorder 1, %s12
      %p140 = scmp.lt.s32.totalorder %s12, 3
      %p141 = pnand %p139, %p140
      %p142 = pneg %p141
      // Predicated region
      $region29: #{_lambda_.5} parent=5 // pred_check
        _
      $region30: #{_lambda_.5} parent=5 // pred_check_branch
        %144 = sbr.rel (%p141) target = $region32
      $region31: #{_lambda_.5} parent=5 // pred_region
        %s145 = ssub.s32 %s12, 1
        %p146 = scmp.lt.s32.totalorder %s17, 1
        %s147 = scalar_select %p146, %s17, 1
        %s148 = smul.addr %s147, 64
        %s149 = smul.addr %s148, 4
        %s150 = scalar_lea.vmem %s0, %s149
        %p151 = pneg %p38
        %p152 = pneg %p35
        %p153 = pneg %p59
        %p154 = pneg %p56
        %p155 = pneg %p80
        %p156 = pneg %p77
        %p157 = pneg %p106
        %p158 = pneg %p103
        %s159 = sand.u32 %s93, 1
        %s160 = scalar_lea.sflag [#allocation3], %s159
        %s161 = sand.u32 %s93, 1
        %s162 = smul.addr %s161, 512
        %s163 = scalar_lea.vmem [#allocation2], %s162
        %p164 = scmp.lt.s32.totalorder %s17, 1
        %s165 = scalar_select %p164, %s17, 1
        %s166 = smul.addr %s165, 64
        %s167 = smul.addr %s166, 4
        %s168 = scalar_lea.vmem %s0, %s167
        %v169 = vld [vmem:[%s168] sm:$0xff]
        %v170 = vld [vmem:[%s168 + $0x8] sm:$0xff]
        %v171 = vld [vmem:[%s168 + $0x10] sm:$0xff]
        %v172 = vld [vmem:[%s168 + $0x18] sm:$0xff]
        %v173 = vld [vmem:[%s168 + $0x20] sm:$0xff]
        %v174 = vld [vmem:[%s168 + $0x28] sm:$0xff]
        %v175 = vld [vmem:[%s168 + $0x30] sm:$0xff]
        %v176 = vld [vmem:[%s168 + $0x38] sm:$0xff]
        %v177 = vld [vmem:[%s168 + $0x40] sm:$0xff]
        %v178 = vld [vmem:[%s168 + $0x48] sm:$0xff]
        %v179 = vld [vmem:[%s168 + $0x50] sm:$0xff]
        %v180 = vld [vmem:[%s168 + $0x58] sm:$0xff]
        %v181 = vld [vmem:[%s168 + $0x60] sm:$0xff]
        %v182 = vld [vmem:[%s168 + $0x68] sm:$0xff]
        %v183 = vld [vmem:[%s168 + $0x70] sm:$0xff]
        %v184 = vld [vmem:[%s168 + $0x78] sm:$0xff]
        %v185 = vld [vmem:[%s168 + $0x80] sm:$0xff]
        %v186 = vld [vmem:[%s168 + $0x88] sm:$0xff]
        %v187 = vld [vmem:[%s168 + $0x90] sm:$0xff]
        %v188 = vld [vmem:[%s168 + $0x98] sm:$0xff]
        %v189 = vld [vmem:[%s168 + $0xa0] sm:$0xff]
        %v190 = vld [vmem:[%s168 + $0xa8] sm:$0xff]
        %v191 = vld [vmem:[%s168 + $0xb0] sm:$0xff]
        %v192 = vld [vmem:[%s168 + $0xb8] sm:$0xff]
        %v193 = vld [vmem:[%s168 + $0xc0] sm:$0xff]
        %v194 = vld [vmem:[%s168 + $0xc8] sm:$0xff]
        %v195 = vld [vmem:[%s168 + $0xd0] sm:$0xff]
        %v196 = vld [vmem:[%s168 + $0xd8] sm:$0xff]
        %v197 = vld [vmem:[%s168 + $0xe0] sm:$0xff]
        %v198 = vld [vmem:[%s168 + $0xe8] sm:$0xff]
        %v199 = vld [vmem:[%s168 + $0xf0] sm:$0xff]
        %v200 = vld [vmem:[%s168 + $0xf8] sm:$0xff]
        %v201 = vunpack.c.l.bf16 %v169
        %v202 = vunpack.c.h.bf16 %v169
        %v203 = vunpack.c.l.bf16 %v170
        %v204 = vunpack.c.h.bf16 %v170
        %v205 = vunpack.c.l.bf16 %v171
        %v206 = vunpack.c.h.bf16 %v171
        %v207 = vunpack.c.l.bf16 %v172
        %v208 = vunpack.c.h.bf16 %v172
        %v209 = vunpack.c.l.bf16 %v173
        %v210 = vunpack.c.h.bf16 %v173
        %v211 = vunpack.c.l.bf16 %v174
        %v212 = vunpack.c.h.bf16 %v174
        %v213 = vunpack.c.l.bf16 %v175
        %v214 = vunpack.c.h.bf16 %v175
        %v215 = vunpack.c.l.bf16 %v176
        %v216 = vunpack.c.h.bf16 %v176
        %v217 = vunpack.c.l.bf16 %v177
        %v218 = vunpack.c.h.bf16 %v177
        %v219 = vunpack.c.l.bf16 %v178
        %v220 = vunpack.c.h.bf16 %v178
        %v221 = vunpack.c.l.bf16 %v179
        %v222 = vunpack.c.h.bf16 %v179
        %v223 = vunpack.c.l.bf16 %v180
        %v224 = vunpack.c.h.bf16 %v180
        %v225 = vunpack.c.l.bf16 %v181
        %v226 = vunpack.c.h.bf16 %v181
        %v227 = vunpack.c.l.bf16 %v182
        %v228 = vunpack.c.h.bf16 %v182
        %v229 = vunpack.c.l.bf16 %v183
        %v230 = vunpack.c.h.bf16 %v183
        %v231 = vunpack.c.l.bf16 %v184
        %v232 = vunpack.c.h.bf16 %v184
        %v233 = vunpack.c.l.bf16 %v185
        %v234 = vunpack.c.h.bf16 %v185
        %v235 = vunpack.c.l.bf16 %v186
        %v236 = vunpack.c.h.bf16 %v186
        %v237 = vunpack.c.l.bf16 %v187
        %v238 = vunpack.c.h.bf16 %v187
        %v239 = vunpack.c.l.bf16 %v188
        %v240 = vunpack.c.h.bf16 %v188
        %v241 = vunpack.c.l.bf16 %v189
        %v242 = vunpack.c.h.bf16 %v189
        %v243 = vunpack.c.l.bf16 %v190
        %v244 = vunpack.c.h.bf16 %v190
        %v245 = vunpack.c.l.bf16 %v191
        %v246 = vunpack.c.h.bf16 %v191
        %v247 = vunpack.c.l.bf16 %v192
        %v248 = vunpack.c.h.bf16 %v192
        %v249 = vunpack.c.l.bf16 %v193
        %v250 = vunpack.c.h.bf16 %v193
        %v251 = vunpack.c.l.bf16 %v194
        %v252 = vunpack.c.h.bf16 %v194
        %v253 = vunpack.c.l.bf16 %v195
        %v254 = vunpack.c.h.bf16 %v195
        %v255 = vunpack.c.l.bf16 %v196
        %v256 = vunpack.c.h.bf16 %v196
        %v257 = vunpack.c.l.bf16 %v197
        %v258 = vunpack.c.h.bf16 %v197
        %v259 = vunpack.c.l.bf16 %v198
        %v260 = vunpack.c.h.bf16 %v198
        %v261 = vunpack.c.l.bf16 %v199
        %v262 = vunpack.c.h.bf16 %v199
        %v263 = vunpack.c.l.bf16 %v200
        %v264 = vunpack.c.h.bf16 %v200
        %v265 = vlaneseq
        %v266 = vshrl.u32 %v265, 7
        %v267 = vadd.s32 %v266, 8
        %vm268 = vcmp.eq.s32.totalorder %v266, 0
        %vm269 = vcmp.eq.s32.totalorder %v267, 0
        %v270 = vrot.slane %v201, 7
        %v271 = vrot.slane %v202, 7
        %v272 = vrot.slane %v205, 7
        %v273 = vrot.slane %v206, 7
        %v274 = vrot.slane %v209, 7
        %v275 = vrot.slane %v210, 7
        %v276 = vrot.slane %v213, 7
        %v277 = vrot.slane %v214, 7
        %v278 = vrot.slane %v217, 7
        %v279 = vrot.slane %v218, 7
        %v280 = vrot.slane %v221, 7
        %v281 = vrot.slane %v222, 7
        %v282 = vrot.slane %v225, 7
        %v283 = vrot.slane %v226, 7
        %v284 = vrot.slane %v229, 7
        %v285 = vrot.slane %v230, 7
        %v286 = vrot.slane %v233, 7
        %v287 = vrot.slane %v234, 7
        %v288 = vrot.slane %v237, 7
        %v289 = vrot.slane %v238, 7
        %v290 = vrot.slane %v241, 7
        %v291 = vrot.slane %v242, 7
        %v292 = vrot.slane %v245, 7
        %v293 = vrot.slane %v246, 7
        %v294 = vrot.slane %v249, 7
        %v295 = vrot.slane %v250, 7
        %v296 = vrot.slane %v253, 7
        %v297 = vrot.slane %v254, 7
        %v298 = vrot.slane %v257, 7
        %v299 = vrot.slane %v258, 7
        %v300 = vrot.slane %v261, 7
        %v301 = vrot.slane %v262, 7
        %v302 = vrot.slane %v203, 7
        %v303 = vrot.slane %v204, 7
        %v304 = vrot.slane %v207, 7
        %v305 = vrot.slane %v208, 7
        %v306 = vrot.slane %v211, 7
        %v307 = vrot.slane %v212, 7
        %v308 = vrot.slane %v215, 7
        %v309 = vrot.slane %v216, 7
        %v310 = vrot.slane %v219, 7
        %v311 = vrot.slane %v220, 7
        %v312 = vrot.slane %v223, 7
        %v313 = vrot.slane %v224, 7
        %v314 = vrot.slane %v227, 7
        %v315 = vrot.slane %v228, 7
        %v316 = vrot.slane %v231, 7
        %v317 = vrot.slane %v232, 7
        %v318 = vrot.slane %v235, 7
        %v319 = vrot.slane %v236, 7
        %v320 = vrot.slane %v239, 7
        %v321 = vrot.slane %v240, 7
        %v322 = vrot.slane %v243, 7
        %v323 = vrot.slane %v244, 7
        %v324 = vrot.slane %v247, 7
        %v325 = vrot.slane %v248, 7
        %v326 = vrot.slane %v251, 7
        %v327 = vrot.slane %v252, 7
        %v328 = vrot.slane %v255, 7
        %v329 = vrot.slane %v256, 7
        %v330 = vrot.slane %v259, 7
        %v331 = vrot.slane %v260, 7
        %v332 = vrot.slane %v263, 7
        %v333 = vrot.slane %v264, 7
        %vm334 = vcmp.lt.s32.totalorder %v266, 1
        %v335 = vsel %vm334, %v270, %v302
        %v336 = vsel %vm334, %v271, %v303
        %v337 = vsel %vm334, %v272, %v304
        %v338 = vsel %vm334, %v273, %v305
        %v339 = vsel %vm334, %v274, %v306
        %v340 = vsel %vm334, %v275, %v307
        %v341 = vsel %vm334, %v276, %v308
        %v342 = vsel %vm334, %v277, %v309
        %v343 = vsel %vm334, %v278, %v310
        %v344 = vsel %vm334, %v279, %v311
        %v345 = vsel %vm334, %v280, %v312
        %v346 = vsel %vm334, %v281, %v313
        %v347 = vsel %vm334, %v282, %v314
        %v348 = vsel %vm334, %v283, %v315
        %v349 = vsel %vm334, %v284, %v316
        %v350 = vsel %vm334, %v285, %v317
        %v351 = vsel %vm334, %v286, %v318
        %v352 = vsel %vm334, %v287, %v319
        %v353 = vsel %vm334, %v288, %v320
        %v354 = vsel %vm334, %v289, %v321
        %v355 = vsel %vm334, %v290, %v322
        %v356 = vsel %vm334, %v291, %v323
        %v357 = vsel %vm334, %v292, %v324
        %v358 = vsel %vm334, %v293, %v325
        %v359 = vsel %vm334, %v294, %v326
        %v360 = vsel %vm334, %v295, %v327
        %v361 = vsel %vm334, %v296, %v328
        %v362 = vsel %vm334, %v297, %v329
        %v363 = vsel %vm334, %v298, %v330
        %v364 = vsel %vm334, %v299, %v331
        %v365 = vsel %vm334, %v300, %v332
        %v366 = vsel %vm334, %v301, %v333
        %v367 = vsel %vm334, %v302, %v270
        %v368 = vsel %vm334, %v303, %v271
        %v369 = vsel %vm334, %v304, %v272
        %v370 = vsel %vm334, %v305, %v273
        %v371 = vsel %vm334, %v306, %v274
        %v372 = vsel %vm334, %v307, %v275
        %v373 = vsel %vm334, %v308, %v276
        %v374 = vsel %vm334, %v309, %v277
        %v375 = vsel %vm334, %v310, %v278
        %v376 = vsel %vm334, %v311, %v279
        %v377 = vsel %vm334, %v312, %v280
        %v378 = vsel %vm334, %v313, %v281
        %v379 = vsel %vm334, %v314, %v282
        %v380 = vsel %vm334, %v315, %v283
        %v381 = vsel %vm334, %v316, %v284
        %v382 = vsel %vm334, %v317, %v285
        %v383 = vsel %vm334, %v318, %v286
        %v384 = vsel %vm334, %v319, %v287
        %v385 = vsel %vm334, %v320, %v288
        %v386 = vsel %vm334, %v321, %v289
        %v387 = vsel %vm334, %v322, %v290
        %v388 = vsel %vm334, %v323, %v291
        %v389 = vsel %vm334, %v324, %v292
        %v390 = vsel %vm334, %v325, %v293
        %v391 = vsel %vm334, %v326, %v294
        %v392 = vsel %vm334, %v327, %v295
        %v393 = vsel %vm334, %v328, %v296
        %v394 = vsel %vm334, %v329, %v297
        %v395 = vsel %vm334, %v330, %v298
        %v396 = vsel %vm334, %v331, %v299
        %v397 = vsel %vm334, %v332, %v300
        %v398 = vsel %vm334, %v333, %v301
        %v399 = vsel %vm268, 0.0, 0.0
        %v400 = vsel %vm269, 0.0, 0.0
        %v401 = vsel %vm268, 0.0, %v367
        %v402 = vsel %vm268, 0.0, %v368
        %v403 = vsel %vm269, 0.0, %v335
        %v404 = vsel %vm269, 0.0, %v336
        %v405 = vsel %vm268, 0.0, %v369
        %v406 = vsel %vm268, 0.0, %v370
        %v407 = vsel %vm269, 0.0, %v337
        %v408 = vsel %vm269, 0.0, %v338
        %v409 = vsel %vm268, 0.0, %v371
        %v410 = vsel %vm268, 0.0, %v372
        %v411 = vsel %vm269, 0.0, %v339
        %v412 = vsel %vm269, 0.0, %v340
        %v413 = vsel %vm268, 0.0, %v373
        %v414 = vsel %vm268, 0.0, %v374
        %v415 = vsel %vm269, 0.0, %v341
        %v416 = vsel %vm269, 0.0, %v342
        %v417 = vsel %vm268, 0.0, %v375
        %v418 = vsel %vm268, 0.0, %v376
        %v419 = vsel %vm269, 0.0, %v343
        %v420 = vsel %vm269, 0.0, %v344
        %v421 = vsel %vm268, 0.0, %v377
        %v422 = vsel %vm268, 0.0, %v378
        %v423 = vsel %vm269, 0.0, %v345
        %v424 = vsel %vm269, 0.0, %v346
        %v425 = vsel %vm268, 0.0, %v379
        %v426 = vsel %vm268, 0.0, %v380
        %v427 = vsel %vm269, 0.0, %v347
        %v428 = vsel %vm269, 0.0, %v348
        %v429 = vsel %vm268, 0.0, %v381
        %v430 = vsel %vm268, 0.0, %v382
        %v431 = vsel %vm269, 0.0, %v349
        %v432 = vsel %vm269, 0.0, %v350
        %v433 = vsel %vm268, 0.0, %v383
        %v434 = vsel %vm268, 0.0, %v384
        %v435 = vsel %vm269, 0.0, %v351
        %v436 = vsel %vm269, 0.0, %v352
        %v437 = vsel %vm268, 0.0, %v385
        %v438 = vsel %vm268, 0.0, %v386
        %v439 = vsel %vm269, 0.0, %v353
        %v440 = vsel %vm269, 0.0, %v354
        %v441 = vsel %vm268, 0.0, %v387
        %v442 = vsel %vm268, 0.0, %v388
        %v443 = vsel %vm269, 0.0, %v355
        %v444 = vsel %vm269, 0.0, %v356
        %v445 = vsel %vm268, 0.0, %v389
        %v446 = vsel %vm268, 0.0, %v390
        %v447 = vsel %vm269, 0.0, %v357
        %v448 = vsel %vm269, 0.0, %v358
        %v449 = vsel %vm268, 0.0, %v391
        %v450 = vsel %vm268, 0.0, %v392
        %v451 = vsel %vm269, 0.0, %v359
        %v452 = vsel %vm269, 0.0, %v360
        %v453 = vsel %vm268, 0.0, %v393
        %v454 = vsel %vm268, 0.0, %v394
        %v455 = vsel %vm269, 0.0, %v361
        %v456 = vsel %vm269, 0.0, %v362
        %v457 = vsel %vm268, 0.0, %v395
        %v458 = vsel %vm268, 0.0, %v396
        %v459 = vsel %vm269, 0.0, %v363
        %v460 = vsel %vm269, 0.0, %v364
        %v461 = vsel %vm268, 0.0, %v397
        %v462 = vsel %vm268, 0.0, %v398
        %v463 = vsel %vm269, 0.0, %v365
        %v464 = vsel %vm269, 0.0, %v366
        %vm465 = vcmp.eq.s32.totalorder %v266, 15
        %vm466 = vcmp.eq.s32.totalorder %v267, 15
        %v467 = vrot.slane %v201, 1
        %v468 = vrot.slane %v202, 1
        %v469 = vrot.slane %v205, 1
        %v470 = vrot.slane %v206, 1
        %v471 = vrot.slane %v209, 1
        %v472 = vrot.slane %v210, 1
        %v473 = vrot.slane %v213, 1
        %v474 = vrot.slane %v214, 1
        %v475 = vrot.slane %v217, 1
        %v476 = vrot.slane %v218, 1
        %v477 = vrot.slane %v221, 1
        %v478 = vrot.slane %v222, 1
        %v479 = vrot.slane %v225, 1
        %v480 = vrot.slane %v226, 1
        %v481 = vrot.slane %v229, 1
        %v482 = vrot.slane %v230, 1
        %v483 = vrot.slane %v233, 1
        %v484 = vrot.slane %v234, 1
        %v485 = vrot.slane %v237, 1
        %v486 = vrot.slane %v238, 1
        %v487 = vrot.slane %v241, 1
        %v488 = vrot.slane %v242, 1
        %v489 = vrot.slane %v245, 1
        %v490 = vrot.slane %v246, 1
        %v491 = vrot.slane %v249, 1
        %v492 = vrot.slane %v250, 1
        %v493 = vrot.slane %v253, 1
        %v494 = vrot.slane %v254, 1
        %v495 = vrot.slane %v257, 1
        %v496 = vrot.slane %v258, 1
        %v497 = vrot.slane %v261, 1
        %v498 = vrot.slane %v262, 1
        %v499 = vrot.slane %v203, 1
        %v500 = vrot.slane %v204, 1
        %v501 = vrot.slane %v207, 1
        %v502 = vrot.slane %v208, 1
        %v503 = vrot.slane %v211, 1
        %v504 = vrot.slane %v212, 1
        %v505 = vrot.slane %v215, 1
        %v506 = vrot.slane %v216, 1
        %v507 = vrot.slane %v219, 1
        %v508 = vrot.slane %v220, 1
        %v509 = vrot.slane %v223, 1
        %v510 = vrot.slane %v224, 1
        %v511 = vrot.slane %v227, 1
        %v512 = vrot.slane %v228, 1
        %v513 = vrot.slane %v231, 1
        %v514 = vrot.slane %v232, 1
        %v515 = vrot.slane %v235, 1
        %v516 = vrot.slane %v236, 1
        %v517 = vrot.slane %v239, 1
        %v518 = vrot.slane %v240, 1
        %v519 = vrot.slane %v243, 1
        %v520 = vrot.slane %v244, 1
        %v521 = vrot.slane %v247, 1
        %v522 = vrot.slane %v248, 1
        %v523 = vrot.slane %v251, 1
        %v524 = vrot.slane %v252, 1
        %v525 = vrot.slane %v255, 1
        %v526 = vrot.slane %v256, 1
        %v527 = vrot.slane %v259, 1
        %v528 = vrot.slane %v260, 1
        %v529 = vrot.slane %v263, 1
        %v530 = vrot.slane %v264, 1
        %vm531 = vcmp.lt.s32.totalorder %v266, 7
        %v532 = vsel %vm531, %v467, %v499
        %v533 = vsel %vm531, %v468, %v500
        %v534 = vsel %vm531, %v469, %v501
        %v535 = vsel %vm531, %v470, %v502
        %v536 = vsel %vm531, %v471, %v503
        %v537 = vsel %vm531, %v472, %v504
        %v538 = vsel %vm531, %v473, %v505
        %v539 = vsel %vm531, %v474, %v506
        %v540 = vsel %vm531, %v475, %v507
        %v541 = vsel %vm531, %v476, %v508
        %v542 = vsel %vm531, %v477, %v509
        %v543 = vsel %vm531, %v478, %v510
        %v544 = vsel %vm531, %v479, %v511
        %v545 = vsel %vm531, %v480, %v512
        %v546 = vsel %vm531, %v481, %v513
        %v547 = vsel %vm531, %v482, %v514
        %v548 = vsel %vm531, %v483, %v515
        %v549 = vsel %vm531, %v484, %v516
        %v550 = vsel %vm531, %v485, %v517
        %v551 = vsel %vm531, %v486, %v518
        %v552 = vsel %vm531, %v487, %v519
        %v553 = vsel %vm531, %v488, %v520
        %v554 = vsel %vm531, %v489, %v521
        %v555 = vsel %vm531, %v490, %v522
        %v556 = vsel %vm531, %v491, %v523
        %v557 = vsel %vm531, %v492, %v524
        %v558 = vsel %vm531, %v493, %v525
        %v559 = vsel %vm531, %v494, %v526
        %v560 = vsel %vm531, %v495, %v527
        %v561 = vsel %vm531, %v496, %v528
        %v562 = vsel %vm531, %v497, %v529
        %v563 = vsel %vm531, %v498, %v530
        %v564 = vsel %vm531, %v499, %v467
        %v565 = vsel %vm531, %v500, %v468
        %v566 = vsel %vm531, %v501, %v469
        %v567 = vsel %vm531, %v502, %v470
        %v568 = vsel %vm531, %v503, %v471
        %v569 = vsel %vm531, %v504, %v472
        %v570 = vsel %vm531, %v505, %v473
        %v571 = vsel %vm531, %v506, %v474
        %v572 = vsel %vm531, %v507, %v475
        %v573 = vsel %vm531, %v508, %v476
        %v574 = vsel %vm531, %v509, %v477
        %v575 = vsel %vm531, %v510, %v478
        %v576 = vsel %vm531, %v511, %v479
        %v577 = vsel %vm531, %v512, %v480
        %v578 = vsel %vm531, %v513, %v481
        %v579 = vsel %vm531, %v514, %v482
        %v580 = vsel %vm531, %v515, %v483
        %v581 = vsel %vm531, %v516, %v484
        %v582 = vsel %vm531, %v517, %v485
        %v583 = vsel %vm531, %v518, %v486
        %v584 = vsel %vm531, %v519, %v487
        %v585 = vsel %vm531, %v520, %v488
        %v586 = vsel %vm531, %v521, %v489
        %v587 = vsel %vm531, %v522, %v490
        %v588 = vsel %vm531, %v523, %v491
        %v589 = vsel %vm531, %v524, %v492
        %v590 = vsel %vm531, %v525, %v493
        %v591 = vsel %vm531, %v526, %v494
        %v592 = vsel %vm531, %v527, %v495
        %v593 = vsel %vm531, %v528, %v496
        %v594 = vsel %vm531, %v529, %v497
        %v595 = vsel %vm531, %v530, %v498
        %v596 = vsel %vm465, 0.0, 0.0
        %v597 = vsel %vm466, 0.0, 0.0
        %v598 = vsel %vm465, 0.0, %v532
        %v599 = vsel %vm465, 0.0, %v533
        %v600 = vsel %vm466, 0.0, %v564
        %v601 = vsel %vm466, 0.0, %v565
        %v602 = vsel %vm465, 0.0, %v534
        %v603 = vsel %vm465, 0.0, %v535
        %v604 = vsel %vm466, 0.0, %v566
        %v605 = vsel %vm466, 0.0, %v567
        %v606 = vsel %vm465, 0.0, %v536
        %v607 = vsel %vm465, 0.0, %v537
        %v608 = vsel %vm466, 0.0, %v568
        %v609 = vsel %vm466, 0.0, %v569
        %v610 = vsel %vm465, 0.0, %v538
        %v611 = vsel %vm465, 0.0, %v539
        %v612 = vsel %vm466, 0.0, %v570
        %v613 = vsel %vm466, 0.0, %v571
        %v614 = vsel %vm465, 0.0, %v540
        %v615 = vsel %vm465, 0.0, %v541
        %v616 = vsel %vm466, 0.0, %v572
        %v617 = vsel %vm466, 0.0, %v573
        %v618 = vsel %vm465, 0.0, %v542
        %v619 = vsel %vm465, 0.0, %v543
        %v620 = vsel %vm466, 0.0, %v574
        %v621 = vsel %vm466, 0.0, %v575
        %v622 = vsel %vm465, 0.0, %v544
        %v623 = vsel %vm465, 0.0, %v545
        %v624 = vsel %vm466, 0.0, %v576
        %v625 = vsel %vm466, 0.0, %v577
        %v626 = vsel %vm465, 0.0, %v546
        %v627 = vsel %vm465, 0.0, %v547
        %v628 = vsel %vm466, 0.0, %v578
        %v629 = vsel %vm466, 0.0, %v579
        %v630 = vsel %vm465, 0.0, %v548
        %v631 = vsel %vm465, 0.0, %v549
        %v632 = vsel %vm466, 0.0, %v580
        %v633 = vsel %vm466, 0.0, %v581
        %v634 = vsel %vm465, 0.0, %v550
        %v635 = vsel %vm465, 0.0, %v551
        %v636 = vsel %vm466, 0.0, %v582
        %v637 = vsel %vm466, 0.0, %v583
        %v638 = vsel %vm465, 0.0, %v552
        %v639 = vsel %vm465, 0.0, %v553
        %v640 = vsel %vm466, 0.0, %v584
        %v641 = vsel %vm466, 0.0, %v585
        %v642 = vsel %vm465, 0.0, %v554
        %v643 = vsel %vm465, 0.0, %v555
        %v644 = vsel %vm466, 0.0, %v586
        %v645 = vsel %vm466, 0.0, %v587
        %v646 = vsel %vm465, 0.0, %v556
        %v647 = vsel %vm465, 0.0, %v557
        %v648 = vsel %vm466, 0.0, %v588
        %v649 = vsel %vm466, 0.0, %v589
        %v650 = vsel %vm465, 0.0, %v558
        %v651 = vsel %vm465, 0.0, %v559
        %v652 = vsel %vm466, 0.0, %v590
        %v653 = vsel %vm466, 0.0, %v591
        %v654 = vsel %vm465, 0.0, %v560
        %v655 = vsel %vm465, 0.0, %v561
        %v656 = vsel %vm466, 0.0, %v592
        %v657 = vsel %vm466, 0.0, %v593
        %v658 = vsel %vm465, 0.0, %v562
        %v659 = vsel %vm465, 0.0, %v563
        %v660 = vsel %vm466, 0.0, %v594
        %v661 = vsel %vm466, 0.0, %v595
        %v662 = vpack.c.bf16 %v400, %v399
        %v663 = vpack.c.bf16 0.0, 0.0
        %v664 = vpack.c.bf16 %v597, %v596
        %v665 = vpack.c.bf16 %v403, %v401
        %v666 = vpack.c.bf16 %v404, %v402
        %v667 = vpack.c.bf16 %v203, %v201
        %v668 = vpack.c.bf16 %v204, %v202
        %v669 = vpack.c.bf16 %v600, %v598
        %v670 = vpack.c.bf16 %v601, %v599
        %v671 = vpack.c.bf16 %v407, %v405
        %v672 = vpack.c.bf16 %v408, %v406
        %v673 = vpack.c.bf16 %v207, %v205
        %v674 = vpack.c.bf16 %v208, %v206
        %v675 = vpack.c.bf16 %v604, %v602
        %v676 = vpack.c.bf16 %v605, %v603
        %v677 = vpack.c.bf16 %v411, %v409
        %v678 = vpack.c.bf16 %v412, %v410
        %v679 = vpack.c.bf16 %v211, %v209
        %v680 = vpack.c.bf16 %v212, %v210
        %v681 = vpack.c.bf16 %v608, %v606
        %v682 = vpack.c.bf16 %v609, %v607
        %v683 = vpack.c.bf16 %v415, %v413
        %v684 = vpack.c.bf16 %v416, %v414
        %v685 = vpack.c.bf16 %v215, %v213
        %v686 = vpack.c.bf16 %v216, %v214
        %v687 = vpack.c.bf16 %v612, %v610
        %v688 = vpack.c.bf16 %v613, %v611
        %v689 = vpack.c.bf16 %v419, %v417
        %v690 = vpack.c.bf16 %v420, %v418
        %v691 = vpack.c.bf16 %v219, %v217
        %v692 = vpack.c.bf16 %v220, %v218
        %v693 = vpack.c.bf16 %v616, %v614
        %v694 = vpack.c.bf16 %v617, %v615
        %v695 = vpack.c.bf16 %v423, %v421
        %v696 = vpack.c.bf16 %v424, %v422
        %v697 = vpack.c.bf16 %v223, %v221
        %v698 = vpack.c.bf16 %v224, %v222
        %v699 = vpack.c.bf16 %v620, %v618
        %v700 = vpack.c.bf16 %v621, %v619
        %v701 = vpack.c.bf16 %v427, %v425
        %v702 = vpack.c.bf16 %v428, %v426
        %v703 = vpack.c.bf16 %v227, %v225
        %v704 = vpack.c.bf16 %v228, %v226
        %v705 = vpack.c.bf16 %v624, %v622
        %v706 = vpack.c.bf16 %v625, %v623
        %v707 = vpack.c.bf16 %v431, %v429
        %v708 = vpack.c.bf16 %v432, %v430
        %v709 = vpack.c.bf16 %v231, %v229
        %v710 = vpack.c.bf16 %v232, %v230
        %v711 = vpack.c.bf16 %v628, %v626
        %v712 = vpack.c.bf16 %v629, %v627
        %v713 = vpack.c.bf16 %v435, %v433
        %v714 = vpack.c.bf16 %v436, %v434
        %v715 = vpack.c.bf16 %v235, %v233
        %v716 = vpack.c.bf16 %v236, %v234
        %v717 = vpack.c.bf16 %v632, %v630
        %v718 = vpack.c.bf16 %v633, %v631
        %v719 = vpack.c.bf16 %v439, %v437
        %v720 = vpack.c.bf16 %v440, %v438
        %v721 = vpack.c.bf16 %v239, %v237
        %v722 = vpack.c.bf16 %v240, %v238
        %v723 = vpack.c.bf16 %v636, %v634
        %v724 = vpack.c.bf16 %v637, %v635
        %v725 = vpack.c.bf16 %v443, %v441
        %v726 = vpack.c.bf16 %v444, %v442
        %v727 = vpack.c.bf16 %v243, %v241
        %v728 = vpack.c.bf16 %v244, %v242
        %v729 = vpack.c.bf16 %v640, %v638
        %v730 = vpack.c.bf16 %v641, %v639
        %v731 = vpack.c.bf16 %v447, %v445
        %v732 = vpack.c.bf16 %v448, %v446
        %v733 = vpack.c.bf16 %v247, %v245
        %v734 = vpack.c.bf16 %v248, %v246
        %v735 = vpack.c.bf16 %v644, %v642
        %v736 = vpack.c.bf16 %v645, %v643
        %v737 = vpack.c.bf16 %v451, %v449
        %v738 = vpack.c.bf16 %v452, %v450
        %v739 = vpack.c.bf16 %v251, %v249
        %v740 = vpack.c.bf16 %v252, %v250
        %v741 = vpack.c.bf16 %v648, %v646
        %v742 = vpack.c.bf16 %v649, %v647
        %v743 = vpack.c.bf16 %v455, %v453
        %v744 = vpack.c.bf16 %v456, %v454
        %v745 = vpack.c.bf16 %v255, %v253
        %v746 = vpack.c.bf16 %v256, %v254
        %v747 = vpack.c.bf16 %v652, %v650
        %v748 = vpack.c.bf16 %v653, %v651
        %v749 = vpack.c.bf16 %v459, %v457
        %v750 = vpack.c.bf16 %v460, %v458
        %v751 = vpack.c.bf16 %v259, %v257
        %v752 = vpack.c.bf16 %v260, %v258
        %v753 = vpack.c.bf16 %v656, %v654
        %v754 = vpack.c.bf16 %v657, %v655
        %v755 = vpack.c.bf16 %v463, %v461
        %v756 = vpack.c.bf16 %v464, %v462
        %v757 = vpack.c.bf16 %v263, %v261
        %v758 = vpack.c.bf16 %v264, %v262
        %v759 = vpack.c.bf16 %v660, %v658
        %v760 = vpack.c.bf16 %v661, %v659
        %v761 = vld [vmem:[%s2] sm:$0x3]
        %v762 = vld [vmem:[%s1] sm:$0xff]
        %v763 = vld [vmem:[%s1 + $0x8] sm:$0xff]
        %v764 = vld [vmem:[%s1 + $0x10] sm:$0xff]
        %v765 = vld [vmem:[%s1 + $0x18] sm:$0xff]
        %v766 = vld [vmem:[%s1 + $0x20] sm:$0xff]
        %v767 = vld [vmem:[%s1 + $0x28] sm:$0xff]
        %v768 = vld [vmem:[%s1 + $0x30] sm:$0xff]
        %v769 = vld [vmem:[%s1 + $0x38] sm:$0xff]
        %v770 = vld [vmem:[%s1 + $0x40] sm:$0xff]
        %v771 = vld [vmem:[%s1 + $0x48] sm:$0xff]
        %v772 = vld [vmem:[%s1 + $0x50] sm:$0xff]
        %v773 = vld [vmem:[%s1 + $0x58] sm:$0xff]
        %v774 = vld [vmem:[%s1 + $0x60] sm:$0xff]
        %v775 = vld [vmem:[%s1 + $0x68] sm:$0xff]
        %v776 = vld [vmem:[%s1 + $0x70] sm:$0xff]
        %v777 = vld [vmem:[%s1 + $0x78] sm:$0xff]
        %v778 = vld [vmem:[%s1 + $0x80] sm:$0xff]
        %v779 = vld [vmem:[%s1 + $0x88] sm:$0xff]
        %v780 = vld [vmem:[%s1 + $0x90] sm:$0xff]
        %v781 = vld [vmem:[%s1 + $0x98] sm:$0xff]
        %v782 = vld [vmem:[%s1 + $0xa0] sm:$0xff]
        %v783 = vld [vmem:[%s1 + $0xa8] sm:$0xff]
        %v784 = vld [vmem:[%s1 + $0xb0] sm:$0xff]
        %v785 = vld [vmem:[%s1 + $0xb8] sm:$0xff]
        %v786 = vld [vmem:[%s1 + $0xc0] sm:$0xff]
        %v787 = vld [vmem:[%s1 + $0xc8] sm:$0xff]
        %v788 = vld [vmem:[%s1 + $0xd0] sm:$0xff]
        %v789 = vld [vmem:[%s1 + $0xd8] sm:$0xff]
        %v790 = vld [vmem:[%s1 + $0xe0] sm:$0xff]
        %v791 = vld [vmem:[%s1 + $0xe8] sm:$0xff]
        %v792 = vld [vmem:[%s1 + $0xf0] sm:$0xff]
        %v793 = vld [vmem:[%s1 + $0xf8] sm:$0xff]
        %v794 = vld [vmem:[%s1 + $0x100] sm:$0xff]
        %v795 = vld [vmem:[%s1 + $0x108] sm:$0xff]
        %v796 = vld [vmem:[%s1 + $0x110] sm:$0xff]
        %v797 = vld [vmem:[%s1 + $0x118] sm:$0xff]
        %v798 = vld [vmem:[%s1 + $0x120] sm:$0xff]
        %v799 = vld [vmem:[%s1 + $0x128] sm:$0xff]
        %v800 = vld [vmem:[%s1 + $0x130] sm:$0xff]
        %v801 = vld [vmem:[%s1 + $0x138] sm:$0xff]
        %v802 = vld [vmem:[%s1 + $0x140] sm:$0xff]
        %v803 = vld [vmem:[%s1 + $0x148] sm:$0xff]
        %v804 = vld [vmem:[%s1 + $0x150] sm:$0xff]
        %v805 = vld [vmem:[%s1 + $0x158] sm:$0xff]
        %v806 = vld [vmem:[%s1 + $0x160] sm:$0xff]
        %v807 = vld [vmem:[%s1 + $0x168] sm:$0xff]
        %v808 = vld [vmem:[%s1 + $0x170] sm:$0xff]
        %v809 = vld [vmem:[%s1 + $0x178] sm:$0xff]
        %v810 = vld [vmem:[%s1 + $0x180] sm:$0xff]
        %v811 = vld [vmem:[%s1 + $0x188] sm:$0xff]
        %v812 = vld [vmem:[%s1 + $0x190] sm:$0xff]
        %v813 = vld [vmem:[%s1 + $0x198] sm:$0xff]
        %v814 = vld [vmem:[%s1 + $0x1a0] sm:$0xff]
        %v815 = vld [vmem:[%s1 + $0x1a8] sm:$0xff]
        %v816 = vld [vmem:[%s1 + $0x1b0] sm:$0xff]
        %v817 = vld [vmem:[%s1 + $0x1b8] sm:$0xff]
        %v818 = vld [vmem:[%s1 + $0x1c0] sm:$0xff]
        %v819 = vld [vmem:[%s1 + $0x1c8] sm:$0xff]
        %v820 = vld [vmem:[%s1 + $0x1d0] sm:$0xff]
        %v821 = vld [vmem:[%s1 + $0x1d8] sm:$0xff]
        %v822 = vld [vmem:[%s1 + $0x1e0] sm:$0xff]
        %v823 = vld [vmem:[%s1 + $0x1e8] sm:$0xff]
        %v824 = vld [vmem:[%s1 + $0x1f0] sm:$0xff]
        %v825 = vld [vmem:[%s1 + $0x1f8] sm:$0xff]
        %v826 = vld [vmem:[%s1 + $0x200] sm:$0xff]
        %v827 = vld [vmem:[%s1 + $0x208] sm:$0xff]
        %v828 = vld [vmem:[%s1 + $0x210] sm:$0xff]
        %v829 = vld [vmem:[%s1 + $0x218] sm:$0xff]
        %v830 = vld [vmem:[%s1 + $0x220] sm:$0xff]
        %v831 = vld [vmem:[%s1 + $0x228] sm:$0xff]
        %v832 = vld [vmem:[%s1 + $0x230] sm:$0xff]
        %v833 = vld [vmem:[%s1 + $0x238] sm:$0xff]
        %v834 = vld [vmem:[%s1 + $0x240] sm:$0xff]
        %v835 = vld [vmem:[%s1 + $0x248] sm:$0xff]
        %v836 = vld [vmem:[%s1 + $0x250] sm:$0xff]
        %v837 = vld [vmem:[%s1 + $0x258] sm:$0xff]
        %v838 = vld [vmem:[%s1 + $0x260] sm:$0xff]
        %v839 = vld [vmem:[%s1 + $0x268] sm:$0xff]
        %v840 = vld [vmem:[%s1 + $0x270] sm:$0xff]
        %v841 = vld [vmem:[%s1 + $0x278] sm:$0xff]
        %v842 = vld [vmem:[%s1 + $0x280] sm:$0xff]
        %v843 = vld [vmem:[%s1 + $0x288] sm:$0xff]
        %v844 = vld [vmem:[%s1 + $0x290] sm:$0xff]
        %v845 = vld [vmem:[%s1 + $0x298] sm:$0xff]
        %v846 = vld [vmem:[%s1 + $0x2a0] sm:$0xff]
        %v847 = vld [vmem:[%s1 + $0x2a8] sm:$0xff]
        %v848 = vld [vmem:[%s1 + $0x2b0] sm:$0xff]
        %v849 = vld [vmem:[%s1 + $0x2b8] sm:$0xff]
        %v850 = vld [vmem:[%s1 + $0x2c0] sm:$0xff]
        %v851 = vld [vmem:[%s1 + $0x2c8] sm:$0xff]
        %v852 = vld [vmem:[%s1 + $0x2d0] sm:$0xff]
        %v853 = vld [vmem:[%s1 + $0x2d8] sm:$0xff]
        %v854 = vld [vmem:[%s1 + $0x2e0] sm:$0xff]
        %v855 = vld [vmem:[%s1 + $0x2e8] sm:$0xff]
        %v856 = vld [vmem:[%s1 + $0x2f0] sm:$0xff]
        %v857 = vld [vmem:[%s1 + $0x2f8] sm:$0xff]
        %s858 = scalar_lea.vmem %s1, 768
        %v859 = vld [vmem:[%s858] sm:$0xff]
        %v860 = vld [vmem:[%s858 + $0x8] sm:$0xff]
        %v861 = vld [vmem:[%s858 + $0x10] sm:$0xff]
        %v862 = vld [vmem:[%s858 + $0x18] sm:$0xff]
        %v863 = vld [vmem:[%s858 + $0x20] sm:$0xff]
        %v864 = vld [vmem:[%s858 + $0x28] sm:$0xff]
        %v865 = vld [vmem:[%s858 + $0x30] sm:$0xff]
        %v866 = vld [vmem:[%s858 + $0x38] sm:$0xff]
        %v867 = vld [vmem:[%s858 + $0x40] sm:$0xff]
        %v868 = vld [vmem:[%s858 + $0x48] sm:$0xff]
        %v869 = vld [vmem:[%s858 + $0x50] sm:$0xff]
        %v870 = vld [vmem:[%s858 + $0x58] sm:$0xff]
        %v871 = vld [vmem:[%s858 + $0x60] sm:$0xff]
        %v872 = vld [vmem:[%s858 + $0x68] sm:$0xff]
        %v873 = vld [vmem:[%s858 + $0x70] sm:$0xff]
        %v874 = vld [vmem:[%s858 + $0x78] sm:$0xff]
        %v875 = vld [vmem:[%s858 + $0x80] sm:$0xff]
        %v876 = vld [vmem:[%s858 + $0x88] sm:$0xff]
        %v877 = vld [vmem:[%s858 + $0x90] sm:$0xff]
        %v878 = vld [vmem:[%s858 + $0x98] sm:$0xff]
        %v879 = vld [vmem:[%s858 + $0xa0] sm:$0xff]
        %v880 = vld [vmem:[%s858 + $0xa8] sm:$0xff]
        %v881 = vld [vmem:[%s858 + $0xb0] sm:$0xff]
        %v882 = vld [vmem:[%s858 + $0xb8] sm:$0xff]
        %v883 = vld [vmem:[%s858 + $0xc0] sm:$0xff]
        %v884 = vld [vmem:[%s858 + $0xc8] sm:$0xff]
        %v885 = vld [vmem:[%s858 + $0xd0] sm:$0xff]
        %v886 = vld [vmem:[%s858 + $0xd8] sm:$0xff]
        %v887 = vld [vmem:[%s858 + $0xe0] sm:$0xff]
        %v888 = vld [vmem:[%s858 + $0xe8] sm:$0xff]
        %v889 = vld [vmem:[%s858 + $0xf0] sm:$0xff]
        %v890 = vld [vmem:[%s858 + $0xf8] sm:$0xff]
        %v891 = vld [vmem:[%s858 + $0x100] sm:$0xff]
        %v892 = vld [vmem:[%s858 + $0x108] sm:$0xff]
        %v893 = vld [vmem:[%s858 + $0x110] sm:$0xff]
        %v894 = vld [vmem:[%s858 + $0x118] sm:$0xff]
        %v895 = vld [vmem:[%s858 + $0x120] sm:$0xff]
        %v896 = vld [vmem:[%s858 + $0x128] sm:$0xff]
        %v897 = vld [vmem:[%s858 + $0x130] sm:$0xff]
        %v898 = vld [vmem:[%s858 + $0x138] sm:$0xff]
        %v899 = vld [vmem:[%s858 + $0x140] sm:$0xff]
        %v900 = vld [vmem:[%s858 + $0x148] sm:$0xff]
        %v901 = vld [vmem:[%s858 + $0x150] sm:$0xff]
        %v902 = vld [vmem:[%s858 + $0x158] sm:$0xff]
        %v903 = vld [vmem:[%s858 + $0x160] sm:$0xff]
        %v904 = vld [vmem:[%s858 + $0x168] sm:$0xff]
        %v905 = vld [vmem:[%s858 + $0x170] sm:$0xff]
        %v906 = vld [vmem:[%s858 + $0x178] sm:$0xff]
        %v907 = vld [vmem:[%s858 + $0x180] sm:$0xff]
        %v908 = vld [vmem:[%s858 + $0x188] sm:$0xff]
        %v909 = vld [vmem:[%s858 + $0x190] sm:$0xff]
        %v910 = vld [vmem:[%s858 + $0x198] sm:$0xff]
        %v911 = vld [vmem:[%s858 + $0x1a0] sm:$0xff]
        %v912 = vld [vmem:[%s858 + $0x1a8] sm:$0xff]
        %v913 = vld [vmem:[%s858 + $0x1b0] sm:$0xff]
        %v914 = vld [vmem:[%s858 + $0x1b8] sm:$0xff]
        %v915 = vld [vmem:[%s858 + $0x1c0] sm:$0xff]
        %v916 = vld [vmem:[%s858 + $0x1c8] sm:$0xff]
        %v917 = vld [vmem:[%s858 + $0x1d0] sm:$0xff]
        %v918 = vld [vmem:[%s858 + $0x1d8] sm:$0xff]
        %v919 = vld [vmem:[%s858 + $0x1e0] sm:$0xff]
        %v920 = vld [vmem:[%s858 + $0x1e8] sm:$0xff]
        %v921 = vld [vmem:[%s858 + $0x1f0] sm:$0xff]
        %v922 = vld [vmem:[%s858 + $0x1f8] sm:$0xff]
        %v923 = vld [vmem:[%s858 + $0x200] sm:$0xff]
        %v924 = vld [vmem:[%s858 + $0x208] sm:$0xff]
        %v925 = vld [vmem:[%s858 + $0x210] sm:$0xff]
        %v926 = vld [vmem:[%s858 + $0x218] sm:$0xff]
        %v927 = vld [vmem:[%s858 + $0x220] sm:$0xff]
        %v928 = vld [vmem:[%s858 + $0x228] sm:$0xff]
        %v929 = vld [vmem:[%s858 + $0x230] sm:$0xff]
        %v930 = vld [vmem:[%s858 + $0x238] sm:$0xff]
        %v931 = vld [vmem:[%s858 + $0x240] sm:$0xff]
        %v932 = vld [vmem:[%s858 + $0x248] sm:$0xff]
        %v933 = vld [vmem:[%s858 + $0x250] sm:$0xff]
        %v934 = vld [vmem:[%s858 + $0x258] sm:$0xff]
        %v935 = vld [vmem:[%s858 + $0x260] sm:$0xff]
        %v936 = vld [vmem:[%s858 + $0x268] sm:$0xff]
        %v937 = vld [vmem:[%s858 + $0x270] sm:$0xff]
        %v938 = vld [vmem:[%s858 + $0x278] sm:$0xff]
        %v939 = vld [vmem:[%s858 + $0x280] sm:$0xff]
        %v940 = vld [vmem:[%s858 + $0x288] sm:$0xff]
        %v941 = vld [vmem:[%s858 + $0x290] sm:$0xff]
        %v942 = vld [vmem:[%s858 + $0x298] sm:$0xff]
        %v943 = vld [vmem:[%s858 + $0x2a0] sm:$0xff]
        %v944 = vld [vmem:[%s858 + $0x2a8] sm:$0xff]
        %v945 = vld [vmem:[%s858 + $0x2b0] sm:$0xff]
        %v946 = vld [vmem:[%s858 + $0x2b8] sm:$0xff]
        %v947 = vld [vmem:[%s858 + $0x2c0] sm:$0xff]
        %v948 = vld [vmem:[%s858 + $0x2c8] sm:$0xff]
        %v949 = vld [vmem:[%s858 + $0x2d0] sm:$0xff]
        %v950 = vld [vmem:[%s858 + $0x2d8] sm:$0xff]
        %v951 = vld [vmem:[%s858 + $0x2e0] sm:$0xff]
        %v952 = vld [vmem:[%s858 + $0x2e8] sm:$0xff]
        %v953 = vld [vmem:[%s858 + $0x2f0] sm:$0xff]
        %v954 = vld [vmem:[%s858 + $0x2f8] sm:$0xff]
        %v1051 = vunpack.c.l.b16 %v859
        %v1052 = vunpack.c.h.b16 %v859
        %v1053 = vunpack.c.l.b16 %v860
        %v1054 = vunpack.c.h.b16 %v860
        %v1055 = vunpack.c.l.b16 %v861
        %v1056 = vunpack.c.h.b16 %v861
        %v1057 = vunpack.c.l.b16 %v862
        %v1058 = vunpack.c.h.b16 %v862
        %v1059 = vunpack.c.l.b16 %v863
        %v1060 = vunpack.c.h.b16 %v863
        %v1061 = vunpack.c.l.b16 %v864
        %v1062 = vunpack.c.h.b16 %v864
        %v1063 = vunpack.c.l.b16 %v865
        %v1064 = vunpack.c.h.b16 %v865
        %v1065 = vunpack.c.l.b16 %v866
        %v1066 = vunpack.c.h.b16 %v866
        %v1067 = vunpack.c.l.b16 %v867
        %v1068 = vunpack.c.h.b16 %v867
        %v1069 = vunpack.c.l.b16 %v868
        %v1070 = vunpack.c.h.b16 %v868
        %v1071 = vunpack.c.l.b16 %v869
        %v1072 = vunpack.c.h.b16 %v869
        %v1073 = vunpack.c.l.b16 %v870
        %v1074 = vunpack.c.h.b16 %v870
        %v1075 = vunpack.c.l.b16 %v871
        %v1076 = vunpack.c.h.b16 %v871
        %v1077 = vunpack.c.l.b16 %v872
        %v1078 = vunpack.c.h.b16 %v872
        %v1079 = vunpack.c.l.b16 %v873
        %v1080 = vunpack.c.h.b16 %v873
        %v1081 = vunpack.c.l.b16 %v874
        %v1082 = vunpack.c.h.b16 %v874
        %v1083 = vunpack.c.l.b16 %v875
        %v1084 = vunpack.c.h.b16 %v875
        %v1085 = vunpack.c.l.b16 %v876
        %v1086 = vunpack.c.h.b16 %v876
        %v1087 = vunpack.c.l.b16 %v877
        %v1088 = vunpack.c.h.b16 %v877
        %v1089 = vunpack.c.l.b16 %v878
        %v1090 = vunpack.c.h.b16 %v878
        %v1091 = vunpack.c.l.b16 %v879
        %v1092 = vunpack.c.h.b16 %v879
        %v1093 = vunpack.c.l.b16 %v880
        %v1094 = vunpack.c.h.b16 %v880
        %v1095 = vunpack.c.l.b16 %v881
        %v1096 = vunpack.c.h.b16 %v881
        %v1097 = vunpack.c.l.b16 %v882
        %v1098 = vunpack.c.h.b16 %v882
        %v1099 = vunpack.c.l.b16 %v883
        %v1100 = vunpack.c.h.b16 %v883
        %v1101 = vunpack.c.l.b16 %v884
        %v1102 = vunpack.c.h.b16 %v884
        %v1103 = vunpack.c.l.b16 %v885
        %v1104 = vunpack.c.h.b16 %v885
        %v1105 = vunpack.c.l.b16 %v886
        %v1106 = vunpack.c.h.b16 %v886
        %v1107 = vunpack.c.l.b16 %v887
        %v1108 = vunpack.c.h.b16 %v887
        %v1109 = vunpack.c.l.b16 %v888
        %v1110 = vunpack.c.h.b16 %v888
        %v1111 = vunpack.c.l.b16 %v889
        %v1112 = vunpack.c.h.b16 %v889
        %v1113 = vunpack.c.l.b16 %v890
        %v1114 = vunpack.c.h.b16 %v890
        %v1115 = vunpack.c.l.b16 %v891
        %v1116 = vunpack.c.h.b16 %v891
        %v1117 = vunpack.c.l.b16 %v892
        %v1118 = vunpack.c.h.b16 %v892
        %v1119 = vunpack.c.l.b16 %v893
        %v1120 = vunpack.c.h.b16 %v893
        %v1121 = vunpack.c.l.b16 %v894
        %v1122 = vunpack.c.h.b16 %v894
        %v1123 = vunpack.c.l.b16 %v895
        %v1124 = vunpack.c.h.b16 %v895
        %v1125 = vunpack.c.l.b16 %v896
        %v1126 = vunpack.c.h.b16 %v896
        %v1127 = vunpack.c.l.b16 %v897
        %v1128 = vunpack.c.h.b16 %v897
        %v1129 = vunpack.c.l.b16 %v898
        %v1130 = vunpack.c.h.b16 %v898
        %v1131 = vunpack.c.l.b16 %v899
        %v1132 = vunpack.c.h.b16 %v899
        %v1133 = vunpack.c.l.b16 %v900
        %v1134 = vunpack.c.h.b16 %v900
        %v1135 = vunpack.c.l.b16 %v901
        %v1136 = vunpack.c.h.b16 %v901
        %v1137 = vunpack.c.l.b16 %v902
        %v1138 = vunpack.c.h.b16 %v902
        %v1139 = vunpack.c.l.b16 %v903
        %v1140 = vunpack.c.h.b16 %v903
        %v1141 = vunpack.c.l.b16 %v904
        %v1142 = vunpack.c.h.b16 %v904
        %v1143 = vunpack.c.l.b16 %v905
        %v1144 = vunpack.c.h.b16 %v905
        %v1145 = vunpack.c.l.b16 %v906
        %v1146 = vunpack.c.h.b16 %v906
        %v1147 = vunpack.c.l.b16 %v907
        %v1148 = vunpack.c.h.b16 %v907
        %v1149 = vunpack.c.l.b16 %v908
        %v1150 = vunpack.c.h.b16 %v908
        %v1151 = vunpack.c.l.b16 %v909
        %v1152 = vunpack.c.h.b16 %v909
        %v1153 = vunpack.c.l.b16 %v910
        %v1154 = vunpack.c.h.b16 %v910
        %v1155 = vunpack.c.l.b16 %v911
        %v1156 = vunpack.c.h.b16 %v911
        %v1157 = vunpack.c.l.b16 %v912
        %v1158 = vunpack.c.h.b16 %v912
        %v1159 = vunpack.c.l.b16 %v913
        %v1160 = vunpack.c.h.b16 %v913
        %v1161 = vunpack.c.l.b16 %v914
        %v1162 = vunpack.c.h.b16 %v914
        %v1163 = vunpack.c.l.b16 %v915
        %v1164 = vunpack.c.h.b16 %v915
        %v1165 = vunpack.c.l.b16 %v916
        %v1166 = vunpack.c.h.b16 %v916
        %v1167 = vunpack.c.l.b16 %v917
        %v1168 = vunpack.c.h.b16 %v917
        %v1169 = vunpack.c.l.b16 %v918
        %v1170 = vunpack.c.h.b16 %v918
        %v1171 = vunpack.c.l.b16 %v919
        %v1172 = vunpack.c.h.b16 %v919
        %v1173 = vunpack.c.l.b16 %v920
        %v1174 = vunpack.c.h.b16 %v920
        %v1175 = vunpack.c.l.b16 %v921
        %v1176 = vunpack.c.h.b16 %v921
        %v1177 = vunpack.c.l.b16 %v922
        %v1178 = vunpack.c.h.b16 %v922
        %v1179 = vunpack.c.l.b16 %v923
        %v1180 = vunpack.c.h.b16 %v923
        %v1181 = vunpack.c.l.b16 %v924
        %v1182 = vunpack.c.h.b16 %v924
        %v1183 = vunpack.c.l.b16 %v925
        %v1184 = vunpack.c.h.b16 %v925
        %v1185 = vunpack.c.l.b16 %v926
        %v1186 = vunpack.c.h.b16 %v926
        %v1187 = vunpack.c.l.b16 %v927
        %v1188 = vunpack.c.h.b16 %v927
        %v1189 = vunpack.c.l.b16 %v928
        %v1190 = vunpack.c.h.b16 %v928
        %v1191 = vunpack.c.l.b16 %v929
        %v1192 = vunpack.c.h.b16 %v929
        %v1193 = vunpack.c.l.b16 %v930
        %v1194 = vunpack.c.h.b16 %v930
        %v1195 = vunpack.c.l.b16 %v931
        %v1196 = vunpack.c.h.b16 %v931
        %v1197 = vunpack.c.l.b16 %v932
        %v1198 = vunpack.c.h.b16 %v932
        %v1199 = vunpack.c.l.b16 %v933
        %v1200 = vunpack.c.h.b16 %v933
        %v1201 = vunpack.c.l.b16 %v934
        %v1202 = vunpack.c.h.b16 %v934
        %v1203 = vunpack.c.l.b16 %v935
        %v1204 = vunpack.c.h.b16 %v935
        %v1205 = vunpack.c.l.b16 %v936
        %v1206 = vunpack.c.h.b16 %v936
        %v1207 = vunpack.c.l.b16 %v937
        %v1208 = vunpack.c.h.b16 %v937
        %v1209 = vunpack.c.l.b16 %v938
        %v1210 = vunpack.c.h.b16 %v938
        %v1211 = vunpack.c.l.b16 %v939
        %v1212 = vunpack.c.h.b16 %v939
        %v1213 = vunpack.c.l.b16 %v940
        %v1214 = vunpack.c.h.b16 %v940
        %v1215 = vunpack.c.l.b16 %v941
        %v1216 = vunpack.c.h.b16 %v941
        %v1217 = vunpack.c.l.b16 %v942
        %v1218 = vunpack.c.h.b16 %v942
        %v1219 = vunpack.c.l.b16 %v943
        %v1220 = vunpack.c.h.b16 %v943
        %v1221 = vunpack.c.l.b16 %v944
        %v1222 = vunpack.c.h.b16 %v944
        %v1223 = vunpack.c.l.b16 %v945
        %v1224 = vunpack.c.h.b16 %v945
        %v1225 = vunpack.c.l.b16 %v946
        %v1226 = vunpack.c.h.b16 %v946
        %v1227 = vunpack.c.l.b16 %v947
        %v1228 = vunpack.c.h.b16 %v947
        %v1229 = vunpack.c.l.b16 %v948
        %v1230 = vunpack.c.h.b16 %v948
        %v1231 = vunpack.c.l.b16 %v949
        %v1232 = vunpack.c.h.b16 %v949
        %v1233 = vunpack.c.l.b16 %v950
        %v1234 = vunpack.c.h.b16 %v950
        %v1235 = vunpack.c.l.b16 %v951
        %v1236 = vunpack.c.h.b16 %v951
        %v1237 = vunpack.c.l.b16 %v952
        %v1238 = vunpack.c.h.b16 %v952
        %v1239 = vunpack.c.l.b16 %v953
        %v1240 = vunpack.c.h.b16 %v953
        %v1241 = vunpack.c.l.b16 %v954
        %v1242 = vunpack.c.h.b16 %v954
        %v1243 = vpack.c.b16 %v1053, %v1051
        %v1244 = vpack.c.b16 %v1054, %v1052
        %v1245 = vpack.c.b16 %v1057, %v1055
        %v1246 = vpack.c.b16 %v1058, %v1056
        %v1247 = vpack.c.b16 %v1061, %v1059
        %v1248 = vpack.c.b16 %v1062, %v1060
        %v1249 = vpack.c.b16 %v1065, %v1063
        %v1250 = vpack.c.b16 %v1066, %v1064
        %v1251 = vpack.c.b16 %v1069, %v1067
        %v1252 = vpack.c.b16 %v1070, %v1068
        %v1253 = vpack.c.b16 %v1073, %v1071
        %v1254 = vpack.c.b16 %v1074, %v1072
        %v1255 = vpack.c.b16 %v1077, %v1075
        %v1256 = vpack.c.b16 %v1078, %v1076
        %v1257 = vpack.c.b16 %v1081, %v1079
        %v1258 = vpack.c.b16 %v1082, %v1080
        %v1259 = vpack.c.b16 %v1085, %v1083
        %v1260 = vpack.c.b16 %v1086, %v1084
        %v1261 = vpack.c.b16 %v1089, %v1087
        %v1262 = vpack.c.b16 %v1090, %v1088
        %v1263 = vpack.c.b16 %v1093, %v1091
        %v1264 = vpack.c.b16 %v1094, %v1092
        %v1265 = vpack.c.b16 %v1097, %v1095
        %v1266 = vpack.c.b16 %v1098, %v1096
        %v1267 = vpack.c.b16 %v1101, %v1099
        %v1268 = vpack.c.b16 %v1102, %v1100
        %v1269 = vpack.c.b16 %v1105, %v1103
        %v1270 = vpack.c.b16 %v1106, %v1104
        %v1271 = vpack.c.b16 %v1109, %v1107
        %v1272 = vpack.c.b16 %v1110, %v1108
        %v1273 = vpack.c.b16 %v1113, %v1111
        %v1274 = vpack.c.b16 %v1114, %v1112
        %v1275 = vpack.c.b16 %v1117, %v1115
        %v1276 = vpack.c.b16 %v1118, %v1116
        %v1277 = vpack.c.b16 %v1121, %v1119
        %v1278 = vpack.c.b16 %v1122, %v1120
        %v1279 = vpack.c.b16 %v1125, %v1123
        %v1280 = vpack.c.b16 %v1126, %v1124
        %v1281 = vpack.c.b16 %v1129, %v1127
        %v1282 = vpack.c.b16 %v1130, %v1128
        %v1283 = vpack.c.b16 %v1133, %v1131
        %v1284 = vpack.c.b16 %v1134, %v1132
        %v1285 = vpack.c.b16 %v1137, %v1135
        %v1286 = vpack.c.b16 %v1138, %v1136
        %v1287 = vpack.c.b16 %v1141, %v1139
        %v1288 = vpack.c.b16 %v1142, %v1140
        %v1289 = vpack.c.b16 %v1145, %v1143
        %v1290 = vpack.c.b16 %v1146, %v1144
        %v1291 = vpack.c.b16 %v1149, %v1147
        %v1292 = vpack.c.b16 %v1150, %v1148
        %v1293 = vpack.c.b16 %v1153, %v1151
        %v1294 = vpack.c.b16 %v1154, %v1152
        %v1295 = vpack.c.b16 %v1157, %v1155
        %v1296 = vpack.c.b16 %v1158, %v1156
        %v1297 = vpack.c.b16 %v1161, %v1159
        %v1298 = vpack.c.b16 %v1162, %v1160
        %v1299 = vpack.c.b16 %v1165, %v1163
        %v1300 = vpack.c.b16 %v1166, %v1164
        %v1301 = vpack.c.b16 %v1169, %v1167
        %v1302 = vpack.c.b16 %v1170, %v1168
        %v1303 = vpack.c.b16 %v1173, %v1171
        %v1304 = vpack.c.b16 %v1174, %v1172
        %v1305 = vpack.c.b16 %v1177, %v1175
        %v1306 = vpack.c.b16 %v1178, %v1176
        %v1307 = vpack.c.b16 %v1181, %v1179
        %v1308 = vpack.c.b16 %v1182, %v1180
        %v1309 = vpack.c.b16 %v1185, %v1183
        %v1310 = vpack.c.b16 %v1186, %v1184
        %v1311 = vpack.c.b16 %v1189, %v1187
        %v1312 = vpack.c.b16 %v1190, %v1188
        %v1313 = vpack.c.b16 %v1193, %v1191
        %v1314 = vpack.c.b16 %v1194, %v1192
        %v1315 = vpack.c.b16 %v1197, %v1195
        %v1316 = vpack.c.b16 %v1198, %v1196
        %v1317 = vpack.c.b16 %v1201, %v1199
        %v1318 = vpack.c.b16 %v1202, %v1200
        %v1319 = vpack.c.b16 %v1205, %v1203
        %v1320 = vpack.c.b16 %v1206, %v1204
        %v1321 = vpack.c.b16 %v1209, %v1207
        %v1322 = vpack.c.b16 %v1210, %v1208
        %v1323 = vpack.c.b16 %v1213, %v1211
        %v1324 = vpack.c.b16 %v1214, %v1212
        %v1325 = vpack.c.b16 %v1217, %v1215
        %v1326 = vpack.c.b16 %v1218, %v1216
        %v1327 = vpack.c.b16 %v1221, %v1219
        %v1328 = vpack.c.b16 %v1222, %v1220
        %v1329 = vpack.c.b16 %v1225, %v1223
        %v1330 = vpack.c.b16 %v1226, %v1224
        %v1331 = vpack.c.b16 %v1229, %v1227
        %v1332 = vpack.c.b16 %v1230, %v1228
        %v1333 = vpack.c.b16 %v1233, %v1231
        %v1334 = vpack.c.b16 %v1234, %v1232
        %v1335 = vpack.c.b16 %v1237, %v1235
        %v1336 = vpack.c.b16 %v1238, %v1236
        %v1337 = vpack.c.b16 %v1241, %v1239
        %v1338 = vpack.c.b16 %v1242, %v1240
        %1435 = vmatprep.subr.bf16.mxu0 %v1258
        %1436 = vmatpush1.bf16.msra.mxu0 %v1257
        %1437 = vmatprep.subr.bf16.mxu0 %v1256
        %1438 = vmatpush1.bf16.msra.mxu0 %v1255
        %1439 = vmatprep.subr.bf16.mxu0 %v1254
        %1440 = vmatpush1.bf16.msra.mxu0 %v1253
        %1441 = vmatprep.subr.bf16.mxu0 %v1252
        %1442 = vmatpush1.bf16.msra.mxu0 %v1251
        %1443 = vmatprep.subr.bf16.mxu0 %v1250
        %1444 = vmatpush1.bf16.msra.mxu0 %v1249
        %1445 = vmatprep.subr.bf16.mxu0 %v1248
        %1446 = vmatpush1.bf16.msra.mxu0 %v1247
        %1447 = vmatprep.subr.bf16.mxu0 %v1246
        %1448 = vmatpush1.bf16.msra.mxu0 %v1245
        %1449 = vmatprep.subr.bf16.mxu0 %v1244
        %1450 = vmatpush1.bf16.msra.mxu0 %v1243
        %1451 = vmatprep.subr.bf16.mxu0 %v1274
        %1452 = vmatpush2.bf16.msra.mxu0 %v1273
        %1453 = vmatprep.subr.bf16.mxu0 %v1272
        %1454 = vmatpush2.bf16.msra.mxu0 %v1271
        %1455 = vmatprep.subr.bf16.mxu0 %v1270
        %1456 = vmatpush2.bf16.msra.mxu0 %v1269
        %1457 = vmatprep.subr.bf16.mxu0 %v1268
        %1458 = vmatpush2.bf16.msra.mxu0 %v1267
        %1459 = vmatprep.subr.bf16.mxu0 %v1266
        %1460 = vmatpush2.bf16.msra.mxu0 %v1265
        %1461 = vmatprep.subr.bf16.mxu0 %v1264
        %1462 = vmatpush2.bf16.msra.mxu0 %v1263
        %1463 = vmatprep.subr.bf16.mxu0 %v1262
        %1464 = vmatpush2.bf16.msra.mxu0 %v1261
        %1465 = vmatprep.subr.bf16.mxu0 %v1260
        %1466 = vmatpush2.bf16.msra.mxu0 %v1259
        %1467 = vmatprep.mubr.bf16.mxu0 %v666
        %1468 = vmatmul.mubr.bf16.gmra.mxu0 %v665
        %v1469 = vpop.f32.mrf.mxu0
        %v1470 = vadd.f32 0.0, %v1469
        %v1471 = vpop.f32.mrf.mxu0
        %v1472 = vadd.f32 0.0, %v1471
        %v1473 = vpop.f32.mrf.mxu0
        %v1474 = vadd.f32 0.0, %v1473
        %v1475 = vpop.f32.mrf.mxu0
        %v1476 = vadd.f32 0.0, %v1475
        %1477 = vmatprep.mubr.bf16.mxu0 %v672
        %1478 = vmatmul.mubr.bf16.gmra.mxu0 %v671
        %v1479 = vpop.f32.mrf.mxu0
        %v1480 = vadd.f32 0.0, %v1479
        %v1481 = vpop.f32.mrf.mxu0
        %v1482 = vadd.f32 0.0, %v1481
        %v1483 = vpop.f32.mrf.mxu0
        %v1484 = vadd.f32 0.0, %v1483
        %v1485 = vpop.f32.mrf.mxu0
        %v1486 = vadd.f32 0.0, %v1485
        %1487 = vmatprep.mubr.bf16.mxu0 %v678
        %1488 = vmatmul.mubr.bf16.gmra.mxu0 %v677
        %v1489 = vpop.f32.mrf.mxu0
        %v1490 = vadd.f32 0.0, %v1489
        %v1491 = vpop.f32.mrf.mxu0
        %v1492 = vadd.f32 0.0, %v1491
        %v1493 = vpop.f32.mrf.mxu0
        %v1494 = vadd.f32 0.0, %v1493
        %v1495 = vpop.f32.mrf.mxu0
        %v1496 = vadd.f32 0.0, %v1495
        %1497 = vmatprep.mubr.bf16.mxu0 %v684
        %1498 = vmatmul.mubr.bf16.gmra.mxu0 %v683
        %v1499 = vpop.f32.mrf.mxu0
        %v1500 = vadd.f32 0.0, %v1499
        %v1501 = vpop.f32.mrf.mxu0
        %v1502 = vadd.f32 0.0, %v1501
        %v1503 = vpop.f32.mrf.mxu0
        %v1504 = vadd.f32 0.0, %v1503
        %v1505 = vpop.f32.mrf.mxu0
        %v1506 = vadd.f32 0.0, %v1505
        %1507 = vmatprep.mubr.bf16.mxu0 %v690
        %1508 = vmatmul.mubr.bf16.gmra.mxu0 %v689
        %v1509 = vpop.f32.mrf.mxu0
        %v1510 = vadd.f32 0.0, %v1509
        %v1511 = vpop.f32.mrf.mxu0
        %v1512 = vadd.f32 0.0, %v1511
        %v1513 = vpop.f32.mrf.mxu0
        %v1514 = vadd.f32 0.0, %v1513
        %v1515 = vpop.f32.mrf.mxu0
        %v1516 = vadd.f32 0.0, %v1515
        %1517 = vmatprep.mubr.bf16.mxu0 %v696
        %1518 = vmatmul.mubr.bf16.gmra.mxu0 %v695
        %v1519 = vpop.f32.mrf.mxu0
        %v1520 = vadd.f32 0.0, %v1519
        %v1521 = vpop.f32.mrf.mxu0
        %v1522 = vadd.f32 0.0, %v1521
        %v1523 = vpop.f32.mrf.mxu0
        %v1524 = vadd.f32 0.0, %v1523
        %v1525 = vpop.f32.mrf.mxu0
        %v1526 = vadd.f32 0.0, %v1525
        %1527 = vmatprep.mubr.bf16.mxu0 %v702
        %1528 = vmatmul.mubr.bf16.gmra.mxu0 %v701
        %v1529 = vpop.f32.mrf.mxu0
        %v1530 = vadd.f32 0.0, %v1529
        %v1531 = vpop.f32.mrf.mxu0
        %v1532 = vadd.f32 0.0, %v1531
        %v1533 = vpop.f32.mrf.mxu0
        %v1534 = vadd.f32 0.0, %v1533
        %v1535 = vpop.f32.mrf.mxu0
        %v1536 = vadd.f32 0.0, %v1535
        %1537 = vmatprep.mubr.bf16.mxu0 %v708
        %1538 = vmatmul.mubr.bf16.gmra.mxu0 %v707
        %v1539 = vpop.f32.mrf.mxu0
        %v1540 = vadd.f32 0.0, %v1539
        %v1541 = vpop.f32.mrf.mxu0
        %v1542 = vadd.f32 0.0, %v1541
        %v1543 = vpop.f32.mrf.mxu0
        %v1544 = vadd.f32 0.0, %v1543
        %v1545 = vpop.f32.mrf.mxu0
        %v1546 = vadd.f32 0.0, %v1545
        %1547 = vdwg.mxu0
        %1548 = vmatprep.subr.bf16.mxu0 %v1290
        %1549 = vmatpush1.bf16.msra.mxu0 %v1289
        %1550 = vmatprep.subr.bf16.mxu0 %v1288
        %1551 = vmatpush1.bf16.msra.mxu0 %v1287
        %1552 = vmatprep.subr.bf16.mxu0 %v1286
        %1553 = vmatpush1.bf16.msra.mxu0 %v1285
        %1554 = vmatprep.subr.bf16.mxu0 %v1284
        %1555 = vmatpush1.bf16.msra.mxu0 %v1283
        %1556 = vmatprep.subr.bf16.mxu0 %v1282
        %1557 = vmatpush1.bf16.msra.mxu0 %v1281
        %1558 = vmatprep.subr.bf16.mxu0 %v1280
        %1559 = vmatpush1.bf16.msra.mxu0 %v1279
        %1560 = vmatprep.subr.bf16.mxu0 %v1278
        %1561 = vmatpush1.bf16.msra.mxu0 %v1277
        %1562 = vmatprep.subr.bf16.mxu0 %v1276
        %1563 = vmatpush1.bf16.msra.mxu0 %v1275
        %1564 = vmatprep.subr.bf16.mxu0 %v1306
        %1565 = vmatpush2.bf16.msra.mxu0 %v1305
        %1566 = vmatprep.subr.bf16.mxu0 %v1304
        %1567 = vmatpush2.bf16.msra.mxu0 %v1303
        %1568 = vmatprep.subr.bf16.mxu0 %v1302
        %1569 = vmatpush2.bf16.msra.mxu0 %v1301
        %1570 = vmatprep.subr.bf16.mxu0 %v1300
        %1571 = vmatpush2.bf16.msra.mxu0 %v1299
        %1572 = vmatprep.subr.bf16.mxu0 %v1298
        %1573 = vmatpush2.bf16.msra.mxu0 %v1297
        %1574 = vmatprep.subr.bf16.mxu0 %v1296
        %1575 = vmatpush2.bf16.msra.mxu0 %v1295
        %1576 = vmatprep.subr.bf16.mxu0 %v1294
        %1577 = vmatpush2.bf16.msra.mxu0 %v1293
        %1578 = vmatprep.subr.bf16.mxu0 %v1292
        %1579 = vmatpush2.bf16.msra.mxu0 %v1291
        %1580 = vmatprep.mubr.bf16.mxu0 %v668
        %1581 = vmatmul.mubr.bf16.gmra.mxu0 %v667
        %v1582 = vpop.f32.mrf.mxu0
        %v1583 = vadd.f32 %v1470, %v1582
        %v1584 = vpop.f32.mrf.mxu0
        %v1585 = vadd.f32 %v1472, %v1584
        %v1586 = vpop.f32.mrf.mxu0
        %v1587 = vadd.f32 %v1474, %v1586
        %v1588 = vpop.f32.mrf.mxu0
        %v1589 = vadd.f32 %v1476, %v1588
        %1590 = vmatprep.mubr.bf16.mxu0 %v674
        %1591 = vmatmul.mubr.bf16.gmra.mxu0 %v673
        %v1592 = vpop.f32.mrf.mxu0
        %v1593 = vadd.f32 %v1480, %v1592
        %v1594 = vpop.f32.mrf.mxu0
        %v1595 = vadd.f32 %v1482, %v1594
        %v1596 = vpop.f32.mrf.mxu0
        %v1597 = vadd.f32 %v1484, %v1596
        %v1598 = vpop.f32.mrf.mxu0
        %v1599 = vadd.f32 %v1486, %v1598
        %1600 = vmatprep.mubr.bf16.mxu0 %v680
        %1601 = vmatmul.mubr.bf16.gmra.mxu0 %v679
        %v1602 = vpop.f32.mrf.mxu0
        %v1603 = vadd.f32 %v1490, %v1602
        %v1604 = vpop.f32.mrf.mxu0
        %v1605 = vadd.f32 %v1492, %v1604
        %v1606 = vpop.f32.mrf.mxu0
        %v1607 = vadd.f32 %v1494, %v1606
        %v1608 = vpop.f32.mrf.mxu0
        %v1609 = vadd.f32 %v1496, %v1608
        %1610 = vmatprep.mubr.bf16.mxu0 %v686
        %1611 = vmatmul.mubr.bf16.gmra.mxu0 %v685
        %v1612 = vpop.f32.mrf.mxu0
        %v1613 = vadd.f32 %v1500, %v1612
        %v1614 = vpop.f32.mrf.mxu0
        %v1615 = vadd.f32 %v1502, %v1614
        %v1616 = vpop.f32.mrf.mxu0
        %v1617 = vadd.f32 %v1504, %v1616
        %v1618 = vpop.f32.mrf.mxu0
        %v1619 = vadd.f32 %v1506, %v1618
        %1620 = vmatprep.mubr.bf16.mxu0 %v692
        %1621 = vmatmul.mubr.bf16.gmra.mxu0 %v691
        %v1622 = vpop.f32.mrf.mxu0
        %v1623 = vadd.f32 %v1510, %v1622
        %v1624 = vpop.f32.mrf.mxu0
        %v1625 = vadd.f32 %v1512, %v1624
        %v1626 = vpop.f32.mrf.mxu0
        %v1627 = vadd.f32 %v1514, %v1626
        %v1628 = vpop.f32.mrf.mxu0
        %v1629 = vadd.f32 %v1516, %v1628
        %1630 = vmatprep.mubr.bf16.mxu0 %v698
        %1631 = vmatmul.mubr.bf16.gmra.mxu0 %v697
        %v1632 = vpop.f32.mrf.mxu0
        %v1633 = vadd.f32 %v1520, %v1632
        %v1634 = vpop.f32.mrf.mxu0
        %v1635 = vadd.f32 %v1522, %v1634
        %v1636 = vpop.f32.mrf.mxu0
        %v1637 = vadd.f32 %v1524, %v1636
        %v1638 = vpop.f32.mrf.mxu0
        %v1639 = vadd.f32 %v1526, %v1638
        %1640 = vmatprep.mubr.bf16.mxu0 %v704
        %1641 = vmatmul.mubr.bf16.gmra.mxu0 %v703
        %v1642 = vpop.f32.mrf.mxu0
        %v1643 = vadd.f32 %v1530, %v1642
        %v1644 = vpop.f32.mrf.mxu0
        %v1645 = vadd.f32 %v1532, %v1644
        %v1646 = vpop.f32.mrf.mxu0
        %v1647 = vadd.f32 %v1534, %v1646
        %v1648 = vpop.f32.mrf.mxu0
        %v1649 = vadd.f32 %v1536, %v1648
        %1650 = vmatprep.mubr.bf16.mxu0 %v710
        %1651 = vmatmul.mubr.bf16.gmra.mxu0 %v709
        %v1652 = vpop.f32.mrf.mxu0
        %v1653 = vadd.f32 %v1540, %v1652
        %v1654 = vpop.f32.mrf.mxu0
        %v1655 = vadd.f32 %v1542, %v1654
        %v1656 = vpop.f32.mrf.mxu0
        %v1657 = vadd.f32 %v1544, %v1656
        %v1658 = vpop.f32.mrf.mxu0
        %v1659 = vadd.f32 %v1546, %v1658
        %1660 = vdwg.mxu0
        %1661 = vmatprep.subr.bf16.mxu0 %v1322
        %1662 = vmatpush1.bf16.msra.mxu0 %v1321
        %1663 = vmatprep.subr.bf16.mxu0 %v1320
        %1664 = vmatpush1.bf16.msra.mxu0 %v1319
        %1665 = vmatprep.subr.bf16.mxu0 %v1318
        %1666 = vmatpush1.bf16.msra.mxu0 %v1317
        %1667 = vmatprep.subr.bf16.mxu0 %v1316
        %1668 = vmatpush1.bf16.msra.mxu0 %v1315
        %1669 = vmatprep.subr.bf16.mxu0 %v1314
        %1670 = vmatpush1.bf16.msra.mxu0 %v1313
        %1671 = vmatprep.subr.bf16.mxu0 %v1312
        %1672 = vmatpush1.bf16.msra.mxu0 %v1311
        %1673 = vmatprep.subr.bf16.mxu0 %v1310
        %1674 = vmatpush1.bf16.msra.mxu0 %v1309
        %1675 = vmatprep.subr.bf16.mxu0 %v1308
        %1676 = vmatpush1.bf16.msra.mxu0 %v1307
        %1677 = vmatprep.subr.bf16.mxu0 %v1338
        %1678 = vmatpush2.bf16.msra.mxu0 %v1337
        %1679 = vmatprep.subr.bf16.mxu0 %v1336
        %1680 = vmatpush2.bf16.msra.mxu0 %v1335
        %1681 = vmatprep.subr.bf16.mxu0 %v1334
        %1682 = vmatpush2.bf16.msra.mxu0 %v1333
        %1683 = vmatprep.subr.bf16.mxu0 %v1332
        %1684 = vmatpush2.bf16.msra.mxu0 %v1331
        %1685 = vmatprep.subr.bf16.mxu0 %v1330
        %1686 = vmatpush2.bf16.msra.mxu0 %v1329
        %1687 = vmatprep.subr.bf16.mxu0 %v1328
        %1688 = vmatpush2.bf16.msra.mxu0 %v1327
        %1689 = vmatprep.subr.bf16.mxu0 %v1326
        %1690 = vmatpush2.bf16.msra.mxu0 %v1325
        %1691 = vmatprep.subr.bf16.mxu0 %v1324
        %1692 = vmatpush2.bf16.msra.mxu0 %v1323
        %1693 = vmatprep.mubr.bf16.mxu0 %v670
        %1694 = vmatmul.mubr.bf16.gmra.mxu0 %v669
        %v1695 = vpop.f32.mrf.mxu0
        %v1696 = vadd.f32 %v1583, %v1695
        %v1697 = vpop.f32.mrf.mxu0
        %v1698 = vadd.f32 %v1585, %v1697
        %v1699 = vpop.f32.mrf.mxu0
        %v1700 = vadd.f32 %v1587, %v1699
        %v1701 = vpop.f32.mrf.mxu0
        %v1702 = vadd.f32 %v1589, %v1701
        %1703 = vmatprep.mubr.bf16.mxu0 %v676
        %1704 = vmatmul.mubr.bf16.gmra.mxu0 %v675
        %v1705 = vpop.f32.mrf.mxu0
        %v1706 = vadd.f32 %v1593, %v1705
        %v1707 = vpop.f32.mrf.mxu0
        %v1708 = vadd.f32 %v1595, %v1707
        %v1709 = vpop.f32.mrf.mxu0
        %v1710 = vadd.f32 %v1597, %v1709
        %v1711 = vpop.f32.mrf.mxu0
        %v1712 = vadd.f32 %v1599, %v1711
        %1713 = vmatprep.mubr.bf16.mxu0 %v682
        %1714 = vmatmul.mubr.bf16.gmra.mxu0 %v681
        %v1715 = vpop.f32.mrf.mxu0
        %v1716 = vadd.f32 %v1603, %v1715
        %v1717 = vpop.f32.mrf.mxu0
        %v1718 = vadd.f32 %v1605, %v1717
        %v1719 = vpop.f32.mrf.mxu0
        %v1720 = vadd.f32 %v1607, %v1719
        %v1721 = vpop.f32.mrf.mxu0
        %v1722 = vadd.f32 %v1609, %v1721
        %1723 = vmatprep.mubr.bf16.mxu0 %v688
        %1724 = vmatmul.mubr.bf16.gmra.mxu0 %v687
        %v1725 = vpop.f32.mrf.mxu0
        %v1726 = vadd.f32 %v1613, %v1725
        %v1727 = vpop.f32.mrf.mxu0
        %v1728 = vadd.f32 %v1615, %v1727
        %v1729 = vpop.f32.mrf.mxu0
        %v1730 = vadd.f32 %v1617, %v1729
        %v1731 = vpop.f32.mrf.mxu0
        %v1732 = vadd.f32 %v1619, %v1731
        %1733 = vmatprep.mubr.bf16.mxu0 %v694
        %1734 = vmatmul.mubr.bf16.gmra.mxu0 %v693
        %v1735 = vpop.f32.mrf.mxu0
        %v1736 = vadd.f32 %v1623, %v1735
        %v1737 = vpop.f32.mrf.mxu0
        %v1738 = vadd.f32 %v1625, %v1737
        %v1739 = vpop.f32.mrf.mxu0
        %v1740 = vadd.f32 %v1627, %v1739
        %v1741 = vpop.f32.mrf.mxu0
        %v1742 = vadd.f32 %v1629, %v1741
        %1743 = vmatprep.mubr.bf16.mxu0 %v700
        %1744 = vmatmul.mubr.bf16.gmra.mxu0 %v699
        %v1745 = vpop.f32.mrf.mxu0
        %v1746 = vadd.f32 %v1633, %v1745
        %v1747 = vpop.f32.mrf.mxu0
        %v1748 = vadd.f32 %v1635, %v1747
        %v1749 = vpop.f32.mrf.mxu0
        %v1750 = vadd.f32 %v1637, %v1749
        %v1751 = vpop.f32.mrf.mxu0
        %v1752 = vadd.f32 %v1639, %v1751
        %1753 = vmatprep.mubr.bf16.mxu0 %v706
        %1754 = vmatmul.mubr.bf16.gmra.mxu0 %v705
        %v1755 = vpop.f32.mrf.mxu0
        %v1756 = vadd.f32 %v1643, %v1755
        %v1757 = vpop.f32.mrf.mxu0
        %v1758 = vadd.f32 %v1645, %v1757
        %v1759 = vpop.f32.mrf.mxu0
        %v1760 = vadd.f32 %v1647, %v1759
        %v1761 = vpop.f32.mrf.mxu0
        %v1762 = vadd.f32 %v1649, %v1761
        %1763 = vmatprep.mubr.bf16.mxu0 %v712
        %1764 = vmatmul.mubr.bf16.gmra.mxu0 %v711
        %v1765 = vpop.f32.mrf.mxu0
        %v1766 = vadd.f32 %v1653, %v1765
        %v1767 = vpop.f32.mrf.mxu0
        %v1768 = vadd.f32 %v1655, %v1767
        %v1769 = vpop.f32.mrf.mxu0
        %v1770 = vadd.f32 %v1657, %v1769
        %v1771 = vpop.f32.mrf.mxu0
        %v1772 = vadd.f32 %v1659, %v1771
        %1773 = vdwg.mxu0
        %v1870 = vunpack.c.l.b16 %v762
        %v1871 = vunpack.c.h.b16 %v762
        %v1872 = vunpack.c.l.b16 %v763
        %v1873 = vunpack.c.h.b16 %v763
        %v1874 = vunpack.c.l.b16 %v764
        %v1875 = vunpack.c.h.b16 %v764
        %v1876 = vunpack.c.l.b16 %v765
        %v1877 = vunpack.c.h.b16 %v765
        %v1878 = vunpack.c.l.b16 %v766
        %v1879 = vunpack.c.h.b16 %v766
        %v1880 = vunpack.c.l.b16 %v767
        %v1881 = vunpack.c.h.b16 %v767
        %v1882 = vunpack.c.l.b16 %v768
        %v1883 = vunpack.c.h.b16 %v768
        %v1884 = vunpack.c.l.b16 %v769
        %v1885 = vunpack.c.h.b16 %v769
        %v1886 = vunpack.c.l.b16 %v770
        %v1887 = vunpack.c.h.b16 %v770
        %v1888 = vunpack.c.l.b16 %v771
        %v1889 = vunpack.c.h.b16 %v771
        %v1890 = vunpack.c.l.b16 %v772
        %v1891 = vunpack.c.h.b16 %v772
        %v1892 = vunpack.c.l.b16 %v773
        %v1893 = vunpack.c.h.b16 %v773
        %v1894 = vunpack.c.l.b16 %v774
        %v1895 = vunpack.c.h.b16 %v774
        %v1896 = vunpack.c.l.b16 %v775
        %v1897 = vunpack.c.h.b16 %v775
        %v1898 = vunpack.c.l.b16 %v776
        %v1899 = vunpack.c.h.b16 %v776
        %v1900 = vunpack.c.l.b16 %v777
        %v1901 = vunpack.c.h.b16 %v777
        %v1902 = vunpack.c.l.b16 %v778
        %v1903 = vunpack.c.h.b16 %v778
        %v1904 = vunpack.c.l.b16 %v779
        %v1905 = vunpack.c.h.b16 %v779
        %v1906 = vunpack.c.l.b16 %v780
        %v1907 = vunpack.c.h.b16 %v780
        %v1908 = vunpack.c.l.b16 %v781
        %v1909 = vunpack.c.h.b16 %v781
        %v1910 = vunpack.c.l.b16 %v782
        %v1911 = vunpack.c.h.b16 %v782
        %v1912 = vunpack.c.l.b16 %v783
        %v1913 = vunpack.c.h.b16 %v783
        %v1914 = vunpack.c.l.b16 %v784
        %v1915 = vunpack.c.h.b16 %v784
        %v1916 = vunpack.c.l.b16 %v785
        %v1917 = vunpack.c.h.b16 %v785
        %v1918 = vunpack.c.l.b16 %v786
        %v1919 = vunpack.c.h.b16 %v786
        %v1920 = vunpack.c.l.b16 %v787
        %v1921 = vunpack.c.h.b16 %v787
        %v1922 = vunpack.c.l.b16 %v788
        %v1923 = vunpack.c.h.b16 %v788
        %v1924 = vunpack.c.l.b16 %v789
        %v1925 = vunpack.c.h.b16 %v789
        %v1926 = vunpack.c.l.b16 %v790
        %v1927 = vunpack.c.h.b16 %v790
        %v1928 = vunpack.c.l.b16 %v791
        %v1929 = vunpack.c.h.b16 %v791
        %v1930 = vunpack.c.l.b16 %v792
        %v1931 = vunpack.c.h.b16 %v792
        %v1932 = vunpack.c.l.b16 %v793
        %v1933 = vunpack.c.h.b16 %v793
        %v1934 = vunpack.c.l.b16 %v794
        %v1935 = vunpack.c.h.b16 %v794
        %v1936 = vunpack.c.l.b16 %v795
        %v1937 = vunpack.c.h.b16 %v795
        %v1938 = vunpack.c.l.b16 %v796
        %v1939 = vunpack.c.h.b16 %v796
        %v1940 = vunpack.c.l.b16 %v797
        %v1941 = vunpack.c.h.b16 %v797
        %v1942 = vunpack.c.l.b16 %v798
        %v1943 = vunpack.c.h.b16 %v798
        %v1944 = vunpack.c.l.b16 %v799
        %v1945 = vunpack.c.h.b16 %v799
        %v1946 = vunpack.c.l.b16 %v800
        %v1947 = vunpack.c.h.b16 %v800
        %v1948 = vunpack.c.l.b16 %v801
        %v1949 = vunpack.c.h.b16 %v801
        %v1950 = vunpack.c.l.b16 %v802
        %v1951 = vunpack.c.h.b16 %v802
        %v1952 = vunpack.c.l.b16 %v803
        %v1953 = vunpack.c.h.b16 %v803
        %v1954 = vunpack.c.l.b16 %v804
        %v1955 = vunpack.c.h.b16 %v804
        %v1956 = vunpack.c.l.b16 %v805
        %v1957 = vunpack.c.h.b16 %v805
        %v1958 = vunpack.c.l.b16 %v806
        %v1959 = vunpack.c.h.b16 %v806
        %v1960 = vunpack.c.l.b16 %v807
        %v1961 = vunpack.c.h.b16 %v807
        %v1962 = vunpack.c.l.b16 %v808
        %v1963 = vunpack.c.h.b16 %v808
        %v1964 = vunpack.c.l.b16 %v809
        %v1965 = vunpack.c.h.b16 %v809
        %v1966 = vunpack.c.l.b16 %v810
        %v1967 = vunpack.c.h.b16 %v810
        %v1968 = vunpack.c.l.b16 %v811
        %v1969 = vunpack.c.h.b16 %v811
        %v1970 = vunpack.c.l.b16 %v812
        %v1971 = vunpack.c.h.b16 %v812
        %v1972 = vunpack.c.l.b16 %v813
        %v1973 = vunpack.c.h.b16 %v813
        %v1974 = vunpack.c.l.b16 %v814
        %v1975 = vunpack.c.h.b16 %v814
        %v1976 = vunpack.c.l.b16 %v815
        %v1977 = vunpack.c.h.b16 %v815
        %v1978 = vunpack.c.l.b16 %v816
        %v1979 = vunpack.c.h.b16 %v816
        %v1980 = vunpack.c.l.b16 %v817
        %v1981 = vunpack.c.h.b16 %v817
        %v1982 = vunpack.c.l.b16 %v818
        %v1983 = vunpack.c.h.b16 %v818
        %v1984 = vunpack.c.l.b16 %v819
        %v1985 = vunpack.c.h.b16 %v819
        %v1986 = vunpack.c.l.b16 %v820
        %v1987 = vunpack.c.h.b16 %v820
        %v1988 = vunpack.c.l.b16 %v821
        %v1989 = vunpack.c.h.b16 %v821
        %v1990 = vunpack.c.l.b16 %v822
        %v1991 = vunpack.c.h.b16 %v822
        %v1992 = vunpack.c.l.b16 %v823
        %v1993 = vunpack.c.h.b16 %v823
        %v1994 = vunpack.c.l.b16 %v824
        %v1995 = vunpack.c.h.b16 %v824
        %v1996 = vunpack.c.l.b16 %v825
        %v1997 = vunpack.c.h.b16 %v825
        %v1998 = vunpack.c.l.b16 %v826
        %v1999 = vunpack.c.h.b16 %v826
        %v2000 = vunpack.c.l.b16 %v827
        %v2001 = vunpack.c.h.b16 %v827
        %v2002 = vunpack.c.l.b16 %v828
        %v2003 = vunpack.c.h.b16 %v828
        %v2004 = vunpack.c.l.b16 %v829
        %v2005 = vunpack.c.h.b16 %v829
        %v2006 = vunpack.c.l.b16 %v830
        %v2007 = vunpack.c.h.b16 %v830
        %v2008 = vunpack.c.l.b16 %v831
        %v2009 = vunpack.c.h.b16 %v831
        %v2010 = vunpack.c.l.b16 %v832
        %v2011 = vunpack.c.h.b16 %v832
        %v2012 = vunpack.c.l.b16 %v833
        %v2013 = vunpack.c.h.b16 %v833
        %v2014 = vunpack.c.l.b16 %v834
        %v2015 = vunpack.c.h.b16 %v834
        %v2016 = vunpack.c.l.b16 %v835
        %v2017 = vunpack.c.h.b16 %v835
        %v2018 = vunpack.c.l.b16 %v836
        %v2019 = vunpack.c.h.b16 %v836
        %v2020 = vunpack.c.l.b16 %v837
        %v2021 = vunpack.c.h.b16 %v837
        %v2022 = vunpack.c.l.b16 %v838
        %v2023 = vunpack.c.h.b16 %v838
        %v2024 = vunpack.c.l.b16 %v839
        %v2025 = vunpack.c.h.b16 %v839
        %v2026 = vunpack.c.l.b16 %v840
        %v2027 = vunpack.c.h.b16 %v840
        %v2028 = vunpack.c.l.b16 %v841
        %v2029 = vunpack.c.h.b16 %v841
        %v2030 = vunpack.c.l.b16 %v842
        %v2031 = vunpack.c.h.b16 %v842
        %v2032 = vunpack.c.l.b16 %v843
        %v2033 = vunpack.c.h.b16 %v843
        %v2034 = vunpack.c.l.b16 %v844
        %v2035 = vunpack.c.h.b16 %v844
        %v2036 = vunpack.c.l.b16 %v845
        %v2037 = vunpack.c.h.b16 %v845
        %v2038 = vunpack.c.l.b16 %v846
        %v2039 = vunpack.c.h.b16 %v846
        %v2040 = vunpack.c.l.b16 %v847
        %v2041 = vunpack.c.h.b16 %v847
        %v2042 = vunpack.c.l.b16 %v848
        %v2043 = vunpack.c.h.b16 %v848
        %v2044 = vunpack.c.l.b16 %v849
        %v2045 = vunpack.c.h.b16 %v849
        %v2046 = vunpack.c.l.b16 %v850
        %v2047 = vunpack.c.h.b16 %v850
        %v2048 = vunpack.c.l.b16 %v851
        %v2049 = vunpack.c.h.b16 %v851
        %v2050 = vunpack.c.l.b16 %v852
        %v2051 = vunpack.c.h.b16 %v852
        %v2052 = vunpack.c.l.b16 %v853
        %v2053 = vunpack.c.h.b16 %v853
        %v2054 = vunpack.c.l.b16 %v854
        %v2055 = vunpack.c.h.b16 %v854
        %v2056 = vunpack.c.l.b16 %v855
        %v2057 = vunpack.c.h.b16 %v855
        %v2058 = vunpack.c.l.b16 %v856
        %v2059 = vunpack.c.h.b16 %v856
        %v2060 = vunpack.c.l.b16 %v857
        %v2061 = vunpack.c.h.b16 %v857
        %v2062 = vpack.c.b16 %v1872, %v1870
        %v2063 = vpack.c.b16 %v1873, %v1871
        %v2064 = vpack.c.b16 %v1876, %v1874
        %v2065 = vpack.c.b16 %v1877, %v1875
        %v2066 = vpack.c.b16 %v1880, %v1878
        %v2067 = vpack.c.b16 %v1881, %v1879
        %v2068 = vpack.c.b16 %v1884, %v1882
        %v2069 = vpack.c.b16 %v1885, %v1883
        %v2070 = vpack.c.b16 %v1888, %v1886
        %v2071 = vpack.c.b16 %v1889, %v1887
        %v2072 = vpack.c.b16 %v1892, %v1890
        %v2073 = vpack.c.b16 %v1893, %v1891
        %v2074 = vpack.c.b16 %v1896, %v1894
        %v2075 = vpack.c.b16 %v1897, %v1895
        %v2076 = vpack.c.b16 %v1900, %v1898
        %v2077 = vpack.c.b16 %v1901, %v1899
        %v2078 = vpack.c.b16 %v1904, %v1902
        %v2079 = vpack.c.b16 %v1905, %v1903
        %v2080 = vpack.c.b16 %v1908, %v1906
        %v2081 = vpack.c.b16 %v1909, %v1907
        %v2082 = vpack.c.b16 %v1912, %v1910
        %v2083 = vpack.c.b16 %v1913, %v1911
        %v2084 = vpack.c.b16 %v1916, %v1914
        %v2085 = vpack.c.b16 %v1917, %v1915
        %v2086 = vpack.c.b16 %v1920, %v1918
        %v2087 = vpack.c.b16 %v1921, %v1919
        %v2088 = vpack.c.b16 %v1924, %v1922
        %v2089 = vpack.c.b16 %v1925, %v1923
        %v2090 = vpack.c.b16 %v1928, %v1926
        %v2091 = vpack.c.b16 %v1929, %v1927
        %v2092 = vpack.c.b16 %v1932, %v1930
        %v2093 = vpack.c.b16 %v1933, %v1931
        %v2094 = vpack.c.b16 %v1936, %v1934
        %v2095 = vpack.c.b16 %v1937, %v1935
        %v2096 = vpack.c.b16 %v1940, %v1938
        %v2097 = vpack.c.b16 %v1941, %v1939
        %v2098 = vpack.c.b16 %v1944, %v1942
        %v2099 = vpack.c.b16 %v1945, %v1943
        %v2100 = vpack.c.b16 %v1948, %v1946
        %v2101 = vpack.c.b16 %v1949, %v1947
        %v2102 = vpack.c.b16 %v1952, %v1950
        %v2103 = vpack.c.b16 %v1953, %v1951
        %v2104 = vpack.c.b16 %v1956, %v1954
        %v2105 = vpack.c.b16 %v1957, %v1955
        %v2106 = vpack.c.b16 %v1960, %v1958
        %v2107 = vpack.c.b16 %v1961, %v1959
        %v2108 = vpack.c.b16 %v1964, %v1962
        %v2109 = vpack.c.b16 %v1965, %v1963
        %v2110 = vpack.c.b16 %v1968, %v1966
        %v2111 = vpack.c.b16 %v1969, %v1967
        %v2112 = vpack.c.b16 %v1972, %v1970
        %v2113 = vpack.c.b16 %v1973, %v1971
        %v2114 = vpack.c.b16 %v1976, %v1974
        %v2115 = vpack.c.b16 %v1977, %v1975
        %v2116 = vpack.c.b16 %v1980, %v1978
        %v2117 = vpack.c.b16 %v1981, %v1979
        %v2118 = vpack.c.b16 %v1984, %v1982
        %v2119 = vpack.c.b16 %v1985, %v1983
        %v2120 = vpack.c.b16 %v1988, %v1986
        %v2121 = vpack.c.b16 %v1989, %v1987
        %v2122 = vpack.c.b16 %v1992, %v1990
        %v2123 = vpack.c.b16 %v1993, %v1991
        %v2124 = vpack.c.b16 %v1996, %v1994
        %v2125 = vpack.c.b16 %v1997, %v1995
        %v2126 = vpack.c.b16 %v2000, %v1998
        %v2127 = vpack.c.b16 %v2001, %v1999
        %v2128 = vpack.c.b16 %v2004, %v2002
        %v2129 = vpack.c.b16 %v2005, %v2003
        %v2130 = vpack.c.b16 %v2008, %v2006
        %v2131 = vpack.c.b16 %v2009, %v2007
        %v2132 = vpack.c.b16 %v2012, %v2010
        %v2133 = vpack.c.b16 %v2013, %v2011
        %v2134 = vpack.c.b16 %v2016, %v2014
        %v2135 = vpack.c.b16 %v2017, %v2015
        %v2136 = vpack.c.b16 %v2020, %v2018
        %v2137 = vpack.c.b16 %v2021, %v2019
        %v2138 = vpack.c.b16 %v2024, %v2022
        %v2139 = vpack.c.b16 %v2025, %v2023
        %v2140 = vpack.c.b16 %v2028, %v2026
        %v2141 = vpack.c.b16 %v2029, %v2027
        %v2142 = vpack.c.b16 %v2032, %v2030
        %v2143 = vpack.c.b16 %v2033, %v2031
        %v2144 = vpack.c.b16 %v2036, %v2034
        %v2145 = vpack.c.b16 %v2037, %v2035
        %v2146 = vpack.c.b16 %v2040, %v2038
        %v2147 = vpack.c.b16 %v2041, %v2039
        %v2148 = vpack.c.b16 %v2044, %v2042
        %v2149 = vpack.c.b16 %v2045, %v2043
        %v2150 = vpack.c.b16 %v2048, %v2046
        %v2151 = vpack.c.b16 %v2049, %v2047
        %v2152 = vpack.c.b16 %v2052, %v2050
        %v2153 = vpack.c.b16 %v2053, %v2051
        %v2154 = vpack.c.b16 %v2056, %v2054
        %v2155 = vpack.c.b16 %v2057, %v2055
        %v2156 = vpack.c.b16 %v2060, %v2058
        %v2157 = vpack.c.b16 %v2061, %v2059
        %2254 = vmatprep.subr.bf16.mxu0 %v2077
        %2255 = vmatpush1.bf16.msra.mxu0 %v2076
        %2256 = vmatprep.subr.bf16.mxu0 %v2075
        %2257 = vmatpush1.bf16.msra.mxu0 %v2074
        %2258 = vmatprep.subr.bf16.mxu0 %v2073
        %2259 = vmatpush1.bf16.msra.mxu0 %v2072
        %2260 = vmatprep.subr.bf16.mxu0 %v2071
        %2261 = vmatpush1.bf16.msra.mxu0 %v2070
        %2262 = vmatprep.subr.bf16.mxu0 %v2069
        %2263 = vmatpush1.bf16.msra.mxu0 %v2068
        %2264 = vmatprep.subr.bf16.mxu0 %v2067
        %2265 = vmatpush1.bf16.msra.mxu0 %v2066
        %2266 = vmatprep.subr.bf16.mxu0 %v2065
        %2267 = vmatpush1.bf16.msra.mxu0 %v2064
        %2268 = vmatprep.subr.bf16.mxu0 %v2063
        %2269 = vmatpush1.bf16.msra.mxu0 %v2062
        %2270 = vmatprep.subr.bf16.mxu0 %v2093
        %2271 = vmatpush2.bf16.msra.mxu0 %v2092
        %2272 = vmatprep.subr.bf16.mxu0 %v2091
        %2273 = vmatpush2.bf16.msra.mxu0 %v2090
        %2274 = vmatprep.subr.bf16.mxu0 %v2089
        %2275 = vmatpush2.bf16.msra.mxu0 %v2088
        %2276 = vmatprep.subr.bf16.mxu0 %v2087
        %2277 = vmatpush2.bf16.msra.mxu0 %v2086
        %2278 = vmatprep.subr.bf16.mxu0 %v2085
        %2279 = vmatpush2.bf16.msra.mxu0 %v2084
        %2280 = vmatprep.subr.bf16.mxu0 %v2083
        %2281 = vmatpush2.bf16.msra.mxu0 %v2082
        %2282 = vmatprep.subr.bf16.mxu0 %v2081
        %2283 = vmatpush2.bf16.msra.mxu0 %v2080
        %2284 = vmatprep.subr.bf16.mxu0 %v2079
        %2285 = vmatpush2.bf16.msra.mxu0 %v2078
        %2286 = vmatprep.mubr.bf16.mxu0 %v662
        %2287 = vmatmul.mubr.bf16.gmra.mxu0 %v662
        %v2288 = vpop.f32.mrf.mxu0
        %v2289 = vadd.f32 %v1696, %v2288
        %v2290 = vpop.f32.mrf.mxu0
        %v2291 = vadd.f32 %v1698, %v2290
        %v2292 = vpop.f32.mrf.mxu0
        %v2293 = vadd.f32 %v1700, %v2292
        %v2294 = vpop.f32.mrf.mxu0
        %v2295 = vadd.f32 %v1702, %v2294
        %2296 = vmatprep.mubr.bf16.mxu0 %v666
        %2297 = vmatmul.mubr.bf16.gmra.mxu0 %v665
        %v2298 = vpop.f32.mrf.mxu0
        %v2299 = vadd.f32 %v1706, %v2298
        %v2300 = vpop.f32.mrf.mxu0
        %v2301 = vadd.f32 %v1708, %v2300
        %v2302 = vpop.f32.mrf.mxu0
        %v2303 = vadd.f32 %v1710, %v2302
        %v2304 = vpop.f32.mrf.mxu0
        %v2305 = vadd.f32 %v1712, %v2304
        %2306 = vmatprep.mubr.bf16.mxu0 %v672
        %2307 = vmatmul.mubr.bf16.gmra.mxu0 %v671
        %v2308 = vpop.f32.mrf.mxu0
        %v2309 = vadd.f32 %v1716, %v2308
        %v2310 = vpop.f32.mrf.mxu0
        %v2311 = vadd.f32 %v1718, %v2310
        %v2312 = vpop.f32.mrf.mxu0
        %v2313 = vadd.f32 %v1720, %v2312
        %v2314 = vpop.f32.mrf.mxu0
        %v2315 = vadd.f32 %v1722, %v2314
        %2316 = vmatprep.mubr.bf16.mxu0 %v678
        %2317 = vmatmul.mubr.bf16.gmra.mxu0 %v677
        %v2318 = vpop.f32.mrf.mxu0
        %v2319 = vadd.f32 %v1726, %v2318
        %v2320 = vpop.f32.mrf.mxu0
        %v2321 = vadd.f32 %v1728, %v2320
        %v2322 = vpop.f32.mrf.mxu0
        %v2323 = vadd.f32 %v1730, %v2322
        %v2324 = vpop.f32.mrf.mxu0
        %v2325 = vadd.f32 %v1732, %v2324
        %2326 = vmatprep.mubr.bf16.mxu0 %v684
        %2327 = vmatmul.mubr.bf16.gmra.mxu0 %v683
        %v2328 = vpop.f32.mrf.mxu0
        %v2329 = vadd.f32 %v1736, %v2328
        %v2330 = vpop.f32.mrf.mxu0
        %v2331 = vadd.f32 %v1738, %v2330
        %v2332 = vpop.f32.mrf.mxu0
        %v2333 = vadd.f32 %v1740, %v2332
        %v2334 = vpop.f32.mrf.mxu0
        %v2335 = vadd.f32 %v1742, %v2334
        %2336 = vmatprep.mubr.bf16.mxu0 %v690
        %2337 = vmatmul.mubr.bf16.gmra.mxu0 %v689
        %v2338 = vpop.f32.mrf.mxu0
        %v2339 = vadd.f32 %v1746, %v2338
        %v2340 = vpop.f32.mrf.mxu0
        %v2341 = vadd.f32 %v1748, %v2340
        %v2342 = vpop.f32.mrf.mxu0
        %v2343 = vadd.f32 %v1750, %v2342
        %v2344 = vpop.f32.mrf.mxu0
        %v2345 = vadd.f32 %v1752, %v2344
        %2346 = vmatprep.mubr.bf16.mxu0 %v696
        %2347 = vmatmul.mubr.bf16.gmra.mxu0 %v695
        %v2348 = vpop.f32.mrf.mxu0
        %v2349 = vadd.f32 %v1756, %v2348
        %v2350 = vpop.f32.mrf.mxu0
        %v2351 = vadd.f32 %v1758, %v2350
        %v2352 = vpop.f32.mrf.mxu0
        %v2353 = vadd.f32 %v1760, %v2352
        %v2354 = vpop.f32.mrf.mxu0
        %v2355 = vadd.f32 %v1762, %v2354
        %2356 = vmatprep.mubr.bf16.mxu0 %v702
        %2357 = vmatmul.mubr.bf16.gmra.mxu0 %v701
        %v2358 = vpop.f32.mrf.mxu0
        %v2359 = vadd.f32 %v1766, %v2358
        %v2360 = vpop.f32.mrf.mxu0
        %v2361 = vadd.f32 %v1768, %v2360
        %v2362 = vpop.f32.mrf.mxu0
        %v2363 = vadd.f32 %v1770, %v2362
        %v2364 = vpop.f32.mrf.mxu0
        %v2365 = vadd.f32 %v1772, %v2364
        %2366 = vdwg.mxu0
        %2367 = vmatprep.subr.bf16.mxu0 %v2109
        %2368 = vmatpush1.bf16.msra.mxu0 %v2108
        %2369 = vmatprep.subr.bf16.mxu0 %v2107
        %2370 = vmatpush1.bf16.msra.mxu0 %v2106
        %2371 = vmatprep.subr.bf16.mxu0 %v2105
        %2372 = vmatpush1.bf16.msra.mxu0 %v2104
        %2373 = vmatprep.subr.bf16.mxu0 %v2103
        %2374 = vmatpush1.bf16.msra.mxu0 %v2102
        %2375 = vmatprep.subr.bf16.mxu0 %v2101
        %2376 = vmatpush1.bf16.msra.mxu0 %v2100
        %2377 = vmatprep.subr.bf16.mxu0 %v2099
        %2378 = vmatpush1.bf16.msra.mxu0 %v2098
        %2379 = vmatprep.subr.bf16.mxu0 %v2097
        %2380 = vmatpush1.bf16.msra.mxu0 %v2096
        %2381 = vmatprep.subr.bf16.mxu0 %v2095
        %2382 = vmatpush1.bf16.msra.mxu0 %v2094
        %2383 = vmatprep.subr.bf16.mxu0 %v2125
        %2384 = vmatpush2.bf16.msra.mxu0 %v2124
        %2385 = vmatprep.subr.bf16.mxu0 %v2123
        %2386 = vmatpush2.bf16.msra.mxu0 %v2122
        %2387 = vmatprep.subr.bf16.mxu0 %v2121
        %2388 = vmatpush2.bf16.msra.mxu0 %v2120
        %2389 = vmatprep.subr.bf16.mxu0 %v2119
        %2390 = vmatpush2.bf16.msra.mxu0 %v2118
        %2391 = vmatprep.subr.bf16.mxu0 %v2117
        %2392 = vmatpush2.bf16.msra.mxu0 %v2116
        %2393 = vmatprep.subr.bf16.mxu0 %v2115
        %2394 = vmatpush2.bf16.msra.mxu0 %v2114
        %2395 = vmatprep.subr.bf16.mxu0 %v2113
        %2396 = vmatpush2.bf16.msra.mxu0 %v2112
        %2397 = vmatprep.subr.bf16.mxu0 %v2111
        %2398 = vmatpush2.bf16.msra.mxu0 %v2110
        %2399 = vmatprep.mubr.bf16.mxu0 %v663
        %2400 = vmatmul.mubr.bf16.gmra.mxu0 %v663
        %v2401 = vpop.f32.mrf.mxu0
        %v2402 = vadd.f32 %v2289, %v2401
        %v2403 = vpop.f32.mrf.mxu0
        %v2404 = vadd.f32 %v2291, %v2403
        %v2405 = vpop.f32.mrf.mxu0
        %v2406 = vadd.f32 %v2293, %v2405
        %v2407 = vpop.f32.mrf.mxu0
        %v2408 = vadd.f32 %v2295, %v2407
        %2409 = vmatprep.mubr.bf16.mxu0 %v668
        %2410 = vmatmul.mubr.bf16.gmra.mxu0 %v667
        %v2411 = vpop.f32.mrf.mxu0
        %v2412 = vadd.f32 %v2299, %v2411
        %v2413 = vpop.f32.mrf.mxu0
        %v2414 = vadd.f32 %v2301, %v2413
        %v2415 = vpop.f32.mrf.mxu0
        %v2416 = vadd.f32 %v2303, %v2415
        %v2417 = vpop.f32.mrf.mxu0
        %v2418 = vadd.f32 %v2305, %v2417
        %2419 = vmatprep.mubr.bf16.mxu0 %v674
        %2420 = vmatmul.mubr.bf16.gmra.mxu0 %v673
        %v2421 = vpop.f32.mrf.mxu0
        %v2422 = vadd.f32 %v2309, %v2421
        %v2423 = vpop.f32.mrf.mxu0
        %v2424 = vadd.f32 %v2311, %v2423
        %v2425 = vpop.f32.mrf.mxu0
        %v2426 = vadd.f32 %v2313, %v2425
        %v2427 = vpop.f32.mrf.mxu0
        %v2428 = vadd.f32 %v2315, %v2427
        %2429 = vmatprep.mubr.bf16.mxu0 %v680
        %2430 = vmatmul.mubr.bf16.gmra.mxu0 %v679
        %v2431 = vpop.f32.mrf.mxu0
        %v2432 = vadd.f32 %v2319, %v2431
        %v2433 = vpop.f32.mrf.mxu0
        %v2434 = vadd.f32 %v2321, %v2433
        %v2435 = vpop.f32.mrf.mxu0
        %v2436 = vadd.f32 %v2323, %v2435
        %v2437 = vpop.f32.mrf.mxu0
        %v2438 = vadd.f32 %v2325, %v2437
        %2439 = vmatprep.mubr.bf16.mxu0 %v686
        %2440 = vmatmul.mubr.bf16.gmra.mxu0 %v685
        %v2441 = vpop.f32.mrf.mxu0
        %v2442 = vadd.f32 %v2329, %v2441
        %v2443 = vpop.f32.mrf.mxu0
        %v2444 = vadd.f32 %v2331, %v2443
        %v2445 = vpop.f32.mrf.mxu0
        %v2446 = vadd.f32 %v2333, %v2445
        %v2447 = vpop.f32.mrf.mxu0
        %v2448 = vadd.f32 %v2335, %v2447
        %2449 = vmatprep.mubr.bf16.mxu0 %v692
        %2450 = vmatmul.mubr.bf16.gmra.mxu0 %v691
        %v2451 = vpop.f32.mrf.mxu0
        %v2452 = vadd.f32 %v2339, %v2451
        %v2453 = vpop.f32.mrf.mxu0
        %v2454 = vadd.f32 %v2341, %v2453
        %v2455 = vpop.f32.mrf.mxu0
        %v2456 = vadd.f32 %v2343, %v2455
        %v2457 = vpop.f32.mrf.mxu0
        %v2458 = vadd.f32 %v2345, %v2457
        %2459 = vmatprep.mubr.bf16.mxu0 %v698
        %2460 = vmatmul.mubr.bf16.gmra.mxu0 %v697
        %v2461 = vpop.f32.mrf.mxu0
        %v2462 = vadd.f32 %v2349, %v2461
        %v2463 = vpop.f32.mrf.mxu0
        %v2464 = vadd.f32 %v2351, %v2463
        %v2465 = vpop.f32.mrf.mxu0
        %v2466 = vadd.f32 %v2353, %v2465
        %v2467 = vpop.f32.mrf.mxu0
        %v2468 = vadd.f32 %v2355, %v2467
        %2469 = vmatprep.mubr.bf16.mxu0 %v704
        %2470 = vmatmul.mubr.bf16.gmra.mxu0 %v703
        %v2471 = vpop.f32.mrf.mxu0
        %v2472 = vadd.f32 %v2359, %v2471
        %v2473 = vpop.f32.mrf.mxu0
        %v2474 = vadd.f32 %v2361, %v2473
        %v2475 = vpop.f32.mrf.mxu0
        %v2476 = vadd.f32 %v2363, %v2475
        %v2477 = vpop.f32.mrf.mxu0
        %v2478 = vadd.f32 %v2365, %v2477
        %2479 = vdwg.mxu0
        %2480 = vmatprep.subr.bf16.mxu0 %v2141
        %2481 = vmatpush1.bf16.msra.mxu0 %v2140
        %2482 = vmatprep.subr.bf16.mxu0 %v2139
        %2483 = vmatpush1.bf16.msra.mxu0 %v2138
        %2484 = vmatprep.subr.bf16.mxu0 %v2137
        %2485 = vmatpush1.bf16.msra.mxu0 %v2136
        %2486 = vmatprep.subr.bf16.mxu0 %v2135
        %2487 = vmatpush1.bf16.msra.mxu0 %v2134
        %2488 = vmatprep.subr.bf16.mxu0 %v2133
        %2489 = vmatpush1.bf16.msra.mxu0 %v2132
        %2490 = vmatprep.subr.bf16.mxu0 %v2131
        %2491 = vmatpush1.bf16.msra.mxu0 %v2130
        %2492 = vmatprep.subr.bf16.mxu0 %v2129
        %2493 = vmatpush1.bf16.msra.mxu0 %v2128
        %2494 = vmatprep.subr.bf16.mxu0 %v2127
        %2495 = vmatpush1.bf16.msra.mxu0 %v2126
        %2496 = vmatprep.subr.bf16.mxu0 %v2157
        %2497 = vmatpush2.bf16.msra.mxu0 %v2156
        %2498 = vmatprep.subr.bf16.mxu0 %v2155
        %2499 = vmatpush2.bf16.msra.mxu0 %v2154
        %2500 = vmatprep.subr.bf16.mxu0 %v2153
        %2501 = vmatpush2.bf16.msra.mxu0 %v2152
        %2502 = vmatprep.subr.bf16.mxu0 %v2151
        %2503 = vmatpush2.bf16.msra.mxu0 %v2150
        %2504 = vmatprep.subr.bf16.mxu0 %v2149
        %2505 = vmatpush2.bf16.msra.mxu0 %v2148
        %2506 = vmatprep.subr.bf16.mxu0 %v2147
        %2507 = vmatpush2.bf16.msra.mxu0 %v2146
        %2508 = vmatprep.subr.bf16.mxu0 %v2145
        %2509 = vmatpush2.bf16.msra.mxu0 %v2144
        %2510 = vmatprep.subr.bf16.mxu0 %v2143
        %2511 = vmatpush2.bf16.msra.mxu0 %v2142
        %2512 = vmatprep.mubr.bf16.mxu0 %v664
        %2513 = vmatmul.mubr.bf16.gmra.mxu0 %v664
        %v2514 = vpop.f32.mrf.mxu0
        %v2515 = vadd.f32 %v2402, %v2514
        %v2516 = vpop.f32.mrf.mxu0
        %v2517 = vadd.f32 %v2404, %v2516
        %v2518 = vpop.f32.mrf.mxu0
        %v2519 = vadd.f32 %v2406, %v2518
        %v2520 = vpop.f32.mrf.mxu0
        %v2521 = vadd.f32 %v2408, %v2520
        %2522 = vmatprep.mubr.bf16.mxu0 %v670
        %2523 = vmatmul.mubr.bf16.gmra.mxu0 %v669
        %v2524 = vpop.f32.mrf.mxu0
        %v2525 = vadd.f32 %v2412, %v2524
        %v2526 = vpop.f32.mrf.mxu0
        %v2527 = vadd.f32 %v2414, %v2526
        %v2528 = vpop.f32.mrf.mxu0
        %v2529 = vadd.f32 %v2416, %v2528
        %v2530 = vpop.f32.mrf.mxu0
        %v2531 = vadd.f32 %v2418, %v2530
        %2532 = vmatprep.mubr.bf16.mxu0 %v676
        %2533 = vmatmul.mubr.bf16.gmra.mxu0 %v675
        %v2534 = vpop.f32.mrf.mxu0
        %v2535 = vadd.f32 %v2422, %v2534
        %v2536 = vpop.f32.mrf.mxu0
        %v2537 = vadd.f32 %v2424, %v2536
        %v2538 = vpop.f32.mrf.mxu0
        %v2539 = vadd.f32 %v2426, %v2538
        %v2540 = vpop.f32.mrf.mxu0
        %v2541 = vadd.f32 %v2428, %v2540
        %2542 = vmatprep.mubr.bf16.mxu0 %v682
        %2543 = vmatmul.mubr.bf16.gmra.mxu0 %v681
        %v2544 = vpop.f32.mrf.mxu0
        %v2545 = vadd.f32 %v2432, %v2544
        %v2546 = vpop.f32.mrf.mxu0
        %v2547 = vadd.f32 %v2434, %v2546
        %v2548 = vpop.f32.mrf.mxu0
        %v2549 = vadd.f32 %v2436, %v2548
        %v2550 = vpop.f32.mrf.mxu0
        %v2551 = vadd.f32 %v2438, %v2550
        %2552 = vmatprep.mubr.bf16.mxu0 %v688
        %2553 = vmatmul.mubr.bf16.gmra.mxu0 %v687
        %v2554 = vpop.f32.mrf.mxu0
        %v2555 = vadd.f32 %v2442, %v2554
        %v2556 = vpop.f32.mrf.mxu0
        %v2557 = vadd.f32 %v2444, %v2556
        %v2558 = vpop.f32.mrf.mxu0
        %v2559 = vadd.f32 %v2446, %v2558
        %v2560 = vpop.f32.mrf.mxu0
        %v2561 = vadd.f32 %v2448, %v2560
        %2562 = vmatprep.mubr.bf16.mxu0 %v694
        %2563 = vmatmul.mubr.bf16.gmra.mxu0 %v693
        %v2564 = vpop.f32.mrf.mxu0
        %v2565 = vadd.f32 %v2452, %v2564
        %v2566 = vpop.f32.mrf.mxu0
        %v2567 = vadd.f32 %v2454, %v2566
        %v2568 = vpop.f32.mrf.mxu0
        %v2569 = vadd.f32 %v2456, %v2568
        %v2570 = vpop.f32.mrf.mxu0
        %v2571 = vadd.f32 %v2458, %v2570
        %2572 = vmatprep.mubr.bf16.mxu0 %v700
        %2573 = vmatmul.mubr.bf16.gmra.mxu0 %v699
        %v2574 = vpop.f32.mrf.mxu0
        %v2575 = vadd.f32 %v2462, %v2574
        %v2576 = vpop.f32.mrf.mxu0
        %v2577 = vadd.f32 %v2464, %v2576
        %v2578 = vpop.f32.mrf.mxu0
        %v2579 = vadd.f32 %v2466, %v2578
        %v2580 = vpop.f32.mrf.mxu0
        %v2581 = vadd.f32 %v2468, %v2580
        %2582 = vmatprep.mubr.bf16.mxu0 %v706
        %2583 = vmatmul.mubr.bf16.gmra.mxu0 %v705
        %v2584 = vpop.f32.mrf.mxu0
        %v2585 = vadd.f32 %v2472, %v2584
        %v2586 = vpop.f32.mrf.mxu0
        %v2587 = vadd.f32 %v2474, %v2586
        %v2588 = vpop.f32.mrf.mxu0
        %v2589 = vadd.f32 %v2476, %v2588
        %v2590 = vpop.f32.mrf.mxu0
        %v2591 = vadd.f32 %v2478, %v2590
        %2592 = vdwg.mxu0
        %s2593 = scalar_lea.vmem %s1, 1536
        %v2594 = vld [vmem:[%s2593] sm:$0xff]
        %v2595 = vld [vmem:[%s2593 + $0x8] sm:$0xff]
        %v2596 = vld [vmem:[%s2593 + $0x10] sm:$0xff]
        %v2597 = vld [vmem:[%s2593 + $0x18] sm:$0xff]
        %v2598 = vld [vmem:[%s2593 + $0x20] sm:$0xff]
        %v2599 = vld [vmem:[%s2593 + $0x28] sm:$0xff]
        %v2600 = vld [vmem:[%s2593 + $0x30] sm:$0xff]
        %v2601 = vld [vmem:[%s2593 + $0x38] sm:$0xff]
        %v2602 = vld [vmem:[%s2593 + $0x40] sm:$0xff]
        %v2603 = vld [vmem:[%s2593 + $0x48] sm:$0xff]
        %v2604 = vld [vmem:[%s2593 + $0x50] sm:$0xff]
        %v2605 = vld [vmem:[%s2593 + $0x58] sm:$0xff]
        %v2606 = vld [vmem:[%s2593 + $0x60] sm:$0xff]
        %v2607 = vld [vmem:[%s2593 + $0x68] sm:$0xff]
        %v2608 = vld [vmem:[%s2593 + $0x70] sm:$0xff]
        %v2609 = vld [vmem:[%s2593 + $0x78] sm:$0xff]
        %v2610 = vld [vmem:[%s2593 + $0x80] sm:$0xff]
        %v2611 = vld [vmem:[%s2593 + $0x88] sm:$0xff]
        %v2612 = vld [vmem:[%s2593 + $0x90] sm:$0xff]
        %v2613 = vld [vmem:[%s2593 + $0x98] sm:$0xff]
        %v2614 = vld [vmem:[%s2593 + $0xa0] sm:$0xff]
        %v2615 = vld [vmem:[%s2593 + $0xa8] sm:$0xff]
        %v2616 = vld [vmem:[%s2593 + $0xb0] sm:$0xff]
        %v2617 = vld [vmem:[%s2593 + $0xb8] sm:$0xff]
        %v2618 = vld [vmem:[%s2593 + $0xc0] sm:$0xff]
        %v2619 = vld [vmem:[%s2593 + $0xc8] sm:$0xff]
        %v2620 = vld [vmem:[%s2593 + $0xd0] sm:$0xff]
        %v2621 = vld [vmem:[%s2593 + $0xd8] sm:$0xff]
        %v2622 = vld [vmem:[%s2593 + $0xe0] sm:$0xff]
        %v2623 = vld [vmem:[%s2593 + $0xe8] sm:$0xff]
        %v2624 = vld [vmem:[%s2593 + $0xf0] sm:$0xff]
        %v2625 = vld [vmem:[%s2593 + $0xf8] sm:$0xff]
        %v2626 = vld [vmem:[%s2593 + $0x100] sm:$0xff]
        %v2627 = vld [vmem:[%s2593 + $0x108] sm:$0xff]
        %v2628 = vld [vmem:[%s2593 + $0x110] sm:$0xff]
        %v2629 = vld [vmem:[%s2593 + $0x118] sm:$0xff]
        %v2630 = vld [vmem:[%s2593 + $0x120] sm:$0xff]
        %v2631 = vld [vmem:[%s2593 + $0x128] sm:$0xff]
        %v2632 = vld [vmem:[%s2593 + $0x130] sm:$0xff]
        %v2633 = vld [vmem:[%s2593 + $0x138] sm:$0xff]
        %v2634 = vld [vmem:[%s2593 + $0x140] sm:$0xff]
        %v2635 = vld [vmem:[%s2593 + $0x148] sm:$0xff]
        %v2636 = vld [vmem:[%s2593 + $0x150] sm:$0xff]
        %v2637 = vld [vmem:[%s2593 + $0x158] sm:$0xff]
        %v2638 = vld [vmem:[%s2593 + $0x160] sm:$0xff]
        %v2639 = vld [vmem:[%s2593 + $0x168] sm:$0xff]
        %v2640 = vld [vmem:[%s2593 + $0x170] sm:$0xff]
        %v2641 = vld [vmem:[%s2593 + $0x178] sm:$0xff]
        %v2642 = vld [vmem:[%s2593 + $0x180] sm:$0xff]
        %v2643 = vld [vmem:[%s2593 + $0x188] sm:$0xff]
        %v2644 = vld [vmem:[%s2593 + $0x190] sm:$0xff]
        %v2645 = vld [vmem:[%s2593 + $0x198] sm:$0xff]
        %v2646 = vld [vmem:[%s2593 + $0x1a0] sm:$0xff]
        %v2647 = vld [vmem:[%s2593 + $0x1a8] sm:$0xff]
        %v2648 = vld [vmem:[%s2593 + $0x1b0] sm:$0xff]
        %v2649 = vld [vmem:[%s2593 + $0x1b8] sm:$0xff]
        %v2650 = vld [vmem:[%s2593 + $0x1c0] sm:$0xff]
        %v2651 = vld [vmem:[%s2593 + $0x1c8] sm:$0xff]
        %v2652 = vld [vmem:[%s2593 + $0x1d0] sm:$0xff]
        %v2653 = vld [vmem:[%s2593 + $0x1d8] sm:$0xff]
        %v2654 = vld [vmem:[%s2593 + $0x1e0] sm:$0xff]
        %v2655 = vld [vmem:[%s2593 + $0x1e8] sm:$0xff]
        %v2656 = vld [vmem:[%s2593 + $0x1f0] sm:$0xff]
        %v2657 = vld [vmem:[%s2593 + $0x1f8] sm:$0xff]
        %v2658 = vld [vmem:[%s2593 + $0x200] sm:$0xff]
        %v2659 = vld [vmem:[%s2593 + $0x208] sm:$0xff]
        %v2660 = vld [vmem:[%s2593 + $0x210] sm:$0xff]
        %v2661 = vld [vmem:[%s2593 + $0x218] sm:$0xff]
        %v2662 = vld [vmem:[%s2593 + $0x220] sm:$0xff]
        %v2663 = vld [vmem:[%s2593 + $0x228] sm:$0xff]
        %v2664 = vld [vmem:[%s2593 + $0x230] sm:$0xff]
        %v2665 = vld [vmem:[%s2593 + $0x238] sm:$0xff]
        %v2666 = vld [vmem:[%s2593 + $0x240] sm:$0xff]
        %v2667 = vld [vmem:[%s2593 + $0x248] sm:$0xff]
        %v2668 = vld [vmem:[%s2593 + $0x250] sm:$0xff]
        %v2669 = vld [vmem:[%s2593 + $0x258] sm:$0xff]
        %v2670 = vld [vmem:[%s2593 + $0x260] sm:$0xff]
        %v2671 = vld [vmem:[%s2593 + $0x268] sm:$0xff]
        %v2672 = vld [vmem:[%s2593 + $0x270] sm:$0xff]
        %v2673 = vld [vmem:[%s2593 + $0x278] sm:$0xff]
        %v2674 = vld [vmem:[%s2593 + $0x280] sm:$0xff]
        %v2675 = vld [vmem:[%s2593 + $0x288] sm:$0xff]
        %v2676 = vld [vmem:[%s2593 + $0x290] sm:$0xff]
        %v2677 = vld [vmem:[%s2593 + $0x298] sm:$0xff]
        %v2678 = vld [vmem:[%s2593 + $0x2a0] sm:$0xff]
        %v2679 = vld [vmem:[%s2593 + $0x2a8] sm:$0xff]
        %v2680 = vld [vmem:[%s2593 + $0x2b0] sm:$0xff]
        %v2681 = vld [vmem:[%s2593 + $0x2b8] sm:$0xff]
        %v2682 = vld [vmem:[%s2593 + $0x2c0] sm:$0xff]
        %v2683 = vld [vmem:[%s2593 + $0x2c8] sm:$0xff]
        %v2684 = vld [vmem:[%s2593 + $0x2d0] sm:$0xff]
        %v2685 = vld [vmem:[%s2593 + $0x2d8] sm:$0xff]
        %v2686 = vld [vmem:[%s2593 + $0x2e0] sm:$0xff]
        %v2687 = vld [vmem:[%s2593 + $0x2e8] sm:$0xff]
        %v2688 = vld [vmem:[%s2593 + $0x2f0] sm:$0xff]
        %v2689 = vld [vmem:[%s2593 + $0x2f8] sm:$0xff]
        %v2786 = vunpack.c.l.b16 %v2594
        %v2787 = vunpack.c.h.b16 %v2594
        %v2788 = vunpack.c.l.b16 %v2595
        %v2789 = vunpack.c.h.b16 %v2595
        %v2790 = vunpack.c.l.b16 %v2596
        %v2791 = vunpack.c.h.b16 %v2596
        %v2792 = vunpack.c.l.b16 %v2597
        %v2793 = vunpack.c.h.b16 %v2597
        %v2794 = vunpack.c.l.b16 %v2598
        %v2795 = vunpack.c.h.b16 %v2598
        %v2796 = vunpack.c.l.b16 %v2599
        %v2797 = vunpack.c.h.b16 %v2599
        %v2798 = vunpack.c.l.b16 %v2600
        %v2799 = vunpack.c.h.b16 %v2600
        %v2800 = vunpack.c.l.b16 %v2601
        %v2801 = vunpack.c.h.b16 %v2601
        %v2802 = vunpack.c.l.b16 %v2602
        %v2803 = vunpack.c.h.b16 %v2602
        %v2804 = vunpack.c.l.b16 %v2603
        %v2805 = vunpack.c.h.b16 %v2603
        %v2806 = vunpack.c.l.b16 %v2604
        %v2807 = vunpack.c.h.b16 %v2604
        %v2808 = vunpack.c.l.b16 %v2605
        %v2809 = vunpack.c.h.b16 %v2605
        %v2810 = vunpack.c.l.b16 %v2606
        %v2811 = vunpack.c.h.b16 %v2606
        %v2812 = vunpack.c.l.b16 %v2607
        %v2813 = vunpack.c.h.b16 %v2607
        %v2814 = vunpack.c.l.b16 %v2608
        %v2815 = vunpack.c.h.b16 %v2608
        %v2816 = vunpack.c.l.b16 %v2609
        %v2817 = vunpack.c.h.b16 %v2609
        %v2818 = vunpack.c.l.b16 %v2610
        %v2819 = vunpack.c.h.b16 %v2610
        %v2820 = vunpack.c.l.b16 %v2611
        %v2821 = vunpack.c.h.b16 %v2611
        %v2822 = vunpack.c.l.b16 %v2612
        %v2823 = vunpack.c.h.b16 %v2612
        %v2824 = vunpack.c.l.b16 %v2613
        %v2825 = vunpack.c.h.b16 %v2613
        %v2826 = vunpack.c.l.b16 %v2614
        %v2827 = vunpack.c.h.b16 %v2614
        %v2828 = vunpack.c.l.b16 %v2615
        %v2829 = vunpack.c.h.b16 %v2615
        %v2830 = vunpack.c.l.b16 %v2616
        %v2831 = vunpack.c.h.b16 %v2616
        %v2832 = vunpack.c.l.b16 %v2617
        %v2833 = vunpack.c.h.b16 %v2617
        %v2834 = vunpack.c.l.b16 %v2618
        %v2835 = vunpack.c.h.b16 %v2618
        %v2836 = vunpack.c.l.b16 %v2619
        %v2837 = vunpack.c.h.b16 %v2619
        %v2838 = vunpack.c.l.b16 %v2620
        %v2839 = vunpack.c.h.b16 %v2620
        %v2840 = vunpack.c.l.b16 %v2621
        %v2841 = vunpack.c.h.b16 %v2621
        %v2842 = vunpack.c.l.b16 %v2622
        %v2843 = vunpack.c.h.b16 %v2622
        %v2844 = vunpack.c.l.b16 %v2623
        %v2845 = vunpack.c.h.b16 %v2623
        %v2846 = vunpack.c.l.b16 %v2624
        %v2847 = vunpack.c.h.b16 %v2624
        %v2848 = vunpack.c.l.b16 %v2625
        %v2849 = vunpack.c.h.b16 %v2625
        %v2850 = vunpack.c.l.b16 %v2626
        %v2851 = vunpack.c.h.b16 %v2626
        %v2852 = vunpack.c.l.b16 %v2627
        %v2853 = vunpack.c.h.b16 %v2627
        %v2854 = vunpack.c.l.b16 %v2628
        %v2855 = vunpack.c.h.b16 %v2628
        %v2856 = vunpack.c.l.b16 %v2629
        %v2857 = vunpack.c.h.b16 %v2629
        %v2858 = vunpack.c.l.b16 %v2630
        %v2859 = vunpack.c.h.b16 %v2630
        %v2860 = vunpack.c.l.b16 %v2631
        %v2861 = vunpack.c.h.b16 %v2631
        %v2862 = vunpack.c.l.b16 %v2632
        %v2863 = vunpack.c.h.b16 %v2632
        %v2864 = vunpack.c.l.b16 %v2633
        %v2865 = vunpack.c.h.b16 %v2633
        %v2866 = vunpack.c.l.b16 %v2634
        %v2867 = vunpack.c.h.b16 %v2634
        %v2868 = vunpack.c.l.b16 %v2635
        %v2869 = vunpack.c.h.b16 %v2635
        %v2870 = vunpack.c.l.b16 %v2636
        %v2871 = vunpack.c.h.b16 %v2636
        %v2872 = vunpack.c.l.b16 %v2637
        %v2873 = vunpack.c.h.b16 %v2637
        %v2874 = vunpack.c.l.b16 %v2638
        %v2875 = vunpack.c.h.b16 %v2638
        %v2876 = vunpack.c.l.b16 %v2639
        %v2877 = vunpack.c.h.b16 %v2639
        %v2878 = vunpack.c.l.b16 %v2640
        %v2879 = vunpack.c.h.b16 %v2640
        %v2880 = vunpack.c.l.b16 %v2641
        %v2881 = vunpack.c.h.b16 %v2641
        %v2882 = vunpack.c.l.b16 %v2642
        %v2883 = vunpack.c.h.b16 %v2642
        %v2884 = vunpack.c.l.b16 %v2643
        %v2885 = vunpack.c.h.b16 %v2643
        %v2886 = vunpack.c.l.b16 %v2644
        %v2887 = vunpack.c.h.b16 %v2644
        %v2888 = vunpack.c.l.b16 %v2645
        %v2889 = vunpack.c.h.b16 %v2645
        %v2890 = vunpack.c.l.b16 %v2646
        %v2891 = vunpack.c.h.b16 %v2646
        %v2892 = vunpack.c.l.b16 %v2647
        %v2893 = vunpack.c.h.b16 %v2647
        %v2894 = vunpack.c.l.b16 %v2648
        %v2895 = vunpack.c.h.b16 %v2648
        %v2896 = vunpack.c.l.b16 %v2649
        %v2897 = vunpack.c.h.b16 %v2649
        %v2898 = vunpack.c.l.b16 %v2650
        %v2899 = vunpack.c.h.b16 %v2650
        %v2900 = vunpack.c.l.b16 %v2651
        %v2901 = vunpack.c.h.b16 %v2651
        %v2902 = vunpack.c.l.b16 %v2652
        %v2903 = vunpack.c.h.b16 %v2652
        %v2904 = vunpack.c.l.b16 %v2653
        %v2905 = vunpack.c.h.b16 %v2653
        %v2906 = vunpack.c.l.b16 %v2654
        %v2907 = vunpack.c.h.b16 %v2654
        %v2908 = vunpack.c.l.b16 %v2655
        %v2909 = vunpack.c.h.b16 %v2655
        %v2910 = vunpack.c.l.b16 %v2656
        %v2911 = vunpack.c.h.b16 %v2656
        %v2912 = vunpack.c.l.b16 %v2657
        %v2913 = vunpack.c.h.b16 %v2657
        %v2914 = vunpack.c.l.b16 %v2658
        %v2915 = vunpack.c.h.b16 %v2658
        %v2916 = vunpack.c.l.b16 %v2659
        %v2917 = vunpack.c.h.b16 %v2659
        %v2918 = vunpack.c.l.b16 %v2660
        %v2919 = vunpack.c.h.b16 %v2660
        %v2920 = vunpack.c.l.b16 %v2661
        %v2921 = vunpack.c.h.b16 %v2661
        %v2922 = vunpack.c.l.b16 %v2662
        %v2923 = vunpack.c.h.b16 %v2662
        %v2924 = vunpack.c.l.b16 %v2663
        %v2925 = vunpack.c.h.b16 %v2663
        %v2926 = vunpack.c.l.b16 %v2664
        %v2927 = vunpack.c.h.b16 %v2664
        %v2928 = vunpack.c.l.b16 %v2665
        %v2929 = vunpack.c.h.b16 %v2665
        %v2930 = vunpack.c.l.b16 %v2666
        %v2931 = vunpack.c.h.b16 %v2666
        %v2932 = vunpack.c.l.b16 %v2667
        %v2933 = vunpack.c.h.b16 %v2667
        %v2934 = vunpack.c.l.b16 %v2668
        %v2935 = vunpack.c.h.b16 %v2668
        %v2936 = vunpack.c.l.b16 %v2669
        %v2937 = vunpack.c.h.b16 %v2669
        %v2938 = vunpack.c.l.b16 %v2670
        %v2939 = vunpack.c.h.b16 %v2670
        %v2940 = vunpack.c.l.b16 %v2671
        %v2941 = vunpack.c.h.b16 %v2671
        %v2942 = vunpack.c.l.b16 %v2672
        %v2943 = vunpack.c.h.b16 %v2672
        %v2944 = vunpack.c.l.b16 %v2673
        %v2945 = vunpack.c.h.b16 %v2673
        %v2946 = vunpack.c.l.b16 %v2674
        %v2947 = vunpack.c.h.b16 %v2674
        %v2948 = vunpack.c.l.b16 %v2675
        %v2949 = vunpack.c.h.b16 %v2675
        %v2950 = vunpack.c.l.b16 %v2676
        %v2951 = vunpack.c.h.b16 %v2676
        %v2952 = vunpack.c.l.b16 %v2677
        %v2953 = vunpack.c.h.b16 %v2677
        %v2954 = vunpack.c.l.b16 %v2678
        %v2955 = vunpack.c.h.b16 %v2678
        %v2956 = vunpack.c.l.b16 %v2679
        %v2957 = vunpack.c.h.b16 %v2679
        %v2958 = vunpack.c.l.b16 %v2680
        %v2959 = vunpack.c.h.b16 %v2680
        %v2960 = vunpack.c.l.b16 %v2681
        %v2961 = vunpack.c.h.b16 %v2681
        %v2962 = vunpack.c.l.b16 %v2682
        %v2963 = vunpack.c.h.b16 %v2682
        %v2964 = vunpack.c.l.b16 %v2683
        %v2965 = vunpack.c.h.b16 %v2683
        %v2966 = vunpack.c.l.b16 %v2684
        %v2967 = vunpack.c.h.b16 %v2684
        %v2968 = vunpack.c.l.b16 %v2685
        %v2969 = vunpack.c.h.b16 %v2685
        %v2970 = vunpack.c.l.b16 %v2686
        %v2971 = vunpack.c.h.b16 %v2686
        %v2972 = vunpack.c.l.b16 %v2687
        %v2973 = vunpack.c.h.b16 %v2687
        %v2974 = vunpack.c.l.b16 %v2688
        %v2975 = vunpack.c.h.b16 %v2688
        %v2976 = vunpack.c.l.b16 %v2689
        %v2977 = vunpack.c.h.b16 %v2689
        %v2978 = vpack.c.b16 %v2788, %v2786
        %v2979 = vpack.c.b16 %v2789, %v2787
        %v2980 = vpack.c.b16 %v2792, %v2790
        %v2981 = vpack.c.b16 %v2793, %v2791
        %v2982 = vpack.c.b16 %v2796, %v2794
        %v2983 = vpack.c.b16 %v2797, %v2795
        %v2984 = vpack.c.b16 %v2800, %v2798
        %v2985 = vpack.c.b16 %v2801, %v2799
        %v2986 = vpack.c.b16 %v2804, %v2802
        %v2987 = vpack.c.b16 %v2805, %v2803
        %v2988 = vpack.c.b16 %v2808, %v2806
        %v2989 = vpack.c.b16 %v2809, %v2807
        %v2990 = vpack.c.b16 %v2812, %v2810
        %v2991 = vpack.c.b16 %v2813, %v2811
        %v2992 = vpack.c.b16 %v2816, %v2814
        %v2993 = vpack.c.b16 %v2817, %v2815
        %v2994 = vpack.c.b16 %v2820, %v2818
        %v2995 = vpack.c.b16 %v2821, %v2819
        %v2996 = vpack.c.b16 %v2824, %v2822
        %v2997 = vpack.c.b16 %v2825, %v2823
        %v2998 = vpack.c.b16 %v2828, %v2826
        %v2999 = vpack.c.b16 %v2829, %v2827
        %v3000 = vpack.c.b16 %v2832, %v2830
        %v3001 = vpack.c.b16 %v2833, %v2831
        %v3002 = vpack.c.b16 %v2836, %v2834
        %v3003 = vpack.c.b16 %v2837, %v2835
        %v3004 = vpack.c.b16 %v2840, %v2838
        %v3005 = vpack.c.b16 %v2841, %v2839
        %v3006 = vpack.c.b16 %v2844, %v2842
        %v3007 = vpack.c.b16 %v2845, %v2843
        %v3008 = vpack.c.b16 %v2848, %v2846
        %v3009 = vpack.c.b16 %v2849, %v2847
        %v3010 = vpack.c.b16 %v2852, %v2850
        %v3011 = vpack.c.b16 %v2853, %v2851
        %v3012 = vpack.c.b16 %v2856, %v2854
        %v3013 = vpack.c.b16 %v2857, %v2855
        %v3014 = vpack.c.b16 %v2860, %v2858
        %v3015 = vpack.c.b16 %v2861, %v2859
        %v3016 = vpack.c.b16 %v2864, %v2862
        %v3017 = vpack.c.b16 %v2865, %v2863
        %v3018 = vpack.c.b16 %v2868, %v2866
        %v3019 = vpack.c.b16 %v2869, %v2867
        %v3020 = vpack.c.b16 %v2872, %v2870
        %v3021 = vpack.c.b16 %v2873, %v2871
        %v3022 = vpack.c.b16 %v2876, %v2874
        %v3023 = vpack.c.b16 %v2877, %v2875
        %v3024 = vpack.c.b16 %v2880, %v2878
        %v3025 = vpack.c.b16 %v2881, %v2879
        %v3026 = vpack.c.b16 %v2884, %v2882
        %v3027 = vpack.c.b16 %v2885, %v2883
        %v3028 = vpack.c.b16 %v2888, %v2886
        %v3029 = vpack.c.b16 %v2889, %v2887
        %v3030 = vpack.c.b16 %v2892, %v2890
        %v3031 = vpack.c.b16 %v2893, %v2891
        %v3032 = vpack.c.b16 %v2896, %v2894
        %v3033 = vpack.c.b16 %v2897, %v2895
        %v3034 = vpack.c.b16 %v2900, %v2898
        %v3035 = vpack.c.b16 %v2901, %v2899
        %v3036 = vpack.c.b16 %v2904, %v2902
        %v3037 = vpack.c.b16 %v2905, %v2903
        %v3038 = vpack.c.b16 %v2908, %v2906
        %v3039 = vpack.c.b16 %v2909, %v2907
        %v3040 = vpack.c.b16 %v2912, %v2910
        %v3041 = vpack.c.b16 %v2913, %v2911
        %v3042 = vpack.c.b16 %v2916, %v2914
        %v3043 = vpack.c.b16 %v2917, %v2915
        %v3044 = vpack.c.b16 %v2920, %v2918
        %v3045 = vpack.c.b16 %v2921, %v2919
        %v3046 = vpack.c.b16 %v2924, %v2922
        %v3047 = vpack.c.b16 %v2925, %v2923
        %v3048 = vpack.c.b16 %v2928, %v2926
        %v3049 = vpack.c.b16 %v2929, %v2927
        %v3050 = vpack.c.b16 %v2932, %v2930
        %v3051 = vpack.c.b16 %v2933, %v2931
        %v3052 = vpack.c.b16 %v2936, %v2934
        %v3053 = vpack.c.b16 %v2937, %v2935
        %v3054 = vpack.c.b16 %v2940, %v2938
        %v3055 = vpack.c.b16 %v2941, %v2939
        %v3056 = vpack.c.b16 %v2944, %v2942
        %v3057 = vpack.c.b16 %v2945, %v2943
        %v3058 = vpack.c.b16 %v2948, %v2946
        %v3059 = vpack.c.b16 %v2949, %v2947
        %v3060 = vpack.c.b16 %v2952, %v2950
        %v3061 = vpack.c.b16 %v2953, %v2951
        %v3062 = vpack.c.b16 %v2956, %v2954
        %v3063 = vpack.c.b16 %v2957, %v2955
        %v3064 = vpack.c.b16 %v2960, %v2958
        %v3065 = vpack.c.b16 %v2961, %v2959
        %v3066 = vpack.c.b16 %v2964, %v2962
        %v3067 = vpack.c.b16 %v2965, %v2963
        %v3068 = vpack.c.b16 %v2968, %v2966
        %v3069 = vpack.c.b16 %v2969, %v2967
        %v3070 = vpack.c.b16 %v2972, %v2970
        %v3071 = vpack.c.b16 %v2973, %v2971
        %v3072 = vpack.c.b16 %v2976, %v2974
        %v3073 = vpack.c.b16 %v2977, %v2975
        %3170 = vmatprep.subr.bf16.mxu0 %v2993
        %3171 = vmatpush1.bf16.msra.mxu0 %v2992
        %3172 = vmatprep.subr.bf16.mxu0 %v2991
        %3173 = vmatpush1.bf16.msra.mxu0 %v2990
        %3174 = vmatprep.subr.bf16.mxu0 %v2989
        %3175 = vmatpush1.bf16.msra.mxu0 %v2988
        %3176 = vmatprep.subr.bf16.mxu0 %v2987
        %3177 = vmatpush1.bf16.msra.mxu0 %v2986
        %3178 = vmatprep.subr.bf16.mxu0 %v2985
        %3179 = vmatpush1.bf16.msra.mxu0 %v2984
        %3180 = vmatprep.subr.bf16.mxu0 %v2983
        %3181 = vmatpush1.bf16.msra.mxu0 %v2982
        %3182 = vmatprep.subr.bf16.mxu0 %v2981
        %3183 = vmatpush1.bf16.msra.mxu0 %v2980
        %3184 = vmatprep.subr.bf16.mxu0 %v2979
        %3185 = vmatpush1.bf16.msra.mxu0 %v2978
        %3186 = vmatprep.subr.bf16.mxu0 %v3009
        %3187 = vmatpush2.bf16.msra.mxu0 %v3008
        %3188 = vmatprep.subr.bf16.mxu0 %v3007
        %3189 = vmatpush2.bf16.msra.mxu0 %v3006
        %3190 = vmatprep.subr.bf16.mxu0 %v3005
        %3191 = vmatpush2.bf16.msra.mxu0 %v3004
        %3192 = vmatprep.subr.bf16.mxu0 %v3003
        %3193 = vmatpush2.bf16.msra.mxu0 %v3002
        %3194 = vmatprep.subr.bf16.mxu0 %v3001
        %3195 = vmatpush2.bf16.msra.mxu0 %v3000
        %3196 = vmatprep.subr.bf16.mxu0 %v2999
        %3197 = vmatpush2.bf16.msra.mxu0 %v2998
        %3198 = vmatprep.subr.bf16.mxu0 %v2997
        %3199 = vmatpush2.bf16.msra.mxu0 %v2996
        %3200 = vmatprep.subr.bf16.mxu0 %v2995
        %3201 = vmatpush2.bf16.msra.mxu0 %v2994
        %3202 = vmatprep.mubr.bf16.mxu0 %v672
        %3203 = vmatmul.mubr.bf16.gmra.mxu0 %v671
        %v3204 = vpop.f32.mrf.mxu0
        %v3205 = vadd.f32 0.0, %v3204
        %v3206 = vpop.f32.mrf.mxu0
        %v3207 = vadd.f32 0.0, %v3206
        %v3208 = vpop.f32.mrf.mxu0
        %v3209 = vadd.f32 0.0, %v3208
        %v3210 = vpop.f32.mrf.mxu0
        %v3211 = vadd.f32 0.0, %v3210
        %3212 = vmatprep.mubr.bf16.mxu0 %v678
        %3213 = vmatmul.mubr.bf16.gmra.mxu0 %v677
        %v3214 = vpop.f32.mrf.mxu0
        %v3215 = vadd.f32 0.0, %v3214
        %v3216 = vpop.f32.mrf.mxu0
        %v3217 = vadd.f32 0.0, %v3216
        %v3218 = vpop.f32.mrf.mxu0
        %v3219 = vadd.f32 0.0, %v3218
        %v3220 = vpop.f32.mrf.mxu0
        %v3221 = vadd.f32 0.0, %v3220
        %3222 = vmatprep.mubr.bf16.mxu0 %v684
        %3223 = vmatmul.mubr.bf16.gmra.mxu0 %v683
        %v3224 = vpop.f32.mrf.mxu0
        %v3225 = vadd.f32 0.0, %v3224
        %v3226 = vpop.f32.mrf.mxu0
        %v3227 = vadd.f32 0.0, %v3226
        %v3228 = vpop.f32.mrf.mxu0
        %v3229 = vadd.f32 0.0, %v3228
        %v3230 = vpop.f32.mrf.mxu0
        %v3231 = vadd.f32 0.0, %v3230
        %3232 = vmatprep.mubr.bf16.mxu0 %v690
        %3233 = vmatmul.mubr.bf16.gmra.mxu0 %v689
        %v3234 = vpop.f32.mrf.mxu0
        %v3235 = vadd.f32 0.0, %v3234
        %v3236 = vpop.f32.mrf.mxu0
        %v3237 = vadd.f32 0.0, %v3236
        %v3238 = vpop.f32.mrf.mxu0
        %v3239 = vadd.f32 0.0, %v3238
        %v3240 = vpop.f32.mrf.mxu0
        %v3241 = vadd.f32 0.0, %v3240
        %3242 = vmatprep.mubr.bf16.mxu0 %v696
        %3243 = vmatmul.mubr.bf16.gmra.mxu0 %v695
        %v3244 = vpop.f32.mrf.mxu0
        %v3245 = vadd.f32 0.0, %v3244
        %v3246 = vpop.f32.mrf.mxu0
        %v3247 = vadd.f32 0.0, %v3246
        %v3248 = vpop.f32.mrf.mxu0
        %v3249 = vadd.f32 0.0, %v3248
        %v3250 = vpop.f32.mrf.mxu0
        %v3251 = vadd.f32 0.0, %v3250
        %3252 = vmatprep.mubr.bf16.mxu0 %v702
        %3253 = vmatmul.mubr.bf16.gmra.mxu0 %v701
        %v3254 = vpop.f32.mrf.mxu0
        %v3255 = vadd.f32 0.0, %v3254
        %v3256 = vpop.f32.mrf.mxu0
        %v3257 = vadd.f32 0.0, %v3256
        %v3258 = vpop.f32.mrf.mxu0
        %v3259 = vadd.f32 0.0, %v3258
        %v3260 = vpop.f32.mrf.mxu0
        %v3261 = vadd.f32 0.0, %v3260
        %3262 = vmatprep.mubr.bf16.mxu0 %v708
        %3263 = vmatmul.mubr.bf16.gmra.mxu0 %v707
        %v3264 = vpop.f32.mrf.mxu0
        %v3265 = vadd.f32 0.0, %v3264
        %v3266 = vpop.f32.mrf.mxu0
        %v3267 = vadd.f32 0.0, %v3266
        %v3268 = vpop.f32.mrf.mxu0
        %v3269 = vadd.f32 0.0, %v3268
        %v3270 = vpop.f32.mrf.mxu0
        %v3271 = vadd.f32 0.0, %v3270
        %3272 = vmatprep.mubr.bf16.mxu0 %v714
        %3273 = vmatmul.mubr.bf16.gmra.mxu0 %v713
        %v3274 = vpop.f32.mrf.mxu0
        %v3275 = vadd.f32 0.0, %v3274
        %v3276 = vpop.f32.mrf.mxu0
        %v3277 = vadd.f32 0.0, %v3276
        %v3278 = vpop.f32.mrf.mxu0
        %v3279 = vadd.f32 0.0, %v3278
        %v3280 = vpop.f32.mrf.mxu0
        %v3281 = vadd.f32 0.0, %v3280
        %3282 = vdwg.mxu0
        %3283 = vmatprep.subr.bf16.mxu0 %v3025
        %3284 = vmatpush1.bf16.msra.mxu0 %v3024
        %3285 = vmatprep.subr.bf16.mxu0 %v3023
        %3286 = vmatpush1.bf16.msra.mxu0 %v3022
        %3287 = vmatprep.subr.bf16.mxu0 %v3021
        %3288 = vmatpush1.bf16.msra.mxu0 %v3020
        %3289 = vmatprep.subr.bf16.mxu0 %v3019
        %3290 = vmatpush1.bf16.msra.mxu0 %v3018
        %3291 = vmatprep.subr.bf16.mxu0 %v3017
        %3292 = vmatpush1.bf16.msra.mxu0 %v3016
        %3293 = vmatprep.subr.bf16.mxu0 %v3015
        %3294 = vmatpush1.bf16.msra.mxu0 %v3014
        %3295 = vmatprep.subr.bf16.mxu0 %v3013
        %3296 = vmatpush1.bf16.msra.mxu0 %v3012
        %3297 = vmatprep.subr.bf16.mxu0 %v3011
        %3298 = vmatpush1.bf16.msra.mxu0 %v3010
        %3299 = vmatprep.subr.bf16.mxu0 %v3041
        %3300 = vmatpush2.bf16.msra.mxu0 %v3040
        %3301 = vmatprep.subr.bf16.mxu0 %v3039
        %3302 = vmatpush2.bf16.msra.mxu0 %v3038
        %3303 = vmatprep.subr.bf16.mxu0 %v3037
        %3304 = vmatpush2.bf16.msra.mxu0 %v3036
        %3305 = vmatprep.subr.bf16.mxu0 %v3035
        %3306 = vmatpush2.bf16.msra.mxu0 %v3034
        %3307 = vmatprep.subr.bf16.mxu0 %v3033
        %3308 = vmatpush2.bf16.msra.mxu0 %v3032
        %3309 = vmatprep.subr.bf16.mxu0 %v3031
        %3310 = vmatpush2.bf16.msra.mxu0 %v3030
        %3311 = vmatprep.subr.bf16.mxu0 %v3029
        %3312 = vmatpush2.bf16.msra.mxu0 %v3028
        %3313 = vmatprep.subr.bf16.mxu0 %v3027
        %3314 = vmatpush2.bf16.msra.mxu0 %v3026
        %3315 = vmatprep.mubr.bf16.mxu0 %v674
        %3316 = vmatmul.mubr.bf16.gmra.mxu0 %v673
        %v3317 = vpop.f32.mrf.mxu0
        %v3318 = vadd.f32 %v3205, %v3317
        %v3319 = vpop.f32.mrf.mxu0
        %v3320 = vadd.f32 %v3207, %v3319
        %v3321 = vpop.f32.mrf.mxu0
        %v3322 = vadd.f32 %v3209, %v3321
        %v3323 = vpop.f32.mrf.mxu0
        %v3324 = vadd.f32 %v3211, %v3323
        %3325 = vmatprep.mubr.bf16.mxu0 %v680
        %3326 = vmatmul.mubr.bf16.gmra.mxu0 %v679
        %v3327 = vpop.f32.mrf.mxu0
        %v3328 = vadd.f32 %v3215, %v3327
        %v3329 = vpop.f32.mrf.mxu0
        %v3330 = vadd.f32 %v3217, %v3329
        %v3331 = vpop.f32.mrf.mxu0
        %v3332 = vadd.f32 %v3219, %v3331
        %v3333 = vpop.f32.mrf.mxu0
        %v3334 = vadd.f32 %v3221, %v3333
        %3335 = vmatprep.mubr.bf16.mxu0 %v686
        %3336 = vmatmul.mubr.bf16.gmra.mxu0 %v685
        %v3337 = vpop.f32.mrf.mxu0
        %v3338 = vadd.f32 %v3225, %v3337
        %v3339 = vpop.f32.mrf.mxu0
        %v3340 = vadd.f32 %v3227, %v3339
        %v3341 = vpop.f32.mrf.mxu0
        %v3342 = vadd.f32 %v3229, %v3341
        %v3343 = vpop.f32.mrf.mxu0
        %v3344 = vadd.f32 %v3231, %v3343
        %3345 = vmatprep.mubr.bf16.mxu0 %v692
        %3346 = vmatmul.mubr.bf16.gmra.mxu0 %v691
        %v3347 = vpop.f32.mrf.mxu0
        %v3348 = vadd.f32 %v3235, %v3347
        %v3349 = vpop.f32.mrf.mxu0
        %v3350 = vadd.f32 %v3237, %v3349
        %v3351 = vpop.f32.mrf.mxu0
        %v3352 = vadd.f32 %v3239, %v3351
        %v3353 = vpop.f32.mrf.mxu0
        %v3354 = vadd.f32 %v3241, %v3353
        %3355 = vmatprep.mubr.bf16.mxu0 %v698
        %3356 = vmatmul.mubr.bf16.gmra.mxu0 %v697
        %v3357 = vpop.f32.mrf.mxu0
        %v3358 = vadd.f32 %v3245, %v3357
        %v3359 = vpop.f32.mrf.mxu0
        %v3360 = vadd.f32 %v3247, %v3359
        %v3361 = vpop.f32.mrf.mxu0
        %v3362 = vadd.f32 %v3249, %v3361
        %v3363 = vpop.f32.mrf.mxu0
        %v3364 = vadd.f32 %v3251, %v3363
        %3365 = vmatprep.mubr.bf16.mxu0 %v704
        %3366 = vmatmul.mubr.bf16.gmra.mxu0 %v703
        %v3367 = vpop.f32.mrf.mxu0
        %v3368 = vadd.f32 %v3255, %v3367
        %v3369 = vpop.f32.mrf.mxu0
        %v3370 = vadd.f32 %v3257, %v3369
        %v3371 = vpop.f32.mrf.mxu0
        %v3372 = vadd.f32 %v3259, %v3371
        %v3373 = vpop.f32.mrf.mxu0
        %v3374 = vadd.f32 %v3261, %v3373
        %3375 = vmatprep.mubr.bf16.mxu0 %v710
        %3376 = vmatmul.mubr.bf16.gmra.mxu0 %v709
        %v3377 = vpop.f32.mrf.mxu0
        %v3378 = vadd.f32 %v3265, %v3377
        %v3379 = vpop.f32.mrf.mxu0
        %v3380 = vadd.f32 %v3267, %v3379
        %v3381 = vpop.f32.mrf.mxu0
        %v3382 = vadd.f32 %v3269, %v3381
        %v3383 = vpop.f32.mrf.mxu0
        %v3384 = vadd.f32 %v3271, %v3383
        %3385 = vmatprep.mubr.bf16.mxu0 %v716
        %3386 = vmatmul.mubr.bf16.gmra.mxu0 %v715
        %v3387 = vpop.f32.mrf.mxu0
        %v3388 = vadd.f32 %v3275, %v3387
        %v3389 = vpop.f32.mrf.mxu0
        %v3390 = vadd.f32 %v3277, %v3389
        %v3391 = vpop.f32.mrf.mxu0
        %v3392 = vadd.f32 %v3279, %v3391
        %v3393 = vpop.f32.mrf.mxu0
        %v3394 = vadd.f32 %v3281, %v3393
        %3395 = vdwg.mxu0
        %3396 = vmatprep.subr.bf16.mxu0 %v3057
        %3397 = vmatpush1.bf16.msra.mxu0 %v3056
        %3398 = vmatprep.subr.bf16.mxu0 %v3055
        %3399 = vmatpush1.bf16.msra.mxu0 %v3054
        %3400 = vmatprep.subr.bf16.mxu0 %v3053
        %3401 = vmatpush1.bf16.msra.mxu0 %v3052
        %3402 = vmatprep.subr.bf16.mxu0 %v3051
        %3403 = vmatpush1.bf16.msra.mxu0 %v3050
        %3404 = vmatprep.subr.bf16.mxu0 %v3049
        %3405 = vmatpush1.bf16.msra.mxu0 %v3048
        %3406 = vmatprep.subr.bf16.mxu0 %v3047
        %3407 = vmatpush1.bf16.msra.mxu0 %v3046
        %3408 = vmatprep.subr.bf16.mxu0 %v3045
        %3409 = vmatpush1.bf16.msra.mxu0 %v3044
        %3410 = vmatprep.subr.bf16.mxu0 %v3043
        %3411 = vmatpush1.bf16.msra.mxu0 %v3042
        %3412 = vmatprep.subr.bf16.mxu0 %v3073
        %3413 = vmatpush2.bf16.msra.mxu0 %v3072
        %3414 = vmatprep.subr.bf16.mxu0 %v3071
        %3415 = vmatpush2.bf16.msra.mxu0 %v3070
        %3416 = vmatprep.subr.bf16.mxu0 %v3069
        %3417 = vmatpush2.bf16.msra.mxu0 %v3068
        %3418 = vmatprep.subr.bf16.mxu0 %v3067
        %3419 = vmatpush2.bf16.msra.mxu0 %v3066
        %3420 = vmatprep.subr.bf16.mxu0 %v3065
        %3421 = vmatpush2.bf16.msra.mxu0 %v3064
        %3422 = vmatprep.subr.bf16.mxu0 %v3063
        %3423 = vmatpush2.bf16.msra.mxu0 %v3062
        %3424 = vmatprep.subr.bf16.mxu0 %v3061
        %3425 = vmatpush2.bf16.msra.mxu0 %v3060
        %3426 = vmatprep.subr.bf16.mxu0 %v3059
        %3427 = vmatpush2.bf16.msra.mxu0 %v3058
        %3428 = vmatprep.mubr.bf16.mxu0 %v676
        %3429 = vmatmul.mubr.bf16.gmra.mxu0 %v675
        %v3430 = vpop.f32.mrf.mxu0
        %v3431 = vadd.f32 %v3318, %v3430
        %v3432 = vpop.f32.mrf.mxu0
        %v3433 = vadd.f32 %v3320, %v3432
        %v3434 = vpop.f32.mrf.mxu0
        %v3435 = vadd.f32 %v3322, %v3434
        %v3436 = vpop.f32.mrf.mxu0
        %v3437 = vadd.f32 %v3324, %v3436
        %3438 = vmatprep.mubr.bf16.mxu0 %v682
        %3439 = vmatmul.mubr.bf16.gmra.mxu0 %v681
        %v3440 = vpop.f32.mrf.mxu0
        %v3441 = vadd.f32 %v3328, %v3440
        %v3442 = vpop.f32.mrf.mxu0
        %v3443 = vadd.f32 %v3330, %v3442
        %v3444 = vpop.f32.mrf.mxu0
        %v3445 = vadd.f32 %v3332, %v3444
        %v3446 = vpop.f32.mrf.mxu0
        %v3447 = vadd.f32 %v3334, %v3446
        %3448 = vmatprep.mubr.bf16.mxu0 %v688
        %3449 = vmatmul.mubr.bf16.gmra.mxu0 %v687
        %v3450 = vpop.f32.mrf.mxu0
        %v3451 = vadd.f32 %v3338, %v3450
        %v3452 = vpop.f32.mrf.mxu0
        %v3453 = vadd.f32 %v3340, %v3452
        %v3454 = vpop.f32.mrf.mxu0
        %v3455 = vadd.f32 %v3342, %v3454
        %v3456 = vpop.f32.mrf.mxu0
        %v3457 = vadd.f32 %v3344, %v3456
        %3458 = vmatprep.mubr.bf16.mxu0 %v694
        %3459 = vmatmul.mubr.bf16.gmra.mxu0 %v693
        %v3460 = vpop.f32.mrf.mxu0
        %v3461 = vadd.f32 %v3348, %v3460
        %v3462 = vpop.f32.mrf.mxu0
        %v3463 = vadd.f32 %v3350, %v3462
        %v3464 = vpop.f32.mrf.mxu0
        %v3465 = vadd.f32 %v3352, %v3464
        %v3466 = vpop.f32.mrf.mxu0
        %v3467 = vadd.f32 %v3354, %v3466
        %3468 = vmatprep.mubr.bf16.mxu0 %v700
        %3469 = vmatmul.mubr.bf16.gmra.mxu0 %v699
        %v3470 = vpop.f32.mrf.mxu0
        %v3471 = vadd.f32 %v3358, %v3470
        %v3472 = vpop.f32.mrf.mxu0
        %v3473 = vadd.f32 %v3360, %v3472
        %v3474 = vpop.f32.mrf.mxu0
        %v3475 = vadd.f32 %v3362, %v3474
        %v3476 = vpop.f32.mrf.mxu0
        %v3477 = vadd.f32 %v3364, %v3476
        %3478 = vmatprep.mubr.bf16.mxu0 %v706
        %3479 = vmatmul.mubr.bf16.gmra.mxu0 %v705
        %v3480 = vpop.f32.mrf.mxu0
        %v3481 = vadd.f32 %v3368, %v3480
        %v3482 = vpop.f32.mrf.mxu0
        %v3483 = vadd.f32 %v3370, %v3482
        %v3484 = vpop.f32.mrf.mxu0
        %v3485 = vadd.f32 %v3372, %v3484
        %v3486 = vpop.f32.mrf.mxu0
        %v3487 = vadd.f32 %v3374, %v3486
        %3488 = vmatprep.mubr.bf16.mxu0 %v712
        %3489 = vmatmul.mubr.bf16.gmra.mxu0 %v711
        %v3490 = vpop.f32.mrf.mxu0
        %v3491 = vadd.f32 %v3378, %v3490
        %v3492 = vpop.f32.mrf.mxu0
        %v3493 = vadd.f32 %v3380, %v3492
        %v3494 = vpop.f32.mrf.mxu0
        %v3495 = vadd.f32 %v3382, %v3494
        %v3496 = vpop.f32.mrf.mxu0
        %v3497 = vadd.f32 %v3384, %v3496
        %3498 = vmatprep.mubr.bf16.mxu0 %v718
        %3499 = vmatmul.mubr.bf16.gmra.mxu0 %v717
        %v3500 = vpop.f32.mrf.mxu0
        %v3501 = vadd.f32 %v3388, %v3500
        %v3502 = vpop.f32.mrf.mxu0
        %v3503 = vadd.f32 %v3390, %v3502
        %v3504 = vpop.f32.mrf.mxu0
        %v3505 = vadd.f32 %v3392, %v3504
        %v3506 = vpop.f32.mrf.mxu0
        %v3507 = vadd.f32 %v3394, %v3506
        %3508 = vdwg.mxu0
        %v3509 = vadd.f32 %v2515, %v3431
        %v3510 = vadd.f32 %v2517, %v3433
        %v3511 = vadd.f32 %v2519, %v3435
        %v3512 = vadd.f32 %v2521, %v3437
        %v3513 = vadd.f32 %v2525, %v3441
        %v3514 = vadd.f32 %v2527, %v3443
        %v3515 = vadd.f32 %v2529, %v3445
        %v3516 = vadd.f32 %v2531, %v3447
        %v3517 = vadd.f32 %v2535, %v3451
        %v3518 = vadd.f32 %v2537, %v3453
        %v3519 = vadd.f32 %v2539, %v3455
        %v3520 = vadd.f32 %v2541, %v3457
        %v3521 = vadd.f32 %v2545, %v3461
        %v3522 = vadd.f32 %v2547, %v3463
        %v3523 = vadd.f32 %v2549, %v3465
        %v3524 = vadd.f32 %v2551, %v3467
        %v3525 = vadd.f32 %v2555, %v3471
        %v3526 = vadd.f32 %v2557, %v3473
        %v3527 = vadd.f32 %v2559, %v3475
        %v3528 = vadd.f32 %v2561, %v3477
        %v3529 = vadd.f32 %v2565, %v3481
        %v3530 = vadd.f32 %v2567, %v3483
        %v3531 = vadd.f32 %v2569, %v3485
        %v3532 = vadd.f32 %v2571, %v3487
        %v3533 = vadd.f32 %v2575, %v3491
        %v3534 = vadd.f32 %v2577, %v3493
        %v3535 = vadd.f32 %v2579, %v3495
        %v3536 = vadd.f32 %v2581, %v3497
        %v3537 = vadd.f32 %v2585, %v3501
        %v3538 = vadd.f32 %v2587, %v3503
        %v3539 = vadd.f32 %v2589, %v3505
        %v3540 = vadd.f32 %v2591, %v3507
        %v3542 = vlaneseq
        %v3543 = vshrl.u32 %v3542, 7
        %v3544 = vsub.s32 0, %v3543
        %v3545 = vrot.slane %v761, %v3544
        %v3546 = vlaneseq
        %v3547 = vshrl.u32 %v3546, 7
        %v3548 = vsub.s32 1, %v3547
        %v3549 = vrot.slane %v761, %v3548
        %v3552 = vadd.f32 %v3509, %v3545
        %v3553 = vadd.f32 %v3510, %v3549
        %v3554 = vadd.f32 %v3511, %v3545
        %v3555 = vadd.f32 %v3512, %v3549
        %v3556 = vadd.f32 %v3513, %v3545
        %v3557 = vadd.f32 %v3514, %v3549
        %v3558 = vadd.f32 %v3515, %v3545
        %v3559 = vadd.f32 %v3516, %v3549
        %v3560 = vadd.f32 %v3517, %v3545
        %v3561 = vadd.f32 %v3518, %v3549
        %v3562 = vadd.f32 %v3519, %v3545
        %v3563 = vadd.f32 %v3520, %v3549
        %v3564 = vadd.f32 %v3521, %v3545
        %v3565 = vadd.f32 %v3522, %v3549
        %v3566 = vadd.f32 %v3523, %v3545
        %v3567 = vadd.f32 %v3524, %v3549
        %v3568 = vadd.f32 %v3525, %v3545
        %v3569 = vadd.f32 %v3526, %v3549
        %v3570 = vadd.f32 %v3527, %v3545
        %v3571 = vadd.f32 %v3528, %v3549
        %v3572 = vadd.f32 %v3529, %v3545
        %v3573 = vadd.f32 %v3530, %v3549
        %v3574 = vadd.f32 %v3531, %v3545
        %v3575 = vadd.f32 %v3532, %v3549
        %v3576 = vadd.f32 %v3533, %v3545
        %v3577 = vadd.f32 %v3534, %v3549
        %v3578 = vadd.f32 %v3535, %v3545
        %v3579 = vadd.f32 %v3536, %v3549
        %v3580 = vadd.f32 %v3537, %v3545
        %v3581 = vadd.f32 %v3538, %v3549
        %v3582 = vadd.f32 %v3539, %v3545
        %v3583 = vadd.f32 %v3540, %v3549
        %v3584 = vmax.f32 %v3552, 0.0
        %v3585 = vmax.f32 %v3553, 0.0
        %v3586 = vmax.f32 %v3554, 0.0
        %v3587 = vmax.f32 %v3555, 0.0
        %v3588 = vmax.f32 %v3556, 0.0
        %v3589 = vmax.f32 %v3557, 0.0
        %v3590 = vmax.f32 %v3558, 0.0
        %v3591 = vmax.f32 %v3559, 0.0
        %v3592 = vmax.f32 %v3560, 0.0
        %v3593 = vmax.f32 %v3561, 0.0
        %v3594 = vmax.f32 %v3562, 0.0
        %v3595 = vmax.f32 %v3563, 0.0
        %v3596 = vmax.f32 %v3564, 0.0
        %v3597 = vmax.f32 %v3565, 0.0
        %v3598 = vmax.f32 %v3566, 0.0
        %v3599 = vmax.f32 %v3567, 0.0
        %v3600 = vmax.f32 %v3568, 0.0
        %v3601 = vmax.f32 %v3569, 0.0
        %v3602 = vmax.f32 %v3570, 0.0
        %v3603 = vmax.f32 %v3571, 0.0
        %v3604 = vmax.f32 %v3572, 0.0
        %v3605 = vmax.f32 %v3573, 0.0
        %v3606 = vmax.f32 %v3574, 0.0
        %v3607 = vmax.f32 %v3575, 0.0
        %v3608 = vmax.f32 %v3576, 0.0
        %v3609 = vmax.f32 %v3577, 0.0
        %v3610 = vmax.f32 %v3578, 0.0
        %v3611 = vmax.f32 %v3579, 0.0
        %v3612 = vmax.f32 %v3580, 0.0
        %v3613 = vmax.f32 %v3581, 0.0
        %v3614 = vmax.f32 %v3582, 0.0
        %v3615 = vmax.f32 %v3583, 0.0
        %3616 = vst [vmem:[%s163] sm:$0xff] %v3584
        %3617 = vst [vmem:[%s163 + $0x8] sm:$0xff] %v3585
        %3618 = vst [vmem:[%s163 + $0x10] sm:$0xff] %v3586
        %3619 = vst [vmem:[%s163 + $0x18] sm:$0xff] %v3587
        %3620 = vst [vmem:[%s163 + $0x20] sm:$0xff] %v3588
        %3621 = vst [vmem:[%s163 + $0x28] sm:$0xff] %v3589
        %3622 = vst [vmem:[%s163 + $0x30] sm:$0xff] %v3590
        %3623 = vst [vmem:[%s163 + $0x38] sm:$0xff] %v3591
        %3624 = vst [vmem:[%s163 + $0x40] sm:$0xff] %v3592
        %3625 = vst [vmem:[%s163 + $0x48] sm:$0xff] %v3593
        %3626 = vst [vmem:[%s163 + $0x50] sm:$0xff] %v3594
        %3627 = vst [vmem:[%s163 + $0x58] sm:$0xff] %v3595
        %3628 = vst [vmem:[%s163 + $0x60] sm:$0xff] %v3596
        %3629 = vst [vmem:[%s163 + $0x68] sm:$0xff] %v3597
        %3630 = vst [vmem:[%s163 + $0x70] sm:$0xff] %v3598
        %3631 = vst [vmem:[%s163 + $0x78] sm:$0xff] %v3599
        %3632 = vst [vmem:[%s163 + $0x80] sm:$0xff] %v3600
        %3633 = vst [vmem:[%s163 + $0x88] sm:$0xff] %v3601
        %3634 = vst [vmem:[%s163 + $0x90] sm:$0xff] %v3602
        %3635 = vst [vmem:[%s163 + $0x98] sm:$0xff] %v3603
        %3636 = vst [vmem:[%s163 + $0xa0] sm:$0xff] %v3604
        %3637 = vst [vmem:[%s163 + $0xa8] sm:$0xff] %v3605
        %3638 = vst [vmem:[%s163 + $0xb0] sm:$0xff] %v3606
        %3639 = vst [vmem:[%s163 + $0xb8] sm:$0xff] %v3607
        %3640 = vst [vmem:[%s163 + $0xc0] sm:$0xff] %v3608
        %3641 = vst [vmem:[%s163 + $0xc8] sm:$0xff] %v3609
        %3642 = vst [vmem:[%s163 + $0xd0] sm:$0xff] %v3610
        %3643 = vst [vmem:[%s163 + $0xd8] sm:$0xff] %v3611
        %3644 = vst [vmem:[%s163 + $0xe0] sm:$0xff] %v3612
        %3645 = vst [vmem:[%s163 + $0xe8] sm:$0xff] %v3613
        %3646 = vst [vmem:[%s163 + $0xf0] sm:$0xff] %v3614
        %3647 = vst [vmem:[%s163 + $0xf8] sm:$0xff] %v3615
        %v3648 = vld [vmem:[%s1] sm:$0xff]
        %v3649 = vld [vmem:[%s1 + $0x8] sm:$0xff]
        %v3650 = vld [vmem:[%s1 + $0x10] sm:$0xff]
        %v3651 = vld [vmem:[%s1 + $0x18] sm:$0xff]
        %v3652 = vld [vmem:[%s1 + $0x20] sm:$0xff]
        %v3653 = vld [vmem:[%s1 + $0x28] sm:$0xff]
        %v3654 = vld [vmem:[%s1 + $0x30] sm:$0xff]
        %v3655 = vld [vmem:[%s1 + $0x38] sm:$0xff]
        %v3656 = vld [vmem:[%s1 + $0x40] sm:$0xff]
        %v3657 = vld [vmem:[%s1 + $0x48] sm:$0xff]
        %v3658 = vld [vmem:[%s1 + $0x50] sm:$0xff]
        %v3659 = vld [vmem:[%s1 + $0x58] sm:$0xff]
        %v3660 = vld [vmem:[%s1 + $0x60] sm:$0xff]
        %v3661 = vld [vmem:[%s1 + $0x68] sm:$0xff]
        %v3662 = vld [vmem:[%s1 + $0x70] sm:$0xff]
        %v3663 = vld [vmem:[%s1 + $0x78] sm:$0xff]
        %v3664 = vld [vmem:[%s1 + $0x80] sm:$0xff]
        %v3665 = vld [vmem:[%s1 + $0x88] sm:$0xff]
        %v3666 = vld [vmem:[%s1 + $0x90] sm:$0xff]
        %v3667 = vld [vmem:[%s1 + $0x98] sm:$0xff]
        %v3668 = vld [vmem:[%s1 + $0xa0] sm:$0xff]
        %v3669 = vld [vmem:[%s1 + $0xa8] sm:$0xff]
        %v3670 = vld [vmem:[%s1 + $0xb0] sm:$0xff]
        %v3671 = vld [vmem:[%s1 + $0xb8] sm:$0xff]
        %v3672 = vld [vmem:[%s1 + $0xc0] sm:$0xff]
        %v3673 = vld [vmem:[%s1 + $0xc8] sm:$0xff]
        %v3674 = vld [vmem:[%s1 + $0xd0] sm:$0xff]
        %v3675 = vld [vmem:[%s1 + $0xd8] sm:$0xff]
        %v3676 = vld [vmem:[%s1 + $0xe0] sm:$0xff]
        %v3677 = vld [vmem:[%s1 + $0xe8] sm:$0xff]
        %v3678 = vld [vmem:[%s1 + $0xf0] sm:$0xff]
        %v3679 = vld [vmem:[%s1 + $0xf8] sm:$0xff]
        %v3680 = vld [vmem:[%s1 + $0x100] sm:$0xff]
        %v3681 = vld [vmem:[%s1 + $0x108] sm:$0xff]
        %v3682 = vld [vmem:[%s1 + $0x110] sm:$0xff]
        %v3683 = vld [vmem:[%s1 + $0x118] sm:$0xff]
        %v3684 = vld [vmem:[%s1 + $0x120] sm:$0xff]
        %v3685 = vld [vmem:[%s1 + $0x128] sm:$0xff]
        %v3686 = vld [vmem:[%s1 + $0x130] sm:$0xff]
        %v3687 = vld [vmem:[%s1 + $0x138] sm:$0xff]
        %v3688 = vld [vmem:[%s1 + $0x140] sm:$0xff]
        %v3689 = vld [vmem:[%s1 + $0x148] sm:$0xff]
        %v3690 = vld [vmem:[%s1 + $0x150] sm:$0xff]
        %v3691 = vld [vmem:[%s1 + $0x158] sm:$0xff]
        %v3692 = vld [vmem:[%s1 + $0x160] sm:$0xff]
        %v3693 = vld [vmem:[%s1 + $0x168] sm:$0xff]
        %v3694 = vld [vmem:[%s1 + $0x170] sm:$0xff]
        %v3695 = vld [vmem:[%s1 + $0x178] sm:$0xff]
        %v3696 = vld [vmem:[%s1 + $0x180] sm:$0xff]
        %v3697 = vld [vmem:[%s1 + $0x188] sm:$0xff]
        %v3698 = vld [vmem:[%s1 + $0x190] sm:$0xff]
        %v3699 = vld [vmem:[%s1 + $0x198] sm:$0xff]
        %v3700 = vld [vmem:[%s1 + $0x1a0] sm:$0xff]
        %v3701 = vld [vmem:[%s1 + $0x1a8] sm:$0xff]
        %v3702 = vld [vmem:[%s1 + $0x1b0] sm:$0xff]
        %v3703 = vld [vmem:[%s1 + $0x1b8] sm:$0xff]
        %v3704 = vld [vmem:[%s1 + $0x1c0] sm:$0xff]
        %v3705 = vld [vmem:[%s1 + $0x1c8] sm:$0xff]
        %v3706 = vld [vmem:[%s1 + $0x1d0] sm:$0xff]
        %v3707 = vld [vmem:[%s1 + $0x1d8] sm:$0xff]
        %v3708 = vld [vmem:[%s1 + $0x1e0] sm:$0xff]
        %v3709 = vld [vmem:[%s1 + $0x1e8] sm:$0xff]
        %v3710 = vld [vmem:[%s1 + $0x1f0] sm:$0xff]
        %v3711 = vld [vmem:[%s1 + $0x1f8] sm:$0xff]
        %v3712 = vld [vmem:[%s1 + $0x200] sm:$0xff]
        %v3713 = vld [vmem:[%s1 + $0x208] sm:$0xff]
        %v3714 = vld [vmem:[%s1 + $0x210] sm:$0xff]
        %v3715 = vld [vmem:[%s1 + $0x218] sm:$0xff]
        %v3716 = vld [vmem:[%s1 + $0x220] sm:$0xff]
        %v3717 = vld [vmem:[%s1 + $0x228] sm:$0xff]
        %v3718 = vld [vmem:[%s1 + $0x230] sm:$0xff]
        %v3719 = vld [vmem:[%s1 + $0x238] sm:$0xff]
        %v3720 = vld [vmem:[%s1 + $0x240] sm:$0xff]
        %v3721 = vld [vmem:[%s1 + $0x248] sm:$0xff]
        %v3722 = vld [vmem:[%s1 + $0x250] sm:$0xff]
        %v3723 = vld [vmem:[%s1 + $0x258] sm:$0xff]
        %v3724 = vld [vmem:[%s1 + $0x260] sm:$0xff]
        %v3725 = vld [vmem:[%s1 + $0x268] sm:$0xff]
        %v3726 = vld [vmem:[%s1 + $0x270] sm:$0xff]
        %v3727 = vld [vmem:[%s1 + $0x278] sm:$0xff]
        %v3728 = vld [vmem:[%s1 + $0x280] sm:$0xff]
        %v3729 = vld [vmem:[%s1 + $0x288] sm:$0xff]
        %v3730 = vld [vmem:[%s1 + $0x290] sm:$0xff]
        %v3731 = vld [vmem:[%s1 + $0x298] sm:$0xff]
        %v3732 = vld [vmem:[%s1 + $0x2a0] sm:$0xff]
        %v3733 = vld [vmem:[%s1 + $0x2a8] sm:$0xff]
        %v3734 = vld [vmem:[%s1 + $0x2b0] sm:$0xff]
        %v3735 = vld [vmem:[%s1 + $0x2b8] sm:$0xff]
        %v3736 = vld [vmem:[%s1 + $0x2c0] sm:$0xff]
        %v3737 = vld [vmem:[%s1 + $0x2c8] sm:$0xff]
        %v3738 = vld [vmem:[%s1 + $0x2d0] sm:$0xff]
        %v3739 = vld [vmem:[%s1 + $0x2d8] sm:$0xff]
        %v3740 = vld [vmem:[%s1 + $0x2e0] sm:$0xff]
        %v3741 = vld [vmem:[%s1 + $0x2e8] sm:$0xff]
        %v3742 = vld [vmem:[%s1 + $0x2f0] sm:$0xff]
        %v3743 = vld [vmem:[%s1 + $0x2f8] sm:$0xff]
        %v3744 = vld [vmem:[%s858] sm:$0xff]
        %v3745 = vld [vmem:[%s858 + $0x8] sm:$0xff]
        %v3746 = vld [vmem:[%s858 + $0x10] sm:$0xff]
        %v3747 = vld [vmem:[%s858 + $0x18] sm:$0xff]
        %v3748 = vld [vmem:[%s858 + $0x20] sm:$0xff]
        %v3749 = vld [vmem:[%s858 + $0x28] sm:$0xff]
        %v3750 = vld [vmem:[%s858 + $0x30] sm:$0xff]
        %v3751 = vld [vmem:[%s858 + $0x38] sm:$0xff]
        %v3752 = vld [vmem:[%s858 + $0x40] sm:$0xff]
        %v3753 = vld [vmem:[%s858 + $0x48] sm:$0xff]
        %v3754 = vld [vmem:[%s858 + $0x50] sm:$0xff]
        %v3755 = vld [vmem:[%s858 + $0x58] sm:$0xff]
        %v3756 = vld [vmem:[%s858 + $0x60] sm:$0xff]
        %v3757 = vld [vmem:[%s858 + $0x68] sm:$0xff]
        %v3758 = vld [vmem:[%s858 + $0x70] sm:$0xff]
        %v3759 = vld [vmem:[%s858 + $0x78] sm:$0xff]
        %v3760 = vld [vmem:[%s858 + $0x80] sm:$0xff]
        %v3761 = vld [vmem:[%s858 + $0x88] sm:$0xff]
        %v3762 = vld [vmem:[%s858 + $0x90] sm:$0xff]
        %v3763 = vld [vmem:[%s858 + $0x98] sm:$0xff]
        %v3764 = vld [vmem:[%s858 + $0xa0] sm:$0xff]
        %v3765 = vld [vmem:[%s858 + $0xa8] sm:$0xff]
        %v3766 = vld [vmem:[%s858 + $0xb0] sm:$0xff]
        %v3767 = vld [vmem:[%s858 + $0xb8] sm:$0xff]
        %v3768 = vld [vmem:[%s858 + $0xc0] sm:$0xff]
        %v3769 = vld [vmem:[%s858 + $0xc8] sm:$0xff]
        %v3770 = vld [vmem:[%s858 + $0xd0] sm:$0xff]
        %v3771 = vld [vmem:[%s858 + $0xd8] sm:$0xff]
        %v3772 = vld [vmem:[%s858 + $0xe0] sm:$0xff]
        %v3773 = vld [vmem:[%s858 + $0xe8] sm:$0xff]
        %v3774 = vld [vmem:[%s858 + $0xf0] sm:$0xff]
        %v3775 = vld [vmem:[%s858 + $0xf8] sm:$0xff]
        %v3776 = vld [vmem:[%s858 + $0x100] sm:$0xff]
        %v3777 = vld [vmem:[%s858 + $0x108] sm:$0xff]
        %v3778 = vld [vmem:[%s858 + $0x110] sm:$0xff]
        %v3779 = vld [vmem:[%s858 + $0x118] sm:$0xff]
        %v3780 = vld [vmem:[%s858 + $0x120] sm:$0xff]
        %v3781 = vld [vmem:[%s858 + $0x128] sm:$0xff]
        %v3782 = vld [vmem:[%s858 + $0x130] sm:$0xff]
        %v3783 = vld [vmem:[%s858 + $0x138] sm:$0xff]
        %v3784 = vld [vmem:[%s858 + $0x140] sm:$0xff]
        %v3785 = vld [vmem:[%s858 + $0x148] sm:$0xff]
        %v3786 = vld [vmem:[%s858 + $0x150] sm:$0xff]
        %v3787 = vld [vmem:[%s858 + $0x158] sm:$0xff]
        %v3788 = vld [vmem:[%s858 + $0x160] sm:$0xff]
        %v3789 = vld [vmem:[%s858 + $0x168] sm:$0xff]
        %v3790 = vld [vmem:[%s858 + $0x170] sm:$0xff]
        %v3791 = vld [vmem:[%s858 + $0x178] sm:$0xff]
        %v3792 = vld [vmem:[%s858 + $0x180] sm:$0xff]
        %v3793 = vld [vmem:[%s858 + $0x188] sm:$0xff]
        %v3794 = vld [vmem:[%s858 + $0x190] sm:$0xff]
        %v3795 = vld [vmem:[%s858 + $0x198] sm:$0xff]
        %v3796 = vld [vmem:[%s858 + $0x1a0] sm:$0xff]
        %v3797 = vld [vmem:[%s858 + $0x1a8] sm:$0xff]
        %v3798 = vld [vmem:[%s858 + $0x1b0] sm:$0xff]
        %v3799 = vld [vmem:[%s858 + $0x1b8] sm:$0xff]
        %v3800 = vld [vmem:[%s858 + $0x1c0] sm:$0xff]
        %v3801 = vld [vmem:[%s858 + $0x1c8] sm:$0xff]
        %v3802 = vld [vmem:[%s858 + $0x1d0] sm:$0xff]
        %v3803 = vld [vmem:[%s858 + $0x1d8] sm:$0xff]
        %v3804 = vld [vmem:[%s858 + $0x1e0] sm:$0xff]
        %v3805 = vld [vmem:[%s858 + $0x1e8] sm:$0xff]
        %v3806 = vld [vmem:[%s858 + $0x1f0] sm:$0xff]
        %v3807 = vld [vmem:[%s858 + $0x1f8] sm:$0xff]
        %v3808 = vld [vmem:[%s858 + $0x200] sm:$0xff]
        %v3809 = vld [vmem:[%s858 + $0x208] sm:$0xff]
        %v3810 = vld [vmem:[%s858 + $0x210] sm:$0xff]
        %v3811 = vld [vmem:[%s858 + $0x218] sm:$0xff]
        %v3812 = vld [vmem:[%s858 + $0x220] sm:$0xff]
        %v3813 = vld [vmem:[%s858 + $0x228] sm:$0xff]
        %v3814 = vld [vmem:[%s858 + $0x230] sm:$0xff]
        %v3815 = vld [vmem:[%s858 + $0x238] sm:$0xff]
        %v3816 = vld [vmem:[%s858 + $0x240] sm:$0xff]
        %v3817 = vld [vmem:[%s858 + $0x248] sm:$0xff]
        %v3818 = vld [vmem:[%s858 + $0x250] sm:$0xff]
        %v3819 = vld [vmem:[%s858 + $0x258] sm:$0xff]
        %v3820 = vld [vmem:[%s858 + $0x260] sm:$0xff]
        %v3821 = vld [vmem:[%s858 + $0x268] sm:$0xff]
        %v3822 = vld [vmem:[%s858 + $0x270] sm:$0xff]
        %v3823 = vld [vmem:[%s858 + $0x278] sm:$0xff]
        %v3824 = vld [vmem:[%s858 + $0x280] sm:$0xff]
        %v3825 = vld [vmem:[%s858 + $0x288] sm:$0xff]
        %v3826 = vld [vmem:[%s858 + $0x290] sm:$0xff]
        %v3827 = vld [vmem:[%s858 + $0x298] sm:$0xff]
        %v3828 = vld [vmem:[%s858 + $0x2a0] sm:$0xff]
        %v3829 = vld [vmem:[%s858 + $0x2a8] sm:$0xff]
        %v3830 = vld [vmem:[%s858 + $0x2b0] sm:$0xff]
        %v3831 = vld [vmem:[%s858 + $0x2b8] sm:$0xff]
        %v3832 = vld [vmem:[%s858 + $0x2c0] sm:$0xff]
        %v3833 = vld [vmem:[%s858 + $0x2c8] sm:$0xff]
        %v3834 = vld [vmem:[%s858 + $0x2d0] sm:$0xff]
        %v3835 = vld [vmem:[%s858 + $0x2d8] sm:$0xff]
        %v3836 = vld [vmem:[%s858 + $0x2e0] sm:$0xff]
        %v3837 = vld [vmem:[%s858 + $0x2e8] sm:$0xff]
        %v3838 = vld [vmem:[%s858 + $0x2f0] sm:$0xff]
        %v3839 = vld [vmem:[%s858 + $0x2f8] sm:$0xff]
        %v3936 = vunpack.c.l.b16 %v3744
        %v3937 = vunpack.c.h.b16 %v3744
        %v3938 = vunpack.c.l.b16 %v3745
        %v3939 = vunpack.c.h.b16 %v3745
        %v3940 = vunpack.c.l.b16 %v3746
        %v3941 = vunpack.c.h.b16 %v3746
        %v3942 = vunpack.c.l.b16 %v3747
        %v3943 = vunpack.c.h.b16 %v3747
        %v3944 = vunpack.c.l.b16 %v3748
        %v3945 = vunpack.c.h.b16 %v3748
        %v3946 = vunpack.c.l.b16 %v3749
        %v3947 = vunpack.c.h.b16 %v3749
        %v3948 = vunpack.c.l.b16 %v3750
        %v3949 = vunpack.c.h.b16 %v3750
        %v3950 = vunpack.c.l.b16 %v3751
        %v3951 = vunpack.c.h.b16 %v3751
        %v3952 = vunpack.c.l.b16 %v3752
        %v3953 = vunpack.c.h.b16 %v3752
        %v3954 = vunpack.c.l.b16 %v3753
        %v3955 = vunpack.c.h.b16 %v3753
        %v3956 = vunpack.c.l.b16 %v3754
        %v3957 = vunpack.c.h.b16 %v3754
        %v3958 = vunpack.c.l.b16 %v3755
        %v3959 = vunpack.c.h.b16 %v3755
        %v3960 = vunpack.c.l.b16 %v3756
        %v3961 = vunpack.c.h.b16 %v3756
        %v3962 = vunpack.c.l.b16 %v3757
        %v3963 = vunpack.c.h.b16 %v3757
        %v3964 = vunpack.c.l.b16 %v3758
        %v3965 = vunpack.c.h.b16 %v3758
        %v3966 = vunpack.c.l.b16 %v3759
        %v3967 = vunpack.c.h.b16 %v3759
        %v3968 = vunpack.c.l.b16 %v3760
        %v3969 = vunpack.c.h.b16 %v3760
        %v3970 = vunpack.c.l.b16 %v3761
        %v3971 = vunpack.c.h.b16 %v3761
        %v3972 = vunpack.c.l.b16 %v3762
        %v3973 = vunpack.c.h.b16 %v3762
        %v3974 = vunpack.c.l.b16 %v3763
        %v3975 = vunpack.c.h.b16 %v3763
        %v3976 = vunpack.c.l.b16 %v3764
        %v3977 = vunpack.c.h.b16 %v3764
        %v3978 = vunpack.c.l.b16 %v3765
        %v3979 = vunpack.c.h.b16 %v3765
        %v3980 = vunpack.c.l.b16 %v3766
        %v3981 = vunpack.c.h.b16 %v3766
        %v3982 = vunpack.c.l.b16 %v3767
        %v3983 = vunpack.c.h.b16 %v3767
        %v3984 = vunpack.c.l.b16 %v3768
        %v3985 = vunpack.c.h.b16 %v3768
        %v3986 = vunpack.c.l.b16 %v3769
        %v3987 = vunpack.c.h.b16 %v3769
        %v3988 = vunpack.c.l.b16 %v3770
        %v3989 = vunpack.c.h.b16 %v3770
        %v3990 = vunpack.c.l.b16 %v3771
        %v3991 = vunpack.c.h.b16 %v3771
        %v3992 = vunpack.c.l.b16 %v3772
        %v3993 = vunpack.c.h.b16 %v3772
        %v3994 = vunpack.c.l.b16 %v3773
        %v3995 = vunpack.c.h.b16 %v3773
        %v3996 = vunpack.c.l.b16 %v3774
        %v3997 = vunpack.c.h.b16 %v3774
        %v3998 = vunpack.c.l.b16 %v3775
        %v3999 = vunpack.c.h.b16 %v3775
        %v4000 = vunpack.c.l.b16 %v3776
        %v4001 = vunpack.c.h.b16 %v3776
        %v4002 = vunpack.c.l.b16 %v3777
        %v4003 = vunpack.c.h.b16 %v3777
        %v4004 = vunpack.c.l.b16 %v3778
        %v4005 = vunpack.c.h.b16 %v3778
        %v4006 = vunpack.c.l.b16 %v3779
        %v4007 = vunpack.c.h.b16 %v3779
        %v4008 = vunpack.c.l.b16 %v3780
        %v4009 = vunpack.c.h.b16 %v3780
        %v4010 = vunpack.c.l.b16 %v3781
        %v4011 = vunpack.c.h.b16 %v3781
        %v4012 = vunpack.c.l.b16 %v3782
        %v4013 = vunpack.c.h.b16 %v3782
        %v4014 = vunpack.c.l.b16 %v3783
        %v4015 = vunpack.c.h.b16 %v3783
        %v4016 = vunpack.c.l.b16 %v3784
        %v4017 = vunpack.c.h.b16 %v3784
        %v4018 = vunpack.c.l.b16 %v3785
        %v4019 = vunpack.c.h.b16 %v3785
        %v4020 = vunpack.c.l.b16 %v3786
        %v4021 = vunpack.c.h.b16 %v3786
        %v4022 = vunpack.c.l.b16 %v3787
        %v4023 = vunpack.c.h.b16 %v3787
        %v4024 = vunpack.c.l.b16 %v3788
        %v4025 = vunpack.c.h.b16 %v3788
        %v4026 = vunpack.c.l.b16 %v3789
        %v4027 = vunpack.c.h.b16 %v3789
        %v4028 = vunpack.c.l.b16 %v3790
        %v4029 = vunpack.c.h.b16 %v3790
        %v4030 = vunpack.c.l.b16 %v3791
        %v4031 = vunpack.c.h.b16 %v3791
        %v4032 = vunpack.c.l.b16 %v3792
        %v4033 = vunpack.c.h.b16 %v3792
        %v4034 = vunpack.c.l.b16 %v3793
        %v4035 = vunpack.c.h.b16 %v3793
        %v4036 = vunpack.c.l.b16 %v3794
        %v4037 = vunpack.c.h.b16 %v3794
        %v4038 = vunpack.c.l.b16 %v3795
        %v4039 = vunpack.c.h.b16 %v3795
        %v4040 = vunpack.c.l.b16 %v3796
        %v4041 = vunpack.c.h.b16 %v3796
        %v4042 = vunpack.c.l.b16 %v3797
        %v4043 = vunpack.c.h.b16 %v3797
        %v4044 = vunpack.c.l.b16 %v3798
        %v4045 = vunpack.c.h.b16 %v3798
        %v4046 = vunpack.c.l.b16 %v3799
        %v4047 = vunpack.c.h.b16 %v3799
        %v4048 = vunpack.c.l.b16 %v3800
        %v4049 = vunpack.c.h.b16 %v3800
        %v4050 = vunpack.c.l.b16 %v3801
        %v4051 = vunpack.c.h.b16 %v3801
        %v4052 = vunpack.c.l.b16 %v3802
        %v4053 = vunpack.c.h.b16 %v3802
        %v4054 = vunpack.c.l.b16 %v3803
        %v4055 = vunpack.c.h.b16 %v3803
        %v4056 = vunpack.c.l.b16 %v3804
        %v4057 = vunpack.c.h.b16 %v3804
        %v4058 = vunpack.c.l.b16 %v3805
        %v4059 = vunpack.c.h.b16 %v3805
        %v4060 = vunpack.c.l.b16 %v3806
        %v4061 = vunpack.c.h.b16 %v3806
        %v4062 = vunpack.c.l.b16 %v3807
        %v4063 = vunpack.c.h.b16 %v3807
        %v4064 = vunpack.c.l.b16 %v3808
        %v4065 = vunpack.c.h.b16 %v3808
        %v4066 = vunpack.c.l.b16 %v3809
        %v4067 = vunpack.c.h.b16 %v3809
        %v4068 = vunpack.c.l.b16 %v3810
        %v4069 = vunpack.c.h.b16 %v3810
        %v4070 = vunpack.c.l.b16 %v3811
        %v4071 = vunpack.c.h.b16 %v3811
        %v4072 = vunpack.c.l.b16 %v3812
        %v4073 = vunpack.c.h.b16 %v3812
        %v4074 = vunpack.c.l.b16 %v3813
        %v4075 = vunpack.c.h.b16 %v3813
        %v4076 = vunpack.c.l.b16 %v3814
        %v4077 = vunpack.c.h.b16 %v3814
        %v4078 = vunpack.c.l.b16 %v3815
        %v4079 = vunpack.c.h.b16 %v3815
        %v4080 = vunpack.c.l.b16 %v3816
        %v4081 = vunpack.c.h.b16 %v3816
        %v4082 = vunpack.c.l.b16 %v3817
        %v4083 = vunpack.c.h.b16 %v3817
        %v4084 = vunpack.c.l.b16 %v3818
        %v4085 = vunpack.c.h.b16 %v3818
        %v4086 = vunpack.c.l.b16 %v3819
        %v4087 = vunpack.c.h.b16 %v3819
        %v4088 = vunpack.c.l.b16 %v3820
        %v4089 = vunpack.c.h.b16 %v3820
        %v4090 = vunpack.c.l.b16 %v3821
        %v4091 = vunpack.c.h.b16 %v3821
        %v4092 = vunpack.c.l.b16 %v3822
        %v4093 = vunpack.c.h.b16 %v3822
        %v4094 = vunpack.c.l.b16 %v3823
        %v4095 = vunpack.c.h.b16 %v3823
        %v4096 = vunpack.c.l.b16 %v3824
        %v4097 = vunpack.c.h.b16 %v3824
        %v4098 = vunpack.c.l.b16 %v3825
        %v4099 = vunpack.c.h.b16 %v3825
        %v4100 = vunpack.c.l.b16 %v3826
        %v4101 = vunpack.c.h.b16 %v3826
        %v4102 = vunpack.c.l.b16 %v3827
        %v4103 = vunpack.c.h.b16 %v3827
        %v4104 = vunpack.c.l.b16 %v3828
        %v4105 = vunpack.c.h.b16 %v3828
        %v4106 = vunpack.c.l.b16 %v3829
        %v4107 = vunpack.c.h.b16 %v3829
        %v4108 = vunpack.c.l.b16 %v3830
        %v4109 = vunpack.c.h.b16 %v3830
        %v4110 = vunpack.c.l.b16 %v3831
        %v4111 = vunpack.c.h.b16 %v3831
        %v4112 = vunpack.c.l.b16 %v3832
        %v4113 = vunpack.c.h.b16 %v3832
        %v4114 = vunpack.c.l.b16 %v3833
        %v4115 = vunpack.c.h.b16 %v3833
        %v4116 = vunpack.c.l.b16 %v3834
        %v4117 = vunpack.c.h.b16 %v3834
        %v4118 = vunpack.c.l.b16 %v3835
        %v4119 = vunpack.c.h.b16 %v3835
        %v4120 = vunpack.c.l.b16 %v3836
        %v4121 = vunpack.c.h.b16 %v3836
        %v4122 = vunpack.c.l.b16 %v3837
        %v4123 = vunpack.c.h.b16 %v3837
        %v4124 = vunpack.c.l.b16 %v3838
        %v4125 = vunpack.c.h.b16 %v3838
        %v4126 = vunpack.c.l.b16 %v3839
        %v4127 = vunpack.c.h.b16 %v3839
        %v4128 = vpack.c.b16 %v3938, %v3936
        %v4129 = vpack.c.b16 %v3939, %v3937
        %v4130 = vpack.c.b16 %v3942, %v3940
        %v4131 = vpack.c.b16 %v3943, %v3941
        %v4132 = vpack.c.b16 %v3946, %v3944
        %v4133 = vpack.c.b16 %v3947, %v3945
        %v4134 = vpack.c.b16 %v3950, %v3948
        %v4135 = vpack.c.b16 %v3951, %v3949
        %v4136 = vpack.c.b16 %v3954, %v3952
        %v4137 = vpack.c.b16 %v3955, %v3953
        %v4138 = vpack.c.b16 %v3958, %v3956
        %v4139 = vpack.c.b16 %v3959, %v3957
        %v4140 = vpack.c.b16 %v3962, %v3960
        %v4141 = vpack.c.b16 %v3963, %v3961
        %v4142 = vpack.c.b16 %v3966, %v3964
        %v4143 = vpack.c.b16 %v3967, %v3965
        %v4144 = vpack.c.b16 %v3970, %v3968
        %v4145 = vpack.c.b16 %v3971, %v3969
        %v4146 = vpack.c.b16 %v3974, %v3972
        %v4147 = vpack.c.b16 %v3975, %v3973
        %v4148 = vpack.c.b16 %v3978, %v3976
        %v4149 = vpack.c.b16 %v3979, %v3977
        %v4150 = vpack.c.b16 %v3982, %v3980
        %v4151 = vpack.c.b16 %v3983, %v3981
        %v4152 = vpack.c.b16 %v3986, %v3984
        %v4153 = vpack.c.b16 %v3987, %v3985
        %v4154 = vpack.c.b16 %v3990, %v3988
        %v4155 = vpack.c.b16 %v3991, %v3989
        %v4156 = vpack.c.b16 %v3994, %v3992
        %v4157 = vpack.c.b16 %v3995, %v3993
        %v4158 = vpack.c.b16 %v3998, %v3996
        %v4159 = vpack.c.b16 %v3999, %v3997
        %v4160 = vpack.c.b16 %v4002, %v4000
        %v4161 = vpack.c.b16 %v4003, %v4001
        %v4162 = vpack.c.b16 %v4006, %v4004
        %v4163 = vpack.c.b16 %v4007, %v4005
        %v4164 = vpack.c.b16 %v4010, %v4008
        %v4165 = vpack.c.b16 %v4011, %v4009
        %v4166 = vpack.c.b16 %v4014, %v4012
        %v4167 = vpack.c.b16 %v4015, %v4013
        %v4168 = vpack.c.b16 %v4018, %v4016
        %v4169 = vpack.c.b16 %v4019, %v4017
        %v4170 = vpack.c.b16 %v4022, %v4020
        %v4171 = vpack.c.b16 %v4023, %v4021
        %v4172 = vpack.c.b16 %v4026, %v4024
        %v4173 = vpack.c.b16 %v4027, %v4025
        %v4174 = vpack.c.b16 %v4030, %v4028
        %v4175 = vpack.c.b16 %v4031, %v4029
        %v4176 = vpack.c.b16 %v4034, %v4032
        %v4177 = vpack.c.b16 %v4035, %v4033
        %v4178 = vpack.c.b16 %v4038, %v4036
        %v4179 = vpack.c.b16 %v4039, %v4037
        %v4180 = vpack.c.b16 %v4042, %v4040
        %v4181 = vpack.c.b16 %v4043, %v4041
        %v4182 = vpack.c.b16 %v4046, %v4044
        %v4183 = vpack.c.b16 %v4047, %v4045
        %v4184 = vpack.c.b16 %v4050, %v4048
        %v4185 = vpack.c.b16 %v4051, %v4049
        %v4186 = vpack.c.b16 %v4054, %v4052
        %v4187 = vpack.c.b16 %v4055, %v4053
        %v4188 = vpack.c.b16 %v4058, %v4056
        %v4189 = vpack.c.b16 %v4059, %v4057
        %v4190 = vpack.c.b16 %v4062, %v4060
        %v4191 = vpack.c.b16 %v4063, %v4061
        %v4192 = vpack.c.b16 %v4066, %v4064
        %v4193 = vpack.c.b16 %v4067, %v4065
        %v4194 = vpack.c.b16 %v4070, %v4068
        %v4195 = vpack.c.b16 %v4071, %v4069
        %v4196 = vpack.c.b16 %v4074, %v4072
        %v4197 = vpack.c.b16 %v4075, %v4073
        %v4198 = vpack.c.b16 %v4078, %v4076
        %v4199 = vpack.c.b16 %v4079, %v4077
        %v4200 = vpack.c.b16 %v4082, %v4080
        %v4201 = vpack.c.b16 %v4083, %v4081
        %v4202 = vpack.c.b16 %v4086, %v4084
        %v4203 = vpack.c.b16 %v4087, %v4085
        %v4204 = vpack.c.b16 %v4090, %v4088
        %v4205 = vpack.c.b16 %v4091, %v4089
        %v4206 = vpack.c.b16 %v4094, %v4092
        %v4207 = vpack.c.b16 %v4095, %v4093
        %v4208 = vpack.c.b16 %v4098, %v4096
        %v4209 = vpack.c.b16 %v4099, %v4097
        %v4210 = vpack.c.b16 %v4102, %v4100
        %v4211 = vpack.c.b16 %v4103, %v4101
        %v4212 = vpack.c.b16 %v4106, %v4104
        %v4213 = vpack.c.b16 %v4107, %v4105
        %v4214 = vpack.c.b16 %v4110, %v4108
        %v4215 = vpack.c.b16 %v4111, %v4109
        %v4216 = vpack.c.b16 %v4114, %v4112
        %v4217 = vpack.c.b16 %v4115, %v4113
        %v4218 = vpack.c.b16 %v4118, %v4116
        %v4219 = vpack.c.b16 %v4119, %v4117
        %v4220 = vpack.c.b16 %v4122, %v4120
        %v4221 = vpack.c.b16 %v4123, %v4121
        %v4222 = vpack.c.b16 %v4126, %v4124
        %v4223 = vpack.c.b16 %v4127, %v4125
        %4320 = vmatprep.subr.bf16.mxu0 %v4143
        %4321 = vmatpush1.bf16.msra.mxu0 %v4142
        %4322 = vmatprep.subr.bf16.mxu0 %v4141
        %4323 = vmatpush1.bf16.msra.mxu0 %v4140
        %4324 = vmatprep.subr.bf16.mxu0 %v4139
        %4325 = vmatpush1.bf16.msra.mxu0 %v4138
        %4326 = vmatprep.subr.bf16.mxu0 %v4137
        %4327 = vmatpush1.bf16.msra.mxu0 %v4136
        %4328 = vmatprep.subr.bf16.mxu0 %v4135
        %4329 = vmatpush1.bf16.msra.mxu0 %v4134
        %4330 = vmatprep.subr.bf16.mxu0 %v4133
        %4331 = vmatpush1.bf16.msra.mxu0 %v4132
        %4332 = vmatprep.subr.bf16.mxu0 %v4131
        %4333 = vmatpush1.bf16.msra.mxu0 %v4130
        %4334 = vmatprep.subr.bf16.mxu0 %v4129
        %4335 = vmatpush1.bf16.msra.mxu0 %v4128
        %4336 = vmatprep.subr.bf16.mxu0 %v4159
        %4337 = vmatpush2.bf16.msra.mxu0 %v4158
        %4338 = vmatprep.subr.bf16.mxu0 %v4157
        %4339 = vmatpush2.bf16.msra.mxu0 %v4156
        %4340 = vmatprep.subr.bf16.mxu0 %v4155
        %4341 = vmatpush2.bf16.msra.mxu0 %v4154
        %4342 = vmatprep.subr.bf16.mxu0 %v4153
        %4343 = vmatpush2.bf16.msra.mxu0 %v4152
        %4344 = vmatprep.subr.bf16.mxu0 %v4151
        %4345 = vmatpush2.bf16.msra.mxu0 %v4150
        %4346 = vmatprep.subr.bf16.mxu0 %v4149
        %4347 = vmatpush2.bf16.msra.mxu0 %v4148
        %4348 = vmatprep.subr.bf16.mxu0 %v4147
        %4349 = vmatpush2.bf16.msra.mxu0 %v4146
        %4350 = vmatprep.subr.bf16.mxu0 %v4145
        %4351 = vmatpush2.bf16.msra.mxu0 %v4144
        %4352 = vmatprep.mubr.bf16.mxu0 %v714
        %4353 = vmatmul.mubr.bf16.gmra.mxu0 %v713
        %v4354 = vpop.f32.mrf.mxu0
        %v4355 = vadd.f32 0.0, %v4354
        %v4356 = vpop.f32.mrf.mxu0
        %v4357 = vadd.f32 0.0, %v4356
        %v4358 = vpop.f32.mrf.mxu0
        %v4359 = vadd.f32 0.0, %v4358
        %v4360 = vpop.f32.mrf.mxu0
        %v4361 = vadd.f32 0.0, %v4360
        %4362 = vmatprep.mubr.bf16.mxu0 %v720
        %4363 = vmatmul.mubr.bf16.gmra.mxu0 %v719
        %v4364 = vpop.f32.mrf.mxu0
        %v4365 = vadd.f32 0.0, %v4364
        %v4366 = vpop.f32.mrf.mxu0
        %v4367 = vadd.f32 0.0, %v4366
        %v4368 = vpop.f32.mrf.mxu0
        %v4369 = vadd.f32 0.0, %v4368
        %v4370 = vpop.f32.mrf.mxu0
        %v4371 = vadd.f32 0.0, %v4370
        %4372 = vmatprep.mubr.bf16.mxu0 %v726
        %4373 = vmatmul.mubr.bf16.gmra.mxu0 %v725
        %v4374 = vpop.f32.mrf.mxu0
        %v4375 = vadd.f32 0.0, %v4374
        %v4376 = vpop.f32.mrf.mxu0
        %v4377 = vadd.f32 0.0, %v4376
        %v4378 = vpop.f32.mrf.mxu0
        %v4379 = vadd.f32 0.0, %v4378
        %v4380 = vpop.f32.mrf.mxu0
        %v4381 = vadd.f32 0.0, %v4380
        %4382 = vmatprep.mubr.bf16.mxu0 %v732
        %4383 = vmatmul.mubr.bf16.gmra.mxu0 %v731
        %v4384 = vpop.f32.mrf.mxu0
        %v4385 = vadd.f32 0.0, %v4384
        %v4386 = vpop.f32.mrf.mxu0
        %v4387 = vadd.f32 0.0, %v4386
        %v4388 = vpop.f32.mrf.mxu0
        %v4389 = vadd.f32 0.0, %v4388
        %v4390 = vpop.f32.mrf.mxu0
        %v4391 = vadd.f32 0.0, %v4390
        %4392 = vmatprep.mubr.bf16.mxu0 %v738
        %4393 = vmatmul.mubr.bf16.gmra.mxu0 %v737
        %v4394 = vpop.f32.mrf.mxu0
        %v4395 = vadd.f32 0.0, %v4394
        %v4396 = vpop.f32.mrf.mxu0
        %v4397 = vadd.f32 0.0, %v4396
        %v4398 = vpop.f32.mrf.mxu0
        %v4399 = vadd.f32 0.0, %v4398
        %v4400 = vpop.f32.mrf.mxu0
        %v4401 = vadd.f32 0.0, %v4400
        %4402 = vmatprep.mubr.bf16.mxu0 %v744
        %4403 = vmatmul.mubr.bf16.gmra.mxu0 %v743
        %v4404 = vpop.f32.mrf.mxu0
        %v4405 = vadd.f32 0.0, %v4404
        %v4406 = vpop.f32.mrf.mxu0
        %v4407 = vadd.f32 0.0, %v4406
        %v4408 = vpop.f32.mrf.mxu0
        %v4409 = vadd.f32 0.0, %v4408
        %v4410 = vpop.f32.mrf.mxu0
        %v4411 = vadd.f32 0.0, %v4410
        %4412 = vmatprep.mubr.bf16.mxu0 %v750
        %4413 = vmatmul.mubr.bf16.gmra.mxu0 %v749
        %v4414 = vpop.f32.mrf.mxu0
        %v4415 = vadd.f32 0.0, %v4414
        %v4416 = vpop.f32.mrf.mxu0
        %v4417 = vadd.f32 0.0, %v4416
        %v4418 = vpop.f32.mrf.mxu0
        %v4419 = vadd.f32 0.0, %v4418
        %v4420 = vpop.f32.mrf.mxu0
        %v4421 = vadd.f32 0.0, %v4420
        %4422 = vmatprep.mubr.bf16.mxu0 %v756
        %4423 = vmatmul.mubr.bf16.gmra.mxu0 %v755
        %v4424 = vpop.f32.mrf.mxu0
        %v4425 = vadd.f32 0.0, %v4424
        %v4426 = vpop.f32.mrf.mxu0
        %v4427 = vadd.f32 0.0, %v4426
        %v4428 = vpop.f32.mrf.mxu0
        %v4429 = vadd.f32 0.0, %v4428
        %v4430 = vpop.f32.mrf.mxu0
        %v4431 = vadd.f32 0.0, %v4430
        %4432 = vdwg.mxu0
        %4433 = vmatprep.subr.bf16.mxu0 %v4175
        %4434 = vmatpush1.bf16.msra.mxu0 %v4174
        %4435 = vmatprep.subr.bf16.mxu0 %v4173
        %4436 = vmatpush1.bf16.msra.mxu0 %v4172
        %4437 = vmatprep.subr.bf16.mxu0 %v4171
        %4438 = vmatpush1.bf16.msra.mxu0 %v4170
        %4439 = vmatprep.subr.bf16.mxu0 %v4169
        %4440 = vmatpush1.bf16.msra.mxu0 %v4168
        %4441 = vmatprep.subr.bf16.mxu0 %v4167
        %4442 = vmatpush1.bf16.msra.mxu0 %v4166
        %4443 = vmatprep.subr.bf16.mxu0 %v4165
        %4444 = vmatpush1.bf16.msra.mxu0 %v4164
        %4445 = vmatprep.subr.bf16.mxu0 %v4163
        %4446 = vmatpush1.bf16.msra.mxu0 %v4162
        %4447 = vmatprep.subr.bf16.mxu0 %v4161
        %4448 = vmatpush1.bf16.msra.mxu0 %v4160
        %4449 = vmatprep.subr.bf16.mxu0 %v4191
        %4450 = vmatpush2.bf16.msra.mxu0 %v4190
        %4451 = vmatprep.subr.bf16.mxu0 %v4189
        %4452 = vmatpush2.bf16.msra.mxu0 %v4188
        %4453 = vmatprep.subr.bf16.mxu0 %v4187
        %4454 = vmatpush2.bf16.msra.mxu0 %v4186
        %4455 = vmatprep.subr.bf16.mxu0 %v4185
        %4456 = vmatpush2.bf16.msra.mxu0 %v4184
        %4457 = vmatprep.subr.bf16.mxu0 %v4183
        %4458 = vmatpush2.bf16.msra.mxu0 %v4182
        %4459 = vmatprep.subr.bf16.mxu0 %v4181
        %4460 = vmatpush2.bf16.msra.mxu0 %v4180
        %4461 = vmatprep.subr.bf16.mxu0 %v4179
        %4462 = vmatpush2.bf16.msra.mxu0 %v4178
        %4463 = vmatprep.subr.bf16.mxu0 %v4177
        %4464 = vmatpush2.bf16.msra.mxu0 %v4176
        %4465 = vmatprep.mubr.bf16.mxu0 %v716
        %4466 = vmatmul.mubr.bf16.gmra.mxu0 %v715
        %v4467 = vpop.f32.mrf.mxu0
        %v4468 = vadd.f32 %v4355, %v4467
        %v4469 = vpop.f32.mrf.mxu0
        %v4470 = vadd.f32 %v4357, %v4469
        %v4471 = vpop.f32.mrf.mxu0
        %v4472 = vadd.f32 %v4359, %v4471
        %v4473 = vpop.f32.mrf.mxu0
        %v4474 = vadd.f32 %v4361, %v4473
        %4475 = vmatprep.mubr.bf16.mxu0 %v722
        %4476 = vmatmul.mubr.bf16.gmra.mxu0 %v721
        %v4477 = vpop.f32.mrf.mxu0
        %v4478 = vadd.f32 %v4365, %v4477
        %v4479 = vpop.f32.mrf.mxu0
        %v4480 = vadd.f32 %v4367, %v4479
        %v4481 = vpop.f32.mrf.mxu0
        %v4482 = vadd.f32 %v4369, %v4481
        %v4483 = vpop.f32.mrf.mxu0
        %v4484 = vadd.f32 %v4371, %v4483
        %4485 = vmatprep.mubr.bf16.mxu0 %v728
        %4486 = vmatmul.mubr.bf16.gmra.mxu0 %v727
        %v4487 = vpop.f32.mrf.mxu0
        %v4488 = vadd.f32 %v4375, %v4487
        %v4489 = vpop.f32.mrf.mxu0
        %v4490 = vadd.f32 %v4377, %v4489
        %v4491 = vpop.f32.mrf.mxu0
        %v4492 = vadd.f32 %v4379, %v4491
        %v4493 = vpop.f32.mrf.mxu0
        %v4494 = vadd.f32 %v4381, %v4493
        %4495 = vmatprep.mubr.bf16.mxu0 %v734
        %4496 = vmatmul.mubr.bf16.gmra.mxu0 %v733
        %v4497 = vpop.f32.mrf.mxu0
        %v4498 = vadd.f32 %v4385, %v4497
        %v4499 = vpop.f32.mrf.mxu0
        %v4500 = vadd.f32 %v4387, %v4499
        %v4501 = vpop.f32.mrf.mxu0
        %v4502 = vadd.f32 %v4389, %v4501
        %v4503 = vpop.f32.mrf.mxu0
        %v4504 = vadd.f32 %v4391, %v4503
        %4505 = vmatprep.mubr.bf16.mxu0 %v740
        %4506 = vmatmul.mubr.bf16.gmra.mxu0 %v739
        %v4507 = vpop.f32.mrf.mxu0
        %v4508 = vadd.f32 %v4395, %v4507
        %v4509 = vpop.f32.mrf.mxu0
        %v4510 = vadd.f32 %v4397, %v4509
        %v4511 = vpop.f32.mrf.mxu0
        %v4512 = vadd.f32 %v4399, %v4511
        %v4513 = vpop.f32.mrf.mxu0
        %v4514 = vadd.f32 %v4401, %v4513
        %4515 = vmatprep.mubr.bf16.mxu0 %v746
        %4516 = vmatmul.mubr.bf16.gmra.mxu0 %v745
        %v4517 = vpop.f32.mrf.mxu0
        %v4518 = vadd.f32 %v4405, %v4517
        %v4519 = vpop.f32.mrf.mxu0
        %v4520 = vadd.f32 %v4407, %v4519
        %v4521 = vpop.f32.mrf.mxu0
        %v4522 = vadd.f32 %v4409, %v4521
        %v4523 = vpop.f32.mrf.mxu0
        %v4524 = vadd.f32 %v4411, %v4523
        %4525 = vmatprep.mubr.bf16.mxu0 %v752
        %4526 = vmatmul.mubr.bf16.gmra.mxu0 %v751
        %v4527 = vpop.f32.mrf.mxu0
        %v4528 = vadd.f32 %v4415, %v4527
        %v4529 = vpop.f32.mrf.mxu0
        %v4530 = vadd.f32 %v4417, %v4529
        %v4531 = vpop.f32.mrf.mxu0
        %v4532 = vadd.f32 %v4419, %v4531
        %v4533 = vpop.f32.mrf.mxu0
        %v4534 = vadd.f32 %v4421, %v4533
        %4535 = vmatprep.mubr.bf16.mxu0 %v758
        %4536 = vmatmul.mubr.bf16.gmra.mxu0 %v757
        %v4537 = vpop.f32.mrf.mxu0
        %v4538 = vadd.f32 %v4425, %v4537
        %v4539 = vpop.f32.mrf.mxu0
        %v4540 = vadd.f32 %v4427, %v4539
        %v4541 = vpop.f32.mrf.mxu0
        %v4542 = vadd.f32 %v4429, %v4541
        %v4543 = vpop.f32.mrf.mxu0
        %v4544 = vadd.f32 %v4431, %v4543
        %4545 = vdwg.mxu0
        %4546 = vmatprep.subr.bf16.mxu0 %v4207
        %4547 = vmatpush1.bf16.msra.mxu0 %v4206
        %4548 = vmatprep.subr.bf16.mxu0 %v4205
        %4549 = vmatpush1.bf16.msra.mxu0 %v4204
        %4550 = vmatprep.subr.bf16.mxu0 %v4203
        %4551 = vmatpush1.bf16.msra.mxu0 %v4202
        %4552 = vmatprep.subr.bf16.mxu0 %v4201
        %4553 = vmatpush1.bf16.msra.mxu0 %v4200
        %4554 = vmatprep.subr.bf16.mxu0 %v4199
        %4555 = vmatpush1.bf16.msra.mxu0 %v4198
        %4556 = vmatprep.subr.bf16.mxu0 %v4197
        %4557 = vmatpush1.bf16.msra.mxu0 %v4196
        %4558 = vmatprep.subr.bf16.mxu0 %v4195
        %4559 = vmatpush1.bf16.msra.mxu0 %v4194
        %4560 = vmatprep.subr.bf16.mxu0 %v4193
        %4561 = vmatpush1.bf16.msra.mxu0 %v4192
        %4562 = vmatprep.subr.bf16.mxu0 %v4223
        %4563 = vmatpush2.bf16.msra.mxu0 %v4222
        %4564 = vmatprep.subr.bf16.mxu0 %v4221
        %4565 = vmatpush2.bf16.msra.mxu0 %v4220
        %4566 = vmatprep.subr.bf16.mxu0 %v4219
        %4567 = vmatpush2.bf16.msra.mxu0 %v4218
        %4568 = vmatprep.subr.bf16.mxu0 %v4217
        %4569 = vmatpush2.bf16.msra.mxu0 %v4216
        %4570 = vmatprep.subr.bf16.mxu0 %v4215
        %4571 = vmatpush2.bf16.msra.mxu0 %v4214
        %4572 = vmatprep.subr.bf16.mxu0 %v4213
        %4573 = vmatpush2.bf16.msra.mxu0 %v4212
        %4574 = vmatprep.subr.bf16.mxu0 %v4211
        %4575 = vmatpush2.bf16.msra.mxu0 %v4210
        %4576 = vmatprep.subr.bf16.mxu0 %v4209
        %4577 = vmatpush2.bf16.msra.mxu0 %v4208
        %4578 = vmatprep.mubr.bf16.mxu0 %v718
        %4579 = vmatmul.mubr.bf16.gmra.mxu0 %v717
        %v4580 = vpop.f32.mrf.mxu0
        %v4581 = vadd.f32 %v4468, %v4580
        %v4582 = vpop.f32.mrf.mxu0
        %v4583 = vadd.f32 %v4470, %v4582
        %v4584 = vpop.f32.mrf.mxu0
        %v4585 = vadd.f32 %v4472, %v4584
        %v4586 = vpop.f32.mrf.mxu0
        %v4587 = vadd.f32 %v4474, %v4586
        %4588 = vmatprep.mubr.bf16.mxu0 %v724
        %4589 = vmatmul.mubr.bf16.gmra.mxu0 %v723
        %v4590 = vpop.f32.mrf.mxu0
        %v4591 = vadd.f32 %v4478, %v4590
        %v4592 = vpop.f32.mrf.mxu0
        %v4593 = vadd.f32 %v4480, %v4592
        %v4594 = vpop.f32.mrf.mxu0
        %v4595 = vadd.f32 %v4482, %v4594
        %v4596 = vpop.f32.mrf.mxu0
        %v4597 = vadd.f32 %v4484, %v4596
        %4598 = vmatprep.mubr.bf16.mxu0 %v730
        %4599 = vmatmul.mubr.bf16.gmra.mxu0 %v729
        %v4600 = vpop.f32.mrf.mxu0
        %v4601 = vadd.f32 %v4488, %v4600
        %v4602 = vpop.f32.mrf.mxu0
        %v4603 = vadd.f32 %v4490, %v4602
        %v4604 = vpop.f32.mrf.mxu0
        %v4605 = vadd.f32 %v4492, %v4604
        %v4606 = vpop.f32.mrf.mxu0
        %v4607 = vadd.f32 %v4494, %v4606
        %4608 = vmatprep.mubr.bf16.mxu0 %v736
        %4609 = vmatmul.mubr.bf16.gmra.mxu0 %v735
        %v4610 = vpop.f32.mrf.mxu0
        %v4611 = vadd.f32 %v4498, %v4610
        %v4612 = vpop.f32.mrf.mxu0
        %v4613 = vadd.f32 %v4500, %v4612
        %v4614 = vpop.f32.mrf.mxu0
        %v4615 = vadd.f32 %v4502, %v4614
        %v4616 = vpop.f32.mrf.mxu0
        %v4617 = vadd.f32 %v4504, %v4616
        %4618 = vmatprep.mubr.bf16.mxu0 %v742
        %4619 = vmatmul.mubr.bf16.gmra.mxu0 %v741
        %v4620 = vpop.f32.mrf.mxu0
        %v4621 = vadd.f32 %v4508, %v4620
        %v4622 = vpop.f32.mrf.mxu0
        %v4623 = vadd.f32 %v4510, %v4622
        %v4624 = vpop.f32.mrf.mxu0
        %v4625 = vadd.f32 %v4512, %v4624
        %v4626 = vpop.f32.mrf.mxu0
        %v4627 = vadd.f32 %v4514, %v4626
        %4628 = vmatprep.mubr.bf16.mxu0 %v748
        %4629 = vmatmul.mubr.bf16.gmra.mxu0 %v747
        %v4630 = vpop.f32.mrf.mxu0
        %v4631 = vadd.f32 %v4518, %v4630
        %v4632 = vpop.f32.mrf.mxu0
        %v4633 = vadd.f32 %v4520, %v4632
        %v4634 = vpop.f32.mrf.mxu0
        %v4635 = vadd.f32 %v4522, %v4634
        %v4636 = vpop.f32.mrf.mxu0
        %v4637 = vadd.f32 %v4524, %v4636
        %4638 = vmatprep.mubr.bf16.mxu0 %v754
        %4639 = vmatmul.mubr.bf16.gmra.mxu0 %v753
        %v4640 = vpop.f32.mrf.mxu0
        %v4641 = vadd.f32 %v4528, %v4640
        %v4642 = vpop.f32.mrf.mxu0
        %v4643 = vadd.f32 %v4530, %v4642
        %v4644 = vpop.f32.mrf.mxu0
        %v4645 = vadd.f32 %v4532, %v4644
        %v4646 = vpop.f32.mrf.mxu0
        %v4647 = vadd.f32 %v4534, %v4646
        %4648 = vmatprep.mubr.bf16.mxu0 %v760
        %4649 = vmatmul.mubr.bf16.gmra.mxu0 %v759
        %v4650 = vpop.f32.mrf.mxu0
        %v4651 = vadd.f32 %v4538, %v4650
        %v4652 = vpop.f32.mrf.mxu0
        %v4653 = vadd.f32 %v4540, %v4652
        %v4654 = vpop.f32.mrf.mxu0
        %v4655 = vadd.f32 %v4542, %v4654
        %v4656 = vpop.f32.mrf.mxu0
        %v4657 = vadd.f32 %v4544, %v4656
        %4658 = vdwg.mxu0
        %v4755 = vunpack.c.l.b16 %v3648
        %v4756 = vunpack.c.h.b16 %v3648
        %v4757 = vunpack.c.l.b16 %v3649
        %v4758 = vunpack.c.h.b16 %v3649
        %v4759 = vunpack.c.l.b16 %v3650
        %v4760 = vunpack.c.h.b16 %v3650
        %v4761 = vunpack.c.l.b16 %v3651
        %v4762 = vunpack.c.h.b16 %v3651
        %v4763 = vunpack.c.l.b16 %v3652
        %v4764 = vunpack.c.h.b16 %v3652
        %v4765 = vunpack.c.l.b16 %v3653
        %v4766 = vunpack.c.h.b16 %v3653
        %v4767 = vunpack.c.l.b16 %v3654
        %v4768 = vunpack.c.h.b16 %v3654
        %v4769 = vunpack.c.l.b16 %v3655
        %v4770 = vunpack.c.h.b16 %v3655
        %v4771 = vunpack.c.l.b16 %v3656
        %v4772 = vunpack.c.h.b16 %v3656
        %v4773 = vunpack.c.l.b16 %v3657
        %v4774 = vunpack.c.h.b16 %v3657
        %v4775 = vunpack.c.l.b16 %v3658
        %v4776 = vunpack.c.h.b16 %v3658
        %v4777 = vunpack.c.l.b16 %v3659
        %v4778 = vunpack.c.h.b16 %v3659
        %v4779 = vunpack.c.l.b16 %v3660
        %v4780 = vunpack.c.h.b16 %v3660
        %v4781 = vunpack.c.l.b16 %v3661
        %v4782 = vunpack.c.h.b16 %v3661
        %v4783 = vunpack.c.l.b16 %v3662
        %v4784 = vunpack.c.h.b16 %v3662
        %v4785 = vunpack.c.l.b16 %v3663
        %v4786 = vunpack.c.h.b16 %v3663
        %v4787 = vunpack.c.l.b16 %v3664
        %v4788 = vunpack.c.h.b16 %v3664
        %v4789 = vunpack.c.l.b16 %v3665
        %v4790 = vunpack.c.h.b16 %v3665
        %v4791 = vunpack.c.l.b16 %v3666
        %v4792 = vunpack.c.h.b16 %v3666
        %v4793 = vunpack.c.l.b16 %v3667
        %v4794 = vunpack.c.h.b16 %v3667
        %v4795 = vunpack.c.l.b16 %v3668
        %v4796 = vunpack.c.h.b16 %v3668
        %v4797 = vunpack.c.l.b16 %v3669
        %v4798 = vunpack.c.h.b16 %v3669
        %v4799 = vunpack.c.l.b16 %v3670
        %v4800 = vunpack.c.h.b16 %v3670
        %v4801 = vunpack.c.l.b16 %v3671
        %v4802 = vunpack.c.h.b16 %v3671
        %v4803 = vunpack.c.l.b16 %v3672
        %v4804 = vunpack.c.h.b16 %v3672
        %v4805 = vunpack.c.l.b16 %v3673
        %v4806 = vunpack.c.h.b16 %v3673
        %v4807 = vunpack.c.l.b16 %v3674
        %v4808 = vunpack.c.h.b16 %v3674
        %v4809 = vunpack.c.l.b16 %v3675
        %v4810 = vunpack.c.h.b16 %v3675
        %v4811 = vunpack.c.l.b16 %v3676
        %v4812 = vunpack.c.h.b16 %v3676
        %v4813 = vunpack.c.l.b16 %v3677
        %v4814 = vunpack.c.h.b16 %v3677
        %v4815 = vunpack.c.l.b16 %v3678
        %v4816 = vunpack.c.h.b16 %v3678
        %v4817 = vunpack.c.l.b16 %v3679
        %v4818 = vunpack.c.h.b16 %v3679
        %v4819 = vunpack.c.l.b16 %v3680
        %v4820 = vunpack.c.h.b16 %v3680
        %v4821 = vunpack.c.l.b16 %v3681
        %v4822 = vunpack.c.h.b16 %v3681
        %v4823 = vunpack.c.l.b16 %v3682
        %v4824 = vunpack.c.h.b16 %v3682
        %v4825 = vunpack.c.l.b16 %v3683
        %v4826 = vunpack.c.h.b16 %v3683
        %v4827 = vunpack.c.l.b16 %v3684
        %v4828 = vunpack.c.h.b16 %v3684
        %v4829 = vunpack.c.l.b16 %v3685
        %v4830 = vunpack.c.h.b16 %v3685
        %v4831 = vunpack.c.l.b16 %v3686
        %v4832 = vunpack.c.h.b16 %v3686
        %v4833 = vunpack.c.l.b16 %v3687
        %v4834 = vunpack.c.h.b16 %v3687
        %v4835 = vunpack.c.l.b16 %v3688
        %v4836 = vunpack.c.h.b16 %v3688
        %v4837 = vunpack.c.l.b16 %v3689
        %v4838 = vunpack.c.h.b16 %v3689
        %v4839 = vunpack.c.l.b16 %v3690
        %v4840 = vunpack.c.h.b16 %v3690
        %v4841 = vunpack.c.l.b16 %v3691
        %v4842 = vunpack.c.h.b16 %v3691
        %v4843 = vunpack.c.l.b16 %v3692
        %v4844 = vunpack.c.h.b16 %v3692
        %v4845 = vunpack.c.l.b16 %v3693
        %v4846 = vunpack.c.h.b16 %v3693
        %v4847 = vunpack.c.l.b16 %v3694
        %v4848 = vunpack.c.h.b16 %v3694
        %v4849 = vunpack.c.l.b16 %v3695
        %v4850 = vunpack.c.h.b16 %v3695
        %v4851 = vunpack.c.l.b16 %v3696
        %v4852 = vunpack.c.h.b16 %v3696
        %v4853 = vunpack.c.l.b16 %v3697
        %v4854 = vunpack.c.h.b16 %v3697
        %v4855 = vunpack.c.l.b16 %v3698
        %v4856 = vunpack.c.h.b16 %v3698
        %v4857 = vunpack.c.l.b16 %v3699
        %v4858 = vunpack.c.h.b16 %v3699
        %v4859 = vunpack.c.l.b16 %v3700
        %v4860 = vunpack.c.h.b16 %v3700
        %v4861 = vunpack.c.l.b16 %v3701
        %v4862 = vunpack.c.h.b16 %v3701
        %v4863 = vunpack.c.l.b16 %v3702
        %v4864 = vunpack.c.h.b16 %v3702
        %v4865 = vunpack.c.l.b16 %v3703
        %v4866 = vunpack.c.h.b16 %v3703
        %v4867 = vunpack.c.l.b16 %v3704
        %v4868 = vunpack.c.h.b16 %v3704
        %v4869 = vunpack.c.l.b16 %v3705
        %v4870 = vunpack.c.h.b16 %v3705
        %v4871 = vunpack.c.l.b16 %v3706
        %v4872 = vunpack.c.h.b16 %v3706
        %v4873 = vunpack.c.l.b16 %v3707
        %v4874 = vunpack.c.h.b16 %v3707
        %v4875 = vunpack.c.l.b16 %v3708
        %v4876 = vunpack.c.h.b16 %v3708
        %v4877 = vunpack.c.l.b16 %v3709
        %v4878 = vunpack.c.h.b16 %v3709
        %v4879 = vunpack.c.l.b16 %v3710
        %v4880 = vunpack.c.h.b16 %v3710
        %v4881 = vunpack.c.l.b16 %v3711
        %v4882 = vunpack.c.h.b16 %v3711
        %v4883 = vunpack.c.l.b16 %v3712
        %v4884 = vunpack.c.h.b16 %v3712
        %v4885 = vunpack.c.l.b16 %v3713
        %v4886 = vunpack.c.h.b16 %v3713
        %v4887 = vunpack.c.l.b16 %v3714
        %v4888 = vunpack.c.h.b16 %v3714
        %v4889 = vunpack.c.l.b16 %v3715
        %v4890 = vunpack.c.h.b16 %v3715
        %v4891 = vunpack.c.l.b16 %v3716
        %v4892 = vunpack.c.h.b16 %v3716
        %v4893 = vunpack.c.l.b16 %v3717
        %v4894 = vunpack.c.h.b16 %v3717
        %v4895 = vunpack.c.l.b16 %v3718
        %v4896 = vunpack.c.h.b16 %v3718
        %v4897 = vunpack.c.l.b16 %v3719
        %v4898 = vunpack.c.h.b16 %v3719
        %v4899 = vunpack.c.l.b16 %v3720
        %v4900 = vunpack.c.h.b16 %v3720
        %v4901 = vunpack.c.l.b16 %v3721
        %v4902 = vunpack.c.h.b16 %v3721
        %v4903 = vunpack.c.l.b16 %v3722
        %v4904 = vunpack.c.h.b16 %v3722
        %v4905 = vunpack.c.l.b16 %v3723
        %v4906 = vunpack.c.h.b16 %v3723
        %v4907 = vunpack.c.l.b16 %v3724
        %v4908 = vunpack.c.h.b16 %v3724
        %v4909 = vunpack.c.l.b16 %v3725
        %v4910 = vunpack.c.h.b16 %v3725
        %v4911 = vunpack.c.l.b16 %v3726
        %v4912 = vunpack.c.h.b16 %v3726
        %v4913 = vunpack.c.l.b16 %v3727
        %v4914 = vunpack.c.h.b16 %v3727
        %v4915 = vunpack.c.l.b16 %v3728
        %v4916 = vunpack.c.h.b16 %v3728
        %v4917 = vunpack.c.l.b16 %v3729
        %v4918 = vunpack.c.h.b16 %v3729
        %v4919 = vunpack.c.l.b16 %v3730
        %v4920 = vunpack.c.h.b16 %v3730
        %v4921 = vunpack.c.l.b16 %v3731
        %v4922 = vunpack.c.h.b16 %v3731
        %v4923 = vunpack.c.l.b16 %v3732
        %v4924 = vunpack.c.h.b16 %v3732
        %v4925 = vunpack.c.l.b16 %v3733
        %v4926 = vunpack.c.h.b16 %v3733
        %v4927 = vunpack.c.l.b16 %v3734
        %v4928 = vunpack.c.h.b16 %v3734
        %v4929 = vunpack.c.l.b16 %v3735
        %v4930 = vunpack.c.h.b16 %v3735
        %v4931 = vunpack.c.l.b16 %v3736
        %v4932 = vunpack.c.h.b16 %v3736
        %v4933 = vunpack.c.l.b16 %v3737
        %v4934 = vunpack.c.h.b16 %v3737
        %v4935 = vunpack.c.l.b16 %v3738
        %v4936 = vunpack.c.h.b16 %v3738
        %v4937 = vunpack.c.l.b16 %v3739
        %v4938 = vunpack.c.h.b16 %v3739
        %v4939 = vunpack.c.l.b16 %v3740
        %v4940 = vunpack.c.h.b16 %v3740
        %v4941 = vunpack.c.l.b16 %v3741
        %v4942 = vunpack.c.h.b16 %v3741
        %v4943 = vunpack.c.l.b16 %v3742
        %v4944 = vunpack.c.h.b16 %v3742
        %v4945 = vunpack.c.l.b16 %v3743
        %v4946 = vunpack.c.h.b16 %v3743
        %v4947 = vpack.c.b16 %v4757, %v4755
        %v4948 = vpack.c.b16 %v4758, %v4756
        %v4949 = vpack.c.b16 %v4761, %v4759
        %v4950 = vpack.c.b16 %v4762, %v4760
        %v4951 = vpack.c.b16 %v4765, %v4763
        %v4952 = vpack.c.b16 %v4766, %v4764
        %v4953 = vpack.c.b16 %v4769, %v4767
        %v4954 = vpack.c.b16 %v4770, %v4768
        %v4955 = vpack.c.b16 %v4773, %v4771
        %v4956 = vpack.c.b16 %v4774, %v4772
        %v4957 = vpack.c.b16 %v4777, %v4775
        %v4958 = vpack.c.b16 %v4778, %v4776
        %v4959 = vpack.c.b16 %v4781, %v4779
        %v4960 = vpack.c.b16 %v4782, %v4780
        %v4961 = vpack.c.b16 %v4785, %v4783
        %v4962 = vpack.c.b16 %v4786, %v4784
        %v4963 = vpack.c.b16 %v4789, %v4787
        %v4964 = vpack.c.b16 %v4790, %v4788
        %v4965 = vpack.c.b16 %v4793, %v4791
        %v4966 = vpack.c.b16 %v4794, %v4792
        %v4967 = vpack.c.b16 %v4797, %v4795
        %v4968 = vpack.c.b16 %v4798, %v4796
        %v4969 = vpack.c.b16 %v4801, %v4799
        %v4970 = vpack.c.b16 %v4802, %v4800
        %v4971 = vpack.c.b16 %v4805, %v4803
        %v4972 = vpack.c.b16 %v4806, %v4804
        %v4973 = vpack.c.b16 %v4809, %v4807
        %v4974 = vpack.c.b16 %v4810, %v4808
        %v4975 = vpack.c.b16 %v4813, %v4811
        %v4976 = vpack.c.b16 %v4814, %v4812
        %v4977 = vpack.c.b16 %v4817, %v4815
        %v4978 = vpack.c.b16 %v4818, %v4816
        %v4979 = vpack.c.b16 %v4821, %v4819
        %v4980 = vpack.c.b16 %v4822, %v4820
        %v4981 = vpack.c.b16 %v4825, %v4823
        %v4982 = vpack.c.b16 %v4826, %v4824
        %v4983 = vpack.c.b16 %v4829, %v4827
        %v4984 = vpack.c.b16 %v4830, %v4828
        %v4985 = vpack.c.b16 %v4833, %v4831
        %v4986 = vpack.c.b16 %v4834, %v4832
        %v4987 = vpack.c.b16 %v4837, %v4835
        %v4988 = vpack.c.b16 %v4838, %v4836
        %v4989 = vpack.c.b16 %v4841, %v4839
        %v4990 = vpack.c.b16 %v4842, %v4840
        %v4991 = vpack.c.b16 %v4845, %v4843
        %v4992 = vpack.c.b16 %v4846, %v4844
        %v4993 = vpack.c.b16 %v4849, %v4847
        %v4994 = vpack.c.b16 %v4850, %v4848
        %v4995 = vpack.c.b16 %v4853, %v4851
        %v4996 = vpack.c.b16 %v4854, %v4852
        %v4997 = vpack.c.b16 %v4857, %v4855
        %v4998 = vpack.c.b16 %v4858, %v4856
        %v4999 = vpack.c.b16 %v4861, %v4859
        %v5000 = vpack.c.b16 %v4862, %v4860
        %v5001 = vpack.c.b16 %v4865, %v4863
        %v5002 = vpack.c.b16 %v4866, %v4864
        %v5003 = vpack.c.b16 %v4869, %v4867
        %v5004 = vpack.c.b16 %v4870, %v4868
        %v5005 = vpack.c.b16 %v4873, %v4871
        %v5006 = vpack.c.b16 %v4874, %v4872
        %v5007 = vpack.c.b16 %v4877, %v4875
        %v5008 = vpack.c.b16 %v4878, %v4876
        %v5009 = vpack.c.b16 %v4881, %v4879
        %v5010 = vpack.c.b16 %v4882, %v4880
        %v5011 = vpack.c.b16 %v4885, %v4883
        %v5012 = vpack.c.b16 %v4886, %v4884
        %v5013 = vpack.c.b16 %v4889, %v4887
        %v5014 = vpack.c.b16 %v4890, %v4888
        %v5015 = vpack.c.b16 %v4893, %v4891
        %v5016 = vpack.c.b16 %v4894, %v4892
        %v5017 = vpack.c.b16 %v4897, %v4895
        %v5018 = vpack.c.b16 %v4898, %v4896
        %v5019 = vpack.c.b16 %v4901, %v4899
        %v5020 = vpack.c.b16 %v4902, %v4900
        %v5021 = vpack.c.b16 %v4905, %v4903
        %v5022 = vpack.c.b16 %v4906, %v4904
        %v5023 = vpack.c.b16 %v4909, %v4907
        %v5024 = vpack.c.b16 %v4910, %v4908
        %v5025 = vpack.c.b16 %v4913, %v4911
        %v5026 = vpack.c.b16 %v4914, %v4912
        %v5027 = vpack.c.b16 %v4917, %v4915
        %v5028 = vpack.c.b16 %v4918, %v4916
        %v5029 = vpack.c.b16 %v4921, %v4919
        %v5030 = vpack.c.b16 %v4922, %v4920
        %v5031 = vpack.c.b16 %v4925, %v4923
        %v5032 = vpack.c.b16 %v4926, %v4924
        %v5033 = vpack.c.b16 %v4929, %v4927
        %v5034 = vpack.c.b16 %v4930, %v4928
        %v5035 = vpack.c.b16 %v4933, %v4931
        %v5036 = vpack.c.b16 %v4934, %v4932
        %v5037 = vpack.c.b16 %v4937, %v4935
        %v5038 = vpack.c.b16 %v4938, %v4936
        %v5039 = vpack.c.b16 %v4941, %v4939
        %v5040 = vpack.c.b16 %v4942, %v4940
        %v5041 = vpack.c.b16 %v4945, %v4943
        %v5042 = vpack.c.b16 %v4946, %v4944
        %5139 = vmatprep.subr.bf16.mxu0 %v4962
        %5140 = vmatpush1.bf16.msra.mxu0 %v4961
        %5141 = vmatprep.subr.bf16.mxu0 %v4960
        %5142 = vmatpush1.bf16.msra.mxu0 %v4959
        %5143 = vmatprep.subr.bf16.mxu0 %v4958
        %5144 = vmatpush1.bf16.msra.mxu0 %v4957
        %5145 = vmatprep.subr.bf16.mxu0 %v4956
        %5146 = vmatpush1.bf16.msra.mxu0 %v4955
        %5147 = vmatprep.subr.bf16.mxu0 %v4954
        %5148 = vmatpush1.bf16.msra.mxu0 %v4953
        %5149 = vmatprep.subr.bf16.mxu0 %v4952
        %5150 = vmatpush1.bf16.msra.mxu0 %v4951
        %5151 = vmatprep.subr.bf16.mxu0 %v4950
        %5152 = vmatpush1.bf16.msra.mxu0 %v4949
        %5153 = vmatprep.subr.bf16.mxu0 %v4948
        %5154 = vmatpush1.bf16.msra.mxu0 %v4947
        %5155 = vmatprep.subr.bf16.mxu0 %v4978
        %5156 = vmatpush2.bf16.msra.mxu0 %v4977
        %5157 = vmatprep.subr.bf16.mxu0 %v4976
        %5158 = vmatpush2.bf16.msra.mxu0 %v4975
        %5159 = vmatprep.subr.bf16.mxu0 %v4974
        %5160 = vmatpush2.bf16.msra.mxu0 %v4973
        %5161 = vmatprep.subr.bf16.mxu0 %v4972
        %5162 = vmatpush2.bf16.msra.mxu0 %v4971
        %5163 = vmatprep.subr.bf16.mxu0 %v4970
        %5164 = vmatpush2.bf16.msra.mxu0 %v4969
        %5165 = vmatprep.subr.bf16.mxu0 %v4968
        %5166 = vmatpush2.bf16.msra.mxu0 %v4967
        %5167 = vmatprep.subr.bf16.mxu0 %v4966
        %5168 = vmatpush2.bf16.msra.mxu0 %v4965
        %5169 = vmatprep.subr.bf16.mxu0 %v4964
        %5170 = vmatpush2.bf16.msra.mxu0 %v4963
        %5171 = vmatprep.mubr.bf16.mxu0 %v708
        %5172 = vmatmul.mubr.bf16.gmra.mxu0 %v707
        %v5173 = vpop.f32.mrf.mxu0
        %v5174 = vadd.f32 %v4581, %v5173
        %v5175 = vpop.f32.mrf.mxu0
        %v5176 = vadd.f32 %v4583, %v5175
        %v5177 = vpop.f32.mrf.mxu0
        %v5178 = vadd.f32 %v4585, %v5177
        %v5179 = vpop.f32.mrf.mxu0
        %v5180 = vadd.f32 %v4587, %v5179
        %5181 = vmatprep.mubr.bf16.mxu0 %v714
        %5182 = vmatmul.mubr.bf16.gmra.mxu0 %v713
        %v5183 = vpop.f32.mrf.mxu0
        %v5184 = vadd.f32 %v4591, %v5183
        %v5185 = vpop.f32.mrf.mxu0
        %v5186 = vadd.f32 %v4593, %v5185
        %v5187 = vpop.f32.mrf.mxu0
        %v5188 = vadd.f32 %v4595, %v5187
        %v5189 = vpop.f32.mrf.mxu0
        %v5190 = vadd.f32 %v4597, %v5189
        %5191 = vmatprep.mubr.bf16.mxu0 %v720
        %5192 = vmatmul.mubr.bf16.gmra.mxu0 %v719
        %v5193 = vpop.f32.mrf.mxu0
        %v5194 = vadd.f32 %v4601, %v5193
        %v5195 = vpop.f32.mrf.mxu0
        %v5196 = vadd.f32 %v4603, %v5195
        %v5197 = vpop.f32.mrf.mxu0
        %v5198 = vadd.f32 %v4605, %v5197
        %v5199 = vpop.f32.mrf.mxu0
        %v5200 = vadd.f32 %v4607, %v5199
        %5201 = vmatprep.mubr.bf16.mxu0 %v726
        %5202 = vmatmul.mubr.bf16.gmra.mxu0 %v725
        %v5203 = vpop.f32.mrf.mxu0
        %v5204 = vadd.f32 %v4611, %v5203
        %v5205 = vpop.f32.mrf.mxu0
        %v5206 = vadd.f32 %v4613, %v5205
        %v5207 = vpop.f32.mrf.mxu0
        %v5208 = vadd.f32 %v4615, %v5207
        %v5209 = vpop.f32.mrf.mxu0
        %v5210 = vadd.f32 %v4617, %v5209
        %5211 = vmatprep.mubr.bf16.mxu0 %v732
        %5212 = vmatmul.mubr.bf16.gmra.mxu0 %v731
        %v5213 = vpop.f32.mrf.mxu0
        %v5214 = vadd.f32 %v4621, %v5213
        %v5215 = vpop.f32.mrf.mxu0
        %v5216 = vadd.f32 %v4623, %v5215
        %v5217 = vpop.f32.mrf.mxu0
        %v5218 = vadd.f32 %v4625, %v5217
        %v5219 = vpop.f32.mrf.mxu0
        %v5220 = vadd.f32 %v4627, %v5219
        %5221 = vmatprep.mubr.bf16.mxu0 %v738
        %5222 = vmatmul.mubr.bf16.gmra.mxu0 %v737
        %v5223 = vpop.f32.mrf.mxu0
        %v5224 = vadd.f32 %v4631, %v5223
        %v5225 = vpop.f32.mrf.mxu0
        %v5226 = vadd.f32 %v4633, %v5225
        %v5227 = vpop.f32.mrf.mxu0
        %v5228 = vadd.f32 %v4635, %v5227
        %v5229 = vpop.f32.mrf.mxu0
        %v5230 = vadd.f32 %v4637, %v5229
        %5231 = vmatprep.mubr.bf16.mxu0 %v744
        %5232 = vmatmul.mubr.bf16.gmra.mxu0 %v743
        %v5233 = vpop.f32.mrf.mxu0
        %v5234 = vadd.f32 %v4641, %v5233
        %v5235 = vpop.f32.mrf.mxu0
        %v5236 = vadd.f32 %v4643, %v5235
        %v5237 = vpop.f32.mrf.mxu0
        %v5238 = vadd.f32 %v4645, %v5237
        %v5239 = vpop.f32.mrf.mxu0
        %v5240 = vadd.f32 %v4647, %v5239
        %5241 = vmatprep.mubr.bf16.mxu0 %v750
        %5242 = vmatmul.mubr.bf16.gmra.mxu0 %v749
        %v5243 = vpop.f32.mrf.mxu0
        %v5244 = vadd.f32 %v4651, %v5243
        %v5245 = vpop.f32.mrf.mxu0
        %v5246 = vadd.f32 %v4653, %v5245
        %v5247 = vpop.f32.mrf.mxu0
        %v5248 = vadd.f32 %v4655, %v5247
        %v5249 = vpop.f32.mrf.mxu0
        %v5250 = vadd.f32 %v4657, %v5249
        %5251 = vdwg.mxu0
        %5252 = vmatprep.subr.bf16.mxu0 %v4994
        %5253 = vmatpush1.bf16.msra.mxu0 %v4993
        %5254 = vmatprep.subr.bf16.mxu0 %v4992
        %5255 = vmatpush1.bf16.msra.mxu0 %v4991
        %5256 = vmatprep.subr.bf16.mxu0 %v4990
        %5257 = vmatpush1.bf16.msra.mxu0 %v4989
        %5258 = vmatprep.subr.bf16.mxu0 %v4988
        %5259 = vmatpush1.bf16.msra.mxu0 %v4987
        %5260 = vmatprep.subr.bf16.mxu0 %v4986
        %5261 = vmatpush1.bf16.msra.mxu0 %v4985
        %5262 = vmatprep.subr.bf16.mxu0 %v4984
        %5263 = vmatpush1.bf16.msra.mxu0 %v4983
        %5264 = vmatprep.subr.bf16.mxu0 %v4982
        %5265 = vmatpush1.bf16.msra.mxu0 %v4981
        %5266 = vmatprep.subr.bf16.mxu0 %v4980
        %5267 = vmatpush1.bf16.msra.mxu0 %v4979
        %5268 = vmatprep.subr.bf16.mxu0 %v5010
        %5269 = vmatpush2.bf16.msra.mxu0 %v5009
        %5270 = vmatprep.subr.bf16.mxu0 %v5008
        %5271 = vmatpush2.bf16.msra.mxu0 %v5007
        %5272 = vmatprep.subr.bf16.mxu0 %v5006
        %5273 = vmatpush2.bf16.msra.mxu0 %v5005
        %5274 = vmatprep.subr.bf16.mxu0 %v5004
        %5275 = vmatpush2.bf16.msra.mxu0 %v5003
        %5276 = vmatprep.subr.bf16.mxu0 %v5002
        %5277 = vmatpush2.bf16.msra.mxu0 %v5001
        %5278 = vmatprep.subr.bf16.mxu0 %v5000
        %5279 = vmatpush2.bf16.msra.mxu0 %v4999
        %5280 = vmatprep.subr.bf16.mxu0 %v4998
        %5281 = vmatpush2.bf16.msra.mxu0 %v4997
        %5282 = vmatprep.subr.bf16.mxu0 %v4996
        %5283 = vmatpush2.bf16.msra.mxu0 %v4995
        %5284 = vmatprep.mubr.bf16.mxu0 %v710
        %5285 = vmatmul.mubr.bf16.gmra.mxu0 %v709
        %v5286 = vpop.f32.mrf.mxu0
        %v5287 = vadd.f32 %v5174, %v5286
        %v5288 = vpop.f32.mrf.mxu0
        %v5289 = vadd.f32 %v5176, %v5288
        %v5290 = vpop.f32.mrf.mxu0
        %v5291 = vadd.f32 %v5178, %v5290
        %v5292 = vpop.f32.mrf.mxu0
        %v5293 = vadd.f32 %v5180, %v5292
        %5294 = vmatprep.mubr.bf16.mxu0 %v716
        %5295 = vmatmul.mubr.bf16.gmra.mxu0 %v715
        %v5296 = vpop.f32.mrf.mxu0
        %v5297 = vadd.f32 %v5184, %v5296
        %v5298 = vpop.f32.mrf.mxu0
        %v5299 = vadd.f32 %v5186, %v5298
        %v5300 = vpop.f32.mrf.mxu0
        %v5301 = vadd.f32 %v5188, %v5300
        %v5302 = vpop.f32.mrf.mxu0
        %v5303 = vadd.f32 %v5190, %v5302
        %5304 = vmatprep.mubr.bf16.mxu0 %v722
        %5305 = vmatmul.mubr.bf16.gmra.mxu0 %v721
        %v5306 = vpop.f32.mrf.mxu0
        %v5307 = vadd.f32 %v5194, %v5306
        %v5308 = vpop.f32.mrf.mxu0
        %v5309 = vadd.f32 %v5196, %v5308
        %v5310 = vpop.f32.mrf.mxu0
        %v5311 = vadd.f32 %v5198, %v5310
        %v5312 = vpop.f32.mrf.mxu0
        %v5313 = vadd.f32 %v5200, %v5312
        %5314 = vmatprep.mubr.bf16.mxu0 %v728
        %5315 = vmatmul.mubr.bf16.gmra.mxu0 %v727
        %v5316 = vpop.f32.mrf.mxu0
        %v5317 = vadd.f32 %v5204, %v5316
        %v5318 = vpop.f32.mrf.mxu0
        %v5319 = vadd.f32 %v5206, %v5318
        %v5320 = vpop.f32.mrf.mxu0
        %v5321 = vadd.f32 %v5208, %v5320
        %v5322 = vpop.f32.mrf.mxu0
        %v5323 = vadd.f32 %v5210, %v5322
        %5324 = vmatprep.mubr.bf16.mxu0 %v734
        %5325 = vmatmul.mubr.bf16.gmra.mxu0 %v733
        %v5326 = vpop.f32.mrf.mxu0
        %v5327 = vadd.f32 %v5214, %v5326
        %v5328 = vpop.f32.mrf.mxu0
        %v5329 = vadd.f32 %v5216, %v5328
        %v5330 = vpop.f32.mrf.mxu0
        %v5331 = vadd.f32 %v5218, %v5330
        %v5332 = vpop.f32.mrf.mxu0
        %v5333 = vadd.f32 %v5220, %v5332
        %5334 = vmatprep.mubr.bf16.mxu0 %v740
        %5335 = vmatmul.mubr.bf16.gmra.mxu0 %v739
        %v5336 = vpop.f32.mrf.mxu0
        %v5337 = vadd.f32 %v5224, %v5336
        %v5338 = vpop.f32.mrf.mxu0
        %v5339 = vadd.f32 %v5226, %v5338
        %v5340 = vpop.f32.mrf.mxu0
        %v5341 = vadd.f32 %v5228, %v5340
        %v5342 = vpop.f32.mrf.mxu0
        %v5343 = vadd.f32 %v5230, %v5342
        %5344 = vmatprep.mubr.bf16.mxu0 %v746
        %5345 = vmatmul.mubr.bf16.gmra.mxu0 %v745
        %v5346 = vpop.f32.mrf.mxu0
        %v5347 = vadd.f32 %v5234, %v5346
        %v5348 = vpop.f32.mrf.mxu0
        %v5349 = vadd.f32 %v5236, %v5348
        %v5350 = vpop.f32.mrf.mxu0
        %v5351 = vadd.f32 %v5238, %v5350
        %v5352 = vpop.f32.mrf.mxu0
        %v5353 = vadd.f32 %v5240, %v5352
        %5354 = vmatprep.mubr.bf16.mxu0 %v752
        %5355 = vmatmul.mubr.bf16.gmra.mxu0 %v751
        %v5356 = vpop.f32.mrf.mxu0
        %v5357 = vadd.f32 %v5244, %v5356
        %v5358 = vpop.f32.mrf.mxu0
        %v5359 = vadd.f32 %v5246, %v5358
        %v5360 = vpop.f32.mrf.mxu0
        %v5361 = vadd.f32 %v5248, %v5360
        %v5362 = vpop.f32.mrf.mxu0
        %v5363 = vadd.f32 %v5250, %v5362
        %5364 = vdwg.mxu0
        %5365 = vmatprep.subr.bf16.mxu0 %v5026
        %5366 = vmatpush1.bf16.msra.mxu0 %v5025
        %5367 = vmatprep.subr.bf16.mxu0 %v5024
        %5368 = vmatpush1.bf16.msra.mxu0 %v5023
        %5369 = vmatprep.subr.bf16.mxu0 %v5022
        %5370 = vmatpush1.bf16.msra.mxu0 %v5021
        %5371 = vmatprep.subr.bf16.mxu0 %v5020
        %5372 = vmatpush1.bf16.msra.mxu0 %v5019
        %5373 = vmatprep.subr.bf16.mxu0 %v5018
        %5374 = vmatpush1.bf16.msra.mxu0 %v5017
        %5375 = vmatprep.subr.bf16.mxu0 %v5016
        %5376 = vmatpush1.bf16.msra.mxu0 %v5015
        %5377 = vmatprep.subr.bf16.mxu0 %v5014
        %5378 = vmatpush1.bf16.msra.mxu0 %v5013
        %5379 = vmatprep.subr.bf16.mxu0 %v5012
        %5380 = vmatpush1.bf16.msra.mxu0 %v5011
        %5381 = vmatprep.subr.bf16.mxu0 %v5042
        %5382 = vmatpush2.bf16.msra.mxu0 %v5041
        %5383 = vmatprep.subr.bf16.mxu0 %v5040
        %5384 = vmatpush2.bf16.msra.mxu0 %v5039
        %5385 = vmatprep.subr.bf16.mxu0 %v5038
        %5386 = vmatpush2.bf16.msra.mxu0 %v5037
        %5387 = vmatprep.subr.bf16.mxu0 %v5036
        %5388 = vmatpush2.bf16.msra.mxu0 %v5035
        %5389 = vmatprep.subr.bf16.mxu0 %v5034
        %5390 = vmatpush2.bf16.msra.mxu0 %v5033
        %5391 = vmatprep.subr.bf16.mxu0 %v5032
        %5392 = vmatpush2.bf16.msra.mxu0 %v5031
        %5393 = vmatprep.subr.bf16.mxu0 %v5030
        %5394 = vmatpush2.bf16.msra.mxu0 %v5029
        %5395 = vmatprep.subr.bf16.mxu0 %v5028
        %5396 = vmatpush2.bf16.msra.mxu0 %v5027
        %5397 = vmatprep.mubr.bf16.mxu0 %v712
        %5398 = vmatmul.mubr.bf16.gmra.mxu0 %v711
        %v5399 = vpop.f32.mrf.mxu0
        %v5400 = vadd.f32 %v5287, %v5399
        %v5401 = vpop.f32.mrf.mxu0
        %v5402 = vadd.f32 %v5289, %v5401
        %v5403 = vpop.f32.mrf.mxu0
        %v5404 = vadd.f32 %v5291, %v5403
        %v5405 = vpop.f32.mrf.mxu0
        %v5406 = vadd.f32 %v5293, %v5405
        %5407 = vmatprep.mubr.bf16.mxu0 %v718
        %5408 = vmatmul.mubr.bf16.gmra.mxu0 %v717
        %v5409 = vpop.f32.mrf.mxu0
        %v5410 = vadd.f32 %v5297, %v5409
        %v5411 = vpop.f32.mrf.mxu0
        %v5412 = vadd.f32 %v5299, %v5411
        %v5413 = vpop.f32.mrf.mxu0
        %v5414 = vadd.f32 %v5301, %v5413
        %v5415 = vpop.f32.mrf.mxu0
        %v5416 = vadd.f32 %v5303, %v5415
        %5417 = vmatprep.mubr.bf16.mxu0 %v724
        %5418 = vmatmul.mubr.bf16.gmra.mxu0 %v723
        %v5419 = vpop.f32.mrf.mxu0
        %v5420 = vadd.f32 %v5307, %v5419
        %v5421 = vpop.f32.mrf.mxu0
        %v5422 = vadd.f32 %v5309, %v5421
        %v5423 = vpop.f32.mrf.mxu0
        %v5424 = vadd.f32 %v5311, %v5423
        %v5425 = vpop.f32.mrf.mxu0
        %v5426 = vadd.f32 %v5313, %v5425
        %5427 = vmatprep.mubr.bf16.mxu0 %v730
        %5428 = vmatmul.mubr.bf16.gmra.mxu0 %v729
        %v5429 = vpop.f32.mrf.mxu0
        %v5430 = vadd.f32 %v5317, %v5429
        %v5431 = vpop.f32.mrf.mxu0
        %v5432 = vadd.f32 %v5319, %v5431
        %v5433 = vpop.f32.mrf.mxu0
        %v5434 = vadd.f32 %v5321, %v5433
        %v5435 = vpop.f32.mrf.mxu0
        %v5436 = vadd.f32 %v5323, %v5435
        %5437 = vmatprep.mubr.bf16.mxu0 %v736
        %5438 = vmatmul.mubr.bf16.gmra.mxu0 %v735
        %v5439 = vpop.f32.mrf.mxu0
        %v5440 = vadd.f32 %v5327, %v5439
        %v5441 = vpop.f32.mrf.mxu0
        %v5442 = vadd.f32 %v5329, %v5441
        %v5443 = vpop.f32.mrf.mxu0
        %v5444 = vadd.f32 %v5331, %v5443
        %v5445 = vpop.f32.mrf.mxu0
        %v5446 = vadd.f32 %v5333, %v5445
        %5447 = vmatprep.mubr.bf16.mxu0 %v742
        %5448 = vmatmul.mubr.bf16.gmra.mxu0 %v741
        %v5449 = vpop.f32.mrf.mxu0
        %v5450 = vadd.f32 %v5337, %v5449
        %v5451 = vpop.f32.mrf.mxu0
        %v5452 = vadd.f32 %v5339, %v5451
        %v5453 = vpop.f32.mrf.mxu0
        %v5454 = vadd.f32 %v5341, %v5453
        %v5455 = vpop.f32.mrf.mxu0
        %v5456 = vadd.f32 %v5343, %v5455
        %5457 = vmatprep.mubr.bf16.mxu0 %v748
        %5458 = vmatmul.mubr.bf16.gmra.mxu0 %v747
        %v5459 = vpop.f32.mrf.mxu0
        %v5460 = vadd.f32 %v5347, %v5459
        %v5461 = vpop.f32.mrf.mxu0
        %v5462 = vadd.f32 %v5349, %v5461
        %v5463 = vpop.f32.mrf.mxu0
        %v5464 = vadd.f32 %v5351, %v5463
        %v5465 = vpop.f32.mrf.mxu0
        %v5466 = vadd.f32 %v5353, %v5465
        %5467 = vmatprep.mubr.bf16.mxu0 %v754
        %5468 = vmatmul.mubr.bf16.gmra.mxu0 %v753
        %v5469 = vpop.f32.mrf.mxu0
        %v5470 = vadd.f32 %v5357, %v5469
        %v5471 = vpop.f32.mrf.mxu0
        %v5472 = vadd.f32 %v5359, %v5471
        %v5473 = vpop.f32.mrf.mxu0
        %v5474 = vadd.f32 %v5361, %v5473
        %v5475 = vpop.f32.mrf.mxu0
        %v5476 = vadd.f32 %v5363, %v5475
        %5477 = vdwg.mxu0
        %v5478 = vld [vmem:[%s2593] sm:$0xff]
        %v5479 = vld [vmem:[%s2593 + $0x8] sm:$0xff]
        %v5480 = vld [vmem:[%s2593 + $0x10] sm:$0xff]
        %v5481 = vld [vmem:[%s2593 + $0x18] sm:$0xff]
        %v5482 = vld [vmem:[%s2593 + $0x20] sm:$0xff]
        %v5483 = vld [vmem:[%s2593 + $0x28] sm:$0xff]
        %v5484 = vld [vmem:[%s2593 + $0x30] sm:$0xff]
        %v5485 = vld [vmem:[%s2593 + $0x38] sm:$0xff]
        %v5486 = vld [vmem:[%s2593 + $0x40] sm:$0xff]
        %v5487 = vld [vmem:[%s2593 + $0x48] sm:$0xff]
        %v5488 = vld [vmem:[%s2593 + $0x50] sm:$0xff]
        %v5489 = vld [vmem:[%s2593 + $0x58] sm:$0xff]
        %v5490 = vld [vmem:[%s2593 + $0x60] sm:$0xff]
        %v5491 = vld [vmem:[%s2593 + $0x68] sm:$0xff]
        %v5492 = vld [vmem:[%s2593 + $0x70] sm:$0xff]
        %v5493 = vld [vmem:[%s2593 + $0x78] sm:$0xff]
        %v5494 = vld [vmem:[%s2593 + $0x80] sm:$0xff]
        %v5495 = vld [vmem:[%s2593 + $0x88] sm:$0xff]
        %v5496 = vld [vmem:[%s2593 + $0x90] sm:$0xff]
        %v5497 = vld [vmem:[%s2593 + $0x98] sm:$0xff]
        %v5498 = vld [vmem:[%s2593 + $0xa0] sm:$0xff]
        %v5499 = vld [vmem:[%s2593 + $0xa8] sm:$0xff]
        %v5500 = vld [vmem:[%s2593 + $0xb0] sm:$0xff]
        %v5501 = vld [vmem:[%s2593 + $0xb8] sm:$0xff]
        %v5502 = vld [vmem:[%s2593 + $0xc0] sm:$0xff]
        %v5503 = vld [vmem:[%s2593 + $0xc8] sm:$0xff]
        %v5504 = vld [vmem:[%s2593 + $0xd0] sm:$0xff]
        %v5505 = vld [vmem:[%s2593 + $0xd8] sm:$0xff]
        %v5506 = vld [vmem:[%s2593 + $0xe0] sm:$0xff]
        %v5507 = vld [vmem:[%s2593 + $0xe8] sm:$0xff]
        %v5508 = vld [vmem:[%s2593 + $0xf0] sm:$0xff]
        %v5509 = vld [vmem:[%s2593 + $0xf8] sm:$0xff]
        %v5510 = vld [vmem:[%s2593 + $0x100] sm:$0xff]
        %v5511 = vld [vmem:[%s2593 + $0x108] sm:$0xff]
        %v5512 = vld [vmem:[%s2593 + $0x110] sm:$0xff]
        %v5513 = vld [vmem:[%s2593 + $0x118] sm:$0xff]
        %v5514 = vld [vmem:[%s2593 + $0x120] sm:$0xff]
        %v5515 = vld [vmem:[%s2593 + $0x128] sm:$0xff]
        %v5516 = vld [vmem:[%s2593 + $0x130] sm:$0xff]
        %v5517 = vld [vmem:[%s2593 + $0x138] sm:$0xff]
        %v5518 = vld [vmem:[%s2593 + $0x140] sm:$0xff]
        %v5519 = vld [vmem:[%s2593 + $0x148] sm:$0xff]
        %v5520 = vld [vmem:[%s2593 + $0x150] sm:$0xff]
        %v5521 = vld [vmem:[%s2593 + $0x158] sm:$0xff]
        %v5522 = vld [vmem:[%s2593 + $0x160] sm:$0xff]
        %v5523 = vld [vmem:[%s2593 + $0x168] sm:$0xff]
        %v5524 = vld [vmem:[%s2593 + $0x170] sm:$0xff]
        %v5525 = vld [vmem:[%s2593 + $0x178] sm:$0xff]
        %v5526 = vld [vmem:[%s2593 + $0x180] sm:$0xff]
        %v5527 = vld [vmem:[%s2593 + $0x188] sm:$0xff]
        %v5528 = vld [vmem:[%s2593 + $0x190] sm:$0xff]
        %v5529 = vld [vmem:[%s2593 + $0x198] sm:$0xff]
        %v5530 = vld [vmem:[%s2593 + $0x1a0] sm:$0xff]
        %v5531 = vld [vmem:[%s2593 + $0x1a8] sm:$0xff]
        %v5532 = vld [vmem:[%s2593 + $0x1b0] sm:$0xff]
        %v5533 = vld [vmem:[%s2593 + $0x1b8] sm:$0xff]
        %v5534 = vld [vmem:[%s2593 + $0x1c0] sm:$0xff]
        %v5535 = vld [vmem:[%s2593 + $0x1c8] sm:$0xff]
        %v5536 = vld [vmem:[%s2593 + $0x1d0] sm:$0xff]
        %v5537 = vld [vmem:[%s2593 + $0x1d8] sm:$0xff]
        %v5538 = vld [vmem:[%s2593 + $0x1e0] sm:$0xff]
        %v5539 = vld [vmem:[%s2593 + $0x1e8] sm:$0xff]
        %v5540 = vld [vmem:[%s2593 + $0x1f0] sm:$0xff]
        %v5541 = vld [vmem:[%s2593 + $0x1f8] sm:$0xff]
        %v5542 = vld [vmem:[%s2593 + $0x200] sm:$0xff]
        %v5543 = vld [vmem:[%s2593 + $0x208] sm:$0xff]
        %v5544 = vld [vmem:[%s2593 + $0x210] sm:$0xff]
        %v5545 = vld [vmem:[%s2593 + $0x218] sm:$0xff]
        %v5546 = vld [vmem:[%s2593 + $0x220] sm:$0xff]
        %v5547 = vld [vmem:[%s2593 + $0x228] sm:$0xff]
        %v5548 = vld [vmem:[%s2593 + $0x230] sm:$0xff]
        %v5549 = vld [vmem:[%s2593 + $0x238] sm:$0xff]
        %v5550 = vld [vmem:[%s2593 + $0x240] sm:$0xff]
        %v5551 = vld [vmem:[%s2593 + $0x248] sm:$0xff]
        %v5552 = vld [vmem:[%s2593 + $0x250] sm:$0xff]
        %v5553 = vld [vmem:[%s2593 + $0x258] sm:$0xff]
        %v5554 = vld [vmem:[%s2593 + $0x260] sm:$0xff]
        %v5555 = vld [vmem:[%s2593 + $0x268] sm:$0xff]
        %v5556 = vld [vmem:[%s2593 + $0x270] sm:$0xff]
        %v5557 = vld [vmem:[%s2593 + $0x278] sm:$0xff]
        %v5558 = vld [vmem:[%s2593 + $0x280] sm:$0xff]
        %v5559 = vld [vmem:[%s2593 + $0x288] sm:$0xff]
        %v5560 = vld [vmem:[%s2593 + $0x290] sm:$0xff]
        %v5561 = vld [vmem:[%s2593 + $0x298] sm:$0xff]
        %v5562 = vld [vmem:[%s2593 + $0x2a0] sm:$0xff]
        %v5563 = vld [vmem:[%s2593 + $0x2a8] sm:$0xff]
        %v5564 = vld [vmem:[%s2593 + $0x2b0] sm:$0xff]
        %v5565 = vld [vmem:[%s2593 + $0x2b8] sm:$0xff]
        %v5566 = vld [vmem:[%s2593 + $0x2c0] sm:$0xff]
        %v5567 = vld [vmem:[%s2593 + $0x2c8] sm:$0xff]
        %v5568 = vld [vmem:[%s2593 + $0x2d0] sm:$0xff]
        %v5569 = vld [vmem:[%s2593 + $0x2d8] sm:$0xff]
        %v5570 = vld [vmem:[%s2593 + $0x2e0] sm:$0xff]
        %v5571 = vld [vmem:[%s2593 + $0x2e8] sm:$0xff]
        %v5572 = vld [vmem:[%s2593 + $0x2f0] sm:$0xff]
        %v5573 = vld [vmem:[%s2593 + $0x2f8] sm:$0xff]
        %v5670 = vunpack.c.l.b16 %v5478
        %v5671 = vunpack.c.h.b16 %v5478
        %v5672 = vunpack.c.l.b16 %v5479
        %v5673 = vunpack.c.h.b16 %v5479
        %v5674 = vunpack.c.l.b16 %v5480
        %v5675 = vunpack.c.h.b16 %v5480
        %v5676 = vunpack.c.l.b16 %v5481
        %v5677 = vunpack.c.h.b16 %v5481
        %v5678 = vunpack.c.l.b16 %v5482
        %v5679 = vunpack.c.h.b16 %v5482
        %v5680 = vunpack.c.l.b16 %v5483
        %v5681 = vunpack.c.h.b16 %v5483
        %v5682 = vunpack.c.l.b16 %v5484
        %v5683 = vunpack.c.h.b16 %v5484
        %v5684 = vunpack.c.l.b16 %v5485
        %v5685 = vunpack.c.h.b16 %v5485
        %v5686 = vunpack.c.l.b16 %v5486
        %v5687 = vunpack.c.h.b16 %v5486
        %v5688 = vunpack.c.l.b16 %v5487
        %v5689 = vunpack.c.h.b16 %v5487
        %v5690 = vunpack.c.l.b16 %v5488
        %v5691 = vunpack.c.h.b16 %v5488
        %v5692 = vunpack.c.l.b16 %v5489
        %v5693 = vunpack.c.h.b16 %v5489
        %v5694 = vunpack.c.l.b16 %v5490
        %v5695 = vunpack.c.h.b16 %v5490
        %v5696 = vunpack.c.l.b16 %v5491
        %v5697 = vunpack.c.h.b16 %v5491
        %v5698 = vunpack.c.l.b16 %v5492
        %v5699 = vunpack.c.h.b16 %v5492
        %v5700 = vunpack.c.l.b16 %v5493
        %v5701 = vunpack.c.h.b16 %v5493
        %v5702 = vunpack.c.l.b16 %v5494
        %v5703 = vunpack.c.h.b16 %v5494
        %v5704 = vunpack.c.l.b16 %v5495
        %v5705 = vunpack.c.h.b16 %v5495
        %v5706 = vunpack.c.l.b16 %v5496
        %v5707 = vunpack.c.h.b16 %v5496
        %v5708 = vunpack.c.l.b16 %v5497
        %v5709 = vunpack.c.h.b16 %v5497
        %v5710 = vunpack.c.l.b16 %v5498
        %v5711 = vunpack.c.h.b16 %v5498
        %v5712 = vunpack.c.l.b16 %v5499
        %v5713 = vunpack.c.h.b16 %v5499
        %v5714 = vunpack.c.l.b16 %v5500
        %v5715 = vunpack.c.h.b16 %v5500
        %v5716 = vunpack.c.l.b16 %v5501
        %v5717 = vunpack.c.h.b16 %v5501
        %v5718 = vunpack.c.l.b16 %v5502
        %v5719 = vunpack.c.h.b16 %v5502
        %v5720 = vunpack.c.l.b16 %v5503
        %v5721 = vunpack.c.h.b16 %v5503
        %v5722 = vunpack.c.l.b16 %v5504
        %v5723 = vunpack.c.h.b16 %v5504
        %v5724 = vunpack.c.l.b16 %v5505
        %v5725 = vunpack.c.h.b16 %v5505
        %v5726 = vunpack.c.l.b16 %v5506
        %v5727 = vunpack.c.h.b16 %v5506
        %v5728 = vunpack.c.l.b16 %v5507
        %v5729 = vunpack.c.h.b16 %v5507
        %v5730 = vunpack.c.l.b16 %v5508
        %v5731 = vunpack.c.h.b16 %v5508
        %v5732 = vunpack.c.l.b16 %v5509
        %v5733 = vunpack.c.h.b16 %v5509
        %v5734 = vunpack.c.l.b16 %v5510
        %v5735 = vunpack.c.h.b16 %v5510
        %v5736 = vunpack.c.l.b16 %v5511
        %v5737 = vunpack.c.h.b16 %v5511
        %v5738 = vunpack.c.l.b16 %v5512
        %v5739 = vunpack.c.h.b16 %v5512
        %v5740 = vunpack.c.l.b16 %v5513
        %v5741 = vunpack.c.h.b16 %v5513
        %v5742 = vunpack.c.l.b16 %v5514
        %v5743 = vunpack.c.h.b16 %v5514
        %v5744 = vunpack.c.l.b16 %v5515
        %v5745 = vunpack.c.h.b16 %v5515
        %v5746 = vunpack.c.l.b16 %v5516
        %v5747 = vunpack.c.h.b16 %v5516
        %v5748 = vunpack.c.l.b16 %v5517
        %v5749 = vunpack.c.h.b16 %v5517
        %v5750 = vunpack.c.l.b16 %v5518
        %v5751 = vunpack.c.h.b16 %v5518
        %v5752 = vunpack.c.l.b16 %v5519
        %v5753 = vunpack.c.h.b16 %v5519
        %v5754 = vunpack.c.l.b16 %v5520
        %v5755 = vunpack.c.h.b16 %v5520
        %v5756 = vunpack.c.l.b16 %v5521
        %v5757 = vunpack.c.h.b16 %v5521
        %v5758 = vunpack.c.l.b16 %v5522
        %v5759 = vunpack.c.h.b16 %v5522
        %v5760 = vunpack.c.l.b16 %v5523
        %v5761 = vunpack.c.h.b16 %v5523
        %v5762 = vunpack.c.l.b16 %v5524
        %v5763 = vunpack.c.h.b16 %v5524
        %v5764 = vunpack.c.l.b16 %v5525
        %v5765 = vunpack.c.h.b16 %v5525
        %v5766 = vunpack.c.l.b16 %v5526
        %v5767 = vunpack.c.h.b16 %v5526
        %v5768 = vunpack.c.l.b16 %v5527
        %v5769 = vunpack.c.h.b16 %v5527
        %v5770 = vunpack.c.l.b16 %v5528
        %v5771 = vunpack.c.h.b16 %v5528
        %v5772 = vunpack.c.l.b16 %v5529
        %v5773 = vunpack.c.h.b16 %v5529
        %v5774 = vunpack.c.l.b16 %v5530
        %v5775 = vunpack.c.h.b16 %v5530
        %v5776 = vunpack.c.l.b16 %v5531
        %v5777 = vunpack.c.h.b16 %v5531
        %v5778 = vunpack.c.l.b16 %v5532
        %v5779 = vunpack.c.h.b16 %v5532
        %v5780 = vunpack.c.l.b16 %v5533
        %v5781 = vunpack.c.h.b16 %v5533
        %v5782 = vunpack.c.l.b16 %v5534
        %v5783 = vunpack.c.h.b16 %v5534
        %v5784 = vunpack.c.l.b16 %v5535
        %v5785 = vunpack.c.h.b16 %v5535
        %v5786 = vunpack.c.l.b16 %v5536
        %v5787 = vunpack.c.h.b16 %v5536
        %v5788 = vunpack.c.l.b16 %v5537
        %v5789 = vunpack.c.h.b16 %v5537
        %v5790 = vunpack.c.l.b16 %v5538
        %v5791 = vunpack.c.h.b16 %v5538
        %v5792 = vunpack.c.l.b16 %v5539
        %v5793 = vunpack.c.h.b16 %v5539
        %v5794 = vunpack.c.l.b16 %v5540
        %v5795 = vunpack.c.h.b16 %v5540
        %v5796 = vunpack.c.l.b16 %v5541
        %v5797 = vunpack.c.h.b16 %v5541
        %v5798 = vunpack.c.l.b16 %v5542
        %v5799 = vunpack.c.h.b16 %v5542
        %v5800 = vunpack.c.l.b16 %v5543
        %v5801 = vunpack.c.h.b16 %v5543
        %v5802 = vunpack.c.l.b16 %v5544
        %v5803 = vunpack.c.h.b16 %v5544
        %v5804 = vunpack.c.l.b16 %v5545
        %v5805 = vunpack.c.h.b16 %v5545
        %v5806 = vunpack.c.l.b16 %v5546
        %v5807 = vunpack.c.h.b16 %v5546
        %v5808 = vunpack.c.l.b16 %v5547
        %v5809 = vunpack.c.h.b16 %v5547
        %v5810 = vunpack.c.l.b16 %v5548
        %v5811 = vunpack.c.h.b16 %v5548
        %v5812 = vunpack.c.l.b16 %v5549
        %v5813 = vunpack.c.h.b16 %v5549
        %v5814 = vunpack.c.l.b16 %v5550
        %v5815 = vunpack.c.h.b16 %v5550
        %v5816 = vunpack.c.l.b16 %v5551
        %v5817 = vunpack.c.h.b16 %v5551
        %v5818 = vunpack.c.l.b16 %v5552
        %v5819 = vunpack.c.h.b16 %v5552
        %v5820 = vunpack.c.l.b16 %v5553
        %v5821 = vunpack.c.h.b16 %v5553
        %v5822 = vunpack.c.l.b16 %v5554
        %v5823 = vunpack.c.h.b16 %v5554
        %v5824 = vunpack.c.l.b16 %v5555
        %v5825 = vunpack.c.h.b16 %v5555
        %v5826 = vunpack.c.l.b16 %v5556
        %v5827 = vunpack.c.h.b16 %v5556
        %v5828 = vunpack.c.l.b16 %v5557
        %v5829 = vunpack.c.h.b16 %v5557
        %v5830 = vunpack.c.l.b16 %v5558
        %v5831 = vunpack.c.h.b16 %v5558
        %v5832 = vunpack.c.l.b16 %v5559
        %v5833 = vunpack.c.h.b16 %v5559
        %v5834 = vunpack.c.l.b16 %v5560
        %v5835 = vunpack.c.h.b16 %v5560
        %v5836 = vunpack.c.l.b16 %v5561
        %v5837 = vunpack.c.h.b16 %v5561
        %v5838 = vunpack.c.l.b16 %v5562
        %v5839 = vunpack.c.h.b16 %v5562
        %v5840 = vunpack.c.l.b16 %v5563
        %v5841 = vunpack.c.h.b16 %v5563
        %v5842 = vunpack.c.l.b16 %v5564
        %v5843 = vunpack.c.h.b16 %v5564
        %v5844 = vunpack.c.l.b16 %v5565
        %v5845 = vunpack.c.h.b16 %v5565
        %v5846 = vunpack.c.l.b16 %v5566
        %v5847 = vunpack.c.h.b16 %v5566
        %v5848 = vunpack.c.l.b16 %v5567
        %v5849 = vunpack.c.h.b16 %v5567
        %v5850 = vunpack.c.l.b16 %v5568
        %v5851 = vunpack.c.h.b16 %v5568
        %v5852 = vunpack.c.l.b16 %v5569
        %v5853 = vunpack.c.h.b16 %v5569
        %v5854 = vunpack.c.l.b16 %v5570
        %v5855 = vunpack.c.h.b16 %v5570
        %v5856 = vunpack.c.l.b16 %v5571
        %v5857 = vunpack.c.h.b16 %v5571
        %v5858 = vunpack.c.l.b16 %v5572
        %v5859 = vunpack.c.h.b16 %v5572
        %v5860 = vunpack.c.l.b16 %v5573
        %v5861 = vunpack.c.h.b16 %v5573
        %v5862 = vpack.c.b16 %v5672, %v5670
        %v5863 = vpack.c.b16 %v5673, %v5671
        %v5864 = vpack.c.b16 %v5676, %v5674
        %v5865 = vpack.c.b16 %v5677, %v5675
        %v5866 = vpack.c.b16 %v5680, %v5678
        %v5867 = vpack.c.b16 %v5681, %v5679
        %v5868 = vpack.c.b16 %v5684, %v5682
        %v5869 = vpack.c.b16 %v5685, %v5683
        %v5870 = vpack.c.b16 %v5688, %v5686
        %v5871 = vpack.c.b16 %v5689, %v5687
        %v5872 = vpack.c.b16 %v5692, %v5690
        %v5873 = vpack.c.b16 %v5693, %v5691
        %v5874 = vpack.c.b16 %v5696, %v5694
        %v5875 = vpack.c.b16 %v5697, %v5695
        %v5876 = vpack.c.b16 %v5700, %v5698
        %v5877 = vpack.c.b16 %v5701, %v5699
        %v5878 = vpack.c.b16 %v5704, %v5702
        %v5879 = vpack.c.b16 %v5705, %v5703
        %v5880 = vpack.c.b16 %v5708, %v5706
        %v5881 = vpack.c.b16 %v5709, %v5707
        %v5882 = vpack.c.b16 %v5712, %v5710
        %v5883 = vpack.c.b16 %v5713, %v5711
        %v5884 = vpack.c.b16 %v5716, %v5714
        %v5885 = vpack.c.b16 %v5717, %v5715
        %v5886 = vpack.c.b16 %v5720, %v5718
        %v5887 = vpack.c.b16 %v5721, %v5719
        %v5888 = vpack.c.b16 %v5724, %v5722
        %v5889 = vpack.c.b16 %v5725, %v5723
        %v5890 = vpack.c.b16 %v5728, %v5726
        %v5891 = vpack.c.b16 %v5729, %v5727
        %v5892 = vpack.c.b16 %v5732, %v5730
        %v5893 = vpack.c.b16 %v5733, %v5731
        %v5894 = vpack.c.b16 %v5736, %v5734
        %v5895 = vpack.c.b16 %v5737, %v5735
        %v5896 = vpack.c.b16 %v5740, %v5738
        %v5897 = vpack.c.b16 %v5741, %v5739
        %v5898 = vpack.c.b16 %v5744, %v5742
        %v5899 = vpack.c.b16 %v5745, %v5743
        %v5900 = vpack.c.b16 %v5748, %v5746
        %v5901 = vpack.c.b16 %v5749, %v5747
        %v5902 = vpack.c.b16 %v5752, %v5750
        %v5903 = vpack.c.b16 %v5753, %v5751
        %v5904 = vpack.c.b16 %v5756, %v5754
        %v5905 = vpack.c.b16 %v5757, %v5755
        %v5906 = vpack.c.b16 %v5760, %v5758
        %v5907 = vpack.c.b16 %v5761, %v5759
        %v5908 = vpack.c.b16 %v5764, %v5762
        %v5909 = vpack.c.b16 %v5765, %v5763
        %v5910 = vpack.c.b16 %v5768, %v5766
        %v5911 = vpack.c.b16 %v5769, %v5767
        %v5912 = vpack.c.b16 %v5772, %v5770
        %v5913 = vpack.c.b16 %v5773, %v5771
        %v5914 = vpack.c.b16 %v5776, %v5774
        %v5915 = vpack.c.b16 %v5777, %v5775
        %v5916 = vpack.c.b16 %v5780, %v5778
        %v5917 = vpack.c.b16 %v5781, %v5779
        %v5918 = vpack.c.b16 %v5784, %v5782
        %v5919 = vpack.c.b16 %v5785, %v5783
        %v5920 = vpack.c.b16 %v5788, %v5786
        %v5921 = vpack.c.b16 %v5789, %v5787
        %v5922 = vpack.c.b16 %v5792, %v5790
        %v5923 = vpack.c.b16 %v5793, %v5791
        %v5924 = vpack.c.b16 %v5796, %v5794
        %v5925 = vpack.c.b16 %v5797, %v5795
        %v5926 = vpack.c.b16 %v5800, %v5798
        %v5927 = vpack.c.b16 %v5801, %v5799
        %v5928 = vpack.c.b16 %v5804, %v5802
        %v5929 = vpack.c.b16 %v5805, %v5803
        %v5930 = vpack.c.b16 %v5808, %v5806
        %v5931 = vpack.c.b16 %v5809, %v5807
        %v5932 = vpack.c.b16 %v5812, %v5810
        %v5933 = vpack.c.b16 %v5813, %v5811
        %v5934 = vpack.c.b16 %v5816, %v5814
        %v5935 = vpack.c.b16 %v5817, %v5815
        %v5936 = vpack.c.b16 %v5820, %v5818
        %v5937 = vpack.c.b16 %v5821, %v5819
        %v5938 = vpack.c.b16 %v5824, %v5822
        %v5939 = vpack.c.b16 %v5825, %v5823
        %v5940 = vpack.c.b16 %v5828, %v5826
        %v5941 = vpack.c.b16 %v5829, %v5827
        %v5942 = vpack.c.b16 %v5832, %v5830
        %v5943 = vpack.c.b16 %v5833, %v5831
        %v5944 = vpack.c.b16 %v5836, %v5834
        %v5945 = vpack.c.b16 %v5837, %v5835
        %v5946 = vpack.c.b16 %v5840, %v5838
        %v5947 = vpack.c.b16 %v5841, %v5839
        %v5948 = vpack.c.b16 %v5844, %v5842
        %v5949 = vpack.c.b16 %v5845, %v5843
        %v5950 = vpack.c.b16 %v5848, %v5846
        %v5951 = vpack.c.b16 %v5849, %v5847
        %v5952 = vpack.c.b16 %v5852, %v5850
        %v5953 = vpack.c.b16 %v5853, %v5851
        %v5954 = vpack.c.b16 %v5856, %v5854
        %v5955 = vpack.c.b16 %v5857, %v5855
        %v5956 = vpack.c.b16 %v5860, %v5858
        %v5957 = vpack.c.b16 %v5861, %v5859
        %6054 = vmatprep.subr.bf16.mxu0 %v5877
        %6055 = vmatpush1.bf16.msra.mxu0 %v5876
        %6056 = vmatprep.subr.bf16.mxu0 %v5875
        %6057 = vmatpush1.bf16.msra.mxu0 %v5874
        %6058 = vmatprep.subr.bf16.mxu0 %v5873
        %6059 = vmatpush1.bf16.msra.mxu0 %v5872
        %6060 = vmatprep.subr.bf16.mxu0 %v5871
        %6061 = vmatpush1.bf16.msra.mxu0 %v5870
        %6062 = vmatprep.subr.bf16.mxu0 %v5869
        %6063 = vmatpush1.bf16.msra.mxu0 %v5868
        %6064 = vmatprep.subr.bf16.mxu0 %v5867
        %6065 = vmatpush1.bf16.msra.mxu0 %v5866
        %6066 = vmatprep.subr.bf16.mxu0 %v5865
        %6067 = vmatpush1.bf16.msra.mxu0 %v5864
        %6068 = vmatprep.subr.bf16.mxu0 %v5863
        %6069 = vmatpush1.bf16.msra.mxu0 %v5862
        %6070 = vmatprep.subr.bf16.mxu0 %v5893
        %6071 = vmatpush2.bf16.msra.mxu0 %v5892
        %6072 = vmatprep.subr.bf16.mxu0 %v5891
        %6073 = vmatpush2.bf16.msra.mxu0 %v5890
        %6074 = vmatprep.subr.bf16.mxu0 %v5889
        %6075 = vmatpush2.bf16.msra.mxu0 %v5888
        %6076 = vmatprep.subr.bf16.mxu0 %v5887
        %6077 = vmatpush2.bf16.msra.mxu0 %v5886
        %6078 = vmatprep.subr.bf16.mxu0 %v5885
        %6079 = vmatpush2.bf16.msra.mxu0 %v5884
        %6080 = vmatprep.subr.bf16.mxu0 %v5883
        %6081 = vmatpush2.bf16.msra.mxu0 %v5882
        %6082 = vmatprep.subr.bf16.mxu0 %v5881
        %6083 = vmatpush2.bf16.msra.mxu0 %v5880
        %6084 = vmatprep.subr.bf16.mxu0 %v5879
        %6085 = vmatpush2.bf16.msra.mxu0 %v5878
        %6086 = vmatprep.mubr.bf16.mxu0 %v720
        %6087 = vmatmul.mubr.bf16.gmra.mxu0 %v719
        %v6088 = vpop.f32.mrf.mxu0
        %v6089 = vadd.f32 0.0, %v6088
        %v6090 = vpop.f32.mrf.mxu0
        %v6091 = vadd.f32 0.0, %v6090
        %v6092 = vpop.f32.mrf.mxu0
        %v6093 = vadd.f32 0.0, %v6092
        %v6094 = vpop.f32.mrf.mxu0
        %v6095 = vadd.f32 0.0, %v6094
        %6096 = vmatprep.mubr.bf16.mxu0 %v726
        %6097 = vmatmul.mubr.bf16.gmra.mxu0 %v725
        %v6098 = vpop.f32.mrf.mxu0
        %v6099 = vadd.f32 0.0, %v6098
        %v6100 = vpop.f32.mrf.mxu0
        %v6101 = vadd.f32 0.0, %v6100
        %v6102 = vpop.f32.mrf.mxu0
        %v6103 = vadd.f32 0.0, %v6102
        %v6104 = vpop.f32.mrf.mxu0
        %v6105 = vadd.f32 0.0, %v6104
        %6106 = vmatprep.mubr.bf16.mxu0 %v732
        %6107 = vmatmul.mubr.bf16.gmra.mxu0 %v731
        %v6108 = vpop.f32.mrf.mxu0
        %v6109 = vadd.f32 0.0, %v6108
        %v6110 = vpop.f32.mrf.mxu0
        %v6111 = vadd.f32 0.0, %v6110
        %v6112 = vpop.f32.mrf.mxu0
        %v6113 = vadd.f32 0.0, %v6112
        %v6114 = vpop.f32.mrf.mxu0
        %v6115 = vadd.f32 0.0, %v6114
        %6116 = vmatprep.mubr.bf16.mxu0 %v738
        %6117 = vmatmul.mubr.bf16.gmra.mxu0 %v737
        %v6118 = vpop.f32.mrf.mxu0
        %v6119 = vadd.f32 0.0, %v6118
        %v6120 = vpop.f32.mrf.mxu0
        %v6121 = vadd.f32 0.0, %v6120
        %v6122 = vpop.f32.mrf.mxu0
        %v6123 = vadd.f32 0.0, %v6122
        %v6124 = vpop.f32.mrf.mxu0
        %v6125 = vadd.f32 0.0, %v6124
        %6126 = vmatprep.mubr.bf16.mxu0 %v744
        %6127 = vmatmul.mubr.bf16.gmra.mxu0 %v743
        %v6128 = vpop.f32.mrf.mxu0
        %v6129 = vadd.f32 0.0, %v6128
        %v6130 = vpop.f32.mrf.mxu0
        %v6131 = vadd.f32 0.0, %v6130
        %v6132 = vpop.f32.mrf.mxu0
        %v6133 = vadd.f32 0.0, %v6132
        %v6134 = vpop.f32.mrf.mxu0
        %v6135 = vadd.f32 0.0, %v6134
        %6136 = vmatprep.mubr.bf16.mxu0 %v750
        %6137 = vmatmul.mubr.bf16.gmra.mxu0 %v749
        %v6138 = vpop.f32.mrf.mxu0
        %v6139 = vadd.f32 0.0, %v6138
        %v6140 = vpop.f32.mrf.mxu0
        %v6141 = vadd.f32 0.0, %v6140
        %v6142 = vpop.f32.mrf.mxu0
        %v6143 = vadd.f32 0.0, %v6142
        %v6144 = vpop.f32.mrf.mxu0
        %v6145 = vadd.f32 0.0, %v6144
        %6146 = vmatprep.mubr.bf16.mxu0 %v756
        %6147 = vmatmul.mubr.bf16.gmra.mxu0 %v755
        %v6148 = vpop.f32.mrf.mxu0
        %v6149 = vadd.f32 0.0, %v6148
        %v6150 = vpop.f32.mrf.mxu0
        %v6151 = vadd.f32 0.0, %v6150
        %v6152 = vpop.f32.mrf.mxu0
        %v6153 = vadd.f32 0.0, %v6152
        %v6154 = vpop.f32.mrf.mxu0
        %v6155 = vadd.f32 0.0, %v6154
        %6156 = vmatprep.mubr.bf16.mxu0 %v662
        %6157 = vmatmul.mubr.bf16.gmra.mxu0 %v662
        %v6158 = vpop.f32.mrf.mxu0
        %v6159 = vadd.f32 0.0, %v6158
        %v6160 = vpop.f32.mrf.mxu0
        %v6161 = vadd.f32 0.0, %v6160
        %v6162 = vpop.f32.mrf.mxu0
        %v6163 = vadd.f32 0.0, %v6162
        %v6164 = vpop.f32.mrf.mxu0
        %v6165 = vadd.f32 0.0, %v6164
        %6166 = vdwg.mxu0
        %6167 = vmatprep.subr.bf16.mxu0 %v5909
        %6168 = vmatpush1.bf16.msra.mxu0 %v5908
        %6169 = vmatprep.subr.bf16.mxu0 %v5907
        %6170 = vmatpush1.bf16.msra.mxu0 %v5906
        %6171 = vmatprep.subr.bf16.mxu0 %v5905
        %6172 = vmatpush1.bf16.msra.mxu0 %v5904
        %6173 = vmatprep.subr.bf16.mxu0 %v5903
        %6174 = vmatpush1.bf16.msra.mxu0 %v5902
        %6175 = vmatprep.subr.bf16.mxu0 %v5901
        %6176 = vmatpush1.bf16.msra.mxu0 %v5900
        %6177 = vmatprep.subr.bf16.mxu0 %v5899
        %6178 = vmatpush1.bf16.msra.mxu0 %v5898
        %6179 = vmatprep.subr.bf16.mxu0 %v5897
        %6180 = vmatpush1.bf16.msra.mxu0 %v5896
        %6181 = vmatprep.subr.bf16.mxu0 %v5895
        %6182 = vmatpush1.bf16.msra.mxu0 %v5894
        %6183 = vmatprep.subr.bf16.mxu0 %v5925
        %6184 = vmatpush2.bf16.msra.mxu0 %v5924
        %6185 = vmatprep.subr.bf16.mxu0 %v5923
        %6186 = vmatpush2.bf16.msra.mxu0 %v5922
        %6187 = vmatprep.subr.bf16.mxu0 %v5921
        %6188 = vmatpush2.bf16.msra.mxu0 %v5920
        %6189 = vmatprep.subr.bf16.mxu0 %v5919
        %6190 = vmatpush2.bf16.msra.mxu0 %v5918
        %6191 = vmatprep.subr.bf16.mxu0 %v5917
        %6192 = vmatpush2.bf16.msra.mxu0 %v5916
        %6193 = vmatprep.subr.bf16.mxu0 %v5915
        %6194 = vmatpush2.bf16.msra.mxu0 %v5914
        %6195 = vmatprep.subr.bf16.mxu0 %v5913
        %6196 = vmatpush2.bf16.msra.mxu0 %v5912
        %6197 = vmatprep.subr.bf16.mxu0 %v5911
        %6198 = vmatpush2.bf16.msra.mxu0 %v5910
        %6199 = vmatprep.mubr.bf16.mxu0 %v722
        %6200 = vmatmul.mubr.bf16.gmra.mxu0 %v721
        %v6201 = vpop.f32.mrf.mxu0
        %v6202 = vadd.f32 %v6089, %v6201
        %v6203 = vpop.f32.mrf.mxu0
        %v6204 = vadd.f32 %v6091, %v6203
        %v6205 = vpop.f32.mrf.mxu0
        %v6206 = vadd.f32 %v6093, %v6205
        %v6207 = vpop.f32.mrf.mxu0
        %v6208 = vadd.f32 %v6095, %v6207
        %6209 = vmatprep.mubr.bf16.mxu0 %v728
        %6210 = vmatmul.mubr.bf16.gmra.mxu0 %v727
        %v6211 = vpop.f32.mrf.mxu0
        %v6212 = vadd.f32 %v6099, %v6211
        %v6213 = vpop.f32.mrf.mxu0
        %v6214 = vadd.f32 %v6101, %v6213
        %v6215 = vpop.f32.mrf.mxu0
        %v6216 = vadd.f32 %v6103, %v6215
        %v6217 = vpop.f32.mrf.mxu0
        %v6218 = vadd.f32 %v6105, %v6217
        %6219 = vmatprep.mubr.bf16.mxu0 %v734
        %6220 = vmatmul.mubr.bf16.gmra.mxu0 %v733
        %v6221 = vpop.f32.mrf.mxu0
        %v6222 = vadd.f32 %v6109, %v6221
        %v6223 = vpop.f32.mrf.mxu0
        %v6224 = vadd.f32 %v6111, %v6223
        %v6225 = vpop.f32.mrf.mxu0
        %v6226 = vadd.f32 %v6113, %v6225
        %v6227 = vpop.f32.mrf.mxu0
        %v6228 = vadd.f32 %v6115, %v6227
        %6229 = vmatprep.mubr.bf16.mxu0 %v740
        %6230 = vmatmul.mubr.bf16.gmra.mxu0 %v739
        %v6231 = vpop.f32.mrf.mxu0
        %v6232 = vadd.f32 %v6119, %v6231
        %v6233 = vpop.f32.mrf.mxu0
        %v6234 = vadd.f32 %v6121, %v6233
        %v6235 = vpop.f32.mrf.mxu0
        %v6236 = vadd.f32 %v6123, %v6235
        %v6237 = vpop.f32.mrf.mxu0
        %v6238 = vadd.f32 %v6125, %v6237
        %6239 = vmatprep.mubr.bf16.mxu0 %v746
        %6240 = vmatmul.mubr.bf16.gmra.mxu0 %v745
        %v6241 = vpop.f32.mrf.mxu0
        %v6242 = vadd.f32 %v6129, %v6241
        %v6243 = vpop.f32.mrf.mxu0
        %v6244 = vadd.f32 %v6131, %v6243
        %v6245 = vpop.f32.mrf.mxu0
        %v6246 = vadd.f32 %v6133, %v6245
        %v6247 = vpop.f32.mrf.mxu0
        %v6248 = vadd.f32 %v6135, %v6247
        %6249 = vmatprep.mubr.bf16.mxu0 %v752
        %6250 = vmatmul.mubr.bf16.gmra.mxu0 %v751
        %v6251 = vpop.f32.mrf.mxu0
        %v6252 = vadd.f32 %v6139, %v6251
        %v6253 = vpop.f32.mrf.mxu0
        %v6254 = vadd.f32 %v6141, %v6253
        %v6255 = vpop.f32.mrf.mxu0
        %v6256 = vadd.f32 %v6143, %v6255
        %v6257 = vpop.f32.mrf.mxu0
        %v6258 = vadd.f32 %v6145, %v6257
        %6259 = vmatprep.mubr.bf16.mxu0 %v758
        %6260 = vmatmul.mubr.bf16.gmra.mxu0 %v757
        %v6261 = vpop.f32.mrf.mxu0
        %v6262 = vadd.f32 %v6149, %v6261
        %v6263 = vpop.f32.mrf.mxu0
        %v6264 = vadd.f32 %v6151, %v6263
        %v6265 = vpop.f32.mrf.mxu0
        %v6266 = vadd.f32 %v6153, %v6265
        %v6267 = vpop.f32.mrf.mxu0
        %v6268 = vadd.f32 %v6155, %v6267
        %6269 = vmatprep.mubr.bf16.mxu0 %v663
        %6270 = vmatmul.mubr.bf16.gmra.mxu0 %v663
        %v6271 = vpop.f32.mrf.mxu0
        %v6272 = vadd.f32 %v6159, %v6271
        %v6273 = vpop.f32.mrf.mxu0
        %v6274 = vadd.f32 %v6161, %v6273
        %v6275 = vpop.f32.mrf.mxu0
        %v6276 = vadd.f32 %v6163, %v6275
        %v6277 = vpop.f32.mrf.mxu0
        %v6278 = vadd.f32 %v6165, %v6277
        %6279 = vdwg.mxu0
        %6280 = vmatprep.subr.bf16.mxu0 %v5941
        %6281 = vmatpush1.bf16.msra.mxu0 %v5940
        %6282 = vmatprep.subr.bf16.mxu0 %v5939
        %6283 = vmatpush1.bf16.msra.mxu0 %v5938
        %6284 = vmatprep.subr.bf16.mxu0 %v5937
        %6285 = vmatpush1.bf16.msra.mxu0 %v5936
        %6286 = vmatprep.subr.bf16.mxu0 %v5935
        %6287 = vmatpush1.bf16.msra.mxu0 %v5934
        %6288 = vmatprep.subr.bf16.mxu0 %v5933
        %6289 = vmatpush1.bf16.msra.mxu0 %v5932
        %6290 = vmatprep.subr.bf16.mxu0 %v5931
        %6291 = vmatpush1.bf16.msra.mxu0 %v5930
        %6292 = vmatprep.subr.bf16.mxu0 %v5929
        %6293 = vmatpush1.bf16.msra.mxu0 %v5928
        %6294 = vmatprep.subr.bf16.mxu0 %v5927
        %6295 = vmatpush1.bf16.msra.mxu0 %v5926
        %6296 = vmatprep.subr.bf16.mxu0 %v5957
        %6297 = vmatpush2.bf16.msra.mxu0 %v5956
        %6298 = vmatprep.subr.bf16.mxu0 %v5955
        %6299 = vmatpush2.bf16.msra.mxu0 %v5954
        %6300 = vmatprep.subr.bf16.mxu0 %v5953
        %6301 = vmatpush2.bf16.msra.mxu0 %v5952
        %6302 = vmatprep.subr.bf16.mxu0 %v5951
        %6303 = vmatpush2.bf16.msra.mxu0 %v5950
        %6304 = vmatprep.subr.bf16.mxu0 %v5949
        %6305 = vmatpush2.bf16.msra.mxu0 %v5948
        %6306 = vmatprep.subr.bf16.mxu0 %v5947
        %6307 = vmatpush2.bf16.msra.mxu0 %v5946
        %6308 = vmatprep.subr.bf16.mxu0 %v5945
        %6309 = vmatpush2.bf16.msra.mxu0 %v5944
        %6310 = vmatprep.subr.bf16.mxu0 %v5943
        %6311 = vmatpush2.bf16.msra.mxu0 %v5942
        %6312 = vmatprep.mubr.bf16.mxu0 %v724
        %6313 = vmatmul.mubr.bf16.gmra.mxu0 %v723
        %v6314 = vpop.f32.mrf.mxu0
        %v6315 = vadd.f32 %v6202, %v6314
        %v6316 = vpop.f32.mrf.mxu0
        %v6317 = vadd.f32 %v6204, %v6316
        %v6318 = vpop.f32.mrf.mxu0
        %v6319 = vadd.f32 %v6206, %v6318
        %v6320 = vpop.f32.mrf.mxu0
        %v6321 = vadd.f32 %v6208, %v6320
        %6322 = vmatprep.mubr.bf16.mxu0 %v730
        %6323 = vmatmul.mubr.bf16.gmra.mxu0 %v729
        %v6324 = vpop.f32.mrf.mxu0
        %v6325 = vadd.f32 %v6212, %v6324
        %v6326 = vpop.f32.mrf.mxu0
        %v6327 = vadd.f32 %v6214, %v6326
        %v6328 = vpop.f32.mrf.mxu0
        %v6329 = vadd.f32 %v6216, %v6328
        %v6330 = vpop.f32.mrf.mxu0
        %v6331 = vadd.f32 %v6218, %v6330
        %6332 = vmatprep.mubr.bf16.mxu0 %v736
        %6333 = vmatmul.mubr.bf16.gmra.mxu0 %v735
        %v6334 = vpop.f32.mrf.mxu0
        %v6335 = vadd.f32 %v6222, %v6334
        %v6336 = vpop.f32.mrf.mxu0
        %v6337 = vadd.f32 %v6224, %v6336
        %v6338 = vpop.f32.mrf.mxu0
        %v6339 = vadd.f32 %v6226, %v6338
        %v6340 = vpop.f32.mrf.mxu0
        %v6341 = vadd.f32 %v6228, %v6340
        %6342 = vmatprep.mubr.bf16.mxu0 %v742
        %6343 = vmatmul.mubr.bf16.gmra.mxu0 %v741
        %v6344 = vpop.f32.mrf.mxu0
        %v6345 = vadd.f32 %v6232, %v6344
        %v6346 = vpop.f32.mrf.mxu0
        %v6347 = vadd.f32 %v6234, %v6346
        %v6348 = vpop.f32.mrf.mxu0
        %v6349 = vadd.f32 %v6236, %v6348
        %v6350 = vpop.f32.mrf.mxu0
        %v6351 = vadd.f32 %v6238, %v6350
        %6352 = vmatprep.mubr.bf16.mxu0 %v748
        %6353 = vmatmul.mubr.bf16.gmra.mxu0 %v747
        %v6354 = vpop.f32.mrf.mxu0
        %v6355 = vadd.f32 %v6242, %v6354
        %v6356 = vpop.f32.mrf.mxu0
        %v6357 = vadd.f32 %v6244, %v6356
        %v6358 = vpop.f32.mrf.mxu0
        %v6359 = vadd.f32 %v6246, %v6358
        %v6360 = vpop.f32.mrf.mxu0
        %v6361 = vadd.f32 %v6248, %v6360
        %6362 = vmatprep.mubr.bf16.mxu0 %v754
        %6363 = vmatmul.mubr.bf16.gmra.mxu0 %v753
        %v6364 = vpop.f32.mrf.mxu0
        %v6365 = vadd.f32 %v6252, %v6364
        %v6366 = vpop.f32.mrf.mxu0
        %v6367 = vadd.f32 %v6254, %v6366
        %v6368 = vpop.f32.mrf.mxu0
        %v6369 = vadd.f32 %v6256, %v6368
        %v6370 = vpop.f32.mrf.mxu0
        %v6371 = vadd.f32 %v6258, %v6370
        %6372 = vmatprep.mubr.bf16.mxu0 %v760
        %6373 = vmatmul.mubr.bf16.gmra.mxu0 %v759
        %v6374 = vpop.f32.mrf.mxu0
        %v6375 = vadd.f32 %v6262, %v6374
        %v6376 = vpop.f32.mrf.mxu0
        %v6377 = vadd.f32 %v6264, %v6376
        %v6378 = vpop.f32.mrf.mxu0
        %v6379 = vadd.f32 %v6266, %v6378
        %v6380 = vpop.f32.mrf.mxu0
        %v6381 = vadd.f32 %v6268, %v6380
        %6382 = vmatprep.mubr.bf16.mxu0 %v664
        %6383 = vmatmul.mubr.bf16.gmra.mxu0 %v664
        %v6384 = vpop.f32.mrf.mxu0
        %v6385 = vadd.f32 %v6272, %v6384
        %v6386 = vpop.f32.mrf.mxu0
        %v6387 = vadd.f32 %v6274, %v6386
        %v6388 = vpop.f32.mrf.mxu0
        %v6389 = vadd.f32 %v6276, %v6388
        %v6390 = vpop.f32.mrf.mxu0
        %v6391 = vadd.f32 %v6278, %v6390
        %6392 = vdwg.mxu0
        %v6393 = vadd.f32 %v5400, %v6315
        %v6394 = vadd.f32 %v5402, %v6317
        %v6395 = vadd.f32 %v5404, %v6319
        %v6396 = vadd.f32 %v5406, %v6321
        %v6397 = vadd.f32 %v5410, %v6325
        %v6398 = vadd.f32 %v5412, %v6327
        %v6399 = vadd.f32 %v5414, %v6329
        %v6400 = vadd.f32 %v5416, %v6331
        %v6401 = vadd.f32 %v5420, %v6335
        %v6402 = vadd.f32 %v5422, %v6337
        %v6403 = vadd.f32 %v5424, %v6339
        %v6404 = vadd.f32 %v5426, %v6341
        %v6405 = vadd.f32 %v5430, %v6345
        %v6406 = vadd.f32 %v5432, %v6347
        %v6407 = vadd.f32 %v5434, %v6349
        %v6408 = vadd.f32 %v5436, %v6351
        %v6409 = vadd.f32 %v5440, %v6355
        %v6410 = vadd.f32 %v5442, %v6357
        %v6411 = vadd.f32 %v5444, %v6359
        %v6412 = vadd.f32 %v5446, %v6361
        %v6413 = vadd.f32 %v5450, %v6365
        %v6414 = vadd.f32 %v5452, %v6367
        %v6415 = vadd.f32 %v5454, %v6369
        %v6416 = vadd.f32 %v5456, %v6371
        %v6417 = vadd.f32 %v5460, %v6375
        %v6418 = vadd.f32 %v5462, %v6377
        %v6419 = vadd.f32 %v5464, %v6379
        %v6420 = vadd.f32 %v5466, %v6381
        %v6421 = vadd.f32 %v5470, %v6385
        %v6422 = vadd.f32 %v5472, %v6387
        %v6423 = vadd.f32 %v5474, %v6389
        %v6424 = vadd.f32 %v5476, %v6391
        %v6425 = vadd.f32 %v6393, %v3545
        %v6426 = vadd.f32 %v6394, %v3549
        %v6427 = vadd.f32 %v6395, %v3545
        %v6428 = vadd.f32 %v6396, %v3549
        %v6429 = vadd.f32 %v6397, %v3545
        %v6430 = vadd.f32 %v6398, %v3549
        %v6431 = vadd.f32 %v6399, %v3545
        %v6432 = vadd.f32 %v6400, %v3549
        %v6433 = vadd.f32 %v6401, %v3545
        %v6434 = vadd.f32 %v6402, %v3549
        %v6435 = vadd.f32 %v6403, %v3545
        %v6436 = vadd.f32 %v6404, %v3549
        %v6437 = vadd.f32 %v6405, %v3545
        %v6438 = vadd.f32 %v6406, %v3549
        %v6439 = vadd.f32 %v6407, %v3545
        %v6440 = vadd.f32 %v6408, %v3549
        %v6441 = vadd.f32 %v6409, %v3545
        %v6442 = vadd.f32 %v6410, %v3549
        %v6443 = vadd.f32 %v6411, %v3545
        %v6444 = vadd.f32 %v6412, %v3549
        %v6445 = vadd.f32 %v6413, %v3545
        %v6446 = vadd.f32 %v6414, %v3549
        %v6447 = vadd.f32 %v6415, %v3545
        %v6448 = vadd.f32 %v6416, %v3549
        %v6449 = vadd.f32 %v6417, %v3545
        %v6450 = vadd.f32 %v6418, %v3549
        %v6451 = vadd.f32 %v6419, %v3545
        %v6452 = vadd.f32 %v6420, %v3549
        %v6453 = vadd.f32 %v6421, %v3545
        %v6454 = vadd.f32 %v6422, %v3549
        %v6455 = vadd.f32 %v6423, %v3545
        %v6456 = vadd.f32 %v6424, %v3549
        %v6457 = vmax.f32 %v6425, 0.0
        %v6458 = vmax.f32 %v6426, 0.0
        %v6459 = vmax.f32 %v6427, 0.0
        %v6460 = vmax.f32 %v6428, 0.0
        %v6461 = vmax.f32 %v6429, 0.0
        %v6462 = vmax.f32 %v6430, 0.0
        %v6463 = vmax.f32 %v6431, 0.0
        %v6464 = vmax.f32 %v6432, 0.0
        %v6465 = vmax.f32 %v6433, 0.0
        %v6466 = vmax.f32 %v6434, 0.0
        %v6467 = vmax.f32 %v6435, 0.0
        %v6468 = vmax.f32 %v6436, 0.0
        %v6469 = vmax.f32 %v6437, 0.0
        %v6470 = vmax.f32 %v6438, 0.0
        %v6471 = vmax.f32 %v6439, 0.0
        %v6472 = vmax.f32 %v6440, 0.0
        %v6473 = vmax.f32 %v6441, 0.0
        %v6474 = vmax.f32 %v6442, 0.0
        %v6475 = vmax.f32 %v6443, 0.0
        %v6476 = vmax.f32 %v6444, 0.0
        %v6477 = vmax.f32 %v6445, 0.0
        %v6478 = vmax.f32 %v6446, 0.0
        %v6479 = vmax.f32 %v6447, 0.0
        %v6480 = vmax.f32 %v6448, 0.0
        %v6481 = vmax.f32 %v6449, 0.0
        %v6482 = vmax.f32 %v6450, 0.0
        %v6483 = vmax.f32 %v6451, 0.0
        %v6484 = vmax.f32 %v6452, 0.0
        %v6485 = vmax.f32 %v6453, 0.0
        %v6486 = vmax.f32 %v6454, 0.0
        %v6487 = vmax.f32 %v6455, 0.0
        %v6488 = vmax.f32 %v6456, 0.0
        %s6489 = scalar_lea.vmem %s163, 256 [#allocation2]
        %6490 = vst [vmem:[%s6489] sm:$0xff] %v6457
        %6491 = vst [vmem:[%s6489 + $0x8] sm:$0xff] %v6458
        %6492 = vst [vmem:[%s6489 + $0x10] sm:$0xff] %v6459
        %6493 = vst [vmem:[%s6489 + $0x18] sm:$0xff] %v6460
        %6494 = vst [vmem:[%s6489 + $0x20] sm:$0xff] %v6461
        %6495 = vst [vmem:[%s6489 + $0x28] sm:$0xff] %v6462
        %6496 = vst [vmem:[%s6489 + $0x30] sm:$0xff] %v6463
        %6497 = vst [vmem:[%s6489 + $0x38] sm:$0xff] %v6464
        %6498 = vst [vmem:[%s6489 + $0x40] sm:$0xff] %v6465
        %6499 = vst [vmem:[%s6489 + $0x48] sm:$0xff] %v6466
        %6500 = vst [vmem:[%s6489 + $0x50] sm:$0xff] %v6467
        %6501 = vst [vmem:[%s6489 + $0x58] sm:$0xff] %v6468
        %6502 = vst [vmem:[%s6489 + $0x60] sm:$0xff] %v6469
        %6503 = vst [vmem:[%s6489 + $0x68] sm:$0xff] %v6470
        %6504 = vst [vmem:[%s6489 + $0x70] sm:$0xff] %v6471
        %6505 = vst [vmem:[%s6489 + $0x78] sm:$0xff] %v6472
        %6506 = vst [vmem:[%s6489 + $0x80] sm:$0xff] %v6473
        %6507 = vst [vmem:[%s6489 + $0x88] sm:$0xff] %v6474
        %6508 = vst [vmem:[%s6489 + $0x90] sm:$0xff] %v6475
        %6509 = vst [vmem:[%s6489 + $0x98] sm:$0xff] %v6476
        %6510 = vst [vmem:[%s6489 + $0xa0] sm:$0xff] %v6477
        %6511 = vst [vmem:[%s6489 + $0xa8] sm:$0xff] %v6478
        %6512 = vst [vmem:[%s6489 + $0xb0] sm:$0xff] %v6479
        %6513 = vst [vmem:[%s6489 + $0xb8] sm:$0xff] %v6480
        %6514 = vst [vmem:[%s6489 + $0xc0] sm:$0xff] %v6481
        %6515 = vst [vmem:[%s6489 + $0xc8] sm:$0xff] %v6482
        %6516 = vst [vmem:[%s6489 + $0xd0] sm:$0xff] %v6483
        %6517 = vst [vmem:[%s6489 + $0xd8] sm:$0xff] %v6484
        %6518 = vst [vmem:[%s6489 + $0xe0] sm:$0xff] %v6485
        %6519 = vst [vmem:[%s6489 + $0xe8] sm:$0xff] %v6486
        %6520 = vst [vmem:[%s6489 + $0xf0] sm:$0xff] %v6487
        %6521 = vst [vmem:[%s6489 + $0xf8] sm:$0xff] %v6488
        %s6522 = sand.u32 %s93, 1
        %s6523 = scalar_lea.sflag [#allocation3], %s6522
        %s6524 = sand.u32 %s93, 1
        %s6525 = smul.addr %s6524, 512
        %s6526 = scalar_lea.vmem [#allocation2], %s6525
        // Predicated region
        $region33: #{_lambda_.5} parent=31 // pred_check
          %p6527 = pneg %p103
        $region34: #{_lambda_.5} parent=31 // pred_check_branch
          %6529 = sbr.rel (%p6527) target = $region36
        $region35: #{_lambda_.5} parent=31 // pred_region
          %s6531 = ssub.s32 8192, 8192
          %6532 = vsyncadd %s6523, %s6531
          %s6533 = smul.addr %s17, 64
          %s6534 = smul.addr %s6533, 128
          %s6535 = scalar_lea.hbm %s3, %s6534
          %s6536 = sshll.u32 %s6526, 4
          %s6537 = int_to_ptr.vmem [resolvable:$true] %s6536
          %6542 = dma.vmem_to_hbm [thread:$0]  %s6537, 8192, %s6535, %s6523, 256, 256, 16
        $region36: #{_lambda_.5} parent=31 // pred_fallthru
          _
      $region32: #{_lambda_.5} parent=5 // pred_fallthru
        _
      %p6543 = scmp.le.s32.totalorder 2, %s12
      // Predicated region
      $region37: #{_lambda_.5} parent=5 // pred_check
        %p6544 = pneg %p6543
      $region38: #{_lambda_.5} parent=5 // pred_check_branch
        %6546 = sbr.rel (%p6544) target = $region40
      $region39: #{_lambda_.5} parent=5 // pred_region
        %s6547 = ssub.s32 %s12, 2
        // Predicated region
        $region41: #{_lambda_.5} parent=39 // pred_check
          %p6548 = pneg %p109
        $region42: #{_lambda_.5} parent=39 // pred_check_branch
          %6550 = sbr.rel (%p6548) target = $region44
        $region43: #{_lambda_.5} parent=39 // pred_region
          %s6551 = sand.u32 %s94, 1
          %s6552 = scalar_lea.sflag [#allocation3], %s6551
          %s6553 = sand.u32 %s94, 1
          %s6554 = smul.addr %s6553, 512
          %s6555 = scalar_lea.vmem [#allocation2], %s6554
          %6556 = dma.done %s6552, 8192
        $region44: #{_lambda_.5} parent=39 // pred_fallthru
          _
      $region40: #{_lambda_.5} parent=5 // pred_fallthru
        _
    $region6: #{_lambda_.5} parent=1 // loop_footer
      %s16 = sadd.s32 1, %s12
    $region7: #{_lambda_.5} parent=1 // loop_footer_branch
      %11 = sbr.rel target = $region3
    $region8: #{_lambda_.5} parent=1 // loop_exit
      _
    %6557 = vsyncpa [#allocation3], 1
    %s6558 = scalar_lea.sflag [#allocation3], 1
    %6559 = vsyncpa %s6558, 1

</llo_original>
